<compile_context>
chip_gen: v6e
topology: v6e:2x2x1
jax: 0.10.0
libtpu: 0.0.40
codegen_flags: <defaults>
</compile_context>

<pallas_src>
import functools
import math

import jax
import jax.numpy as jnp
from jax.experimental import pallas as pl
from jax.experimental.pallas import tpu as pltpu

# ---------------- config (vit_small, patch 16, HIPT feature size 384) ----------------
PATCH = 16
EMBED_DIM = 384
DEPTH = 12
NUM_HEADS = 6
HEAD_DIM = EMBED_DIM // NUM_HEADS
MLP_HIDDEN = EMBED_DIM * 4
LATENT_DIM = 128          # latent_embedding_dimension of Projection_Head
LN_EPS = 1e-5

_VMEM_LIMIT = 32 * 1024 * 1024   # <= default on v6e/v7x, raises v5e's 16 MiB default


# ------------------------------------ helpers ----------------------------------------
def _resident(shape):
    """Whole-array block, constant across the grid (weight stays VMEM-resident)."""
    return pl.BlockSpec(shape, lambda *_: (0,) * len(shape))


def _pick_row_tile(m):
    """Largest sublane-aligned row tile dividing m (falls back to the full extent)."""
    for t in (512, 256, 128, 64, 32, 16, 8):
        if m % t == 0:
            return t
    return m


def _round_up(x, m):
    return (x + m - 1) // m * m


def _gelu_exact(x):
    # matches torch.nn.GELU() (erf-based, not tanh approximation)
    return 0.5 * x * (1.0 + jax.lax.erf(x * (1.0 / math.sqrt(2.0))))


def _layernorm(x, g, b):
    mean = jnp.mean(x, axis=-1, keepdims=True)
    var = jnp.mean((x - mean) ** 2, axis=-1, keepdims=True)
    return (x - mean) * jax.lax.rsqrt(var + LN_EPS) * g + b


# ---------------------------------- Pallas kernels -----------------------------------
def _linear_kernel(x_ref, w_ref, b_ref, o_ref):
    acc = jnp.dot(x_ref[...].astype(jnp.bfloat16), w_ref[...],
                  preferred_element_type=jnp.float32)
    o_ref[...] = (acc + b_ref[...]).astype(o_ref.dtype)


def pallas_linear(x, w, b):
    """Row-tiled linear: x (M,K) f32 @ w (K,N) bf16 + b (1,N) f32 -> (M,N) f32."""
    M, K = x.shape
    N = w.shape[1]
    tm = _pick_row_tile(M)
    return pl.pallas_call(
        _linear_kernel,
        grid=(M // tm,),
        in_specs=[pl.BlockSpec((tm, K), lambda i: (i, 0)),
                  _resident((K, N)), _resident((1, N))],
        out_specs=pl.BlockSpec((tm, N), lambda i: (i, 0)),
        out_shape=jax.ShapeDtypeStruct((M, N), jnp.float32),
        compiler_params=pltpu.CompilerParams(
            dimension_semantics=("parallel",), vmem_limit_bytes=_VMEM_LIMIT),
    )(x, w, b)


def _layernorm_kernel(x_ref, g_ref, b_ref, o_ref):
    o_ref[...] = _layernorm(x_ref[...].astype(jnp.float32),
                            g_ref[...], b_ref[...]).astype(o_ref.dtype)


def pallas_layernorm(x, g, b):
    M, D = x.shape
    return pl.pallas_call(
        _layernorm_kernel,
        grid=(1,),
        in_specs=[_resident((M, D)), _resident((1, D)), _resident((1, D))],
        out_specs=_resident((M, D)),
        out_shape=jax.ShapeDtypeStruct((M, D), jnp.float32),
    )(x, g, b)


def _attn_block_kernel(x_ref, g_ref, be_ref, qkvw_ref, qkvb_ref, pw_ref, pb_ref,
                       o_ref, *, n_valid):
    """Fused LN1 -> QKV -> multi-head attention -> out-proj -> residual (one batch)."""
    x = x_ref[0].astype(jnp.float32)                              # (Tp, D)
    xn = _layernorm(x, g_ref[...], be_ref[...])
    # QKV projection; bf16 operands, f32 accumulation. 1/sqrt(Dh) folded into Q weights.
    qkv = jnp.dot(xn.astype(jnp.bfloat16), qkvw_ref[...],
                  preferred_element_type=jnp.float32) + qkvb_ref[...]
    tp = x.shape[0]
    if n_valid < tp:   # mask padded key positions (static decision at trace time)
        key_mask = jax.lax.broadcasted_iota(jnp.int32, (tp, tp), 1) < n_valid
    else:
        key_mask = None

    heads = []
    for h in range(NUM_HEADS):                                    # static lane slices
        q = qkv[:, h * HEAD_DIM:(h + 1) * HEAD_DIM]
        k = qkv[:, EMBED_DIM + h * HEAD_DIM:EMBED_DIM + (h + 1) * HEAD_DIM]
        v = qkv[:, 2 * EMBED_DIM + h * HEAD_DIM:2 * EMBED_DIM + (h + 1) * HEAD_DIM]
        # q @ k^T without materializing the transpose (contract last dims)
        s = jax.lax.dot_general(q.astype(jnp.bfloat16), k.astype(jnp.bfloat16),
                                (((1,), (1,)), ((), ())),
                                preferred_element_type=jnp.float32)
        if key_mask is not None:
            s = jnp.where(key_mask, s, -jnp.inf)
        p = jnp.exp(s - jnp.max(s, axis=-1, keepdims=True))
        inv_l = pl.reciprocal(jnp.sum(p, axis=-1, keepdims=True), approx=True)
        o_h = jnp.dot(p.astype(jnp.bfloat16), v.astype(jnp.bfloat16),
                      preferred_element_type=jnp.float32)
        heads.append(o_h * inv_l)

    attn = jnp.concatenate(heads, axis=-1)                        # lane-dense (Tp, D)
    y = jnp.dot(attn.astype(jnp.bfloat16), pw_ref[...],
                preferred_element_type=jnp.float32) + pb_ref[...]
    o_ref[0] = (x + y).astype(o_ref.dtype)


def pallas_attention_block(x, blk, n_valid):
    B, Tp, D = x.shape
    flops = B * (2 * Tp * D * 3 * D
                 + NUM_HEADS * 4 * Tp * Tp * HEAD_DIM
                 + 2 * Tp * D * D)
    cost = pl.CostEstimate(
        flops=flops,
        transcendentals=B * (NUM_HEADS * Tp * Tp + Tp),
        bytes_accessed=2 * B * Tp * D * 4 + (3 * D * D + D * D) * 2 + 6 * D * 4)
    kern = functools.partial(_attn_block_kernel, n_valid=n_valid)
    xspec = pl.BlockSpec((1, Tp, D), lambda b: (b, 0, 0))
    return pl.pallas_call(
        kern,
        grid=(B,),
        in_specs=[xspec,
                  _resident((1, D)), _resident((1, D)),
                  _resident((D, 3 * D)), _resident((1, 3 * D)),
                  _resident((D, D)), _resident((1, D))],
        out_specs=xspec,
        out_shape=jax.ShapeDtypeStruct((B, Tp, D), jnp.float32),
        cost_estimate=cost,
        compiler_params=pltpu.CompilerParams(
            dimension_semantics=("parallel",), vmem_limit_bytes=_VMEM_LIMIT),
    )(x, blk["ln1_g"], blk["ln1_b"], blk["qkv_w"], blk["qkv_b"],
      blk["proj_w"], blk["proj_b"])


def _mlp_block_kernel(x_ref, g_ref, be_ref, w1_ref, b1_ref, w2_ref, b2_ref, o_ref):
    """Fused LN2 -> fc1 -> GELU -> fc2 -> residual add on a row tile."""
    x = x_ref[...].astype(jnp.float32)
    xn = _layernorm(x, g_ref[...], be_ref[...])
    h = jnp.dot(xn.astype(jnp.bfloat16), w1_ref[...],
                preferred_element_type=jnp.float32) + b1_ref[...]
    h = _gelu_exact(h)
    y = jnp.dot(h.astype(jnp.bfloat16), w2_ref[...],
                preferred_element_type=jnp.float32) + b2_ref[...]
    o_ref[...] = (x + y).astype(o_ref.dtype)


def pallas_mlp_block(x2d, blk):
    M, D = x2d.shape
    H = MLP_HIDDEN
    tm = _pick_row_tile(M)
    cost = pl.CostEstimate(
        flops=4 * M * D * H,
        transcendentals=M * H,
        bytes_accessed=2 * M * D * 4 + 2 * D * H * 2)
    return pl.pallas_call(
        _mlp_block_kernel,
        grid=(M // tm,),
        in_specs=[pl.BlockSpec((tm, D), lambda i: (i, 0)),
                  _resident((1, D)), _resident((1, D)),
                  _resident((D, H)), _resident((1, H)),
                  _resident((H, D)), _resident((1, D))],
        out_specs=pl.BlockSpec((tm, D), lambda i: (i, 0)),
        out_shape=jax.ShapeDtypeStruct((M, D), jnp.float32),
        cost_estimate=cost,
        compiler_params=pltpu.CompilerParams(
            dimension_semantics=("parallel",), vmem_limit_bytes=_VMEM_LIMIT),
    )(x2d, blk["ln2_g"], blk["ln2_b"], blk["fc1_w"], blk["fc1_b"],
      blk["fc2_w"], blk["fc2_b"])


def _proj_head_kernel(x_ref, w1_ref, b1_ref, w2_ref, b2_ref, g_ref, be_ref, o_ref):
    # Projection_Head: proj = Linear(x); y = Linear(GELU(proj)) + proj; LayerNorm(y)
    proj = jnp.dot(x_ref[...].astype(jnp.bfloat16), w1_ref[...],
                   preferred_element_type=jnp.float32) + b1_ref[...]
    h = _gelu_exact(proj)
    h = jnp.dot(h.astype(jnp.bfloat16), w2_ref[...],
                preferred_element_type=jnp.float32) + b2_ref[...]
    h = h + proj
    o_ref[...] = _layernorm(h, g_ref[...], be_ref[...]).astype(o_ref.dtype)


def pallas_projection_head(x, p):
    M, D = x.shape
    P = LATENT_DIM
    return pl.pallas_call(
        _proj_head_kernel,
        grid=(1,),
        in_specs=[_resident((M, D)), _resident((D, P)), _resident((1, P)),
                  _resident((P, P)), _resident((1, P)),
                  _resident((1, P)), _resident((1, P))],
        out_specs=_resident((M, P)),
        out_shape=jax.ShapeDtypeStruct((M, P), jnp.float32),
    )(x, p["w1"], p["b1"], p["w2"], p["b2"], p["ln_g"], p["ln_b"])


# ------------------------------- parameter construction ------------------------------
def init_params(key, num_patches, in_chans=3):
    """Canonical f32 parameters (torch-like layout: qkv columns = [Q | K | V], head-major)."""
    def normal(k, shape, std=0.02):
        return std * jax.random.normal(k, shape, dtype=jnp.float32)

    keys = iter(jax.random.split(key, 8 + DEPTH * 8))
    params = {
        "patch_w": normal(next(keys), (in_chans * PATCH * PATCH, EMBED_DIM)),
        "patch_b": jnp.zeros((EMBED_DIM,), jnp.float32),
        "cls": normal(next(keys), (1, 1, EMBED_DIM)),
        "pos": normal(next(keys), (1, num_patches + 1, EMBED_DIM)),
        "norm_g": jnp.ones((EMBED_DIM,), jnp.float32),
        "norm_b": jnp.zeros((EMBED_DIM,), jnp.float32),
        "blocks": [],
        "proj_head": {
            "w1": normal(next(keys), (EMBED_DIM, LATENT_DIM)),
            "b1": jnp.zeros((LATENT_DIM,), jnp.float32),
            "w2": normal(next(keys), (LATENT_DIM, LATENT_DIM)),
            "b2": jnp.zeros((LATENT_DIM,), jnp.float32),
            "ln_g": jnp.ones((LATENT_DIM,), jnp.float32),
            "ln_b": jnp.zeros((LATENT_DIM,), jnp.float32),
        },
    }
    for _ in range(DEPTH):
        params["blocks"].append({
            "ln1_g": jnp.ones((EMBED_DIM,), jnp.float32),
            "ln1_b": jnp.zeros((EMBED_DIM,), jnp.float32),
            "qkv_w": normal(next(keys), (EMBED_DIM, 3 * EMBED_DIM)),
            "qkv_b": jnp.zeros((3 * EMBED_DIM,), jnp.float32),
            "proj_w": normal(next(keys), (EMBED_DIM, EMBED_DIM)),
            "proj_b": jnp.zeros((EMBED_DIM,), jnp.float32),
            "ln2_g": jnp.ones((EMBED_DIM,), jnp.float32),
            "ln2_b": jnp.zeros((EMBED_DIM,), jnp.float32),
            "fc1_w": normal(next(keys), (EMBED_DIM, MLP_HIDDEN)),
            "fc1_b": jnp.zeros((MLP_HIDDEN,), jnp.float32),
            "fc2_w": normal(next(keys), (MLP_HIDDEN, EMBED_DIM)),
            "fc2_b": jnp.zeros((EMBED_DIM,), jnp.float32),
        })
    return params


def prepare_params(params):
    """Repack params for the kernels: bf16 weights, f32 biases/LN as (1,N) rows,
    and the softmax 1/sqrt(Dh) scale folded into the Q columns of qkv_w / qkv_b."""
    scale = 1.0 / math.sqrt(HEAD_DIM)
    bf16 = lambda w: w.astype(jnp.bfloat16)
    row = lambda v: v.reshape(1, -1)

    kp = {
        "patch_w": bf16(params["patch_w"]),
        "patch_b": row(params["patch_b"]),
        "cls": params["cls"],
        "pos": params["pos"],
        "norm_g": row(params["norm_g"]),
        "norm_b": row(params["norm_b"]),
        "blocks": [],
    }
    for blk in params["blocks"]:
        qkv_w = blk["qkv_w"].at[:, :EMBED_DIM].multiply(scale)
        qkv_b = blk["qkv_b"].at[:EMBED_DIM].multiply(scale)
        kp["blocks"].append({
            "ln1_g": row(blk["ln1_g"]), "ln1_b": row(blk["ln1_b"]),
            "qkv_w": bf16(qkv_w), "qkv_b": row(qkv_b),
            "proj_w": bf16(blk["proj_w"]), "proj_b": row(blk["proj_b"]),
            "ln2_g": row(blk["ln2_g"]), "ln2_b": row(blk["ln2_b"]),
            "fc1_w": bf16(blk["fc1_w"]), "fc1_b": row(blk["fc1_b"]),
            "fc2_w": bf16(blk["fc2_w"]), "fc2_b": row(blk["fc2_b"]),
        })
    ph = params["proj_head"]
    kp["proj_head"] = {
        "w1": bf16(ph["w1"]), "b1": row(ph["b1"]),
        "w2": bf16(ph["w2"]), "b2": row(ph["b2"]),
        "ln_g": row(ph["ln_g"]), "ln_b": row(ph["ln_b"]),
    }
    return kp


# ------------------------------------ forward pass -----------------------------------
def vit_small_forward(kp, images):
    """DINO ViT-small forward: returns CLS token features (B, 384)."""
    B, C, H, W = images.shape
    gh, gw = H // PATCH, W // PATCH
    n_patch = gh * gw
    # patchify: exact equivalent of Conv2d(C, 384, k=16, s=16) with flattened weight
    patches = images.reshape(B, C, gh, PATCH, gw, PATCH)
    patches = patches.transpose(0, 2, 4, 1, 3, 5).reshape(B * n_patch, C * PATCH * PATCH)
    tok = pallas_linear(patches, kp["patch_w"], kp["patch_b"]).reshape(B, n_patch, EMBED_DIM)

    cls = jnp.broadcast_to(kp["cls"], (B, 1, EMBED_DIM))
    x = jnp.concatenate([cls, tok], axis=1) + kp["pos"]            # (B, T, D)
    T = n_patch + 1
    Tp = _round_up(T, 8)                                           # sublane alignment
    if Tp != T:
        x = jnp.pad(x, ((0, 0), (0, Tp - T), (0, 0)))              # padded keys masked

    for blk in kp["blocks"]:
        x = pallas_attention_block(x, blk, n_valid=T)
        x = pallas_mlp_block(x.reshape(B * Tp, EMBED_DIM), blk).reshape(B, Tp, EMBED_DIM)

    # final LayerNorm only on the CLS row (only the CLS token is returned)
    return pallas_layernorm(x[:, 0, :], kp["norm_g"], kp["norm_b"])


def image_encoder_forward(kp, images, retrieval_parallel=False):
    """Mirrors ImageEncoder.forward."""
    model_out = vit_small_forward(kp, images)
    if retrieval_parallel:
        return model_out, pallas_projection_head(model_out, kp["proj_head"])
    return model_out


def image_encoder_forward_head(kp, x):
    """Mirrors ImageEncoder.forward_head."""
    return pallas_projection_head(x, kp["proj_head"])


# ---------------------------------------- main ----------------------------------------
if __name__ == "__main__":
    key = jax.random.PRNGKey(0)
    k_img, k_params = jax.random.split(key)

    B, C, H, W = 2, 3, 32, 32          # small image consistent with patch_size=16
    images = jax.random.normal(k_img, (B, C, H, W), dtype=jnp.float32)

    params = init_params(k_params, num_patches=(H // PATCH) * (W // PATCH), in_chans=C)
    kparams = prepare_params(params)

    fwd = jax.jit(lambda p, im: image_encoder_forward(p, im))
    fwd_par = jax.jit(lambda p, im: image_encoder_forward(p, im, retrieval_parallel=True))
    fwd_head = jax.jit(image_encoder_forward_head)

    feats = fwd(kparams, images)                         # default path
    feats2, proj = fwd_par(kparams, images)              # retrieval_parallel=True
    head_out = fwd_head(kparams, feats)                  # forward_head

    jax.block_until_ready((feats, feats2, proj, head_out))

    assert feats.shape == (B, EMBED_DIM)
    assert feats2.shape == (B, EMBED_DIM)
    assert proj.shape == (B, LATENT_DIM)
    assert head_out.shape == (B, LATENT_DIM)
    assert bool(jnp.all(jnp.isfinite(feats))) and bool(jnp.all(jnp.isfinite(proj)))
    print("KERNEL_OK")
</pallas_src>

<mosaic_0001>
module attributes {stable_mosaic.version = 11 : i64} {
  func.func @_linear_kernel(%arg0: i32, %arg1: memref<8x768xf32, #tpu.memory_space<vmem>>, %arg2: memref<768x384xbf16, #tpu.memory_space<vmem>>, %arg3: memref<1x384xf32, #tpu.memory_space<vmem>>, %arg4: memref<8x384xf32, #tpu.memory_space<vmem>>) attributes {dimension_semantics = [#tpu.dimension_semantics<parallel>], iteration_bounds = array<i64: 1>, scalar_prefetch = 0 : i64, scratch_operands = 0 : i64, tpu.core_type = #tpu.core_type<tc>, window_params = [{transform_indices = @transform_0, window_bounds = array<i64: 8, 768>}, {pipeline_mode = #tpu.pipeline_mode<synchronous>, transform_indices = @transform_1, window_bounds = array<i64: 768, 384>}, {pipeline_mode = #tpu.pipeline_mode<synchronous>, transform_indices = @transform_2, window_bounds = array<i64: 1, 384>}, {transform_indices = @transform_3, window_bounds = array<i64: 8, 384>}]} {
    %c0 = arith.constant 0 : index
    %c0_0 = arith.constant 0 : index
    %0 = vector.load %arg1[%c0, %c0_0] : memref<8x768xf32, #tpu.memory_space<vmem>>, vector<8x768xf32>
    %1 = arith.truncf %0 : vector<8x768xf32> to vector<8x768xbf16>
    %c0_1 = arith.constant 0 : index
    %c0_2 = arith.constant 0 : index
    %2 = vector.load %arg2[%c0_1, %c0_2] : memref<768x384xbf16, #tpu.memory_space<vmem>>, vector<768x384xbf16>
    %cst = arith.constant dense<0.000000e+00> : vector<8x384xf32>
    %3 = tpu.matmul %1, %2, %cst {dimension_numbers = #tpu.dot_dimension_numbers<[1], [0], [0], [1], [0, 0, 1, 1], [], []>} : vector<8x768xbf16>, vector<768x384xbf16>, vector<8x384xf32> -> vector<8x384xf32>
    %c0_3 = arith.constant 0 : index
    %c0_4 = arith.constant 0 : index
    %4 = vector.load %arg3[%c0_3, %c0_4] : memref<1x384xf32, #tpu.memory_space<vmem>>, vector<1x384xf32>
    %5 = vector.broadcast %4 : vector<1x384xf32> to vector<8x384xf32>
    %6 = arith.addf %3, %5 : vector<8x384xf32>
    %c0_5 = arith.constant 0 : index
    %c0_6 = arith.constant 0 : index
    %7 = vector.load %arg4[%c0_5, %c0_6] : memref<8x384xf32, #tpu.memory_space<vmem>>, vector<8x384xf32>
    tpu.vector_store %arg4[%c0_5, %c0_6], %6 {strides = array<i32>} : memref<8x384xf32, #tpu.memory_space<vmem>>, vector<8x384xf32>,
    return
  }
  func.func @transform_0(%arg0: i32) -> (i32, i32) {
    %c0_i32 = arith.constant 0 : i32
    %c0_i32_0 = arith.constant 0 : i32
    return %arg0, %c0_i32 : i32, i32
  }
  func.func @transform_1(%arg0: i32) -> (i32, i32) {
    %c0_i32 = arith.constant 0 : i32
    %c0_i32_0 = arith.constant 0 : i32
    %c0_i32_1 = arith.constant 0 : i32
    return %c0_i32, %c0_i32_0 : i32, i32
  }
  func.func @transform_2(%arg0: i32) -> (i32, i32) {
    %c0_i32 = arith.constant 0 : i32
    %c0_i32_0 = arith.constant 0 : i32
    %c0_i32_1 = arith.constant 0 : i32
    return %c0_i32, %c0_i32_0 : i32, i32
  }
  func.func @transform_3(%arg0: i32) -> (i32, i32) {
    %c0_i32 = arith.constant 0 : i32
    %c0_i32_0 = arith.constant 0 : i32
    return %arg0, %c0_i32 : i32, i32
  }
}

module attributes {stable_mosaic.version = 11 : i64} {
  func.func @_mlp_block_kernel(%arg0: i32, %arg1: memref<16x384xf32, #tpu.memory_space<vmem>>, %arg2: memref<1x384xf32, #tpu.memory_space<vmem>>, %arg3: memref<1x384xf32, #tpu.memory_space<vmem>>, %arg4: memref<384x1536xbf16, #tpu.memory_space<vmem>>, %arg5: memref<1x1536xf32, #tpu.memory_space<vmem>>, %arg6: memref<1536x384xbf16, #tpu.memory_space<vmem>>, %arg7: memref<1x384xf32, #tpu.memory_space<vmem>>, %arg8: memref<16x384xf32, #tpu.memory_space<vmem>>) attributes {dimension_semantics = [#tpu.dimension_semantics<parallel>], iteration_bounds = array<i64: 1>, scalar_prefetch = 0 : i64, scratch_operands = 0 : i64, tpu.core_type = #tpu.core_type<tc>, window_params = [{transform_indices = @transform_0, window_bounds = array<i64: 16, 384>}, {pipeline_mode = #tpu.pipeline_mode<synchronous>, transform_indices = @transform_1, window_bounds = array<i64: 1, 384>}, {pipeline_mode = #tpu.pipeline_mode<synchronous>, transform_indices = @transform_2, window_bounds = array<i64: 1, 384>}, {pipeline_mode = #tpu.pipeline_mode<synchronous>, transform_indices = @transform_3, window_bounds = array<i64: 384, 1536>}, {pipeline_mode = #tpu.pipeline_mode<synchronous>, transform_indices = @transform_4, window_bounds = array<i64: 1, 1536>}, {pipeline_mode = #tpu.pipeline_mode<synchronous>, transform_indices = @transform_5, window_bounds = array<i64: 1536, 384>}, {pipeline_mode = #tpu.pipeline_mode<synchronous>, transform_indices = @transform_6, window_bounds = array<i64: 1, 384>}, {transform_indices = @transform_7, window_bounds = array<i64: 16, 384>}]} {
    %c0 = arith.constant 0 : index
    %c0_0 = arith.constant 0 : index
    %0 = vector.load %arg1[%c0, %c0_0] : memref<16x384xf32, #tpu.memory_space<vmem>>, vector<16x384xf32>
    %c0_1 = arith.constant 0 : index
    %c0_2 = arith.constant 0 : index
    %1 = vector.load %arg2[%c0_1, %c0_2] : memref<1x384xf32, #tpu.memory_space<vmem>>, vector<1x384xf32>
    %c0_3 = arith.constant 0 : index
    %c0_4 = arith.constant 0 : index
    %2 = vector.load %arg3[%c0_3, %c0_4] : memref<1x384xf32, #tpu.memory_space<vmem>>, vector<1x384xf32>
    %cst = arith.constant dense<0.000000e+00> : vector<16xf32>
    %3 = vector.multi_reduction <add>, %0, %cst [1] : vector<16x384xf32> to vector<16xf32>
    %4 = vector.shape_cast %3 : vector<16xf32> to vector<16x1xf32>
    %cst_5 = arith.constant 3.840000e+02 : f32
    %5 = vector.broadcast %cst_5 : f32 to vector<16x1xf32>
    %6 = arith.divf %4, %5 : vector<16x1xf32>
    %7 = vector.broadcast %6 : vector<16x1xf32> to vector<16x384xf32>
    %8 = arith.subf %0, %7 : vector<16x384xf32>
    %9 = arith.mulf %8, %8 : vector<16x384xf32>
    %cst_6 = arith.constant dense<0.000000e+00> : vector<16xf32>
    %10 = vector.multi_reduction <add>, %9, %cst_6 [1] : vector<16x384xf32> to vector<16xf32>
    %11 = vector.shape_cast %10 : vector<16xf32> to vector<16x1xf32>
    %cst_7 = arith.constant 3.840000e+02 : f32
    %12 = vector.broadcast %cst_7 : f32 to vector<16x1xf32>
    %13 = arith.divf %11, %12 : vector<16x1xf32>
    %14 = vector.broadcast %6 : vector<16x1xf32> to vector<16x384xf32>
    %15 = arith.subf %0, %14 : vector<16x384xf32>
    %cst_8 = arith.constant 9.99999974E-6 : f32
    %16 = vector.broadcast %cst_8 : f32 to vector<16x1xf32>
    %17 = arith.addf %13, %16 : vector<16x1xf32>
    %18 = math.rsqrt %17 : vector<16x1xf32>
    %19 = vector.broadcast %18 : vector<16x1xf32> to vector<16x384xf32>
    %20 = arith.mulf %15, %19 : vector<16x384xf32>
    %21 = vector.broadcast %1 : vector<1x384xf32> to vector<16x384xf32>
    %22 = arith.mulf %20, %21 : vector<16x384xf32>
    %23 = vector.broadcast %2 : vector<1x384xf32> to vector<16x384xf32>
    %24 = arith.addf %22, %23 : vector<16x384xf32>
    %25 = arith.truncf %24 : vector<16x384xf32> to vector<16x384xbf16>
    %c0_9 = arith.constant 0 : index
    %c0_10 = arith.constant 0 : index
    %26 = vector.load %arg4[%c0_9, %c0_10] : memref<384x1536xbf16, #tpu.memory_space<vmem>>, vector<384x1536xbf16>
    %cst_11 = arith.constant dense<0.000000e+00> : vector<16x1536xf32>
    %27 = tpu.matmul %25, %26, %cst_11 {dimension_numbers = #tpu.dot_dimension_numbers<[1], [0], [0], [1], [0, 0, 1, 1], [], []>} : vector<16x384xbf16>, vector<384x1536xbf16>, vector<16x1536xf32> -> vector<16x1536xf32>
    %c0_12 = arith.constant 0 : index
    %c0_13 = arith.constant 0 : index
    %28 = vector.load %arg5[%c0_12, %c0_13] : memref<1x1536xf32, #tpu.memory_space<vmem>>, vector<1x1536xf32>
    %29 = vector.broadcast %28 : vector<1x1536xf32> to vector<16x1536xf32>
    %30 = arith.addf %27, %29 : vector<16x1536xf32>
    %cst_14 = arith.constant 5.000000e-01 : f32
    %31 = vector.broadcast %cst_14 : f32 to vector<16x1536xf32>
    %32 = arith.mulf %31, %30 : vector<16x1536xf32>
    %cst_15 = arith.constant 0.707106769 : f32
    %33 = vector.broadcast %cst_15 : f32 to vector<16x1536xf32>
    %34 = arith.mulf %30, %33 : vector<16x1536xf32>
    %35 = math.erf %34 : vector<16x1536xf32>
    %cst_16 = arith.constant 1.000000e+00 : f32
    %36 = vector.broadcast %cst_16 : f32 to vector<16x1536xf32>
    %37 = arith.addf %36, %35 : vector<16x1536xf32>
    %38 = arith.mulf %32, %37 : vector<16x1536xf32>
    %39 = arith.truncf %38 : vector<16x1536xf32> to vector<16x1536xbf16>
    %c0_17 = arith.constant 0 : index
    %c0_18 = arith.constant 0 : index
    %40 = vector.load %arg6[%c0_17, %c0_18] : memref<1536x384xbf16, #tpu.memory_space<vmem>>, vector<1536x384xbf16>
    %cst_19 = arith.constant dense<0.000000e+00> : vector<16x384xf32>
    %41 = tpu.matmul %39, %40, %cst_19 {dimension_numbers = #tpu.dot_dimension_numbers<[1], [0], [0], [1], [0, 0, 1, 1], [], []>} : vector<16x1536xbf16>, vector<1536x384xbf16>, vector<16x384xf32> -> vector<16x384xf32>
    %c0_20 = arith.constant 0 : index
    %c0_21 = arith.constant 0 : index
    %42 = vector.load %arg7[%c0_20, %c0_21] : memref<1x384xf32, #tpu.memory_space<vmem>>, vector<1x384xf32>
    %43 = vector.broadcast %42 : vector<1x384xf32> to vector<16x384xf32>
    %44 = arith.addf %41, %43 : vector<16x384xf32>
    %45 = arith.addf %0, %44 : vector<16x384xf32>
    %c0_22 = arith.constant 0 : index
    %c0_23 = arith.constant 0 : index
    %46 = vector.load %arg8[%c0_22, %c0_23] : memref<16x384xf32, #tpu.memory_space<vmem>>, vector<16x384xf32>
    tpu.vector_store %arg8[%c0_22, %c0_23], %45 {strides = array<i32>} : memref<16x384xf32, #tpu.memory_space<vmem>>, vector<16x384xf32>,
    return
  }
  func.func @transform_0(%arg0: i32) -> (i32, i32) {
    %c0_i32 = arith.constant 0 : i32
    %c0_i32_0 = arith.constant 0 : i32
    return %arg0, %c0_i32 : i32, i32
  }
  func.func @transform_1(%arg0: i32) -> (i32, i32) {
    %c0_i32 = arith.constant 0 : i32
    %c0_i32_0 = arith.constant 0 : i32
    %c0_i32_1 = arith.constant 0 : i32
    return %c0_i32, %c0_i32_0 : i32, i32
  }
  func.func @transform_2(%arg0: i32) -> (i32, i32) {
    %c0_i32 = arith.constant 0 : i32
    %c0_i32_0 = arith.constant 0 : i32
    %c0_i32_1 = arith.constant 0 : i32
    return %c0_i32, %c0_i32_0 : i32, i32
  }
  func.func @transform_3(%arg0: i32) -> (i32, i32) {
    %c0_i32 = arith.constant 0 : i32
    %c0_i32_0 = arith.constant 0 : i32
    %c0_i32_1 = arith.constant 0 : i32
    return %c0_i32, %c0_i32_0 : i32, i32
  }
  func.func @transform_4(%arg0: i32) -> (i32, i32) {
    %c0_i32 = arith.constant 0 : i32
    %c0_i32_0 = arith.constant 0 : i32
    %c0_i32_1 = arith.constant 0 : i32
    return %c0_i32, %c0_i32_0 : i32, i32
  }
  func.func @transform_5(%arg0: i32) -> (i32, i32) {
    %c0_i32 = arith.constant 0 : i32
    %c0_i32_0 = arith.constant 0 : i32
    %c0_i32_1 = arith.constant 0 : i32
    return %c0_i32, %c0_i32_0 : i32, i32
  }
  func.func @transform_6(%arg0: i32) -> (i32, i32) {
    %c0_i32 = arith.constant 0 : i32
    %c0_i32_0 = arith.constant 0 : i32
    %c0_i32_1 = arith.constant 0 : i32
    return %c0_i32, %c0_i32_0 : i32, i32
  }
  func.func @transform_7(%arg0: i32) -> (i32, i32) {
    %c0_i32 = arith.constant 0 : i32
    %c0_i32_0 = arith.constant 0 : i32
    return %arg0, %c0_i32 : i32, i32
  }
}

module attributes {stable_mosaic.version = 11 : i64} {
  func.func @_attn_block_kernel(%arg0: i32, %arg1: memref<1x8x384xf32, #tpu.memory_space<vmem>>, %arg2: memref<1x384xf32, #tpu.memory_space<vmem>>, %arg3: memref<1x384xf32, #tpu.memory_space<vmem>>, %arg4: memref<384x1152xbf16, #tpu.memory_space<vmem>>, %arg5: memref<1x1152xf32, #tpu.memory_space<vmem>>, %arg6: memref<384x384xbf16, #tpu.memory_space<vmem>>, %arg7: memref<1x384xf32, #tpu.memory_space<vmem>>, %arg8: memref<1x8x384xf32, #tpu.memory_space<vmem>>) attributes {dimension_semantics = [#tpu.dimension_semantics<parallel>], iteration_bounds = array<i64: 2>, scalar_prefetch = 0 : i64, scratch_operands = 0 : i64, tpu.core_type = #tpu.core_type<tc>, window_params = [{transform_indices = @transform_0, window_bounds = array<i64: 1, 8, 384>}, {pipeline_mode = #tpu.pipeline_mode<synchronous>, transform_indices = @transform_1, window_bounds = array<i64: 1, 384>}, {pipeline_mode = #tpu.pipeline_mode<synchronous>, transform_indices = @transform_2, window_bounds = array<i64: 1, 384>}, {pipeline_mode = #tpu.pipeline_mode<synchronous>, transform_indices = @transform_3, window_bounds = array<i64: 384, 1152>}, {pipeline_mode = #tpu.pipeline_mode<synchronous>, transform_indices = @transform_4, window_bounds = array<i64: 1, 1152>}, {pipeline_mode = #tpu.pipeline_mode<synchronous>, transform_indices = @transform_5, window_bounds = array<i64: 384, 384>}, {pipeline_mode = #tpu.pipeline_mode<synchronous>, transform_indices = @transform_6, window_bounds = array<i64: 1, 384>}, {transform_indices = @transform_7, window_bounds = array<i64: 1, 8, 384>}]} {
    %c0 = arith.constant 0 : index
    %c0_0 = arith.constant 0 : index
    %c0_1 = arith.constant 0 : index
    %0 = vector.load %arg1[%c0, %c0_0, %c0_1] : memref<1x8x384xf32, #tpu.memory_space<vmem>>, vector<1x8x384xf32>
    %1 = vector.shape_cast %0 : vector<1x8x384xf32> to vector<8x384xf32>
    %c0_2 = arith.constant 0 : index
    %c0_3 = arith.constant 0 : index
    %2 = vector.load %arg2[%c0_2, %c0_3] : memref<1x384xf32, #tpu.memory_space<vmem>>, vector<1x384xf32>
    %c0_4 = arith.constant 0 : index
    %c0_5 = arith.constant 0 : index
    %3 = vector.load %arg3[%c0_4, %c0_5] : memref<1x384xf32, #tpu.memory_space<vmem>>, vector<1x384xf32>
    %cst = arith.constant dense<0.000000e+00> : vector<8xf32>
    %4 = vector.multi_reduction <add>, %1, %cst [1] : vector<8x384xf32> to vector<8xf32>
    %5 = vector.shape_cast %4 : vector<8xf32> to vector<8x1xf32>
    %cst_6 = arith.constant 3.840000e+02 : f32
    %6 = vector.broadcast %cst_6 : f32 to vector<8x1xf32>
    %7 = arith.divf %5, %6 : vector<8x1xf32>
    %8 = vector.broadcast %7 : vector<8x1xf32> to vector<8x384xf32>
    %9 = arith.subf %1, %8 : vector<8x384xf32>
    %10 = arith.mulf %9, %9 : vector<8x384xf32>
    %cst_7 = arith.constant dense<0.000000e+00> : vector<8xf32>
    %11 = vector.multi_reduction <add>, %10, %cst_7 [1] : vector<8x384xf32> to vector<8xf32>
    %12 = vector.shape_cast %11 : vector<8xf32> to vector<8x1xf32>
    %cst_8 = arith.constant 3.840000e+02 : f32
    %13 = vector.broadcast %cst_8 : f32 to vector<8x1xf32>
    %14 = arith.divf %12, %13 : vector<8x1xf32>
    %15 = vector.broadcast %7 : vector<8x1xf32> to vector<8x384xf32>
    %16 = arith.subf %1, %15 : vector<8x384xf32>
    %cst_9 = arith.constant 9.99999974E-6 : f32
    %17 = vector.broadcast %cst_9 : f32 to vector<8x1xf32>
    %18 = arith.addf %14, %17 : vector<8x1xf32>
    %19 = math.rsqrt %18 : vector<8x1xf32>
    %20 = vector.broadcast %19 : vector<8x1xf32> to vector<8x384xf32>
    %21 = arith.mulf %16, %20 : vector<8x384xf32>
    %22 = vector.broadcast %2 : vector<1x384xf32> to vector<8x384xf32>
    %23 = arith.mulf %21, %22 : vector<8x384xf32>
    %24 = vector.broadcast %3 : vector<1x384xf32> to vector<8x384xf32>
    %25 = arith.addf %23, %24 : vector<8x384xf32>
    %26 = arith.truncf %25 : vector<8x384xf32> to vector<8x384xbf16>
    %c0_10 = arith.constant 0 : index
    %c0_11 = arith.constant 0 : index
    %27 = vector.load %arg4[%c0_10, %c0_11] : memref<384x1152xbf16, #tpu.memory_space<vmem>>, vector<384x1152xbf16>
    %cst_12 = arith.constant dense<0.000000e+00> : vector<8x1152xf32>
    %28 = tpu.matmul %26, %27, %cst_12 {dimension_numbers = #tpu.dot_dimension_numbers<[1], [0], [0], [1], [0, 0, 1, 1], [], []>} : vector<8x384xbf16>, vector<384x1152xbf16>, vector<8x1152xf32> -> vector<8x1152xf32>
    %c0_13 = arith.constant 0 : index
    %c0_14 = arith.constant 0 : index
    %29 = vector.load %arg5[%c0_13, %c0_14] : memref<1x1152xf32, #tpu.memory_space<vmem>>, vector<1x1152xf32>
    %30 = vector.broadcast %29 : vector<1x1152xf32> to vector<8x1152xf32>
    %31 = arith.addf %28, %30 : vector<8x1152xf32>
    %32 = tpu.iota {dimensions = array<i32: 1>} : vector<8x8xi32>
    %c5_i32 = arith.constant 5 : i32
    %33 = vector.broadcast %c5_i32 : i32 to vector<8x8xi32>
    %34 = arith.cmpi slt, %32, %33 : vector<8x8xi32>
    %35 = vector.extract_strided_slice %31 {offsets = [0, 0], sizes = [8, 64], strides = [1, 1]} : vector<8x1152xf32> to vector<8x64xf32>
    %36 = vector.extract_strided_slice %31 {offsets = [0, 384], sizes = [8, 64], strides = [1, 1]} : vector<8x1152xf32> to vector<8x64xf32>
    %37 = vector.extract_strided_slice %31 {offsets = [0, 768], sizes = [8, 64], strides = [1, 1]} : vector<8x1152xf32> to vector<8x64xf32>
    %38 = arith.truncf %35 : vector<8x64xf32> to vector<8x64xbf16>
    %39 = arith.truncf %36 : vector<8x64xf32> to vector<8x64xbf16>
    %cst_15 = arith.constant dense<0.000000e+00> : vector<8x8xf32>
    %40 = tpu.matmul %38, %39, %cst_15 {dimension_numbers = #tpu.dot_dimension_numbers<[1], [1], [0], [0], [0, 0, 1, 0], [], []>} : vector<8x64xbf16>, vector<8x64xbf16>, vector<8x8xf32> -> vector<8x8xf32>
    %cst_16 = arith.constant 0xFF800000 : f32
    %41 = vector.broadcast %cst_16 : f32 to vector<8x8xf32>
    %42 = arith.select %34, %40, %41 : vector<8x8xi1>, vector<8x8xf32>
    %cst_17 = arith.constant dense<0xFF800000> : vector<8xf32>
    %43 = vector.multi_reduction <maximumf>, %42, %cst_17 [1] : vector<8x8xf32> to vector<8xf32>
    %44 = vector.shape_cast %43 : vector<8xf32> to vector<8x1xf32>
    %45 = vector.broadcast %44 : vector<8x1xf32> to vector<8x8xf32>
    %46 = arith.subf %42, %45 : vector<8x8xf32>
    %47 = math.exp %46 : vector<8x8xf32>
    %cst_18 = arith.constant dense<0.000000e+00> : vector<8xf32>
    %48 = vector.multi_reduction <add>, %47, %cst_18 [1] : vector<8x8xf32> to vector<8xf32>
    %49 = vector.shape_cast %48 : vector<8xf32> to vector<8x1xf32>
    %50 = tpu.reciprocal %49 {approx = true} : vector<8x1xf32> -> vector<8x1xf32>
    %51 = arith.truncf %47 : vector<8x8xf32> to vector<8x8xbf16>
    %52 = arith.truncf %37 : vector<8x64xf32> to vector<8x64xbf16>
    %cst_19 = arith.constant dense<0.000000e+00> : vector<8x64xf32>
    %53 = tpu.matmul %51, %52, %cst_19 {dimension_numbers = #tpu.dot_dimension_numbers<[1], [0], [0], [1], [0, 0, 1, 1], [], []>} : vector<8x8xbf16>, vector<8x64xbf16>, vector<8x64xf32> -> vector<8x64xf32>
    %54 = vector.broadcast %50 : vector<8x1xf32> to vector<8x64xf32>
    %55 = arith.mulf %53, %54 : vector<8x64xf32>
    %56 = vector.extract_strided_slice %31 {offsets = [0, 64], sizes = [8, 64], strides = [1, 1]} : vector<8x1152xf32> to vector<8x64xf32>
    %57 = vector.extract_strided_slice %31 {offsets = [0, 448], sizes = [8, 64], strides = [1, 1]} : vector<8x1152xf32> to vector<8x64xf32>
    %58 = vector.extract_strided_slice %31 {offsets = [0, 832], sizes = [8, 64], strides = [1, 1]} : vector<8x1152xf32> to vector<8x64xf32>
    %59 = arith.truncf %56 : vector<8x64xf32> to vector<8x64xbf16>
    %60 = arith.truncf %57 : vector<8x64xf32> to vector<8x64xbf16>
    %cst_20 = arith.constant dense<0.000000e+00> : vector<8x8xf32>
    %61 = tpu.matmul %59, %60, %cst_20 {dimension_numbers = #tpu.dot_dimension_numbers<[1], [1], [0], [0], [0, 0, 1, 0], [], []>} : vector<8x64xbf16>, vector<8x64xbf16>, vector<8x8xf32> -> vector<8x8xf32>
    %cst_21 = arith.constant 0xFF800000 : f32
    %62 = vector.broadcast %cst_21 : f32 to vector<8x8xf32>
    %63 = arith.select %34, %61, %62 : vector<8x8xi1>, vector<8x8xf32>
    %cst_22 = arith.constant dense<0xFF800000> : vector<8xf32>
    %64 = vector.multi_reduction <maximumf>, %63, %cst_22 [1] : vector<8x8xf32> to vector<8xf32>
    %65 = vector.shape_cast %64 : vector<8xf32> to vector<8x1xf32>
    %66 = vector.broadcast %65 : vector<8x1xf32> to vector<8x8xf32>
    %67 = arith.subf %63, %66 : vector<8x8xf32>
    %68 = math.exp %67 : vector<8x8xf32>
    %cst_23 = arith.constant dense<0.000000e+00> : vector<8xf32>
    %69 = vector.multi_reduction <add>, %68, %cst_23 [1] : vector<8x8xf32> to vector<8xf32>
    %70 = vector.shape_cast %69 : vector<8xf32> to vector<8x1xf32>
    %71 = tpu.reciprocal %70 {approx = true} : vector<8x1xf32> -> vector<8x1xf32>
    %72 = arith.truncf %68 : vector<8x8xf32> to vector<8x8xbf16>
    %73 = arith.truncf %58 : vector<8x64xf32> to vector<8x64xbf16>
    %cst_24 = arith.constant dense<0.000000e+00> : vector<8x64xf32>
    %74 = tpu.matmul %72, %73, %cst_24 {dimension_numbers = #tpu.dot_dimension_numbers<[1], [0], [0], [1], [0, 0, 1, 1], [], []>} : vector<8x8xbf16>, vector<8x64xbf16>, vector<8x64xf32> -> vector<8x64xf32>
    %75 = vector.broadcast %71 : vector<8x1xf32> to vector<8x64xf32>
    %76 = arith.mulf %74, %75 : vector<8x64xf32>
    %77 = vector.extract_strided_slice %31 {offsets = [0, 128], sizes = [8, 64], strides = [1, 1]} : vector<8x1152xf32> to vector<8x64xf32>
    %78 = vector.extract_strided_slice %31 {offsets = [0, 512], sizes = [8, 64], strides = [1, 1]} : vector<8x1152xf32> to vector<8x64xf32>
    %79 = vector.extract_strided_slice %31 {offsets = [0, 896], sizes = [8, 64], strides = [1, 1]} : vector<8x1152xf32> to vector<8x64xf32>
    %80 = arith.truncf %77 : vector<8x64xf32> to vector<8x64xbf16>
    %81 = arith.truncf %78 : vector<8x64xf32> to vector<8x64xbf16>
    %cst_25 = arith.constant dense<0.000000e+00> : vector<8x8xf32>
    %82 = tpu.matmul %80, %81, %cst_25 {dimension_numbers = #tpu.dot_dimension_numbers<[1], [1], [0], [0], [0, 0, 1, 0], [], []>} : vector<8x64xbf16>, vector<8x64xbf16>, vector<8x8xf32> -> vector<8x8xf32>
    %cst_26 = arith.constant 0xFF800000 : f32
    %83 = vector.broadcast %cst_26 : f32 to vector<8x8xf32>
    %84 = arith.select %34, %82, %83 : vector<8x8xi1>, vector<8x8xf32>
    %cst_27 = arith.constant dense<0xFF800000> : vector<8xf32>
    %85 = vector.multi_reduction <maximumf>, %84, %cst_27 [1] : vector<8x8xf32> to vector<8xf32>
    %86 = vector.shape_cast %85 : vector<8xf32> to vector<8x1xf32>
    %87 = vector.broadcast %86 : vector<8x1xf32> to vector<8x8xf32>
    %88 = arith.subf %84, %87 : vector<8x8xf32>
    %89 = math.exp %88 : vector<8x8xf32>
    %cst_28 = arith.constant dense<0.000000e+00> : vector<8xf32>
    %90 = vector.multi_reduction <add>, %89, %cst_28 [1] : vector<8x8xf32> to vector<8xf32>
    %91 = vector.shape_cast %90 : vector<8xf32> to vector<8x1xf32>
    %92 = tpu.reciprocal %91 {approx = true} : vector<8x1xf32> -> vector<8x1xf32>
    %93 = arith.truncf %89 : vector<8x8xf32> to vector<8x8xbf16>
    %94 = arith.truncf %79 : vector<8x64xf32> to vector<8x64xbf16>
    %cst_29 = arith.constant dense<0.000000e+00> : vector<8x64xf32>
    %95 = tpu.matmul %93, %94, %cst_29 {dimension_numbers = #tpu.dot_dimension_numbers<[1], [0], [0], [1], [0, 0, 1, 1], [], []>} : vector<8x8xbf16>, vector<8x64xbf16>, vector<8x64xf32> -> vector<8x64xf32>
    %96 = vector.broadcast %92 : vector<8x1xf32> to vector<8x64xf32>
    %97 = arith.mulf %95, %96 : vector<8x64xf32>
    %98 = vector.extract_strided_slice %31 {offsets = [0, 192], sizes = [8, 64], strides = [1, 1]} : vector<8x1152xf32> to vector<8x64xf32>
    %99 = vector.extract_strided_slice %31 {offsets = [0, 576], sizes = [8, 64], strides = [1, 1]} : vector<8x1152xf32> to vector<8x64xf32>
    %100 = vector.extract_strided_slice %31 {offsets = [0, 960], sizes = [8, 64], strides = [1, 1]} : vector<8x1152xf32> to vector<8x64xf32>
    %101 = arith.truncf %98 : vector<8x64xf32> to vector<8x64xbf16>
    %102 = arith.truncf %99 : vector<8x64xf32> to vector<8x64xbf16>
    %cst_30 = arith.constant dense<0.000000e+00> : vector<8x8xf32>
    %103 = tpu.matmul %101, %102, %cst_30 {dimension_numbers = #tpu.dot_dimension_numbers<[1], [1], [0], [0], [0, 0, 1, 0], [], []>} : vector<8x64xbf16>, vector<8x64xbf16>, vector<8x8xf32> -> vector<8x8xf32>
    %cst_31 = arith.constant 0xFF800000 : f32
    %104 = vector.broadcast %cst_31 : f32 to vector<8x8xf32>
    %105 = arith.select %34, %103, %104 : vector<8x8xi1>, vector<8x8xf32>
    %cst_32 = arith.constant dense<0xFF800000> : vector<8xf32>
    %106 = vector.multi_reduction <maximumf>, %105, %cst_32 [1] : vector<8x8xf32> to vector<8xf32>
    %107 = vector.shape_cast %106 : vector<8xf32> to vector<8x1xf32>
    %108 = vector.broadcast %107 : vector<8x1xf32> to vector<8x8xf32>
    %109 = arith.subf %105, %108 : vector<8x8xf32>
    %110 = math.exp %109 : vector<8x8xf32>
    %cst_33 = arith.constant dense<0.000000e+00> : vector<8xf32>
    %111 = vector.multi_reduction <add>, %110, %cst_33 [1] : vector<8x8xf32> to vector<8xf32>
    %112 = vector.shape_cast %111 : vector<8xf32> to vector<8x1xf32>
    %113 = tpu.reciprocal %112 {approx = true} : vector<8x1xf32> -> vector<8x1xf32>
    %114 = arith.truncf %110 : vector<8x8xf32> to vector<8x8xbf16>
    %115 = arith.truncf %100 : vector<8x64xf32> to vector<8x64xbf16>
    %cst_34 = arith.constant dense<0.000000e+00> : vector<8x64xf32>
    %116 = tpu.matmul %114, %115, %cst_34 {dimension_numbers = #tpu.dot_dimension_numbers<[1], [0], [0], [1], [0, 0, 1, 1], [], []>} : vector<8x8xbf16>, vector<8x64xbf16>, vector<8x64xf32> -> vector<8x64xf32>
    %117 = vector.broadcast %113 : vector<8x1xf32> to vector<8x64xf32>
    %118 = arith.mulf %116, %117 : vector<8x64xf32>
    %119 = vector.extract_strided_slice %31 {offsets = [0, 256], sizes = [8, 64], strides = [1, 1]} : vector<8x1152xf32> to vector<8x64xf32>
    %120 = vector.extract_strided_slice %31 {offsets = [0, 640], sizes = [8, 64], strides = [1, 1]} : vector<8x1152xf32> to vector<8x64xf32>
    %121 = vector.extract_strided_slice %31 {offsets = [0, 1024], sizes = [8, 64], strides = [1, 1]} : vector<8x1152xf32> to vector<8x64xf32>
    %122 = arith.truncf %119 : vector<8x64xf32> to vector<8x64xbf16>
    %123 = arith.truncf %120 : vector<8x64xf32> to vector<8x64xbf16>
    %cst_35 = arith.constant dense<0.000000e+00> : vector<8x8xf32>
    %124 = tpu.matmul %122, %123, %cst_35 {dimension_numbers = #tpu.dot_dimension_numbers<[1], [1], [0], [0], [0, 0, 1, 0], [], []>} : vector<8x64xbf16>, vector<8x64xbf16>, vector<8x8xf32> -> vector<8x8xf32>
    %cst_36 = arith.constant 0xFF800000 : f32
    %125 = vector.broadcast %cst_36 : f32 to vector<8x8xf32>
    %126 = arith.select %34, %124, %125 : vector<8x8xi1>, vector<8x8xf32>
    %cst_37 = arith.constant dense<0xFF800000> : vector<8xf32>
    %127 = vector.multi_reduction <maximumf>, %126, %cst_37 [1] : vector<8x8xf32> to vector<8xf32>
    %128 = vector.shape_cast %127 : vector<8xf32> to vector<8x1xf32>
    %129 = vector.broadcast %128 : vector<8x1xf32> to vector<8x8xf32>
    %130 = arith.subf %126, %129 : vector<8x8xf32>
    %131 = math.exp %130 : vector<8x8xf32>
    %cst_38 = arith.constant dense<0.000000e+00> : vector<8xf32>
    %132 = vector.multi_reduction <add>, %131, %cst_38 [1] : vector<8x8xf32> to vector<8xf32>
    %133 = vector.shape_cast %132 : vector<8xf32> to vector<8x1xf32>
    %134 = tpu.reciprocal %133 {approx = true} : vector<8x1xf32> -> vector<8x1xf32>
    %135 = arith.truncf %131 : vector<8x8xf32> to vector<8x8xbf16>
    %136 = arith.truncf %121 : vector<8x64xf32> to vector<8x64xbf16>
    %cst_39 = arith.constant dense<0.000000e+00> : vector<8x64xf32>
    %137 = tpu.matmul %135, %136, %cst_39 {dimension_numbers = #tpu.dot_dimension_numbers<[1], [0], [0], [1], [0, 0, 1, 1], [], []>} : vector<8x8xbf16>, vector<8x64xbf16>, vector<8x64xf32> -> vector<8x64xf32>
    %138 = vector.broadcast %134 : vector<8x1xf32> to vector<8x64xf32>
    %139 = arith.mulf %137, %138 : vector<8x64xf32>
    %140 = vector.extract_strided_slice %31 {offsets = [0, 320], sizes = [8, 64], strides = [1, 1]} : vector<8x1152xf32> to vector<8x64xf32>
    %141 = vector.extract_strided_slice %31 {offsets = [0, 704], sizes = [8, 64], strides = [1, 1]} : vector<8x1152xf32> to vector<8x64xf32>
    %142 = vector.extract_strided_slice %31 {offsets = [0, 1088], sizes = [8, 64], strides = [1, 1]} : vector<8x1152xf32> to vector<8x64xf32>
    %143 = arith.truncf %140 : vector<8x64xf32> to vector<8x64xbf16>
    %144 = arith.truncf %141 : vector<8x64xf32> to vector<8x64xbf16>
    %cst_40 = arith.constant dense<0.000000e+00> : vector<8x8xf32>
    %145 = tpu.matmul %143, %144, %cst_40 {dimension_numbers = #tpu.dot_dimension_numbers<[1], [1], [0], [0], [0, 0, 1, 0], [], []>} : vector<8x64xbf16>, vector<8x64xbf16>, vector<8x8xf32> -> vector<8x8xf32>
    %cst_41 = arith.constant 0xFF800000 : f32
    %146 = vector.broadcast %cst_41 : f32 to vector<8x8xf32>
    %147 = arith.select %34, %145, %146 : vector<8x8xi1>, vector<8x8xf32>
    %cst_42 = arith.constant dense<0xFF800000> : vector<8xf32>
    %148 = vector.multi_reduction <maximumf>, %147, %cst_42 [1] : vector<8x8xf32> to vector<8xf32>
    %149 = vector.shape_cast %148 : vector<8xf32> to vector<8x1xf32>
    %150 = vector.broadcast %149 : vector<8x1xf32> to vector<8x8xf32>
    %151 = arith.subf %147, %150 : vector<8x8xf32>
    %152 = math.exp %151 : vector<8x8xf32>
    %cst_43 = arith.constant dense<0.000000e+00> : vector<8xf32>
    %153 = vector.multi_reduction <add>, %152, %cst_43 [1] : vector<8x8xf32> to vector<8xf32>
    %154 = vector.shape_cast %153 : vector<8xf32> to vector<8x1xf32>
    %155 = tpu.reciprocal %154 {approx = true} : vector<8x1xf32> -> vector<8x1xf32>
    %156 = arith.truncf %152 : vector<8x8xf32> to vector<8x8xbf16>
    %157 = arith.truncf %142 : vector<8x64xf32> to vector<8x64xbf16>
    %cst_44 = arith.constant dense<0.000000e+00> : vector<8x64xf32>
    %158 = tpu.matmul %156, %157, %cst_44 {dimension_numbers = #tpu.dot_dimension_numbers<[1], [0], [0], [1], [0, 0, 1, 1], [], []>} : vector<8x8xbf16>, vector<8x64xbf16>, vector<8x64xf32> -> vector<8x64xf32>
    %159 = vector.broadcast %155 : vector<8x1xf32> to vector<8x64xf32>
    %160 = arith.mulf %158, %159 : vector<8x64xf32>
    %161 = tpu.concatenate %55, %76, %97, %118, %139, %160 in 1 : vector<8x64xf32>, vector<8x64xf32>, vector<8x64xf32>, vector<8x64xf32>, vector<8x64xf32>, vector<8x64xf32> -> vector<8x384xf32>
    %162 = arith.truncf %161 : vector<8x384xf32> to vector<8x384xbf16>
    %c0_45 = arith.constant 0 : index
    %c0_46 = arith.constant 0 : index
    %163 = vector.load %arg6[%c0_45, %c0_46] : memref<384x384xbf16, #tpu.memory_space<vmem>>, vector<384x384xbf16>
    %cst_47 = arith.constant dense<0.000000e+00> : vector<8x384xf32>
    %164 = tpu.matmul %162, %163, %cst_47 {dimension_numbers = #tpu.dot_dimension_numbers<[1], [0], [0], [1], [0, 0, 1, 1], [], []>} : vector<8x384xbf16>, vector<384x384xbf16>, vector<8x384xf32> -> vector<8x384xf32>
    %c0_48 = arith.constant 0 : index
    %c0_49 = arith.constant 0 : index
    %165 = vector.load %arg7[%c0_48, %c0_49] : memref<1x384xf32, #tpu.memory_space<vmem>>, vector<1x384xf32>
    %166 = vector.broadcast %165 : vector<1x384xf32> to vector<8x384xf32>
    %167 = arith.addf %164, %166 : vector<8x384xf32>
    %168 = arith.addf %1, %167 : vector<8x384xf32>
    %c0_50 = arith.constant 0 : index
    %c0_51 = arith.constant 0 : index
    %c0_52 = arith.constant 0 : index
    %169 = vector.load %arg8[%c0_50, %c0_51, %c0_52] : memref<1x8x384xf32, #tpu.memory_space<vmem>>, vector<1x8x384xf32>
    %170 = vector.shape_cast %169 : vector<1x8x384xf32> to vector<8x384xf32>
    %171 = vector.shape_cast %168 : vector<8x384xf32> to vector<1x8x384xf32>
    tpu.vector_store %arg8[%c0_50, %c0_51, %c0_52], %171 {strides = array<i32>} : memref<1x8x384xf32, #tpu.memory_space<vmem>>, vector<1x8x384xf32>,
    return
  }
  func.func @transform_0(%arg0: i32) -> (i32, i32, i32) {
    %c0_i32 = arith.constant 0 : i32
    %c0_i32_0 = arith.constant 0 : i32
    %c0_i32_1 = arith.constant 0 : i32
    return %arg0, %c0_i32, %c0_i32_0 : i32, i32, i32
  }
  func.func @transform_1(%arg0: i32) -> (i32, i32) {
    %c0_i32 = arith.constant 0 : i32
    %c0_i32_0 = arith.constant 0 : i32
    %c0_i32_1 = arith.constant 0 : i32
    return %c0_i32, %c0_i32_0 : i32, i32
  }
  func.func @transform_2(%arg0: i32) -> (i32, i32) {
    %c0_i32 = arith.constant 0 : i32
    %c0_i32_0 = arith.constant 0 : i32
    %c0_i32_1 = arith.constant 0 : i32
    return %c0_i32, %c0_i32_0 : i32, i32
  }
  func.func @transform_3(%arg0: i32) -> (i32, i32) {
    %c0_i32 = arith.constant 0 : i32
    %c0_i32_0 = arith.constant 0 : i32
    %c0_i32_1 = arith.constant 0 : i32
    return %c0_i32, %c0_i32_0 : i32, i32
  }
  func.func @transform_4(%arg0: i32) -> (i32, i32) {
    %c0_i32 = arith.constant 0 : i32
    %c0_i32_0 = arith.constant 0 : i32
    %c0_i32_1 = arith.constant 0 : i32
    return %c0_i32, %c0_i32_0 : i32, i32
  }
  func.func @transform_5(%arg0: i32) -> (i32, i32) {
    %c0_i32 = arith.constant 0 : i32
    %c0_i32_0 = arith.constant 0 : i32
    %c0_i32_1 = arith.constant 0 : i32
    return %c0_i32, %c0_i32_0 : i32, i32
  }
  func.func @transform_6(%arg0: i32) -> (i32, i32) {
    %c0_i32 = arith.constant 0 : i32
    %c0_i32_0 = arith.constant 0 : i32
    %c0_i32_1 = arith.constant 0 : i32
    return %c0_i32, %c0_i32_0 : i32, i32
  }
  func.func @transform_7(%arg0: i32) -> (i32, i32, i32) {
    %c0_i32 = arith.constant 0 : i32
    %c0_i32_0 = arith.constant 0 : i32
    %c0_i32_1 = arith.constant 0 : i32
    return %arg0, %c0_i32, %c0_i32_0 : i32, i32, i32
  }
}

module attributes {stable_mosaic.version = 11 : i64} {
  func.func @_layernorm_kernel(%arg0: i32, %arg1: memref<2x384xf32, #tpu.memory_space<vmem>>, %arg2: memref<1x384xf32, #tpu.memory_space<vmem>>, %arg3: memref<1x384xf32, #tpu.memory_space<vmem>>, %arg4: memref<2x384xf32, #tpu.memory_space<vmem>>) attributes {dimension_semantics = [#tpu.dimension_semantics<arbitrary>], iteration_bounds = array<i64: 1>, scalar_prefetch = 0 : i64, scratch_operands = 0 : i64, tpu.core_type = #tpu.core_type<tc>, window_params = [{pipeline_mode = #tpu.pipeline_mode<synchronous>, transform_indices = @transform_0, window_bounds = array<i64: 2, 384>}, {pipeline_mode = #tpu.pipeline_mode<synchronous>, transform_indices = @transform_1, window_bounds = array<i64: 1, 384>}, {pipeline_mode = #tpu.pipeline_mode<synchronous>, transform_indices = @transform_2, window_bounds = array<i64: 1, 384>}, {pipeline_mode = #tpu.pipeline_mode<synchronous>, transform_indices = @transform_3, window_bounds = array<i64: 2, 384>}]} {
    %c0 = arith.constant 0 : index
    %c0_0 = arith.constant 0 : index
    %0 = vector.load %arg1[%c0, %c0_0] : memref<2x384xf32, #tpu.memory_space<vmem>>, vector<2x384xf32>
    %c0_1 = arith.constant 0 : index
    %c0_2 = arith.constant 0 : index
    %1 = vector.load %arg2[%c0_1, %c0_2] : memref<1x384xf32, #tpu.memory_space<vmem>>, vector<1x384xf32>
    %c0_3 = arith.constant 0 : index
    %c0_4 = arith.constant 0 : index
    %2 = vector.load %arg3[%c0_3, %c0_4] : memref<1x384xf32, #tpu.memory_space<vmem>>, vector<1x384xf32>
    %cst = arith.constant dense<0.000000e+00> : vector<2xf32>
    %3 = vector.multi_reduction <add>, %0, %cst [1] : vector<2x384xf32> to vector<2xf32>
    %4 = vector.shape_cast %3 : vector<2xf32> to vector<2x1xf32>
    %cst_5 = arith.constant 3.840000e+02 : f32
    %5 = vector.broadcast %cst_5 : f32 to vector<2x1xf32>
    %6 = arith.divf %4, %5 : vector<2x1xf32>
    %7 = vector.broadcast %6 : vector<2x1xf32> to vector<2x384xf32>
    %8 = arith.subf %0, %7 : vector<2x384xf32>
    %9 = arith.mulf %8, %8 : vector<2x384xf32>
    %cst_6 = arith.constant dense<0.000000e+00> : vector<2xf32>
    %10 = vector.multi_reduction <add>, %9, %cst_6 [1] : vector<2x384xf32> to vector<2xf32>
    %11 = vector.shape_cast %10 : vector<2xf32> to vector<2x1xf32>
    %cst_7 = arith.constant 3.840000e+02 : f32
    %12 = vector.broadcast %cst_7 : f32 to vector<2x1xf32>
    %13 = arith.divf %11, %12 : vector<2x1xf32>
    %14 = vector.broadcast %6 : vector<2x1xf32> to vector<2x384xf32>
    %15 = arith.subf %0, %14 : vector<2x384xf32>
    %cst_8 = arith.constant 9.99999974E-6 : f32
    %16 = vector.broadcast %cst_8 : f32 to vector<2x1xf32>
    %17 = arith.addf %13, %16 : vector<2x1xf32>
    %18 = math.rsqrt %17 : vector<2x1xf32>
    %19 = vector.broadcast %18 : vector<2x1xf32> to vector<2x384xf32>
    %20 = arith.mulf %15, %19 : vector<2x384xf32>
    %21 = vector.broadcast %1 : vector<1x384xf32> to vector<2x384xf32>
    %22 = arith.mulf %20, %21 : vector<2x384xf32>
    %23 = vector.broadcast %2 : vector<1x384xf32> to vector<2x384xf32>
    %24 = arith.addf %22, %23 : vector<2x384xf32>
    %c0_9 = arith.constant 0 : index
    %c0_10 = arith.constant 0 : index
    %25 = vector.load %arg4[%c0_9, %c0_10] : memref<2x384xf32, #tpu.memory_space<vmem>>, vector<2x384xf32>
    tpu.vector_store %arg4[%c0_9, %c0_10], %24 {strides = array<i32>} : memref<2x384xf32, #tpu.memory_space<vmem>>, vector<2x384xf32>,
    return
  }
  func.func @transform_0(%arg0: i32) -> (i32, i32) {
    %c0_i32 = arith.constant 0 : i32
    %c0_i32_0 = arith.constant 0 : i32
    %c0_i32_1 = arith.constant 0 : i32
    return %c0_i32, %c0_i32_0 : i32, i32
  }
  func.func @transform_1(%arg0: i32) -> (i32, i32) {
    %c0_i32 = arith.constant 0 : i32
    %c0_i32_0 = arith.constant 0 : i32
    %c0_i32_1 = arith.constant 0 : i32
    return %c0_i32, %c0_i32_0 : i32, i32
  }
  func.func @transform_2(%arg0: i32) -> (i32, i32) {
    %c0_i32 = arith.constant 0 : i32
    %c0_i32_0 = arith.constant 0 : i32
    %c0_i32_1 = arith.constant 0 : i32
    return %c0_i32, %c0_i32_0 : i32, i32
  }
  func.func @transform_3(%arg0: i32) -> (i32, i32) {
    %c0_i32 = arith.constant 0 : i32
    %c0_i32_0 = arith.constant 0 : i32
    %c0_i32_1 = arith.constant 0 : i32
    return %c0_i32, %c0_i32_0 : i32, i32
  }
}

</mosaic_0001>

<llo_original>
// kernel: _lambda_.51
$region0: #{_lambda_.51}
  #allocation0 [shape = 'u32[]', space=smem, size = 0x4, offset = 0x4, fixed_abs, tag = 'smem constant byte address 0x4 - core index']
  #allocation1 [shape = 'u32[144,128]{1,0:T(1,128)}', space=vmem, size = 0x12000, scoped, tag = 'internal scratch']
  %s0 = inlined_call_operand.vmem [shape: f32[2,384], index: 0, kind: input, shape index: {}]
  %s1 = inlined_call_operand.vmem [shape: f32[1,384], index: 1, kind: input, shape index: {}]
  %s2 = inlined_call_operand.vmem [shape: f32[1,384], index: 2, kind: input, shape index: {}]
  %s3 = inlined_call_operand.hbm [shape: f32[2,384], index: 3, kind: output, shape index: {}]
  %s4 = sld [smem:[#allocation0]]
  $region22: #{_lambda_.51} parent=0
    _
  %s6 = ssub.s32 1, %s4
  %s7 = scalar_select 0, %s6, %s4
  $region1: #{_lambda_.51} parent=0
    #allocation2 [shape = 'u8[3072]{0}', space=vmem, size = 0xc00, scoped, tag = 'output window, operand 0, single buffered']
    #allocation3 [shape = 's32[1]{0}', space=sflag, size = 0x4, scoped, tag = 'scoped memory for _lambda_.51']
    %8 = vsyncpa [#allocation3], 0
    // Predicated region
    $region2: #{_lambda_.51} parent=1 // pred_check
      _
    $region3: #{_lambda_.51} parent=1 // pred_check_branch
      %10 = sbr.rel (0) target = $region5
    $region4: #{_lambda_.51} parent=1 // pred_region
      _
    $region5: #{_lambda_.51} parent=1 // pred_fallthru
      _
    // Predicated region
    $region6: #{_lambda_.51} parent=1 // pred_check
      _
    $region7: #{_lambda_.51} parent=1 // pred_check_branch
      %12 = sbr.rel (0) target = $region9
    $region8: #{_lambda_.51} parent=1 // pred_region
      _
    $region9: #{_lambda_.51} parent=1 // pred_fallthru
      _
    // Predicated region
    $region10: #{_lambda_.51} parent=1 // pred_check
      _
    $region11: #{_lambda_.51} parent=1 // pred_check_branch
      %14 = sbr.rel (0) target = $region13
    $region12: #{_lambda_.51} parent=1 // pred_region
      _
    $region13: #{_lambda_.51} parent=1 // pred_fallthru
      _
    %v15 = vld [vmem:[%s0] sm:$0x3f]
    %v16 = vld [vmem:[%s1] sm:$0x7]
    %v17 = vld [vmem:[%s2] sm:$0x7]
    %v19 = vcombine.high %v15, %v15
    %v21 = vunpack.c.l.s4 1983009808
    %v22 = vunpack.c.0.s8 %v21
    %v23 = vlaneseq
    %v24 = vshrl.u32 %v23, 7
    %v25 = vsub.s32 %v22, %v24
    %v26 = vrot.slane %v15, %v25
    %v28 = vunpack.c.l.s4 1983009808
    %v29 = vunpack.c.0.s8 %v28
    %v30 = vlaneseq
    %v31 = vshrl.u32 %v30, 7
    %v32 = vsub.s32 %v29, %v31
    %v33 = vrot.slane %v19, %v32
    %v34 = vcombine.high %v26, %v26
    %vm38 = vcmask 1041408
    %v39 = vsel %vm38, %v26, 0.0
    %v40 = vsel %vm38, %v34, 0.0
    %v41 = vadd.f32 %v39, %v40
    %v42 = vsel %vm38, %v33, 0.0
    %v43 = vadd.f32 %v41, %v42
    %44 = vadd.xlane.f32.xlu0 %v43
    %v45 = vpop.xlane.xlu0 %44
    %v46 = vrcp.pop 384.0
    %v47 = vmul.f32 %v45, %v46
    %v50 = vunpack.c.l.s4 269488144
    %v51 = vunpack.c.0.s8 %v50
    %v52 = vlaneseq
    %v53 = vshrl.u32 %v52, 7
    %v54 = vsub.s32 %v51, %v53
    %v55 = vrot.slane %v47, %v54
    %v57 = vsub.f32 %v15, %v55
    %v58 = vmul.f32 %v57, %v57
    %v60 = vcombine.high %v58, %v58
    %v62 = vunpack.c.l.s4 1983009808
    %v63 = vunpack.c.0.s8 %v62
    %v64 = vlaneseq
    %v65 = vshrl.u32 %v64, 7
    %v66 = vsub.s32 %v63, %v65
    %v67 = vrot.slane %v58, %v66
    %v69 = vunpack.c.l.s4 1983009808
    %v70 = vunpack.c.0.s8 %v69
    %v71 = vlaneseq
    %v72 = vshrl.u32 %v71, 7
    %v73 = vsub.s32 %v70, %v72
    %v74 = vrot.slane %v60, %v73
    %v75 = vcombine.high %v67, %v67
    %v79 = vsel %vm38, %v67, 0.0
    %v80 = vsel %vm38, %v75, 0.0
    %v81 = vadd.f32 %v79, %v80
    %v82 = vsel %vm38, %v74, 0.0
    %v83 = vadd.f32 %v81, %v82
    %84 = vadd.xlane.f32.xlu0 %v83
    %v85 = vpop.xlane.xlu0 %84
    %v86 = vmul.f32 %v85, %v46
    %v87 = vadd.f32 %v86, 1e-05
    %v88 = vrsqrt.pop %v87
    %v91 = vunpack.c.l.s4 269488144
    %v92 = vunpack.c.0.s8 %v91
    %v93 = vlaneseq
    %v94 = vshrl.u32 %v93, 7
    %v95 = vsub.s32 %v92, %v94
    %v96 = vrot.slane %v88, %v95
    %v98 = vmul.f32 %v57, %v96
    %v100 = vlaneseq
    %v101 = vshrl.u32 %v100, 7
    %v102 = vsub.s32 0, %v101
    %v103 = vrot.slane %v16, %v102
    %v104 = vlaneseq
    %v105 = vshrl.u32 %v104, 7
    %v106 = vsub.s32 1, %v105
    %v107 = vrot.slane %v16, %v106
    %v108 = vlaneseq
    %v109 = vshrl.u32 %v108, 7
    %v110 = vsub.s32 2, %v109
    %v111 = vrot.slane %v16, %v110
    %v112 = vcombine.low %v103, %v107
    %v114 = vunpack.c.l.s4 1983009808
    %v115 = vunpack.c.0.s8 %v114
    %v116 = vlaneseq
    %v117 = vshrl.u32 %v116, 7
    %v118 = vsub.s32 %v115, %v117
    %v119 = vrot.slane %v112, %v118
    %v121 = vunpack.c.l.s4 1983009808
    %v122 = vunpack.c.0.s8 %v121
    %v123 = vlaneseq
    %v124 = vshrl.u32 %v123, 7
    %v125 = vsub.s32 %v122, %v124
    %v126 = vrot.slane %v111, %v125
    %v127 = vcombine.low %v119, %v126
    %v129 = vmul.f32 %v98, %v127
    %v131 = vlaneseq
    %v132 = vshrl.u32 %v131, 7
    %v133 = vsub.s32 0, %v132
    %v134 = vrot.slane %v17, %v133
    %v135 = vlaneseq
    %v136 = vshrl.u32 %v135, 7
    %v137 = vsub.s32 1, %v136
    %v138 = vrot.slane %v17, %v137
    %v139 = vlaneseq
    %v140 = vshrl.u32 %v139, 7
    %v141 = vsub.s32 2, %v140
    %v142 = vrot.slane %v17, %v141
    %v143 = vcombine.low %v134, %v138
    %v145 = vunpack.c.l.s4 1983009808
    %v146 = vunpack.c.0.s8 %v145
    %v147 = vlaneseq
    %v148 = vshrl.u32 %v147, 7
    %v149 = vsub.s32 %v146, %v148
    %v150 = vrot.slane %v143, %v149
    %v152 = vunpack.c.l.s4 1983009808
    %v153 = vunpack.c.0.s8 %v152
    %v154 = vlaneseq
    %v155 = vshrl.u32 %v154, 7
    %v156 = vsub.s32 %v153, %v155
    %v157 = vrot.slane %v142, %v156
    %v158 = vcombine.low %v150, %v157
    %v160 = vadd.f32 %v129, %v158
    %161 = vst [vmem:[#allocation2] sm:$0x3f] %v160
    // Predicated region
    $region14: #{_lambda_.51} parent=1 // pred_check
      _
    $region15: #{_lambda_.51} parent=1 // pred_check_branch
      %163 = sbr.rel (0) target = $region17
    $region16: #{_lambda_.51} parent=1 // pred_region
      %s165 = ssub.s32 96, 96
      %166 = vsyncadd [#allocation3], %s165
      %s168 = sshll.u32 [#allocation2], 4
      %s169 = int_to_ptr.vmem [resolvable:$true] %s168
      %171 = dma.vmem_to_hbm [thread:$0]  %s169, 96, %s3, [#allocation3]
    $region17: #{_lambda_.51} parent=1 // pred_fallthru
      _
    // Predicated region
    $region18: #{_lambda_.51} parent=1 // pred_check
      _
    $region19: #{_lambda_.51} parent=1 // pred_check_branch
      %173 = sbr.rel (0) target = $region21
    $region20: #{_lambda_.51} parent=1 // pred_region
      %174 = dma.done [#allocation3], 96
    $region21: #{_lambda_.51} parent=1 // pred_fallthru
      _
    %175 = vsyncpa [#allocation3], 1

// kernel: _lambda_.26
$region0: #{_lambda_.26}
  #allocation0 [shape = 'u32[]', space=smem, size = 0x4, offset = 0x4, fixed_abs, tag = 'smem constant byte address 0x4 - core index']
  #allocation1 [shape = 'u32[144,128]{1,0:T(1,128)}', space=vmem, size = 0x12000, scoped, tag = 'internal scratch']
  %s0 = inlined_call_operand.vmem [shape: f32[8,768], index: 0, kind: input, shape index: {}]
  %s1 = inlined_call_operand.vmem [shape: bf16[768,384], index: 1, kind: input, shape index: {}]
  %s2 = inlined_call_operand.hbm [shape: f32[1,384], index: 2, kind: input, shape index: {}]
  %s3 = inlined_call_operand.vmem [shape: f32[8,384], index: 3, kind: output, shape index: {}]
  %s4 = sld [smem:[#allocation0]]
  $region26: #{_lambda_.26} parent=0
    _
  %s6 = ssub.s32 1, %s4
  %s7 = scalar_select 0, %s6, %s4
  $region1: #{_lambda_.26} parent=0
    #allocation2 [shape = 'u8[1536]{0}', space=vmem, size = 0x800, scoped, tag = 'input window, operand 2, single buffered']
    #allocation3 [shape = 's32[1]{0}', space=sflag, size = 0x4, scoped, tag = 'scoped memory for _lambda_.26']
    %8 = vsyncpa [#allocation3], 0
    // Predicated region
    $region2: #{_lambda_.26} parent=1 // pred_check
      _
    $region3: #{_lambda_.26} parent=1 // pred_check_branch
      %10 = sbr.rel (0) target = $region5
    $region4: #{_lambda_.26} parent=1 // pred_region
      _
    $region5: #{_lambda_.26} parent=1 // pred_fallthru
      _
    // Predicated region
    $region6: #{_lambda_.26} parent=1 // pred_check
      _
    $region7: #{_lambda_.26} parent=1 // pred_check_branch
      %12 = sbr.rel (0) target = $region9
    $region8: #{_lambda_.26} parent=1 // pred_region
      _
    $region9: #{_lambda_.26} parent=1 // pred_fallthru
      _
    // Predicated region
    $region10: #{_lambda_.26} parent=1 // pred_check
      _
    $region11: #{_lambda_.26} parent=1 // pred_check_branch
      %14 = sbr.rel (0) target = $region13
    $region12: #{_lambda_.26} parent=1 // pred_region
      %s16 = ssub.s32 48, 48
      %17 = vsyncadd [#allocation3], %s16
      %s19 = sshll.u32 [#allocation2], 4
      %s20 = int_to_ptr.vmem [resolvable:$true] %s19
      %22 = dma.hbm_to_vmem [thread:$0]  %s2, 48, %s20, [#allocation3]
    $region13: #{_lambda_.26} parent=1 // pred_fallthru
      _
    // Predicated region
    $region14: #{_lambda_.26} parent=1 // pred_check
      _
    $region15: #{_lambda_.26} parent=1 // pred_check_branch
      %24 = sbr.rel (0) target = $region17
    $region16: #{_lambda_.26} parent=1 // pred_region
      %25 = dma.done [#allocation3], 48
    $region17: #{_lambda_.26} parent=1 // pred_fallthru
      _
    %v27 = vld [vmem:[%s0] sm:$0xff]
    %v28 = vld [vmem:[%s0 + $0x8] sm:$0xff]
    %v29 = vld [vmem:[%s0 + $0x10] sm:$0xff]
    %v30 = vld [vmem:[%s0 + $0x18] sm:$0xff]
    %v31 = vld [vmem:[%s0 + $0x20] sm:$0xff]
    %v32 = vld [vmem:[%s0 + $0x28] sm:$0xff]
    %v33 = vpack.c.bf16 %v27, %v27
    %v34 = vpack.c.bf16 %v28, %v28
    %v35 = vpack.c.bf16 %v29, %v29
    %v36 = vpack.c.bf16 %v30, %v30
    %v37 = vpack.c.bf16 %v31, %v31
    %v38 = vpack.c.bf16 %v32, %v32
    %v39 = vld [vmem:[%s1] sm:$0xff]
    %v40 = vld [vmem:[%s1 + $0x8] sm:$0xf]
    %v41 = vld [vmem:[%s1 + $0xc] sm:$0xff]
    %v42 = vld [vmem:[%s1 + $0x14] sm:$0xf]
    %v43 = vld [vmem:[%s1 + $0x18] sm:$0xff]
    %v44 = vld [vmem:[%s1 + $0x20] sm:$0xf]
    %v45 = vld [vmem:[%s1 + $0x24] sm:$0xff]
    %v46 = vld [vmem:[%s1 + $0x2c] sm:$0xf]
    %v47 = vld [vmem:[%s1 + $0x30] sm:$0xff]
    %v48 = vld [vmem:[%s1 + $0x38] sm:$0xf]
    %v49 = vld [vmem:[%s1 + $0x3c] sm:$0xff]
    %v50 = vld [vmem:[%s1 + $0x44] sm:$0xf]
    %v51 = vld [vmem:[%s1 + $0x48] sm:$0xff]
    %v52 = vld [vmem:[%s1 + $0x50] sm:$0xf]
    %v53 = vld [vmem:[%s1 + $0x54] sm:$0xff]
    %v54 = vld [vmem:[%s1 + $0x5c] sm:$0xf]
    %v55 = vld [vmem:[%s1 + $0x60] sm:$0xff]
    %v56 = vld [vmem:[%s1 + $0x68] sm:$0xf]
    %v57 = vld [vmem:[%s1 + $0x6c] sm:$0xff]
    %v58 = vld [vmem:[%s1 + $0x74] sm:$0xf]
    %v59 = vld [vmem:[%s1 + $0x78] sm:$0xff]
    %v60 = vld [vmem:[%s1 + $0x80] sm:$0xf]
    %v61 = vld [vmem:[%s1 + $0x84] sm:$0xff]
    %v62 = vld [vmem:[%s1 + $0x8c] sm:$0xf]
    %v63 = vld [vmem:[%s1 + $0x90] sm:$0xff]
    %v64 = vld [vmem:[%s1 + $0x98] sm:$0xf]
    %v65 = vld [vmem:[%s1 + $0x9c] sm:$0xff]
    %v66 = vld [vmem:[%s1 + $0xa4] sm:$0xf]
    %v67 = vld [vmem:[%s1 + $0xa8] sm:$0xff]
    %v68 = vld [vmem:[%s1 + $0xb0] sm:$0xf]
    %v69 = vld [vmem:[%s1 + $0xb4] sm:$0xff]
    %v70 = vld [vmem:[%s1 + $0xbc] sm:$0xf]
    %v71 = vld [vmem:[%s1 + $0xc0] sm:$0xff]
    %v72 = vld [vmem:[%s1 + $0xc8] sm:$0xf]
    %v73 = vld [vmem:[%s1 + $0xcc] sm:$0xff]
    %v74 = vld [vmem:[%s1 + $0xd4] sm:$0xf]
    %v75 = vld [vmem:[%s1 + $0xd8] sm:$0xff]
    %v76 = vld [vmem:[%s1 + $0xe0] sm:$0xf]
    %v77 = vld [vmem:[%s1 + $0xe4] sm:$0xff]
    %v78 = vld [vmem:[%s1 + $0xec] sm:$0xf]
    %v79 = vld [vmem:[%s1 + $0xf0] sm:$0xff]
    %v80 = vld [vmem:[%s1 + $0xf8] sm:$0xf]
    %v81 = vld [vmem:[%s1 + $0xfc] sm:$0xff]
    %v82 = vld [vmem:[%s1 + $0x104] sm:$0xf]
    %v83 = vld [vmem:[%s1 + $0x108] sm:$0xff]
    %v84 = vld [vmem:[%s1 + $0x110] sm:$0xf]
    %v85 = vld [vmem:[%s1 + $0x114] sm:$0xff]
    %v86 = vld [vmem:[%s1 + $0x11c] sm:$0xf]
    %v87 = vld [vmem:[%s1 + $0x120] sm:$0xff]
    %v88 = vld [vmem:[%s1 + $0x128] sm:$0xf]
    %v89 = vld [vmem:[%s1 + $0x12c] sm:$0xff]
    %v90 = vld [vmem:[%s1 + $0x134] sm:$0xf]
    %v91 = vld [vmem:[%s1 + $0x138] sm:$0xff]
    %v92 = vld [vmem:[%s1 + $0x140] sm:$0xf]
    %v93 = vld [vmem:[%s1 + $0x144] sm:$0xff]
    %v94 = vld [vmem:[%s1 + $0x14c] sm:$0xf]
    %v95 = vld [vmem:[%s1 + $0x150] sm:$0xff]
    %v96 = vld [vmem:[%s1 + $0x158] sm:$0xf]
    %v97 = vld [vmem:[%s1 + $0x15c] sm:$0xff]
    %v98 = vld [vmem:[%s1 + $0x164] sm:$0xf]
    %v99 = vld [vmem:[%s1 + $0x168] sm:$0xff]
    %v100 = vld [vmem:[%s1 + $0x170] sm:$0xf]
    %v101 = vld [vmem:[%s1 + $0x174] sm:$0xff]
    %v102 = vld [vmem:[%s1 + $0x17c] sm:$0xf]
    %v103 = vld [vmem:[%s1 + $0x180] sm:$0xff]
    %v104 = vld [vmem:[%s1 + $0x188] sm:$0xf]
    %v105 = vld [vmem:[%s1 + $0x18c] sm:$0xff]
    %v106 = vld [vmem:[%s1 + $0x194] sm:$0xf]
    %v107 = vld [vmem:[%s1 + $0x198] sm:$0xff]
    %v108 = vld [vmem:[%s1 + $0x1a0] sm:$0xf]
    %v109 = vld [vmem:[%s1 + $0x1a4] sm:$0xff]
    %v110 = vld [vmem:[%s1 + $0x1ac] sm:$0xf]
    %v111 = vld [vmem:[%s1 + $0x1b0] sm:$0xff]
    %v112 = vld [vmem:[%s1 + $0x1b8] sm:$0xf]
    %v113 = vld [vmem:[%s1 + $0x1bc] sm:$0xff]
    %v114 = vld [vmem:[%s1 + $0x1c4] sm:$0xf]
    %v115 = vld [vmem:[%s1 + $0x1c8] sm:$0xff]
    %v116 = vld [vmem:[%s1 + $0x1d0] sm:$0xf]
    %v117 = vld [vmem:[%s1 + $0x1d4] sm:$0xff]
    %v118 = vld [vmem:[%s1 + $0x1dc] sm:$0xf]
    %v119 = vld [vmem:[%s1 + $0x1e0] sm:$0xff]
    %v120 = vld [vmem:[%s1 + $0x1e8] sm:$0xf]
    %v121 = vld [vmem:[%s1 + $0x1ec] sm:$0xff]
    %v122 = vld [vmem:[%s1 + $0x1f4] sm:$0xf]
    %v123 = vld [vmem:[%s1 + $0x1f8] sm:$0xff]
    %v124 = vld [vmem:[%s1 + $0x200] sm:$0xf]
    %v125 = vld [vmem:[%s1 + $0x204] sm:$0xff]
    %v126 = vld [vmem:[%s1 + $0x20c] sm:$0xf]
    %v127 = vld [vmem:[%s1 + $0x210] sm:$0xff]
    %v128 = vld [vmem:[%s1 + $0x218] sm:$0xf]
    %v129 = vld [vmem:[%s1 + $0x21c] sm:$0xff]
    %v130 = vld [vmem:[%s1 + $0x224] sm:$0xf]
    %v131 = vld [vmem:[%s1 + $0x228] sm:$0xff]
    %v132 = vld [vmem:[%s1 + $0x230] sm:$0xf]
    %v133 = vld [vmem:[%s1 + $0x234] sm:$0xff]
    %v134 = vld [vmem:[%s1 + $0x23c] sm:$0xf]
    %v135 = vld [vmem:[%s1 + $0x240] sm:$0xff]
    %v136 = vld [vmem:[%s1 + $0x248] sm:$0xf]
    %v137 = vld [vmem:[%s1 + $0x24c] sm:$0xff]
    %v138 = vld [vmem:[%s1 + $0x254] sm:$0xf]
    %v139 = vld [vmem:[%s1 + $0x258] sm:$0xff]
    %v140 = vld [vmem:[%s1 + $0x260] sm:$0xf]
    %v141 = vld [vmem:[%s1 + $0x264] sm:$0xff]
    %v142 = vld [vmem:[%s1 + $0x26c] sm:$0xf]
    %v143 = vld [vmem:[%s1 + $0x270] sm:$0xff]
    %v144 = vld [vmem:[%s1 + $0x278] sm:$0xf]
    %v145 = vld [vmem:[%s1 + $0x27c] sm:$0xff]
    %v146 = vld [vmem:[%s1 + $0x284] sm:$0xf]
    %v147 = vld [vmem:[%s1 + $0x288] sm:$0xff]
    %v148 = vld [vmem:[%s1 + $0x290] sm:$0xf]
    %v149 = vld [vmem:[%s1 + $0x294] sm:$0xff]
    %v150 = vld [vmem:[%s1 + $0x29c] sm:$0xf]
    %v151 = vld [vmem:[%s1 + $0x2a0] sm:$0xff]
    %v152 = vld [vmem:[%s1 + $0x2a8] sm:$0xf]
    %v153 = vld [vmem:[%s1 + $0x2ac] sm:$0xff]
    %v154 = vld [vmem:[%s1 + $0x2b4] sm:$0xf]
    %v155 = vld [vmem:[%s1 + $0x2b8] sm:$0xff]
    %v156 = vld [vmem:[%s1 + $0x2c0] sm:$0xf]
    %v157 = vld [vmem:[%s1 + $0x2c4] sm:$0xff]
    %v158 = vld [vmem:[%s1 + $0x2cc] sm:$0xf]
    %v159 = vld [vmem:[%s1 + $0x2d0] sm:$0xff]
    %v160 = vld [vmem:[%s1 + $0x2d8] sm:$0xf]
    %v161 = vld [vmem:[%s1 + $0x2dc] sm:$0xff]
    %v162 = vld [vmem:[%s1 + $0x2e4] sm:$0xf]
    %v163 = vld [vmem:[%s1 + $0x2e8] sm:$0xff]
    %v164 = vld [vmem:[%s1 + $0x2f0] sm:$0xf]
    %v165 = vld [vmem:[%s1 + $0x2f4] sm:$0xff]
    %v166 = vld [vmem:[%s1 + $0x2fc] sm:$0xf]
    %v167 = vld [vmem:[%s1 + $0x300] sm:$0xff]
    %v168 = vld [vmem:[%s1 + $0x308] sm:$0xf]
    %v169 = vld [vmem:[%s1 + $0x30c] sm:$0xff]
    %v170 = vld [vmem:[%s1 + $0x314] sm:$0xf]
    %v171 = vld [vmem:[%s1 + $0x318] sm:$0xff]
    %v172 = vld [vmem:[%s1 + $0x320] sm:$0xf]
    %v173 = vld [vmem:[%s1 + $0x324] sm:$0xff]
    %v174 = vld [vmem:[%s1 + $0x32c] sm:$0xf]
    %v175 = vld [vmem:[%s1 + $0x330] sm:$0xff]
    %v176 = vld [vmem:[%s1 + $0x338] sm:$0xf]
    %v177 = vld [vmem:[%s1 + $0x33c] sm:$0xff]
    %v178 = vld [vmem:[%s1 + $0x344] sm:$0xf]
    %v179 = vld [vmem:[%s1 + $0x348] sm:$0xff]
    %v180 = vld [vmem:[%s1 + $0x350] sm:$0xf]
    %v181 = vld [vmem:[%s1 + $0x354] sm:$0xff]
    %v182 = vld [vmem:[%s1 + $0x35c] sm:$0xf]
    %v183 = vld [vmem:[%s1 + $0x360] sm:$0xff]
    %v184 = vld [vmem:[%s1 + $0x368] sm:$0xf]
    %v185 = vld [vmem:[%s1 + $0x36c] sm:$0xff]
    %v186 = vld [vmem:[%s1 + $0x374] sm:$0xf]
    %v187 = vld [vmem:[%s1 + $0x378] sm:$0xff]
    %v188 = vld [vmem:[%s1 + $0x380] sm:$0xf]
    %v189 = vld [vmem:[%s1 + $0x384] sm:$0xff]
    %v190 = vld [vmem:[%s1 + $0x38c] sm:$0xf]
    %v191 = vld [vmem:[%s1 + $0x390] sm:$0xff]
    %v192 = vld [vmem:[%s1 + $0x398] sm:$0xf]
    %v193 = vld [vmem:[%s1 + $0x39c] sm:$0xff]
    %v194 = vld [vmem:[%s1 + $0x3a4] sm:$0xf]
    %v195 = vld [vmem:[%s1 + $0x3a8] sm:$0xff]
    %v196 = vld [vmem:[%s1 + $0x3b0] sm:$0xf]
    %v197 = vld [vmem:[%s1 + $0x3b4] sm:$0xff]
    %v198 = vld [vmem:[%s1 + $0x3bc] sm:$0xf]
    %v199 = vld [vmem:[%s1 + $0x3c0] sm:$0xff]
    %v200 = vld [vmem:[%s1 + $0x3c8] sm:$0xf]
    %v201 = vld [vmem:[%s1 + $0x3cc] sm:$0xff]
    %v202 = vld [vmem:[%s1 + $0x3d4] sm:$0xf]
    %v203 = vld [vmem:[%s1 + $0x3d8] sm:$0xff]
    %v204 = vld [vmem:[%s1 + $0x3e0] sm:$0xf]
    %v205 = vld [vmem:[%s1 + $0x3e4] sm:$0xff]
    %v206 = vld [vmem:[%s1 + $0x3ec] sm:$0xf]
    %v207 = vld [vmem:[%s1 + $0x3f0] sm:$0xff]
    %v208 = vld [vmem:[%s1 + $0x3f8] sm:$0xf]
    %v209 = vld [vmem:[%s1 + $0x3fc] sm:$0xff]
    %v210 = vld [vmem:[%s1 + $0x404] sm:$0xf]
    %v211 = vld [vmem:[%s1 + $0x408] sm:$0xff]
    %v212 = vld [vmem:[%s1 + $0x410] sm:$0xf]
    %v213 = vld [vmem:[%s1 + $0x414] sm:$0xff]
    %v214 = vld [vmem:[%s1 + $0x41c] sm:$0xf]
    %v215 = vld [vmem:[%s1 + $0x420] sm:$0xff]
    %v216 = vld [vmem:[%s1 + $0x428] sm:$0xf]
    %v217 = vld [vmem:[%s1 + $0x42c] sm:$0xff]
    %v218 = vld [vmem:[%s1 + $0x434] sm:$0xf]
    %v219 = vld [vmem:[%s1 + $0x438] sm:$0xff]
    %v220 = vld [vmem:[%s1 + $0x440] sm:$0xf]
    %v221 = vld [vmem:[%s1 + $0x444] sm:$0xff]
    %v222 = vld [vmem:[%s1 + $0x44c] sm:$0xf]
    %v223 = vld [vmem:[%s1 + $0x450] sm:$0xff]
    %v224 = vld [vmem:[%s1 + $0x458] sm:$0xf]
    %v225 = vld [vmem:[%s1 + $0x45c] sm:$0xff]
    %v226 = vld [vmem:[%s1 + $0x464] sm:$0xf]
    %v227 = vld [vmem:[%s1 + $0x468] sm:$0xff]
    %v228 = vld [vmem:[%s1 + $0x470] sm:$0xf]
    %v229 = vld [vmem:[%s1 + $0x474] sm:$0xff]
    %v230 = vld [vmem:[%s1 + $0x47c] sm:$0xf]
    %v231 = vld [vmem:[#allocation2] sm:$0x7]
    %v233 = vlaneseq
    %v234 = vshrl.u32 %v233, 7
    %v235 = vsub.s32 0, %v234
    %v236 = vrot.slane %v231, %v235
    %v237 = vlaneseq
    %v238 = vshrl.u32 %v237, 7
    %v239 = vsub.s32 1, %v238
    %v240 = vrot.slane %v231, %v239
    %v241 = vlaneseq
    %v242 = vshrl.u32 %v241, 7
    %v243 = vsub.s32 2, %v242
    %v244 = vrot.slane %v231, %v243
    %v440 = vunpack.c.l.b16 %v39
    %v441 = vunpack.c.h.b16 %v39
    %v442 = vunpack.c.l.b16 %v40
    %v443 = vunpack.c.l.b16 %v41
    %v444 = vunpack.c.h.b16 %v41
    %v445 = vunpack.c.l.b16 %v42
    %v446 = vunpack.c.l.b16 %v43
    %v447 = vunpack.c.h.b16 %v43
    %v448 = vunpack.c.l.b16 %v44
    %v449 = vunpack.c.l.b16 %v45
    %v450 = vunpack.c.h.b16 %v45
    %v451 = vunpack.c.l.b16 %v46
    %v452 = vunpack.c.l.b16 %v47
    %v453 = vunpack.c.h.b16 %v47
    %v454 = vunpack.c.l.b16 %v48
    %v455 = vunpack.c.l.b16 %v49
    %v456 = vunpack.c.h.b16 %v49
    %v457 = vunpack.c.l.b16 %v50
    %v458 = vunpack.c.l.b16 %v51
    %v459 = vunpack.c.h.b16 %v51
    %v460 = vunpack.c.l.b16 %v52
    %v461 = vunpack.c.l.b16 %v53
    %v462 = vunpack.c.h.b16 %v53
    %v463 = vunpack.c.l.b16 %v54
    %v464 = vunpack.c.l.b16 %v55
    %v465 = vunpack.c.h.b16 %v55
    %v466 = vunpack.c.l.b16 %v56
    %v467 = vunpack.c.l.b16 %v57
    %v468 = vunpack.c.h.b16 %v57
    %v469 = vunpack.c.l.b16 %v58
    %v470 = vunpack.c.l.b16 %v59
    %v471 = vunpack.c.h.b16 %v59
    %v472 = vunpack.c.l.b16 %v60
    %v473 = vunpack.c.l.b16 %v61
    %v474 = vunpack.c.h.b16 %v61
    %v475 = vunpack.c.l.b16 %v62
    %v476 = vunpack.c.l.b16 %v63
    %v477 = vunpack.c.h.b16 %v63
    %v478 = vunpack.c.l.b16 %v64
    %v479 = vunpack.c.l.b16 %v65
    %v480 = vunpack.c.h.b16 %v65
    %v481 = vunpack.c.l.b16 %v66
    %v482 = vunpack.c.l.b16 %v67
    %v483 = vunpack.c.h.b16 %v67
    %v484 = vunpack.c.l.b16 %v68
    %v485 = vunpack.c.l.b16 %v69
    %v486 = vunpack.c.h.b16 %v69
    %v487 = vunpack.c.l.b16 %v70
    %v488 = vunpack.c.l.b16 %v71
    %v489 = vunpack.c.h.b16 %v71
    %v490 = vunpack.c.l.b16 %v72
    %v491 = vunpack.c.l.b16 %v73
    %v492 = vunpack.c.h.b16 %v73
    %v493 = vunpack.c.l.b16 %v74
    %v494 = vunpack.c.l.b16 %v75
    %v495 = vunpack.c.h.b16 %v75
    %v496 = vunpack.c.l.b16 %v76
    %v497 = vunpack.c.l.b16 %v77
    %v498 = vunpack.c.h.b16 %v77
    %v499 = vunpack.c.l.b16 %v78
    %v500 = vunpack.c.l.b16 %v79
    %v501 = vunpack.c.h.b16 %v79
    %v502 = vunpack.c.l.b16 %v80
    %v503 = vunpack.c.l.b16 %v81
    %v504 = vunpack.c.h.b16 %v81
    %v505 = vunpack.c.l.b16 %v82
    %v506 = vunpack.c.l.b16 %v83
    %v507 = vunpack.c.h.b16 %v83
    %v508 = vunpack.c.l.b16 %v84
    %v509 = vunpack.c.l.b16 %v85
    %v510 = vunpack.c.h.b16 %v85
    %v511 = vunpack.c.l.b16 %v86
    %v512 = vunpack.c.l.b16 %v87
    %v513 = vunpack.c.h.b16 %v87
    %v514 = vunpack.c.l.b16 %v88
    %v515 = vunpack.c.l.b16 %v89
    %v516 = vunpack.c.h.b16 %v89
    %v517 = vunpack.c.l.b16 %v90
    %v518 = vunpack.c.l.b16 %v91
    %v519 = vunpack.c.h.b16 %v91
    %v520 = vunpack.c.l.b16 %v92
    %v521 = vunpack.c.l.b16 %v93
    %v522 = vunpack.c.h.b16 %v93
    %v523 = vunpack.c.l.b16 %v94
    %v524 = vunpack.c.l.b16 %v95
    %v525 = vunpack.c.h.b16 %v95
    %v526 = vunpack.c.l.b16 %v96
    %v527 = vunpack.c.l.b16 %v97
    %v528 = vunpack.c.h.b16 %v97
    %v529 = vunpack.c.l.b16 %v98
    %v530 = vunpack.c.l.b16 %v99
    %v531 = vunpack.c.h.b16 %v99
    %v532 = vunpack.c.l.b16 %v100
    %v533 = vunpack.c.l.b16 %v101
    %v534 = vunpack.c.h.b16 %v101
    %v535 = vunpack.c.l.b16 %v102
    %v536 = vunpack.c.l.b16 %v103
    %v537 = vunpack.c.h.b16 %v103
    %v538 = vunpack.c.l.b16 %v104
    %v539 = vunpack.c.l.b16 %v105
    %v540 = vunpack.c.h.b16 %v105
    %v541 = vunpack.c.l.b16 %v106
    %v542 = vunpack.c.l.b16 %v107
    %v543 = vunpack.c.h.b16 %v107
    %v544 = vunpack.c.l.b16 %v108
    %v545 = vunpack.c.l.b16 %v109
    %v546 = vunpack.c.h.b16 %v109
    %v547 = vunpack.c.l.b16 %v110
    %v548 = vunpack.c.l.b16 %v111
    %v549 = vunpack.c.h.b16 %v111
    %v550 = vunpack.c.l.b16 %v112
    %v551 = vunpack.c.l.b16 %v113
    %v552 = vunpack.c.h.b16 %v113
    %v553 = vunpack.c.l.b16 %v114
    %v554 = vunpack.c.l.b16 %v115
    %v555 = vunpack.c.h.b16 %v115
    %v556 = vunpack.c.l.b16 %v116
    %v557 = vunpack.c.l.b16 %v117
    %v558 = vunpack.c.h.b16 %v117
    %v559 = vunpack.c.l.b16 %v118
    %v560 = vunpack.c.l.b16 %v119
    %v561 = vunpack.c.h.b16 %v119
    %v562 = vunpack.c.l.b16 %v120
    %v563 = vunpack.c.l.b16 %v121
    %v564 = vunpack.c.h.b16 %v121
    %v565 = vunpack.c.l.b16 %v122
    %v566 = vunpack.c.l.b16 %v123
    %v567 = vunpack.c.h.b16 %v123
    %v568 = vunpack.c.l.b16 %v124
    %v569 = vunpack.c.l.b16 %v125
    %v570 = vunpack.c.h.b16 %v125
    %v571 = vunpack.c.l.b16 %v126
    %v572 = vunpack.c.l.b16 %v127
    %v573 = vunpack.c.h.b16 %v127
    %v574 = vunpack.c.l.b16 %v128
    %v575 = vunpack.c.l.b16 %v129
    %v576 = vunpack.c.h.b16 %v129
    %v577 = vunpack.c.l.b16 %v130
    %v578 = vunpack.c.l.b16 %v131
    %v579 = vunpack.c.h.b16 %v131
    %v580 = vunpack.c.l.b16 %v132
    %v581 = vunpack.c.l.b16 %v133
    %v582 = vunpack.c.h.b16 %v133
    %v583 = vunpack.c.l.b16 %v134
    %v584 = vunpack.c.l.b16 %v135
    %v585 = vunpack.c.h.b16 %v135
    %v586 = vunpack.c.l.b16 %v136
    %v587 = vunpack.c.l.b16 %v137
    %v588 = vunpack.c.h.b16 %v137
    %v589 = vunpack.c.l.b16 %v138
    %v590 = vunpack.c.l.b16 %v139
    %v591 = vunpack.c.h.b16 %v139
    %v592 = vunpack.c.l.b16 %v140
    %v593 = vunpack.c.l.b16 %v141
    %v594 = vunpack.c.h.b16 %v141
    %v595 = vunpack.c.l.b16 %v142
    %v596 = vunpack.c.l.b16 %v143
    %v597 = vunpack.c.h.b16 %v143
    %v598 = vunpack.c.l.b16 %v144
    %v599 = vunpack.c.l.b16 %v145
    %v600 = vunpack.c.h.b16 %v145
    %v601 = vunpack.c.l.b16 %v146
    %v602 = vunpack.c.l.b16 %v147
    %v603 = vunpack.c.h.b16 %v147
    %v604 = vunpack.c.l.b16 %v148
    %v605 = vunpack.c.l.b16 %v149
    %v606 = vunpack.c.h.b16 %v149
    %v607 = vunpack.c.l.b16 %v150
    %v608 = vunpack.c.l.b16 %v151
    %v609 = vunpack.c.h.b16 %v151
    %v610 = vunpack.c.l.b16 %v152
    %v611 = vunpack.c.l.b16 %v153
    %v612 = vunpack.c.h.b16 %v153
    %v613 = vunpack.c.l.b16 %v154
    %v614 = vunpack.c.l.b16 %v155
    %v615 = vunpack.c.h.b16 %v155
    %v616 = vunpack.c.l.b16 %v156
    %v617 = vunpack.c.l.b16 %v157
    %v618 = vunpack.c.h.b16 %v157
    %v619 = vunpack.c.l.b16 %v158
    %v620 = vunpack.c.l.b16 %v159
    %v621 = vunpack.c.h.b16 %v159
    %v622 = vunpack.c.l.b16 %v160
    %v623 = vunpack.c.l.b16 %v161
    %v624 = vunpack.c.h.b16 %v161
    %v625 = vunpack.c.l.b16 %v162
    %v626 = vunpack.c.l.b16 %v163
    %v627 = vunpack.c.h.b16 %v163
    %v628 = vunpack.c.l.b16 %v164
    %v629 = vunpack.c.l.b16 %v165
    %v630 = vunpack.c.h.b16 %v165
    %v631 = vunpack.c.l.b16 %v166
    %v632 = vunpack.c.l.b16 %v167
    %v633 = vunpack.c.h.b16 %v167
    %v634 = vunpack.c.l.b16 %v168
    %v635 = vunpack.c.l.b16 %v169
    %v636 = vunpack.c.h.b16 %v169
    %v637 = vunpack.c.l.b16 %v170
    %v638 = vunpack.c.l.b16 %v171
    %v639 = vunpack.c.h.b16 %v171
    %v640 = vunpack.c.l.b16 %v172
    %v641 = vunpack.c.l.b16 %v173
    %v642 = vunpack.c.h.b16 %v173
    %v643 = vunpack.c.l.b16 %v174
    %v644 = vunpack.c.l.b16 %v175
    %v645 = vunpack.c.h.b16 %v175
    %v646 = vunpack.c.l.b16 %v176
    %v647 = vunpack.c.l.b16 %v177
    %v648 = vunpack.c.h.b16 %v177
    %v649 = vunpack.c.l.b16 %v178
    %v650 = vunpack.c.l.b16 %v179
    %v651 = vunpack.c.h.b16 %v179
    %v652 = vunpack.c.l.b16 %v180
    %v653 = vunpack.c.l.b16 %v181
    %v654 = vunpack.c.h.b16 %v181
    %v655 = vunpack.c.l.b16 %v182
    %v656 = vunpack.c.l.b16 %v183
    %v657 = vunpack.c.h.b16 %v183
    %v658 = vunpack.c.l.b16 %v184
    %v659 = vunpack.c.l.b16 %v185
    %v660 = vunpack.c.h.b16 %v185
    %v661 = vunpack.c.l.b16 %v186
    %v662 = vunpack.c.l.b16 %v187
    %v663 = vunpack.c.h.b16 %v187
    %v664 = vunpack.c.l.b16 %v188
    %v665 = vunpack.c.l.b16 %v189
    %v666 = vunpack.c.h.b16 %v189
    %v667 = vunpack.c.l.b16 %v190
    %v668 = vunpack.c.l.b16 %v191
    %v669 = vunpack.c.h.b16 %v191
    %v670 = vunpack.c.l.b16 %v192
    %v671 = vunpack.c.l.b16 %v193
    %v672 = vunpack.c.h.b16 %v193
    %v673 = vunpack.c.l.b16 %v194
    %v674 = vunpack.c.l.b16 %v195
    %v675 = vunpack.c.h.b16 %v195
    %v676 = vunpack.c.l.b16 %v196
    %v677 = vunpack.c.l.b16 %v197
    %v678 = vunpack.c.h.b16 %v197
    %v679 = vunpack.c.l.b16 %v198
    %v680 = vunpack.c.l.b16 %v199
    %v681 = vunpack.c.h.b16 %v199
    %v682 = vunpack.c.l.b16 %v200
    %v683 = vunpack.c.l.b16 %v201
    %v684 = vunpack.c.h.b16 %v201
    %v685 = vunpack.c.l.b16 %v202
    %v686 = vunpack.c.l.b16 %v203
    %v687 = vunpack.c.h.b16 %v203
    %v688 = vunpack.c.l.b16 %v204
    %v689 = vunpack.c.l.b16 %v205
    %v690 = vunpack.c.h.b16 %v205
    %v691 = vunpack.c.l.b16 %v206
    %v692 = vunpack.c.l.b16 %v207
    %v693 = vunpack.c.h.b16 %v207
    %v694 = vunpack.c.l.b16 %v208
    %v695 = vunpack.c.l.b16 %v209
    %v696 = vunpack.c.h.b16 %v209
    %v697 = vunpack.c.l.b16 %v210
    %v698 = vunpack.c.l.b16 %v211
    %v699 = vunpack.c.h.b16 %v211
    %v700 = vunpack.c.l.b16 %v212
    %v701 = vunpack.c.l.b16 %v213
    %v702 = vunpack.c.h.b16 %v213
    %v703 = vunpack.c.l.b16 %v214
    %v704 = vunpack.c.l.b16 %v215
    %v705 = vunpack.c.h.b16 %v215
    %v706 = vunpack.c.l.b16 %v216
    %v707 = vunpack.c.l.b16 %v217
    %v708 = vunpack.c.h.b16 %v217
    %v709 = vunpack.c.l.b16 %v218
    %v710 = vunpack.c.l.b16 %v219
    %v711 = vunpack.c.h.b16 %v219
    %v712 = vunpack.c.l.b16 %v220
    %v713 = vunpack.c.l.b16 %v221
    %v714 = vunpack.c.h.b16 %v221
    %v715 = vunpack.c.l.b16 %v222
    %v716 = vunpack.c.l.b16 %v223
    %v717 = vunpack.c.h.b16 %v223
    %v718 = vunpack.c.l.b16 %v224
    %v719 = vunpack.c.l.b16 %v225
    %v720 = vunpack.c.h.b16 %v225
    %v721 = vunpack.c.l.b16 %v226
    %v722 = vunpack.c.l.b16 %v227
    %v723 = vunpack.c.h.b16 %v227
    %v724 = vunpack.c.l.b16 %v228
    %v725 = vunpack.c.l.b16 %v229
    %v726 = vunpack.c.h.b16 %v229
    %v727 = vunpack.c.l.b16 %v230
    %v728 = vpack.c.b16 %v443, %v440
    %v729 = vpack.c.b16 %v444, %v441
    %v730 = vpack.c.b16 %v445, %v442
    %v731 = vpack.c.b16 %v449, %v446
    %v732 = vpack.c.b16 %v450, %v447
    %v733 = vpack.c.b16 %v451, %v448
    %v734 = vpack.c.b16 %v455, %v452
    %v735 = vpack.c.b16 %v456, %v453
    %v736 = vpack.c.b16 %v457, %v454
    %v737 = vpack.c.b16 %v461, %v458
    %v738 = vpack.c.b16 %v462, %v459
    %v739 = vpack.c.b16 %v463, %v460
    %v740 = vpack.c.b16 %v467, %v464
    %v741 = vpack.c.b16 %v468, %v465
    %v742 = vpack.c.b16 %v469, %v466
    %v743 = vpack.c.b16 %v473, %v470
    %v744 = vpack.c.b16 %v474, %v471
    %v745 = vpack.c.b16 %v475, %v472
    %v746 = vpack.c.b16 %v479, %v476
    %v747 = vpack.c.b16 %v480, %v477
    %v748 = vpack.c.b16 %v481, %v478
    %v749 = vpack.c.b16 %v485, %v482
    %v750 = vpack.c.b16 %v486, %v483
    %v751 = vpack.c.b16 %v487, %v484
    %v752 = vpack.c.b16 %v491, %v488
    %v753 = vpack.c.b16 %v492, %v489
    %v754 = vpack.c.b16 %v493, %v490
    %v755 = vpack.c.b16 %v497, %v494
    %v756 = vpack.c.b16 %v498, %v495
    %v757 = vpack.c.b16 %v499, %v496
    %v758 = vpack.c.b16 %v503, %v500
    %v759 = vpack.c.b16 %v504, %v501
    %v760 = vpack.c.b16 %v505, %v502
    %v761 = vpack.c.b16 %v509, %v506
    %v762 = vpack.c.b16 %v510, %v507
    %v763 = vpack.c.b16 %v511, %v508
    %v764 = vpack.c.b16 %v515, %v512
    %v765 = vpack.c.b16 %v516, %v513
    %v766 = vpack.c.b16 %v517, %v514
    %v767 = vpack.c.b16 %v521, %v518
    %v768 = vpack.c.b16 %v522, %v519
    %v769 = vpack.c.b16 %v523, %v520
    %v770 = vpack.c.b16 %v527, %v524
    %v771 = vpack.c.b16 %v528, %v525
    %v772 = vpack.c.b16 %v529, %v526
    %v773 = vpack.c.b16 %v533, %v530
    %v774 = vpack.c.b16 %v534, %v531
    %v775 = vpack.c.b16 %v535, %v532
    %v776 = vpack.c.b16 %v539, %v536
    %v777 = vpack.c.b16 %v540, %v537
    %v778 = vpack.c.b16 %v541, %v538
    %v779 = vpack.c.b16 %v545, %v542
    %v780 = vpack.c.b16 %v546, %v543
    %v781 = vpack.c.b16 %v547, %v544
    %v782 = vpack.c.b16 %v551, %v548
    %v783 = vpack.c.b16 %v552, %v549
    %v784 = vpack.c.b16 %v553, %v550
    %v785 = vpack.c.b16 %v557, %v554
    %v786 = vpack.c.b16 %v558, %v555
    %v787 = vpack.c.b16 %v559, %v556
    %v788 = vpack.c.b16 %v563, %v560
    %v789 = vpack.c.b16 %v564, %v561
    %v790 = vpack.c.b16 %v565, %v562
    %v791 = vpack.c.b16 %v569, %v566
    %v792 = vpack.c.b16 %v570, %v567
    %v793 = vpack.c.b16 %v571, %v568
    %v794 = vpack.c.b16 %v575, %v572
    %v795 = vpack.c.b16 %v576, %v573
    %v796 = vpack.c.b16 %v577, %v574
    %v797 = vpack.c.b16 %v581, %v578
    %v798 = vpack.c.b16 %v582, %v579
    %v799 = vpack.c.b16 %v583, %v580
    %v800 = vpack.c.b16 %v587, %v584
    %v801 = vpack.c.b16 %v588, %v585
    %v802 = vpack.c.b16 %v589, %v586
    %v803 = vpack.c.b16 %v593, %v590
    %v804 = vpack.c.b16 %v594, %v591
    %v805 = vpack.c.b16 %v595, %v592
    %v806 = vpack.c.b16 %v599, %v596
    %v807 = vpack.c.b16 %v600, %v597
    %v808 = vpack.c.b16 %v601, %v598
    %v809 = vpack.c.b16 %v605, %v602
    %v810 = vpack.c.b16 %v606, %v603
    %v811 = vpack.c.b16 %v607, %v604
    %v812 = vpack.c.b16 %v611, %v608
    %v813 = vpack.c.b16 %v612, %v609
    %v814 = vpack.c.b16 %v613, %v610
    %v815 = vpack.c.b16 %v617, %v614
    %v816 = vpack.c.b16 %v618, %v615
    %v817 = vpack.c.b16 %v619, %v616
    %v818 = vpack.c.b16 %v623, %v620
    %v819 = vpack.c.b16 %v624, %v621
    %v820 = vpack.c.b16 %v625, %v622
    %v821 = vpack.c.b16 %v629, %v626
    %v822 = vpack.c.b16 %v630, %v627
    %v823 = vpack.c.b16 %v631, %v628
    %v824 = vpack.c.b16 %v635, %v632
    %v825 = vpack.c.b16 %v636, %v633
    %v826 = vpack.c.b16 %v637, %v634
    %v827 = vpack.c.b16 %v641, %v638
    %v828 = vpack.c.b16 %v642, %v639
    %v829 = vpack.c.b16 %v643, %v640
    %v830 = vpack.c.b16 %v647, %v644
    %v831 = vpack.c.b16 %v648, %v645
    %v832 = vpack.c.b16 %v649, %v646
    %v833 = vpack.c.b16 %v653, %v650
    %v834 = vpack.c.b16 %v654, %v651
    %v835 = vpack.c.b16 %v655, %v652
    %v836 = vpack.c.b16 %v659, %v656
    %v837 = vpack.c.b16 %v660, %v657
    %v838 = vpack.c.b16 %v661, %v658
    %v839 = vpack.c.b16 %v665, %v662
    %v840 = vpack.c.b16 %v666, %v663
    %v841 = vpack.c.b16 %v667, %v664
    %v842 = vpack.c.b16 %v671, %v668
    %v843 = vpack.c.b16 %v672, %v669
    %v844 = vpack.c.b16 %v673, %v670
    %v845 = vpack.c.b16 %v677, %v674
    %v846 = vpack.c.b16 %v678, %v675
    %v847 = vpack.c.b16 %v679, %v676
    %v848 = vpack.c.b16 %v683, %v680
    %v849 = vpack.c.b16 %v684, %v681
    %v850 = vpack.c.b16 %v685, %v682
    %v851 = vpack.c.b16 %v689, %v686
    %v852 = vpack.c.b16 %v690, %v687
    %v853 = vpack.c.b16 %v691, %v688
    %v854 = vpack.c.b16 %v695, %v692
    %v855 = vpack.c.b16 %v696, %v693
    %v856 = vpack.c.b16 %v697, %v694
    %v857 = vpack.c.b16 %v701, %v698
    %v858 = vpack.c.b16 %v702, %v699
    %v859 = vpack.c.b16 %v703, %v700
    %v860 = vpack.c.b16 %v707, %v704
    %v861 = vpack.c.b16 %v708, %v705
    %v862 = vpack.c.b16 %v709, %v706
    %v863 = vpack.c.b16 %v713, %v710
    %v864 = vpack.c.b16 %v714, %v711
    %v865 = vpack.c.b16 %v715, %v712
    %v866 = vpack.c.b16 %v719, %v716
    %v867 = vpack.c.b16 %v720, %v717
    %v868 = vpack.c.b16 %v721, %v718
    %v869 = vpack.c.b16 %v725, %v722
    %v870 = vpack.c.b16 %v726, %v723
    %v871 = vpack.c.b16 %v727, %v724
    %1016 = vmatprep.subr.bf16.mxu0 %v750
    %1017 = vmatpush1.bf16.msra.mxu0 %v749
    %1018 = vmatprep.subr.bf16.mxu0 %v747
    %1019 = vmatpush1.bf16.msra.mxu0 %v746
    %1020 = vmatprep.subr.bf16.mxu0 %v744
    %1021 = vmatpush1.bf16.msra.mxu0 %v743
    %1022 = vmatprep.subr.bf16.mxu0 %v741
    %1023 = vmatpush1.bf16.msra.mxu0 %v740
    %1024 = vmatprep.subr.bf16.mxu0 %v738
    %1025 = vmatpush1.bf16.msra.mxu0 %v737
    %1026 = vmatprep.subr.bf16.mxu0 %v735
    %1027 = vmatpush1.bf16.msra.mxu0 %v734
    %1028 = vmatprep.subr.bf16.mxu0 %v732
    %1029 = vmatpush1.bf16.msra.mxu0 %v731
    %1030 = vmatprep.subr.bf16.mxu0 %v729
    %1031 = vmatpush1.bf16.msra.mxu0 %v728
    %1032 = vmatprep.subr.bf16.mxu0 %v774
    %1033 = vmatpush2.bf16.msra.mxu0 %v773
    %1034 = vmatprep.subr.bf16.mxu0 %v771
    %1035 = vmatpush2.bf16.msra.mxu0 %v770
    %1036 = vmatprep.subr.bf16.mxu0 %v768
    %1037 = vmatpush2.bf16.msra.mxu0 %v767
    %1038 = vmatprep.subr.bf16.mxu0 %v765
    %1039 = vmatpush2.bf16.msra.mxu0 %v764
    %1040 = vmatprep.subr.bf16.mxu0 %v762
    %1041 = vmatpush2.bf16.msra.mxu0 %v761
    %1042 = vmatprep.subr.bf16.mxu0 %v759
    %1043 = vmatpush2.bf16.msra.mxu0 %v758
    %1044 = vmatprep.subr.bf16.mxu0 %v756
    %1045 = vmatpush2.bf16.msra.mxu0 %v755
    %1046 = vmatprep.subr.bf16.mxu0 %v753
    %1047 = vmatpush2.bf16.msra.mxu0 %v752
    %1048 = vmatprep.mubr.bf16.mxu0 %v34
    %1049 = vmatmul.mubr.bf16.gmra.mxu0 %v33
    %v1050 = vpop.f32.mrf.mxu0
    %v1051 = vadd.f32 %v236, %v1050
    %v1052 = vpop.f32.mrf.mxu0
    %v1053 = vadd.f32 %v240, %v1052
    %v1054 = vpop.f32.mrf.mxu0
    %v1055 = vpop.f32.mrf.mxu0
    %1056 = vdwg.mxu0
    %1057 = vmatprep.subr.bf16.mxu0 %v798
    %1058 = vmatpush1.bf16.msra.mxu0 %v797
    %1059 = vmatprep.subr.bf16.mxu0 %v795
    %1060 = vmatpush1.bf16.msra.mxu0 %v794
    %1061 = vmatprep.subr.bf16.mxu0 %v792
    %1062 = vmatpush1.bf16.msra.mxu0 %v791
    %1063 = vmatprep.subr.bf16.mxu0 %v789
    %1064 = vmatpush1.bf16.msra.mxu0 %v788
    %1065 = vmatprep.subr.bf16.mxu0 %v786
    %1066 = vmatpush1.bf16.msra.mxu0 %v785
    %1067 = vmatprep.subr.bf16.mxu0 %v783
    %1068 = vmatpush1.bf16.msra.mxu0 %v782
    %1069 = vmatprep.subr.bf16.mxu0 %v780
    %1070 = vmatpush1.bf16.msra.mxu0 %v779
    %1071 = vmatprep.subr.bf16.mxu0 %v777
    %1072 = vmatpush1.bf16.msra.mxu0 %v776
    %1073 = vmatprep.subr.bf16.mxu0 %v822
    %1074 = vmatpush2.bf16.msra.mxu0 %v821
    %1075 = vmatprep.subr.bf16.mxu0 %v819
    %1076 = vmatpush2.bf16.msra.mxu0 %v818
    %1077 = vmatprep.subr.bf16.mxu0 %v816
    %1078 = vmatpush2.bf16.msra.mxu0 %v815
    %1079 = vmatprep.subr.bf16.mxu0 %v813
    %1080 = vmatpush2.bf16.msra.mxu0 %v812
    %1081 = vmatprep.subr.bf16.mxu0 %v810
    %1082 = vmatpush2.bf16.msra.mxu0 %v809
    %1083 = vmatprep.subr.bf16.mxu0 %v807
    %1084 = vmatpush2.bf16.msra.mxu0 %v806
    %1085 = vmatprep.subr.bf16.mxu0 %v804
    %1086 = vmatpush2.bf16.msra.mxu0 %v803
    %1087 = vmatprep.subr.bf16.mxu0 %v801
    %1088 = vmatpush2.bf16.msra.mxu0 %v800
    %1089 = vmatprep.mubr.bf16.mxu0 %v36
    %1090 = vmatmul.mubr.bf16.gmra.mxu0 %v35
    %v1091 = vpop.f32.mrf.mxu0
    %v1092 = vadd.f32 %v1051, %v1091
    %v1093 = vpop.f32.mrf.mxu0
    %v1094 = vadd.f32 %v1053, %v1093
    %v1095 = vpop.f32.mrf.mxu0
    %v1096 = vpop.f32.mrf.mxu0
    %1097 = vdwg.mxu0
    %1098 = vmatprep.subr.bf16.mxu0 %v846
    %1099 = vmatpush1.bf16.msra.mxu0 %v845
    %1100 = vmatprep.subr.bf16.mxu0 %v843
    %1101 = vmatpush1.bf16.msra.mxu0 %v842
    %1102 = vmatprep.subr.bf16.mxu0 %v840
    %1103 = vmatpush1.bf16.msra.mxu0 %v839
    %1104 = vmatprep.subr.bf16.mxu0 %v837
    %1105 = vmatpush1.bf16.msra.mxu0 %v836
    %1106 = vmatprep.subr.bf16.mxu0 %v834
    %1107 = vmatpush1.bf16.msra.mxu0 %v833
    %1108 = vmatprep.subr.bf16.mxu0 %v831
    %1109 = vmatpush1.bf16.msra.mxu0 %v830
    %1110 = vmatprep.subr.bf16.mxu0 %v828
    %1111 = vmatpush1.bf16.msra.mxu0 %v827
    %1112 = vmatprep.subr.bf16.mxu0 %v825
    %1113 = vmatpush1.bf16.msra.mxu0 %v824
    %1114 = vmatprep.subr.bf16.mxu0 %v870
    %1115 = vmatpush2.bf16.msra.mxu0 %v869
    %1116 = vmatprep.subr.bf16.mxu0 %v867
    %1117 = vmatpush2.bf16.msra.mxu0 %v866
    %1118 = vmatprep.subr.bf16.mxu0 %v864
    %1119 = vmatpush2.bf16.msra.mxu0 %v863
    %1120 = vmatprep.subr.bf16.mxu0 %v861
    %1121 = vmatpush2.bf16.msra.mxu0 %v860
    %1122 = vmatprep.subr.bf16.mxu0 %v858
    %1123 = vmatpush2.bf16.msra.mxu0 %v857
    %1124 = vmatprep.subr.bf16.mxu0 %v855
    %1125 = vmatpush2.bf16.msra.mxu0 %v854
    %1126 = vmatprep.subr.bf16.mxu0 %v852
    %1127 = vmatpush2.bf16.msra.mxu0 %v851
    %1128 = vmatprep.subr.bf16.mxu0 %v849
    %1129 = vmatpush2.bf16.msra.mxu0 %v848
    %1130 = vmatprep.mubr.bf16.mxu0 %v38
    %1131 = vmatmul.mubr.bf16.gmra.mxu0 %v37
    %v1132 = vpop.f32.mrf.mxu0
    %v1133 = vadd.f32 %v1092, %v1132
    %v1134 = vpop.f32.mrf.mxu0
    %v1135 = vadd.f32 %v1094, %v1134
    %v1136 = vpop.f32.mrf.mxu0
    %v1137 = vpop.f32.mrf.mxu0
    %1138 = vdwg.mxu0
    %1139 = vmatprep.subr.bf16.mxu0 0
    %1140 = vmatpush1.bf16.msra.mxu0 %v751
    %1141 = vmatprep.subr.bf16.mxu0 0
    %1142 = vmatpush1.bf16.msra.mxu0 %v748
    %1143 = vmatprep.subr.bf16.mxu0 0
    %1144 = vmatpush1.bf16.msra.mxu0 %v745
    %1145 = vmatprep.subr.bf16.mxu0 0
    %1146 = vmatpush1.bf16.msra.mxu0 %v742
    %1147 = vmatprep.subr.bf16.mxu0 0
    %1148 = vmatpush1.bf16.msra.mxu0 %v739
    %1149 = vmatprep.subr.bf16.mxu0 0
    %1150 = vmatpush1.bf16.msra.mxu0 %v736
    %1151 = vmatprep.subr.bf16.mxu0 0
    %1152 = vmatpush1.bf16.msra.mxu0 %v733
    %1153 = vmatprep.subr.bf16.mxu0 0
    %1154 = vmatpush1.bf16.msra.mxu0 %v730
    %1155 = vmatprep.subr.bf16.mxu0 0
    %1156 = vmatpush2.bf16.msra.mxu0 %v775
    %1157 = vmatprep.subr.bf16.mxu0 0
    %1158 = vmatpush2.bf16.msra.mxu0 %v772
    %1159 = vmatprep.subr.bf16.mxu0 0
    %1160 = vmatpush2.bf16.msra.mxu0 %v769
    %1161 = vmatprep.subr.bf16.mxu0 0
    %1162 = vmatpush2.bf16.msra.mxu0 %v766
    %1163 = vmatprep.subr.bf16.mxu0 0
    %1164 = vmatpush2.bf16.msra.mxu0 %v763
    %1165 = vmatprep.subr.bf16.mxu0 0
    %1166 = vmatpush2.bf16.msra.mxu0 %v760
    %1167 = vmatprep.subr.bf16.mxu0 0
    %1168 = vmatpush2.bf16.msra.mxu0 %v757
    %1169 = vmatprep.subr.bf16.mxu0 0
    %1170 = vmatpush2.bf16.msra.mxu0 %v754
    %1171 = vmatprep.mubr.bf16.mxu0 %v34
    %1172 = vmatmul.mubr.bf16.gmra.mxu0 %v33
    %v1173 = vpop.f32.mrf.mxu0
    %v1174 = vadd.f32 %v244, %v1173
    %v1175 = vpop.f32.mrf.mxu0
    %v1176 = vpop.f32.mrf.mxu0
    %v1177 = vpop.f32.mrf.mxu0
    %1178 = vdwg.mxu0
    %1179 = vmatprep.subr.bf16.mxu0 0
    %1180 = vmatpush1.bf16.msra.mxu0 %v799
    %1181 = vmatprep.subr.bf16.mxu0 0
    %1182 = vmatpush1.bf16.msra.mxu0 %v796
    %1183 = vmatprep.subr.bf16.mxu0 0
    %1184 = vmatpush1.bf16.msra.mxu0 %v793
    %1185 = vmatprep.subr.bf16.mxu0 0
    %1186 = vmatpush1.bf16.msra.mxu0 %v790
    %1187 = vmatprep.subr.bf16.mxu0 0
    %1188 = vmatpush1.bf16.msra.mxu0 %v787
    %1189 = vmatprep.subr.bf16.mxu0 0
    %1190 = vmatpush1.bf16.msra.mxu0 %v784
    %1191 = vmatprep.subr.bf16.mxu0 0
    %1192 = vmatpush1.bf16.msra.mxu0 %v781
    %1193 = vmatprep.subr.bf16.mxu0 0
    %1194 = vmatpush1.bf16.msra.mxu0 %v778
    %1195 = vmatprep.subr.bf16.mxu0 0
    %1196 = vmatpush2.bf16.msra.mxu0 %v823
    %1197 = vmatprep.subr.bf16.mxu0 0
    %1198 = vmatpush2.bf16.msra.mxu0 %v820
    %1199 = vmatprep.subr.bf16.mxu0 0
    %1200 = vmatpush2.bf16.msra.mxu0 %v817
    %1201 = vmatprep.subr.bf16.mxu0 0
    %1202 = vmatpush2.bf16.msra.mxu0 %v814
    %1203 = vmatprep.subr.bf16.mxu0 0
    %1204 = vmatpush2.bf16.msra.mxu0 %v811
    %1205 = vmatprep.subr.bf16.mxu0 0
    %1206 = vmatpush2.bf16.msra.mxu0 %v808
    %1207 = vmatprep.subr.bf16.mxu0 0
    %1208 = vmatpush2.bf16.msra.mxu0 %v805
    %1209 = vmatprep.subr.bf16.mxu0 0
    %1210 = vmatpush2.bf16.msra.mxu0 %v802
    %1211 = vmatprep.mubr.bf16.mxu0 %v36
    %1212 = vmatmul.mubr.bf16.gmra.mxu0 %v35
    %v1213 = vpop.f32.mrf.mxu0
    %v1214 = vadd.f32 %v1174, %v1213
    %v1215 = vpop.f32.mrf.mxu0
    %v1216 = vpop.f32.mrf.mxu0
    %v1217 = vpop.f32.mrf.mxu0
    %1218 = vdwg.mxu0
    %1219 = vmatprep.subr.bf16.mxu0 0
    %1220 = vmatpush1.bf16.msra.mxu0 %v847
    %1221 = vmatprep.subr.bf16.mxu0 0
    %1222 = vmatpush1.bf16.msra.mxu0 %v844
    %1223 = vmatprep.subr.bf16.mxu0 0
    %1224 = vmatpush1.bf16.msra.mxu0 %v841
    %1225 = vmatprep.subr.bf16.mxu0 0
    %1226 = vmatpush1.bf16.msra.mxu0 %v838
    %1227 = vmatprep.subr.bf16.mxu0 0
    %1228 = vmatpush1.bf16.msra.mxu0 %v835
    %1229 = vmatprep.subr.bf16.mxu0 0
    %1230 = vmatpush1.bf16.msra.mxu0 %v832
    %1231 = vmatprep.subr.bf16.mxu0 0
    %1232 = vmatpush1.bf16.msra.mxu0 %v829
    %1233 = vmatprep.subr.bf16.mxu0 0
    %1234 = vmatpush1.bf16.msra.mxu0 %v826
    %1235 = vmatprep.subr.bf16.mxu0 0
    %1236 = vmatpush2.bf16.msra.mxu0 %v871
    %1237 = vmatprep.subr.bf16.mxu0 0
    %1238 = vmatpush2.bf16.msra.mxu0 %v868
    %1239 = vmatprep.subr.bf16.mxu0 0
    %1240 = vmatpush2.bf16.msra.mxu0 %v865
    %1241 = vmatprep.subr.bf16.mxu0 0
    %1242 = vmatpush2.bf16.msra.mxu0 %v862
    %1243 = vmatprep.subr.bf16.mxu0 0
    %1244 = vmatpush2.bf16.msra.mxu0 %v859
    %1245 = vmatprep.subr.bf16.mxu0 0
    %1246 = vmatpush2.bf16.msra.mxu0 %v856
    %1247 = vmatprep.subr.bf16.mxu0 0
    %1248 = vmatpush2.bf16.msra.mxu0 %v853
    %1249 = vmatprep.subr.bf16.mxu0 0
    %1250 = vmatpush2.bf16.msra.mxu0 %v850
    %1251 = vmatprep.mubr.bf16.mxu0 %v38
    %1252 = vmatmul.mubr.bf16.gmra.mxu0 %v37
    %v1253 = vpop.f32.mrf.mxu0
    %v1254 = vadd.f32 %v1214, %v1253
    %v1255 = vpop.f32.mrf.mxu0
    %v1256 = vpop.f32.mrf.mxu0
    %v1257 = vpop.f32.mrf.mxu0
    %1258 = vdwg.mxu0
    %1259 = vst [vmem:[%s3] sm:$0xff] %v1133
    %1260 = vst [vmem:[%s3 + $0x8] sm:$0xff] %v1135
    %1261 = vst [vmem:[%s3 + $0x10] sm:$0xff] %v1254
    // Predicated region
    $region18: #{_lambda_.26} parent=1 // pred_check
      _
    $region19: #{_lambda_.26} parent=1 // pred_check_branch
      %1263 = sbr.rel (0) target = $region21
    $region20: #{_lambda_.26} parent=1 // pred_region
      _
    $region21: #{_lambda_.26} parent=1 // pred_fallthru
      _
    // Predicated region
    $region22: #{_lambda_.26} parent=1 // pred_check
      _
    $region23: #{_lambda_.26} parent=1 // pred_check_branch
      %1265 = sbr.rel (0) target = $region25
    $region24: #{_lambda_.26} parent=1 // pred_region
      _
    $region25: #{_lambda_.26} parent=1 // pred_fallthru
      _
    %1266 = vsyncpa [#allocation3], 1

// kernel: _lambda_.27
$region0: #{_lambda_.27}
  #allocation0 [shape = 'u32[]', space=smem, size = 0x4, offset = 0x4, fixed_abs, tag = 'smem constant byte address 0x4 - core index']
  #allocation1 [shape = 'u32[144,128]{1,0:T(1,128)}', space=vmem, size = 0x12000, scoped, tag = 'internal scratch']
  %s0 = inlined_call_operand.vmem [shape: f32[2,8,384], index: 0, kind: input, shape index: {}]
  %s1 = inlined_call_operand.vmem [shape: f32[1,384], index: 1, kind: input, shape index: {}]
  %s2 = inlined_call_operand.vmem [shape: f32[1,384], index: 2, kind: input, shape index: {}]
  %s3 = inlined_call_operand.vmem [shape: bf16[384,1152], index: 3, kind: input, shape index: {}]
  %s4 = inlined_call_operand.vmem [shape: f32[1,1152], index: 4, kind: input, shape index: {}]
  %s5 = inlined_call_operand.vmem [shape: bf16[384,384], index: 5, kind: input, shape index: {}]
  %s6 = inlined_call_operand.vmem [shape: f32[1,384], index: 6, kind: input, shape index: {}]
  %s7 = inlined_call_operand.vmem [shape: f32[2,8,384], index: 7, kind: output, shape index: {}]
  %s8 = sld [smem:[#allocation0]]
  $region61: #{_lambda_.27} parent=0
    _
  %s10 = ssub.s32 1, %s8
  %s11 = scalar_select 0, %s10, %s8
  loop: start=0, step=1, limit=4
  $region2: #{_lambda_.27} parent=0 // loop_pre_header
    _
  $region3: #{_lambda_.27} parent=0 // loop_header
    %s13 = sphi 0, %s17
    %p14 = scmp.ge.s32.totalorder %s13, 4
    %s23 = sphi 0, %s25
    %s26 = sphi 0, %s23
    %s27 = sphi 0, %s26
    %s43 = sphi 0, %s27
    %s47 = sphi 0, %s47
    %s49 = sphi 0, %s47
    %s50 = sphi 0, %s49
    %s64 = sphi 0, %s50
    %s68 = sphi 0, %s68
    %s70 = sphi 0, %s68
    %s71 = sphi 0, %s70
    %s85 = sphi 0, %s71
    %s89 = sphi 0, %s89
    %s91 = sphi 0, %s89
    %s92 = sphi 0, %s91
    %s106 = sphi 0, %s92
    %s110 = sphi 0, %s110
    %s112 = sphi 0, %s110
    %s113 = sphi 0, %s112
    %s127 = sphi 0, %s113
    %s131 = sphi 0, %s131
    %s133 = sphi 0, %s131
    %s134 = sphi 0, %s133
    %s148 = sphi 0, %s134
    %s152 = sphi 0, %s152
    %s154 = sphi 0, %s152
    %s155 = sphi 0, %s154
    %s169 = sphi 0, %s155
    %s175 = sphi 0, %s177
    %s178 = sphi 0, %s175
    %s179 = sphi 0, %s178
    %s195 = sphi 0, %s179
  $region4: #{_lambda_.27} parent=0 // loop_header_branch
    %16 = sbr.rel (%p14) target = $region8
  $region5: #{_lambda_.27} parent=0 // loop_body
    %s18 = ssub.s32 %s13, 1
    %s19 = ssub.s32 %s13, 2
    %s20 = sadd.s32 %s13, 1
    %s21 = ssub.s32 %s13, %s20
    %p22 = scmp.eq.s32.totalorder %s21, 0
    %s24 = sadd.s32 %s23, 1
    %s25 = scalar_select %p22, %s23, %s24
    %p28 = pneg %p22
    %p29 = scmp.eq.s32.totalorder %s13, 1
    %p30 = por %p28, %p29
    %p31 = scmp.ne.s32.totalorder %s23, %s26
    %p32 = scmp.eq.s32.totalorder %s13, 0
    %p33 = por %p31, %p32
    %p34 = scmp.ne.s32.totalorder %s23, %s26
    %p35 = scmp.eq.s32.totalorder %s18, 1
    %p36 = por %p34, %p35
    %p37 = scmp.ne.s32.totalorder %s26, %s27
    %p38 = scmp.eq.s32.totalorder %s18, 0
    %p39 = por %p37, %p38
    %p40 = scmp.ne.s32.totalorder %s26, %s27
    %p41 = scmp.eq.s32.totalorder %s19, 1
    %p42 = por %p40, %p41
    %p44 = scmp.ne.s32.totalorder %s27, %s43
    %p45 = scmp.eq.s32.totalorder %s19, 0
    %p46 = por %p44, %p45
    %s48 = sadd.s32 %s47, 1
    %p51 = scmp.eq.s32.totalorder %s13, 1
    %p52 = scmp.ne.s32.totalorder %s47, %s49
    %p53 = scmp.eq.s32.totalorder %s13, 0
    %p54 = por %p52, %p53
    %p55 = scmp.ne.s32.totalorder %s47, %s49
    %p56 = scmp.eq.s32.totalorder %s18, 1
    %p57 = por %p55, %p56
    %p58 = scmp.ne.s32.totalorder %s49, %s50
    %p59 = scmp.eq.s32.totalorder %s18, 0
    %p60 = por %p58, %p59
    %p61 = scmp.ne.s32.totalorder %s49, %s50
    %p62 = scmp.eq.s32.totalorder %s19, 1
    %p63 = por %p61, %p62
    %p65 = scmp.ne.s32.totalorder %s50, %s64
    %p66 = scmp.eq.s32.totalorder %s19, 0
    %p67 = por %p65, %p66
    %s69 = sadd.s32 %s68, 1
    %p72 = scmp.eq.s32.totalorder %s13, 1
    %p73 = scmp.ne.s32.totalorder %s68, %s70
    %p74 = scmp.eq.s32.totalorder %s13, 0
    %p75 = por %p73, %p74
    %p76 = scmp.ne.s32.totalorder %s68, %s70
    %p77 = scmp.eq.s32.totalorder %s18, 1
    %p78 = por %p76, %p77
    %p79 = scmp.ne.s32.totalorder %s70, %s71
    %p80 = scmp.eq.s32.totalorder %s18, 0
    %p81 = por %p79, %p80
    %p82 = scmp.ne.s32.totalorder %s70, %s71
    %p83 = scmp.eq.s32.totalorder %s19, 1
    %p84 = por %p82, %p83
    %p86 = scmp.ne.s32.totalorder %s71, %s85
    %p87 = scmp.eq.s32.totalorder %s19, 0
    %p88 = por %p86, %p87
    %s90 = sadd.s32 %s89, 1
    %p93 = scmp.eq.s32.totalorder %s13, 1
    %p94 = scmp.ne.s32.totalorder %s89, %s91
    %p95 = scmp.eq.s32.totalorder %s13, 0
    %p96 = por %p94, %p95
    %p97 = scmp.ne.s32.totalorder %s89, %s91
    %p98 = scmp.eq.s32.totalorder %s18, 1
    %p99 = por %p97, %p98
    %p100 = scmp.ne.s32.totalorder %s91, %s92
    %p101 = scmp.eq.s32.totalorder %s18, 0
    %p102 = por %p100, %p101
    %p103 = scmp.ne.s32.totalorder %s91, %s92
    %p104 = scmp.eq.s32.totalorder %s19, 1
    %p105 = por %p103, %p104
    %p107 = scmp.ne.s32.totalorder %s92, %s106
    %p108 = scmp.eq.s32.totalorder %s19, 0
    %p109 = por %p107, %p108
    %s111 = sadd.s32 %s110, 1
    %p114 = scmp.eq.s32.totalorder %s13, 1
    %p115 = scmp.ne.s32.totalorder %s110, %s112
    %p116 = scmp.eq.s32.totalorder %s13, 0
    %p117 = por %p115, %p116
    %p118 = scmp.ne.s32.totalorder %s110, %s112
    %p119 = scmp.eq.s32.totalorder %s18, 1
    %p120 = por %p118, %p119
    %p121 = scmp.ne.s32.totalorder %s112, %s113
    %p122 = scmp.eq.s32.totalorder %s18, 0
    %p123 = por %p121, %p122
    %p124 = scmp.ne.s32.totalorder %s112, %s113
    %p125 = scmp.eq.s32.totalorder %s19, 1
    %p126 = por %p124, %p125
    %p128 = scmp.ne.s32.totalorder %s113, %s127
    %p129 = scmp.eq.s32.totalorder %s19, 0
    %p130 = por %p128, %p129
    %s132 = sadd.s32 %s131, 1
    %p135 = scmp.eq.s32.totalorder %s13, 1
    %p136 = scmp.ne.s32.totalorder %s131, %s133
    %p137 = scmp.eq.s32.totalorder %s13, 0
    %p138 = por %p136, %p137
    %p139 = scmp.ne.s32.totalorder %s131, %s133
    %p140 = scmp.eq.s32.totalorder %s18, 1
    %p141 = por %p139, %p140
    %p142 = scmp.ne.s32.totalorder %s133, %s134
    %p143 = scmp.eq.s32.totalorder %s18, 0
    %p144 = por %p142, %p143
    %p145 = scmp.ne.s32.totalorder %s133, %s134
    %p146 = scmp.eq.s32.totalorder %s19, 1
    %p147 = por %p145, %p146
    %p149 = scmp.ne.s32.totalorder %s134, %s148
    %p150 = scmp.eq.s32.totalorder %s19, 0
    %p151 = por %p149, %p150
    %s153 = sadd.s32 %s152, 1
    %p156 = scmp.eq.s32.totalorder %s13, 1
    %p157 = scmp.ne.s32.totalorder %s152, %s154
    %p158 = scmp.eq.s32.totalorder %s13, 0
    %p159 = por %p157, %p158
    %p160 = scmp.ne.s32.totalorder %s152, %s154
    %p161 = scmp.eq.s32.totalorder %s18, 1
    %p162 = por %p160, %p161
    %p163 = scmp.ne.s32.totalorder %s154, %s155
    %p164 = scmp.eq.s32.totalorder %s18, 0
    %p165 = por %p163, %p164
    %p166 = scmp.ne.s32.totalorder %s154, %s155
    %p167 = scmp.eq.s32.totalorder %s19, 1
    %p168 = por %p166, %p167
    %p170 = scmp.ne.s32.totalorder %s155, %s169
    %p171 = scmp.eq.s32.totalorder %s19, 0
    %p172 = por %p170, %p171
    %s173 = ssub.s32 %s13, %s20
    %p174 = scmp.eq.s32.totalorder %s173, 0
    %s176 = sadd.s32 %s175, 1
    %s177 = scalar_select %p174, %s175, %s176
    %p180 = pneg %p174
    %p181 = scmp.eq.s32.totalorder %s13, 1
    %p182 = por %p180, %p181
    %p183 = scmp.ne.s32.totalorder %s175, %s178
    %p184 = scmp.eq.s32.totalorder %s13, 0
    %p185 = por %p183, %p184
    %p186 = scmp.ne.s32.totalorder %s175, %s178
    %p187 = scmp.eq.s32.totalorder %s18, 1
    %p188 = por %p186, %p187
    %p189 = scmp.ne.s32.totalorder %s178, %s179
    %p190 = scmp.eq.s32.totalorder %s18, 0
    %p191 = por %p189, %p190
    %p192 = scmp.ne.s32.totalorder %s178, %s179
    %p193 = scmp.eq.s32.totalorder %s19, 1
    %p194 = por %p192, %p193
    %p196 = scmp.ne.s32.totalorder %s179, %s195
    %p197 = scmp.eq.s32.totalorder %s19, 0
    %p198 = por %p196, %p197
    %p199 = scmp.le.s32.totalorder 1, %s13
    %p200 = scmp.lt.s32.totalorder %s13, 3
    %p201 = pnand %p199, %p200
    %p202 = pneg %p201
    // Predicated region
    $region9: #{_lambda_.27} parent=5 // pred_check
      _
    $region10: #{_lambda_.27} parent=5 // pred_check_branch
      %204 = sbr.rel (%p201) target = $region12
    $region11: #{_lambda_.27} parent=5 // pred_region
      %s205 = ssub.s32 %s13, 1
      // Predicated region
      $region13: #{_lambda_.27} parent=11 // pred_check
        %p206 = pneg %p60
      $region14: #{_lambda_.27} parent=11 // pred_check_branch
        %208 = sbr.rel (%p206) target = $region16
      $region15: #{_lambda_.27} parent=11 // pred_region
        _
      $region16: #{_lambda_.27} parent=11 // pred_fallthru
        _
      // Predicated region
      $region17: #{_lambda_.27} parent=11 // pred_check
        %p209 = pneg %p81
      $region18: #{_lambda_.27} parent=11 // pred_check_branch
        %211 = sbr.rel (%p209) target = $region20
      $region19: #{_lambda_.27} parent=11 // pred_region
        _
      $region20: #{_lambda_.27} parent=11 // pred_fallthru
        _
      // Predicated region
      $region21: #{_lambda_.27} parent=11 // pred_check
        %p212 = pneg %p102
      $region22: #{_lambda_.27} parent=11 // pred_check_branch
        %214 = sbr.rel (%p212) target = $region24
      $region23: #{_lambda_.27} parent=11 // pred_region
        _
      $region24: #{_lambda_.27} parent=11 // pred_fallthru
        _
      // Predicated region
      $region25: #{_lambda_.27} parent=11 // pred_check
        %p215 = pneg %p123
      $region26: #{_lambda_.27} parent=11 // pred_check_branch
        %217 = sbr.rel (%p215) target = $region28
      $region27: #{_lambda_.27} parent=11 // pred_region
        _
      $region28: #{_lambda_.27} parent=11 // pred_fallthru
        _
      // Predicated region
      $region29: #{_lambda_.27} parent=11 // pred_check
        %p218 = pneg %p144
      $region30: #{_lambda_.27} parent=11 // pred_check_branch
        %220 = sbr.rel (%p218) target = $region32
      $region31: #{_lambda_.27} parent=11 // pred_region
        _
      $region32: #{_lambda_.27} parent=11 // pred_fallthru
        _
      // Predicated region
      $region33: #{_lambda_.27} parent=11 // pred_check
        %p221 = pneg %p165
      $region34: #{_lambda_.27} parent=11 // pred_check_branch
        %223 = sbr.rel (%p221) target = $region36
      $region35: #{_lambda_.27} parent=11 // pred_region
        _
      $region36: #{_lambda_.27} parent=11 // pred_fallthru
        _
    $region12: #{_lambda_.27} parent=5 // pred_fallthru
      _
    %p224 = scmp.lt.s32.totalorder %s13, 2
    // Predicated region
    $region37: #{_lambda_.27} parent=5 // pred_check
      %p225 = pneg %p224
    $region38: #{_lambda_.27} parent=5 // pred_check_branch
      %227 = sbr.rel (%p225) target = $region40
    $region39: #{_lambda_.27} parent=5 // pred_region
      // Predicated region
      $region41: #{_lambda_.27} parent=39 // pred_check
        %p228 = pneg %p33
      $region42: #{_lambda_.27} parent=39 // pred_check_branch
        %230 = sbr.rel (%p228) target = $region44
      $region43: #{_lambda_.27} parent=39 // pred_region
        %p231 = scmp.lt.s32.totalorder %s13, 1
        %s232 = scalar_select %p231, %s13, 1
        %s233 = smul.addr %s232, 3
        %s234 = smul.addr %s233, 8
        %s235 = scalar_lea.vmem %s0, %s234
      $region44: #{_lambda_.27} parent=39 // pred_fallthru
        _
    $region40: #{_lambda_.27} parent=5 // pred_fallthru
      _
    %p236 = scmp.le.s32.totalorder 1, %s13
    %p237 = scmp.lt.s32.totalorder %s13, 3
    %p238 = pnand %p236, %p237
    %p239 = pneg %p238
    // Predicated region
    $region45: #{_lambda_.27} parent=5 // pred_check
      _
    $region46: #{_lambda_.27} parent=5 // pred_check_branch
      %241 = sbr.rel (%p238) target = $region48
    $region47: #{_lambda_.27} parent=5 // pred_region
      %s242 = ssub.s32 %s13, 1
      %p243 = scmp.lt.s32.totalorder %s18, 1
      %s244 = scalar_select %p243, %s18, 1
      %s245 = smul.addr %s244, 3
      %s246 = smul.addr %s245, 8
      %s247 = scalar_lea.vmem %s0, %s246
      %p248 = pneg %p39
      %p249 = pneg %p36
      %p250 = pneg %p60
      %p251 = pneg %p57
      %p252 = pneg %p81
      %p253 = pneg %p78
      %p254 = pneg %p102
      %p255 = pneg %p99
      %p256 = pneg %p123
      %p257 = pneg %p120
      %p258 = pneg %p144
      %p259 = pneg %p141
      %p260 = pneg %p165
      %p261 = pneg %p162
      %p262 = pneg %p191
      %p263 = pneg %p188
      %p264 = scmp.lt.s32.totalorder %s18, 1
      %s265 = scalar_select %p264, %s18, 1
      %s266 = smul.addr %s265, 3
      %s267 = smul.addr %s266, 8
      %s268 = scalar_lea.vmem %s7, %s267
      %p269 = scmp.lt.s32.totalorder %s18, 1
      %s270 = scalar_select %p269, %s18, 1
      %s271 = smul.addr %s270, 3
      %s272 = smul.addr %s271, 8
      %s273 = scalar_lea.vmem %s0, %s272
      %p274 = scmp.lt.s32.totalorder %s18, 1
      %s275 = scalar_select %p274, %s18, 1
      %s276 = smul.addr %s275, 3
      %s277 = smul.addr %s276, 8
      %s278 = scalar_lea.vmem %s7, %s277
      %v280 = vld [vmem:[%s273] sm:$0xff]
      %v281 = vld [vmem:[%s273 + $0x8] sm:$0xff]
      %v282 = vld [vmem:[%s273 + $0x10] sm:$0xff]
      %v283 = vld [vmem:[%s1] sm:$0x7]
      %v284 = vld [vmem:[%s2] sm:$0x7]
      %v285 = vadd.f32 %v280, %v281
      %v286 = vadd.f32 %v285, %v282
      %287 = vadd.xlane.f32.xlu0 %v286
      %v288 = vpop.xlane.xlu0 %287
      %v289 = vrcp.pop 384.0
      %v290 = vmul.f32 %v288, %v289
      %v291 = vsub.f32 %v280, %v290
      %v292 = vsub.f32 %v281, %v290
      %v293 = vsub.f32 %v282, %v290
      %v294 = vmul.f32 %v291, %v291
      %v295 = vmul.f32 %v292, %v292
      %v296 = vmul.f32 %v293, %v293
      %v297 = vadd.f32 %v294, %v295
      %v298 = vadd.f32 %v297, %v296
      %299 = vadd.xlane.f32.xlu0 %v298
      %v300 = vpop.xlane.xlu0 %299
      %v301 = vmul.f32 %v300, %v289
      %v302 = vadd.f32 %v301, 1e-05
      %v303 = vrsqrt.pop %v302
      %v304 = vmul.f32 %v291, %v303
      %v305 = vmul.f32 %v292, %v303
      %v306 = vmul.f32 %v293, %v303
      %v308 = vlaneseq
      %v309 = vshrl.u32 %v308, 7
      %v310 = vsub.s32 0, %v309
      %v311 = vrot.slane %v283, %v310
      %v312 = vlaneseq
      %v313 = vshrl.u32 %v312, 7
      %v314 = vsub.s32 1, %v313
      %v315 = vrot.slane %v283, %v314
      %v316 = vlaneseq
      %v317 = vshrl.u32 %v316, 7
      %v318 = vsub.s32 2, %v317
      %v319 = vrot.slane %v283, %v318
      %v323 = vmul.f32 %v304, %v311
      %v324 = vmul.f32 %v305, %v315
      %v325 = vmul.f32 %v306, %v319
      %v327 = vlaneseq
      %v328 = vshrl.u32 %v327, 7
      %v329 = vsub.s32 0, %v328
      %v330 = vrot.slane %v284, %v329
      %v331 = vlaneseq
      %v332 = vshrl.u32 %v331, 7
      %v333 = vsub.s32 1, %v332
      %v334 = vrot.slane %v284, %v333
      %v335 = vlaneseq
      %v336 = vshrl.u32 %v335, 7
      %v337 = vsub.s32 2, %v336
      %v338 = vrot.slane %v284, %v337
      %v342 = vadd.f32 %v323, %v330
      %v343 = vadd.f32 %v324, %v334
      %v344 = vadd.f32 %v325, %v338
      %v345 = vpack.c.bf16 %v342, %v342
      %v346 = vpack.c.bf16 %v343, %v343
      %v347 = vpack.c.bf16 %v344, %v344
      %v348 = vld [vmem:[%s3] sm:$0xff]
      %v349 = vld [vmem:[%s3 + $0x8] sm:$0xff]
      %v350 = vld [vmem:[%s3 + $0x10] sm:$0xff]
      %v351 = vld [vmem:[%s3 + $0x18] sm:$0xff]
      %v352 = vld [vmem:[%s3 + $0x20] sm:$0xf]
      %v353 = vld [vmem:[%s3 + $0x24] sm:$0xff]
      %v354 = vld [vmem:[%s3 + $0x2c] sm:$0xff]
      %v355 = vld [vmem:[%s3 + $0x34] sm:$0xff]
      %v356 = vld [vmem:[%s3 + $0x3c] sm:$0xff]
      %v357 = vld [vmem:[%s3 + $0x44] sm:$0xf]
      %v358 = vld [vmem:[%s3 + $0x48] sm:$0xff]
      %v359 = vld [vmem:[%s3 + $0x50] sm:$0xff]
      %v360 = vld [vmem:[%s3 + $0x58] sm:$0xff]
      %v361 = vld [vmem:[%s3 + $0x60] sm:$0xff]
      %v362 = vld [vmem:[%s3 + $0x68] sm:$0xf]
      %v363 = vld [vmem:[%s3 + $0x6c] sm:$0xff]
      %v364 = vld [vmem:[%s3 + $0x74] sm:$0xff]
      %v365 = vld [vmem:[%s3 + $0x7c] sm:$0xff]
      %v366 = vld [vmem:[%s3 + $0x84] sm:$0xff]
      %v367 = vld [vmem:[%s3 + $0x8c] sm:$0xf]
      %v368 = vld [vmem:[%s3 + $0x90] sm:$0xff]
      %v369 = vld [vmem:[%s3 + $0x98] sm:$0xff]
      %v370 = vld [vmem:[%s3 + $0xa0] sm:$0xff]
      %v371 = vld [vmem:[%s3 + $0xa8] sm:$0xff]
      %v372 = vld [vmem:[%s3 + $0xb0] sm:$0xf]
      %v373 = vld [vmem:[%s3 + $0xb4] sm:$0xff]
      %v374 = vld [vmem:[%s3 + $0xbc] sm:$0xff]
      %v375 = vld [vmem:[%s3 + $0xc4] sm:$0xff]
      %v376 = vld [vmem:[%s3 + $0xcc] sm:$0xff]
      %v377 = vld [vmem:[%s3 + $0xd4] sm:$0xf]
      %v378 = vld [vmem:[%s3 + $0xd8] sm:$0xff]
      %v379 = vld [vmem:[%s3 + $0xe0] sm:$0xff]
      %v380 = vld [vmem:[%s3 + $0xe8] sm:$0xff]
      %v381 = vld [vmem:[%s3 + $0xf0] sm:$0xff]
      %v382 = vld [vmem:[%s3 + $0xf8] sm:$0xf]
      %v383 = vld [vmem:[%s3 + $0xfc] sm:$0xff]
      %v384 = vld [vmem:[%s3 + $0x104] sm:$0xff]
      %v385 = vld [vmem:[%s3 + $0x10c] sm:$0xff]
      %v386 = vld [vmem:[%s3 + $0x114] sm:$0xff]
      %v387 = vld [vmem:[%s3 + $0x11c] sm:$0xf]
      %v388 = vld [vmem:[%s3 + $0x120] sm:$0xff]
      %v389 = vld [vmem:[%s3 + $0x128] sm:$0xff]
      %v390 = vld [vmem:[%s3 + $0x130] sm:$0xff]
      %v391 = vld [vmem:[%s3 + $0x138] sm:$0xff]
      %v392 = vld [vmem:[%s3 + $0x140] sm:$0xf]
      %v393 = vld [vmem:[%s3 + $0x144] sm:$0xff]
      %v394 = vld [vmem:[%s3 + $0x14c] sm:$0xff]
      %v395 = vld [vmem:[%s3 + $0x154] sm:$0xff]
      %v396 = vld [vmem:[%s3 + $0x15c] sm:$0xff]
      %v397 = vld [vmem:[%s3 + $0x164] sm:$0xf]
      %v398 = vld [vmem:[%s3 + $0x168] sm:$0xff]
      %v399 = vld [vmem:[%s3 + $0x170] sm:$0xff]
      %v400 = vld [vmem:[%s3 + $0x178] sm:$0xff]
      %v401 = vld [vmem:[%s3 + $0x180] sm:$0xff]
      %v402 = vld [vmem:[%s3 + $0x188] sm:$0xf]
      %v403 = vld [vmem:[%s3 + $0x18c] sm:$0xff]
      %v404 = vld [vmem:[%s3 + $0x194] sm:$0xff]
      %v405 = vld [vmem:[%s3 + $0x19c] sm:$0xff]
      %v406 = vld [vmem:[%s3 + $0x1a4] sm:$0xff]
      %v407 = vld [vmem:[%s3 + $0x1ac] sm:$0xf]
      %v408 = vld [vmem:[%s3 + $0x1b0] sm:$0xff]
      %v409 = vld [vmem:[%s3 + $0x1b8] sm:$0xff]
      %v410 = vld [vmem:[%s3 + $0x1c0] sm:$0xff]
      %v411 = vld [vmem:[%s3 + $0x1c8] sm:$0xff]
      %v412 = vld [vmem:[%s3 + $0x1d0] sm:$0xf]
      %v413 = vld [vmem:[%s3 + $0x1d4] sm:$0xff]
      %v414 = vld [vmem:[%s3 + $0x1dc] sm:$0xff]
      %v415 = vld [vmem:[%s3 + $0x1e4] sm:$0xff]
      %v416 = vld [vmem:[%s3 + $0x1ec] sm:$0xff]
      %v417 = vld [vmem:[%s3 + $0x1f4] sm:$0xf]
      %v418 = vld [vmem:[%s3 + $0x1f8] sm:$0xff]
      %v419 = vld [vmem:[%s3 + $0x200] sm:$0xff]
      %v420 = vld [vmem:[%s3 + $0x208] sm:$0xff]
      %v421 = vld [vmem:[%s3 + $0x210] sm:$0xff]
      %v422 = vld [vmem:[%s3 + $0x218] sm:$0xf]
      %v423 = vld [vmem:[%s3 + $0x21c] sm:$0xff]
      %v424 = vld [vmem:[%s3 + $0x224] sm:$0xff]
      %v425 = vld [vmem:[%s3 + $0x22c] sm:$0xff]
      %v426 = vld [vmem:[%s3 + $0x234] sm:$0xff]
      %v427 = vld [vmem:[%s3 + $0x23c] sm:$0xf]
      %v428 = vld [vmem:[%s3 + $0x240] sm:$0xff]
      %v429 = vld [vmem:[%s3 + $0x248] sm:$0xff]
      %v430 = vld [vmem:[%s3 + $0x250] sm:$0xff]
      %v431 = vld [vmem:[%s3 + $0x258] sm:$0xff]
      %v432 = vld [vmem:[%s3 + $0x260] sm:$0xf]
      %v433 = vld [vmem:[%s3 + $0x264] sm:$0xff]
      %v434 = vld [vmem:[%s3 + $0x26c] sm:$0xff]
      %v435 = vld [vmem:[%s3 + $0x274] sm:$0xff]
      %v436 = vld [vmem:[%s3 + $0x27c] sm:$0xff]
      %v437 = vld [vmem:[%s3 + $0x284] sm:$0xf]
      %v438 = vld [vmem:[%s3 + $0x288] sm:$0xff]
      %v439 = vld [vmem:[%s3 + $0x290] sm:$0xff]
      %v440 = vld [vmem:[%s3 + $0x298] sm:$0xff]
      %v441 = vld [vmem:[%s3 + $0x2a0] sm:$0xff]
      %v442 = vld [vmem:[%s3 + $0x2a8] sm:$0xf]
      %v443 = vld [vmem:[%s3 + $0x2ac] sm:$0xff]
      %v444 = vld [vmem:[%s3 + $0x2b4] sm:$0xff]
      %v445 = vld [vmem:[%s3 + $0x2bc] sm:$0xff]
      %v446 = vld [vmem:[%s3 + $0x2c4] sm:$0xff]
      %v447 = vld [vmem:[%s3 + $0x2cc] sm:$0xf]
      %v448 = vld [vmem:[%s3 + $0x2d0] sm:$0xff]
      %v449 = vld [vmem:[%s3 + $0x2d8] sm:$0xff]
      %v450 = vld [vmem:[%s3 + $0x2e0] sm:$0xff]
      %v451 = vld [vmem:[%s3 + $0x2e8] sm:$0xff]
      %v452 = vld [vmem:[%s3 + $0x2f0] sm:$0xf]
      %v453 = vld [vmem:[%s3 + $0x2f4] sm:$0xff]
      %v454 = vld [vmem:[%s3 + $0x2fc] sm:$0xff]
      %v455 = vld [vmem:[%s3 + $0x304] sm:$0xff]
      %v456 = vld [vmem:[%s3 + $0x30c] sm:$0xff]
      %v457 = vld [vmem:[%s3 + $0x314] sm:$0xf]
      %v458 = vld [vmem:[%s3 + $0x318] sm:$0xff]
      %v459 = vld [vmem:[%s3 + $0x320] sm:$0xff]
      %v460 = vld [vmem:[%s3 + $0x328] sm:$0xff]
      %v461 = vld [vmem:[%s3 + $0x330] sm:$0xff]
      %v462 = vld [vmem:[%s3 + $0x338] sm:$0xf]
      %v463 = vld [vmem:[%s3 + $0x33c] sm:$0xff]
      %v464 = vld [vmem:[%s3 + $0x344] sm:$0xff]
      %v465 = vld [vmem:[%s3 + $0x34c] sm:$0xff]
      %v466 = vld [vmem:[%s3 + $0x354] sm:$0xff]
      %v467 = vld [vmem:[%s3 + $0x35c] sm:$0xf]
      %v468 = vld [vmem:[%s3 + $0x360] sm:$0xff]
      %v469 = vld [vmem:[%s3 + $0x368] sm:$0xff]
      %v470 = vld [vmem:[%s3 + $0x370] sm:$0xff]
      %v471 = vld [vmem:[%s3 + $0x378] sm:$0xff]
      %v472 = vld [vmem:[%s3 + $0x380] sm:$0xf]
      %v473 = vld [vmem:[%s3 + $0x384] sm:$0xff]
      %v474 = vld [vmem:[%s3 + $0x38c] sm:$0xff]
      %v475 = vld [vmem:[%s3 + $0x394] sm:$0xff]
      %v476 = vld [vmem:[%s3 + $0x39c] sm:$0xff]
      %v477 = vld [vmem:[%s3 + $0x3a4] sm:$0xf]
      %v478 = vld [vmem:[%s3 + $0x3a8] sm:$0xff]
      %v479 = vld [vmem:[%s3 + $0x3b0] sm:$0xff]
      %v480 = vld [vmem:[%s3 + $0x3b8] sm:$0xff]
      %v481 = vld [vmem:[%s3 + $0x3c0] sm:$0xff]
      %v482 = vld [vmem:[%s3 + $0x3c8] sm:$0xf]
      %v483 = vld [vmem:[%s3 + $0x3cc] sm:$0xff]
      %v484 = vld [vmem:[%s3 + $0x3d4] sm:$0xff]
      %v485 = vld [vmem:[%s3 + $0x3dc] sm:$0xff]
      %v486 = vld [vmem:[%s3 + $0x3e4] sm:$0xff]
      %v487 = vld [vmem:[%s3 + $0x3ec] sm:$0xf]
      %v488 = vld [vmem:[%s3 + $0x3f0] sm:$0xff]
      %v489 = vld [vmem:[%s3 + $0x3f8] sm:$0xff]
      %v490 = vld [vmem:[%s3 + $0x400] sm:$0xff]
      %v491 = vld [vmem:[%s3 + $0x408] sm:$0xff]
      %v492 = vld [vmem:[%s3 + $0x410] sm:$0xf]
      %v493 = vld [vmem:[%s3 + $0x414] sm:$0xff]
      %v494 = vld [vmem:[%s3 + $0x41c] sm:$0xff]
      %v495 = vld [vmem:[%s3 + $0x424] sm:$0xff]
      %v496 = vld [vmem:[%s3 + $0x42c] sm:$0xff]
      %v497 = vld [vmem:[%s3 + $0x434] sm:$0xf]
      %v498 = vld [vmem:[%s3 + $0x438] sm:$0xff]
      %v499 = vld [vmem:[%s3 + $0x440] sm:$0xff]
      %v500 = vld [vmem:[%s3 + $0x448] sm:$0xff]
      %v501 = vld [vmem:[%s3 + $0x450] sm:$0xff]
      %v502 = vld [vmem:[%s3 + $0x458] sm:$0xf]
      %v503 = vld [vmem:[%s3 + $0x45c] sm:$0xff]
      %v504 = vld [vmem:[%s3 + $0x464] sm:$0xff]
      %v505 = vld [vmem:[%s3 + $0x46c] sm:$0xff]
      %v506 = vld [vmem:[%s3 + $0x474] sm:$0xff]
      %v507 = vld [vmem:[%s3 + $0x47c] sm:$0xf]
      %v508 = vld [vmem:[%s3 + $0x480] sm:$0xff]
      %v509 = vld [vmem:[%s3 + $0x488] sm:$0xff]
      %v510 = vld [vmem:[%s3 + $0x490] sm:$0xff]
      %v511 = vld [vmem:[%s3 + $0x498] sm:$0xff]
      %v512 = vld [vmem:[%s3 + $0x4a0] sm:$0xf]
      %v513 = vld [vmem:[%s3 + $0x4a4] sm:$0xff]
      %v514 = vld [vmem:[%s3 + $0x4ac] sm:$0xff]
      %v515 = vld [vmem:[%s3 + $0x4b4] sm:$0xff]
      %v516 = vld [vmem:[%s3 + $0x4bc] sm:$0xff]
      %v517 = vld [vmem:[%s3 + $0x4c4] sm:$0xf]
      %v518 = vld [vmem:[%s3 + $0x4c8] sm:$0xff]
      %v519 = vld [vmem:[%s3 + $0x4d0] sm:$0xff]
      %v520 = vld [vmem:[%s3 + $0x4d8] sm:$0xff]
      %v521 = vld [vmem:[%s3 + $0x4e0] sm:$0xff]
      %v522 = vld [vmem:[%s3 + $0x4e8] sm:$0xf]
      %v523 = vld [vmem:[%s3 + $0x4ec] sm:$0xff]
      %v524 = vld [vmem:[%s3 + $0x4f4] sm:$0xff]
      %v525 = vld [vmem:[%s3 + $0x4fc] sm:$0xff]
      %v526 = vld [vmem:[%s3 + $0x504] sm:$0xff]
      %v527 = vld [vmem:[%s3 + $0x50c] sm:$0xf]
      %v528 = vld [vmem:[%s3 + $0x510] sm:$0xff]
      %v529 = vld [vmem:[%s3 + $0x518] sm:$0xff]
      %v530 = vld [vmem:[%s3 + $0x520] sm:$0xff]
      %v531 = vld [vmem:[%s3 + $0x528] sm:$0xff]
      %v532 = vld [vmem:[%s3 + $0x530] sm:$0xf]
      %v533 = vld [vmem:[%s3 + $0x534] sm:$0xff]
      %v534 = vld [vmem:[%s3 + $0x53c] sm:$0xff]
      %v535 = vld [vmem:[%s3 + $0x544] sm:$0xff]
      %v536 = vld [vmem:[%s3 + $0x54c] sm:$0xff]
      %v537 = vld [vmem:[%s3 + $0x554] sm:$0xf]
      %v538 = vld [vmem:[%s3 + $0x558] sm:$0xff]
      %v539 = vld [vmem:[%s3 + $0x560] sm:$0xff]
      %v540 = vld [vmem:[%s3 + $0x568] sm:$0xff]
      %v541 = vld [vmem:[%s3 + $0x570] sm:$0xff]
      %v542 = vld [vmem:[%s3 + $0x578] sm:$0xf]
      %v543 = vld [vmem:[%s3 + $0x57c] sm:$0xff]
      %v544 = vld [vmem:[%s3 + $0x584] sm:$0xff]
      %v545 = vld [vmem:[%s3 + $0x58c] sm:$0xff]
      %v546 = vld [vmem:[%s3 + $0x594] sm:$0xff]
      %v547 = vld [vmem:[%s3 + $0x59c] sm:$0xf]
      %v548 = vld [vmem:[%s3 + $0x5a0] sm:$0xff]
      %v549 = vld [vmem:[%s3 + $0x5a8] sm:$0xff]
      %v550 = vld [vmem:[%s3 + $0x5b0] sm:$0xff]
      %v551 = vld [vmem:[%s3 + $0x5b8] sm:$0xff]
      %v552 = vld [vmem:[%s3 + $0x5c0] sm:$0xf]
      %v553 = vld [vmem:[%s3 + $0x5c4] sm:$0xff]
      %v554 = vld [vmem:[%s3 + $0x5cc] sm:$0xff]
      %v555 = vld [vmem:[%s3 + $0x5d4] sm:$0xff]
      %v556 = vld [vmem:[%s3 + $0x5dc] sm:$0xff]
      %v557 = vld [vmem:[%s3 + $0x5e4] sm:$0xf]
      %v558 = vld [vmem:[%s3 + $0x5e8] sm:$0xff]
      %v559 = vld [vmem:[%s3 + $0x5f0] sm:$0xff]
      %v560 = vld [vmem:[%s3 + $0x5f8] sm:$0xff]
      %v561 = vld [vmem:[%s3 + $0x600] sm:$0xff]
      %v562 = vld [vmem:[%s3 + $0x608] sm:$0xf]
      %v563 = vld [vmem:[%s3 + $0x60c] sm:$0xff]
      %v564 = vld [vmem:[%s3 + $0x614] sm:$0xff]
      %v565 = vld [vmem:[%s3 + $0x61c] sm:$0xff]
      %v566 = vld [vmem:[%s3 + $0x624] sm:$0xff]
      %v567 = vld [vmem:[%s3 + $0x62c] sm:$0xf]
      %v568 = vld [vmem:[%s3 + $0x630] sm:$0xff]
      %v569 = vld [vmem:[%s3 + $0x638] sm:$0xff]
      %v570 = vld [vmem:[%s3 + $0x640] sm:$0xff]
      %v571 = vld [vmem:[%s3 + $0x648] sm:$0xff]
      %v572 = vld [vmem:[%s3 + $0x650] sm:$0xf]
      %v573 = vld [vmem:[%s3 + $0x654] sm:$0xff]
      %v574 = vld [vmem:[%s3 + $0x65c] sm:$0xff]
      %v575 = vld [vmem:[%s3 + $0x664] sm:$0xff]
      %v576 = vld [vmem:[%s3 + $0x66c] sm:$0xff]
      %v577 = vld [vmem:[%s3 + $0x674] sm:$0xf]
      %v578 = vld [vmem:[%s3 + $0x678] sm:$0xff]
      %v579 = vld [vmem:[%s3 + $0x680] sm:$0xff]
      %v580 = vld [vmem:[%s3 + $0x688] sm:$0xff]
      %v581 = vld [vmem:[%s3 + $0x690] sm:$0xff]
      %v582 = vld [vmem:[%s3 + $0x698] sm:$0xf]
      %v583 = vld [vmem:[%s3 + $0x69c] sm:$0xff]
      %v584 = vld [vmem:[%s3 + $0x6a4] sm:$0xff]
      %v585 = vld [vmem:[%s3 + $0x6ac] sm:$0xff]
      %v586 = vld [vmem:[%s3 + $0x6b4] sm:$0xff]
      %v587 = vld [vmem:[%s3 + $0x6bc] sm:$0xf]
      %v588 = vld [vmem:[%s4] sm:$0xff]
      %v589 = vld [vmem:[%s4 + $0x8] sm:$0x1]
      %v592 = vlaneseq
      %v593 = vshrl.u32 %v592, 7
      %v594 = vsub.s32 0, %v593
      %v595 = vrot.slane %v588, %v594
      %v596 = vlaneseq
      %v597 = vshrl.u32 %v596, 7
      %v598 = vsub.s32 1, %v597
      %v599 = vrot.slane %v588, %v598
      %v600 = vlaneseq
      %v601 = vshrl.u32 %v600, 7
      %v602 = vsub.s32 2, %v601
      %v603 = vrot.slane %v588, %v602
      %v604 = vlaneseq
      %v605 = vshrl.u32 %v604, 7
      %v606 = vsub.s32 3, %v605
      %v607 = vrot.slane %v588, %v606
      %v608 = vlaneseq
      %v609 = vshrl.u32 %v608, 7
      %v610 = vsub.s32 4, %v609
      %v611 = vrot.slane %v588, %v610
      %v612 = vlaneseq
      %v613 = vshrl.u32 %v612, 7
      %v614 = vsub.s32 5, %v613
      %v615 = vrot.slane %v588, %v614
      %v616 = vlaneseq
      %v617 = vshrl.u32 %v616, 7
      %v618 = vsub.s32 6, %v617
      %v619 = vrot.slane %v588, %v618
      %v620 = vlaneseq
      %v621 = vshrl.u32 %v620, 7
      %v622 = vsub.s32 7, %v621
      %v623 = vrot.slane %v588, %v622
      %v624 = vlaneseq
      %v625 = vshrl.u32 %v624, 7
      %v626 = vsub.s32 0, %v625
      %v627 = vrot.slane %v589, %v626
      %v877 = vunpack.c.l.b16 %v348
      %v878 = vunpack.c.h.b16 %v348
      %v879 = vunpack.c.l.b16 %v349
      %v880 = vunpack.c.h.b16 %v349
      %v881 = vunpack.c.l.b16 %v350
      %v882 = vunpack.c.h.b16 %v350
      %v883 = vunpack.c.l.b16 %v351
      %v884 = vunpack.c.h.b16 %v351
      %v885 = vunpack.c.l.b16 %v352
      %v886 = vunpack.c.l.b16 %v353
      %v887 = vunpack.c.h.b16 %v353
      %v888 = vunpack.c.l.b16 %v354
      %v889 = vunpack.c.h.b16 %v354
      %v890 = vunpack.c.l.b16 %v355
      %v891 = vunpack.c.h.b16 %v355
      %v892 = vunpack.c.l.b16 %v356
      %v893 = vunpack.c.h.b16 %v356
      %v894 = vunpack.c.l.b16 %v357
      %v895 = vunpack.c.l.b16 %v358
      %v896 = vunpack.c.h.b16 %v358
      %v897 = vunpack.c.l.b16 %v359
      %v898 = vunpack.c.h.b16 %v359
      %v899 = vunpack.c.l.b16 %v360
      %v900 = vunpack.c.h.b16 %v360
      %v901 = vunpack.c.l.b16 %v361
      %v902 = vunpack.c.h.b16 %v361
      %v903 = vunpack.c.l.b16 %v362
      %v904 = vunpack.c.l.b16 %v363
      %v905 = vunpack.c.h.b16 %v363
      %v906 = vunpack.c.l.b16 %v364
      %v907 = vunpack.c.h.b16 %v364
      %v908 = vunpack.c.l.b16 %v365
      %v909 = vunpack.c.h.b16 %v365
      %v910 = vunpack.c.l.b16 %v366
      %v911 = vunpack.c.h.b16 %v366
      %v912 = vunpack.c.l.b16 %v367
      %v913 = vunpack.c.l.b16 %v368
      %v914 = vunpack.c.h.b16 %v368
      %v915 = vunpack.c.l.b16 %v369
      %v916 = vunpack.c.h.b16 %v369
      %v917 = vunpack.c.l.b16 %v370
      %v918 = vunpack.c.h.b16 %v370
      %v919 = vunpack.c.l.b16 %v371
      %v920 = vunpack.c.h.b16 %v371
      %v921 = vunpack.c.l.b16 %v372
      %v922 = vunpack.c.l.b16 %v373
      %v923 = vunpack.c.h.b16 %v373
      %v924 = vunpack.c.l.b16 %v374
      %v925 = vunpack.c.h.b16 %v374
      %v926 = vunpack.c.l.b16 %v375
      %v927 = vunpack.c.h.b16 %v375
      %v928 = vunpack.c.l.b16 %v376
      %v929 = vunpack.c.h.b16 %v376
      %v930 = vunpack.c.l.b16 %v377
      %v931 = vunpack.c.l.b16 %v378
      %v932 = vunpack.c.h.b16 %v378
      %v933 = vunpack.c.l.b16 %v379
      %v934 = vunpack.c.h.b16 %v379
      %v935 = vunpack.c.l.b16 %v380
      %v936 = vunpack.c.h.b16 %v380
      %v937 = vunpack.c.l.b16 %v381
      %v938 = vunpack.c.h.b16 %v381
      %v939 = vunpack.c.l.b16 %v382
      %v940 = vunpack.c.l.b16 %v383
      %v941 = vunpack.c.h.b16 %v383
      %v942 = vunpack.c.l.b16 %v384
      %v943 = vunpack.c.h.b16 %v384
      %v944 = vunpack.c.l.b16 %v385
      %v945 = vunpack.c.h.b16 %v385
      %v946 = vunpack.c.l.b16 %v386
      %v947 = vunpack.c.h.b16 %v386
      %v948 = vunpack.c.l.b16 %v387
      %v949 = vunpack.c.l.b16 %v388
      %v950 = vunpack.c.h.b16 %v388
      %v951 = vunpack.c.l.b16 %v389
      %v952 = vunpack.c.h.b16 %v389
      %v953 = vunpack.c.l.b16 %v390
      %v954 = vunpack.c.h.b16 %v390
      %v955 = vunpack.c.l.b16 %v391
      %v956 = vunpack.c.h.b16 %v391
      %v957 = vunpack.c.l.b16 %v392
      %v958 = vunpack.c.l.b16 %v393
      %v959 = vunpack.c.h.b16 %v393
      %v960 = vunpack.c.l.b16 %v394
      %v961 = vunpack.c.h.b16 %v394
      %v962 = vunpack.c.l.b16 %v395
      %v963 = vunpack.c.h.b16 %v395
      %v964 = vunpack.c.l.b16 %v396
      %v965 = vunpack.c.h.b16 %v396
      %v966 = vunpack.c.l.b16 %v397
      %v967 = vunpack.c.l.b16 %v398
      %v968 = vunpack.c.h.b16 %v398
      %v969 = vunpack.c.l.b16 %v399
      %v970 = vunpack.c.h.b16 %v399
      %v971 = vunpack.c.l.b16 %v400
      %v972 = vunpack.c.h.b16 %v400
      %v973 = vunpack.c.l.b16 %v401
      %v974 = vunpack.c.h.b16 %v401
      %v975 = vunpack.c.l.b16 %v402
      %v976 = vunpack.c.l.b16 %v403
      %v977 = vunpack.c.h.b16 %v403
      %v978 = vunpack.c.l.b16 %v404
      %v979 = vunpack.c.h.b16 %v404
      %v980 = vunpack.c.l.b16 %v405
      %v981 = vunpack.c.h.b16 %v405
      %v982 = vunpack.c.l.b16 %v406
      %v983 = vunpack.c.h.b16 %v406
      %v984 = vunpack.c.l.b16 %v407
      %v985 = vunpack.c.l.b16 %v408
      %v986 = vunpack.c.h.b16 %v408
      %v987 = vunpack.c.l.b16 %v409
      %v988 = vunpack.c.h.b16 %v409
      %v989 = vunpack.c.l.b16 %v410
      %v990 = vunpack.c.h.b16 %v410
      %v991 = vunpack.c.l.b16 %v411
      %v992 = vunpack.c.h.b16 %v411
      %v993 = vunpack.c.l.b16 %v412
      %v994 = vunpack.c.l.b16 %v413
      %v995 = vunpack.c.h.b16 %v413
      %v996 = vunpack.c.l.b16 %v414
      %v997 = vunpack.c.h.b16 %v414
      %v998 = vunpack.c.l.b16 %v415
      %v999 = vunpack.c.h.b16 %v415
      %v1000 = vunpack.c.l.b16 %v416
      %v1001 = vunpack.c.h.b16 %v416
      %v1002 = vunpack.c.l.b16 %v417
      %v1003 = vunpack.c.l.b16 %v418
      %v1004 = vunpack.c.h.b16 %v418
      %v1005 = vunpack.c.l.b16 %v419
      %v1006 = vunpack.c.h.b16 %v419
      %v1007 = vunpack.c.l.b16 %v420
      %v1008 = vunpack.c.h.b16 %v420
      %v1009 = vunpack.c.l.b16 %v421
      %v1010 = vunpack.c.h.b16 %v421
      %v1011 = vunpack.c.l.b16 %v422
      %v1012 = vunpack.c.l.b16 %v423
      %v1013 = vunpack.c.h.b16 %v423
      %v1014 = vunpack.c.l.b16 %v424
      %v1015 = vunpack.c.h.b16 %v424
      %v1016 = vunpack.c.l.b16 %v425
      %v1017 = vunpack.c.h.b16 %v425
      %v1018 = vunpack.c.l.b16 %v426
      %v1019 = vunpack.c.h.b16 %v426
      %v1020 = vunpack.c.l.b16 %v427
      %v1021 = vunpack.c.l.b16 %v428
      %v1022 = vunpack.c.h.b16 %v428
      %v1023 = vunpack.c.l.b16 %v429
      %v1024 = vunpack.c.h.b16 %v429
      %v1025 = vunpack.c.l.b16 %v430
      %v1026 = vunpack.c.h.b16 %v430
      %v1027 = vunpack.c.l.b16 %v431
      %v1028 = vunpack.c.h.b16 %v431
      %v1029 = vunpack.c.l.b16 %v432
      %v1030 = vunpack.c.l.b16 %v433
      %v1031 = vunpack.c.h.b16 %v433
      %v1032 = vunpack.c.l.b16 %v434
      %v1033 = vunpack.c.h.b16 %v434
      %v1034 = vunpack.c.l.b16 %v435
      %v1035 = vunpack.c.h.b16 %v435
      %v1036 = vunpack.c.l.b16 %v436
      %v1037 = vunpack.c.h.b16 %v436
      %v1038 = vunpack.c.l.b16 %v437
      %v1039 = vunpack.c.l.b16 %v438
      %v1040 = vunpack.c.h.b16 %v438
      %v1041 = vunpack.c.l.b16 %v439
      %v1042 = vunpack.c.h.b16 %v439
      %v1043 = vunpack.c.l.b16 %v440
      %v1044 = vunpack.c.h.b16 %v440
      %v1045 = vunpack.c.l.b16 %v441
      %v1046 = vunpack.c.h.b16 %v441
      %v1047 = vunpack.c.l.b16 %v442
      %v1048 = vunpack.c.l.b16 %v443
      %v1049 = vunpack.c.h.b16 %v443
      %v1050 = vunpack.c.l.b16 %v444
      %v1051 = vunpack.c.h.b16 %v444
      %v1052 = vunpack.c.l.b16 %v445
      %v1053 = vunpack.c.h.b16 %v445
      %v1054 = vunpack.c.l.b16 %v446
      %v1055 = vunpack.c.h.b16 %v446
      %v1056 = vunpack.c.l.b16 %v447
      %v1057 = vunpack.c.l.b16 %v448
      %v1058 = vunpack.c.h.b16 %v448
      %v1059 = vunpack.c.l.b16 %v449
      %v1060 = vunpack.c.h.b16 %v449
      %v1061 = vunpack.c.l.b16 %v450
      %v1062 = vunpack.c.h.b16 %v450
      %v1063 = vunpack.c.l.b16 %v451
      %v1064 = vunpack.c.h.b16 %v451
      %v1065 = vunpack.c.l.b16 %v452
      %v1066 = vunpack.c.l.b16 %v453
      %v1067 = vunpack.c.h.b16 %v453
      %v1068 = vunpack.c.l.b16 %v454
      %v1069 = vunpack.c.h.b16 %v454
      %v1070 = vunpack.c.l.b16 %v455
      %v1071 = vunpack.c.h.b16 %v455
      %v1072 = vunpack.c.l.b16 %v456
      %v1073 = vunpack.c.h.b16 %v456
      %v1074 = vunpack.c.l.b16 %v457
      %v1075 = vunpack.c.l.b16 %v458
      %v1076 = vunpack.c.h.b16 %v458
      %v1077 = vunpack.c.l.b16 %v459
      %v1078 = vunpack.c.h.b16 %v459
      %v1079 = vunpack.c.l.b16 %v460
      %v1080 = vunpack.c.h.b16 %v460
      %v1081 = vunpack.c.l.b16 %v461
      %v1082 = vunpack.c.h.b16 %v461
      %v1083 = vunpack.c.l.b16 %v462
      %v1084 = vunpack.c.l.b16 %v463
      %v1085 = vunpack.c.h.b16 %v463
      %v1086 = vunpack.c.l.b16 %v464
      %v1087 = vunpack.c.h.b16 %v464
      %v1088 = vunpack.c.l.b16 %v465
      %v1089 = vunpack.c.h.b16 %v465
      %v1090 = vunpack.c.l.b16 %v466
      %v1091 = vunpack.c.h.b16 %v466
      %v1092 = vunpack.c.l.b16 %v467
      %v1093 = vunpack.c.l.b16 %v468
      %v1094 = vunpack.c.h.b16 %v468
      %v1095 = vunpack.c.l.b16 %v469
      %v1096 = vunpack.c.h.b16 %v469
      %v1097 = vunpack.c.l.b16 %v470
      %v1098 = vunpack.c.h.b16 %v470
      %v1099 = vunpack.c.l.b16 %v471
      %v1100 = vunpack.c.h.b16 %v471
      %v1101 = vunpack.c.l.b16 %v472
      %v1102 = vunpack.c.l.b16 %v473
      %v1103 = vunpack.c.h.b16 %v473
      %v1104 = vunpack.c.l.b16 %v474
      %v1105 = vunpack.c.h.b16 %v474
      %v1106 = vunpack.c.l.b16 %v475
      %v1107 = vunpack.c.h.b16 %v475
      %v1108 = vunpack.c.l.b16 %v476
      %v1109 = vunpack.c.h.b16 %v476
      %v1110 = vunpack.c.l.b16 %v477
      %v1111 = vunpack.c.l.b16 %v478
      %v1112 = vunpack.c.h.b16 %v478
      %v1113 = vunpack.c.l.b16 %v479
      %v1114 = vunpack.c.h.b16 %v479
      %v1115 = vunpack.c.l.b16 %v480
      %v1116 = vunpack.c.h.b16 %v480
      %v1117 = vunpack.c.l.b16 %v481
      %v1118 = vunpack.c.h.b16 %v481
      %v1119 = vunpack.c.l.b16 %v482
      %v1120 = vunpack.c.l.b16 %v483
      %v1121 = vunpack.c.h.b16 %v483
      %v1122 = vunpack.c.l.b16 %v484
      %v1123 = vunpack.c.h.b16 %v484
      %v1124 = vunpack.c.l.b16 %v485
      %v1125 = vunpack.c.h.b16 %v485
      %v1126 = vunpack.c.l.b16 %v486
      %v1127 = vunpack.c.h.b16 %v486
      %v1128 = vunpack.c.l.b16 %v487
      %v1129 = vunpack.c.l.b16 %v488
      %v1130 = vunpack.c.h.b16 %v488
      %v1131 = vunpack.c.l.b16 %v489
      %v1132 = vunpack.c.h.b16 %v489
      %v1133 = vunpack.c.l.b16 %v490
      %v1134 = vunpack.c.h.b16 %v490
      %v1135 = vunpack.c.l.b16 %v491
      %v1136 = vunpack.c.h.b16 %v491
      %v1137 = vunpack.c.l.b16 %v492
      %v1138 = vunpack.c.l.b16 %v493
      %v1139 = vunpack.c.h.b16 %v493
      %v1140 = vunpack.c.l.b16 %v494
      %v1141 = vunpack.c.h.b16 %v494
      %v1142 = vunpack.c.l.b16 %v495
      %v1143 = vunpack.c.h.b16 %v495
      %v1144 = vunpack.c.l.b16 %v496
      %v1145 = vunpack.c.h.b16 %v496
      %v1146 = vunpack.c.l.b16 %v497
      %v1147 = vunpack.c.l.b16 %v498
      %v1148 = vunpack.c.h.b16 %v498
      %v1149 = vunpack.c.l.b16 %v499
      %v1150 = vunpack.c.h.b16 %v499
      %v1151 = vunpack.c.l.b16 %v500
      %v1152 = vunpack.c.h.b16 %v500
      %v1153 = vunpack.c.l.b16 %v501
      %v1154 = vunpack.c.h.b16 %v501
      %v1155 = vunpack.c.l.b16 %v502
      %v1156 = vunpack.c.l.b16 %v503
      %v1157 = vunpack.c.h.b16 %v503
      %v1158 = vunpack.c.l.b16 %v504
      %v1159 = vunpack.c.h.b16 %v504
      %v1160 = vunpack.c.l.b16 %v505
      %v1161 = vunpack.c.h.b16 %v505
      %v1162 = vunpack.c.l.b16 %v506
      %v1163 = vunpack.c.h.b16 %v506
      %v1164 = vunpack.c.l.b16 %v507
      %v1165 = vunpack.c.l.b16 %v508
      %v1166 = vunpack.c.h.b16 %v508
      %v1167 = vunpack.c.l.b16 %v509
      %v1168 = vunpack.c.h.b16 %v509
      %v1169 = vunpack.c.l.b16 %v510
      %v1170 = vunpack.c.h.b16 %v510
      %v1171 = vunpack.c.l.b16 %v511
      %v1172 = vunpack.c.h.b16 %v511
      %v1173 = vunpack.c.l.b16 %v512
      %v1174 = vunpack.c.l.b16 %v513
      %v1175 = vunpack.c.h.b16 %v513
      %v1176 = vunpack.c.l.b16 %v514
      %v1177 = vunpack.c.h.b16 %v514
      %v1178 = vunpack.c.l.b16 %v515
      %v1179 = vunpack.c.h.b16 %v515
      %v1180 = vunpack.c.l.b16 %v516
      %v1181 = vunpack.c.h.b16 %v516
      %v1182 = vunpack.c.l.b16 %v517
      %v1183 = vunpack.c.l.b16 %v518
      %v1184 = vunpack.c.h.b16 %v518
      %v1185 = vunpack.c.l.b16 %v519
      %v1186 = vunpack.c.h.b16 %v519
      %v1187 = vunpack.c.l.b16 %v520
      %v1188 = vunpack.c.h.b16 %v520
      %v1189 = vunpack.c.l.b16 %v521
      %v1190 = vunpack.c.h.b16 %v521
      %v1191 = vunpack.c.l.b16 %v522
      %v1192 = vunpack.c.l.b16 %v523
      %v1193 = vunpack.c.h.b16 %v523
      %v1194 = vunpack.c.l.b16 %v524
      %v1195 = vunpack.c.h.b16 %v524
      %v1196 = vunpack.c.l.b16 %v525
      %v1197 = vunpack.c.h.b16 %v525
      %v1198 = vunpack.c.l.b16 %v526
      %v1199 = vunpack.c.h.b16 %v526
      %v1200 = vunpack.c.l.b16 %v527
      %v1201 = vunpack.c.l.b16 %v528
      %v1202 = vunpack.c.h.b16 %v528
      %v1203 = vunpack.c.l.b16 %v529
      %v1204 = vunpack.c.h.b16 %v529
      %v1205 = vunpack.c.l.b16 %v530
      %v1206 = vunpack.c.h.b16 %v530
      %v1207 = vunpack.c.l.b16 %v531
      %v1208 = vunpack.c.h.b16 %v531
      %v1209 = vunpack.c.l.b16 %v532
      %v1210 = vunpack.c.l.b16 %v533
      %v1211 = vunpack.c.h.b16 %v533
      %v1212 = vunpack.c.l.b16 %v534
      %v1213 = vunpack.c.h.b16 %v534
      %v1214 = vunpack.c.l.b16 %v535
      %v1215 = vunpack.c.h.b16 %v535
      %v1216 = vunpack.c.l.b16 %v536
      %v1217 = vunpack.c.h.b16 %v536
      %v1218 = vunpack.c.l.b16 %v537
      %v1219 = vunpack.c.l.b16 %v538
      %v1220 = vunpack.c.h.b16 %v538
      %v1221 = vunpack.c.l.b16 %v539
      %v1222 = vunpack.c.h.b16 %v539
      %v1223 = vunpack.c.l.b16 %v540
      %v1224 = vunpack.c.h.b16 %v540
      %v1225 = vunpack.c.l.b16 %v541
      %v1226 = vunpack.c.h.b16 %v541
      %v1227 = vunpack.c.l.b16 %v542
      %v1228 = vunpack.c.l.b16 %v543
      %v1229 = vunpack.c.h.b16 %v543
      %v1230 = vunpack.c.l.b16 %v544
      %v1231 = vunpack.c.h.b16 %v544
      %v1232 = vunpack.c.l.b16 %v545
      %v1233 = vunpack.c.h.b16 %v545
      %v1234 = vunpack.c.l.b16 %v546
      %v1235 = vunpack.c.h.b16 %v546
      %v1236 = vunpack.c.l.b16 %v547
      %v1237 = vunpack.c.l.b16 %v548
      %v1238 = vunpack.c.h.b16 %v548
      %v1239 = vunpack.c.l.b16 %v549
      %v1240 = vunpack.c.h.b16 %v549
      %v1241 = vunpack.c.l.b16 %v550
      %v1242 = vunpack.c.h.b16 %v550
      %v1243 = vunpack.c.l.b16 %v551
      %v1244 = vunpack.c.h.b16 %v551
      %v1245 = vunpack.c.l.b16 %v552
      %v1246 = vunpack.c.l.b16 %v553
      %v1247 = vunpack.c.h.b16 %v553
      %v1248 = vunpack.c.l.b16 %v554
      %v1249 = vunpack.c.h.b16 %v554
      %v1250 = vunpack.c.l.b16 %v555
      %v1251 = vunpack.c.h.b16 %v555
      %v1252 = vunpack.c.l.b16 %v556
      %v1253 = vunpack.c.h.b16 %v556
      %v1254 = vunpack.c.l.b16 %v557
      %v1255 = vunpack.c.l.b16 %v558
      %v1256 = vunpack.c.h.b16 %v558
      %v1257 = vunpack.c.l.b16 %v559
      %v1258 = vunpack.c.h.b16 %v559
      %v1259 = vunpack.c.l.b16 %v560
      %v1260 = vunpack.c.h.b16 %v560
      %v1261 = vunpack.c.l.b16 %v561
      %v1262 = vunpack.c.h.b16 %v561
      %v1263 = vunpack.c.l.b16 %v562
      %v1264 = vunpack.c.l.b16 %v563
      %v1265 = vunpack.c.h.b16 %v563
      %v1266 = vunpack.c.l.b16 %v564
      %v1267 = vunpack.c.h.b16 %v564
      %v1268 = vunpack.c.l.b16 %v565
      %v1269 = vunpack.c.h.b16 %v565
      %v1270 = vunpack.c.l.b16 %v566
      %v1271 = vunpack.c.h.b16 %v566
      %v1272 = vunpack.c.l.b16 %v567
      %v1273 = vunpack.c.l.b16 %v568
      %v1274 = vunpack.c.h.b16 %v568
      %v1275 = vunpack.c.l.b16 %v569
      %v1276 = vunpack.c.h.b16 %v569
      %v1277 = vunpack.c.l.b16 %v570
      %v1278 = vunpack.c.h.b16 %v570
      %v1279 = vunpack.c.l.b16 %v571
      %v1280 = vunpack.c.h.b16 %v571
      %v1281 = vunpack.c.l.b16 %v572
      %v1282 = vunpack.c.l.b16 %v573
      %v1283 = vunpack.c.h.b16 %v573
      %v1284 = vunpack.c.l.b16 %v574
      %v1285 = vunpack.c.h.b16 %v574
      %v1286 = vunpack.c.l.b16 %v575
      %v1287 = vunpack.c.h.b16 %v575
      %v1288 = vunpack.c.l.b16 %v576
      %v1289 = vunpack.c.h.b16 %v576
      %v1290 = vunpack.c.l.b16 %v577
      %v1291 = vunpack.c.l.b16 %v578
      %v1292 = vunpack.c.h.b16 %v578
      %v1293 = vunpack.c.l.b16 %v579
      %v1294 = vunpack.c.h.b16 %v579
      %v1295 = vunpack.c.l.b16 %v580
      %v1296 = vunpack.c.h.b16 %v580
      %v1297 = vunpack.c.l.b16 %v581
      %v1298 = vunpack.c.h.b16 %v581
      %v1299 = vunpack.c.l.b16 %v582
      %v1300 = vunpack.c.l.b16 %v583
      %v1301 = vunpack.c.h.b16 %v583
      %v1302 = vunpack.c.l.b16 %v584
      %v1303 = vunpack.c.h.b16 %v584
      %v1304 = vunpack.c.l.b16 %v585
      %v1305 = vunpack.c.h.b16 %v585
      %v1306 = vunpack.c.l.b16 %v586
      %v1307 = vunpack.c.h.b16 %v586
      %v1308 = vunpack.c.l.b16 %v587
      %v1309 = vpack.c.b16 %v886, %v877
      %v1310 = vpack.c.b16 %v887, %v878
      %v1311 = vpack.c.b16 %v888, %v879
      %v1312 = vpack.c.b16 %v889, %v880
      %v1313 = vpack.c.b16 %v890, %v881
      %v1314 = vpack.c.b16 %v891, %v882
      %v1315 = vpack.c.b16 %v892, %v883
      %v1316 = vpack.c.b16 %v893, %v884
      %v1317 = vpack.c.b16 %v894, %v885
      %v1318 = vpack.c.b16 %v904, %v895
      %v1319 = vpack.c.b16 %v905, %v896
      %v1320 = vpack.c.b16 %v906, %v897
      %v1321 = vpack.c.b16 %v907, %v898
      %v1322 = vpack.c.b16 %v908, %v899
      %v1323 = vpack.c.b16 %v909, %v900
      %v1324 = vpack.c.b16 %v910, %v901
      %v1325 = vpack.c.b16 %v911, %v902
      %v1326 = vpack.c.b16 %v912, %v903
      %v1327 = vpack.c.b16 %v922, %v913
      %v1328 = vpack.c.b16 %v923, %v914
      %v1329 = vpack.c.b16 %v924, %v915
      %v1330 = vpack.c.b16 %v925, %v916
      %v1331 = vpack.c.b16 %v926, %v917
      %v1332 = vpack.c.b16 %v927, %v918
      %v1333 = vpack.c.b16 %v928, %v919
      %v1334 = vpack.c.b16 %v929, %v920
      %v1335 = vpack.c.b16 %v930, %v921
      %v1336 = vpack.c.b16 %v940, %v931
      %v1337 = vpack.c.b16 %v941, %v932
      %v1338 = vpack.c.b16 %v942, %v933
      %v1339 = vpack.c.b16 %v943, %v934
      %v1340 = vpack.c.b16 %v944, %v935
      %v1341 = vpack.c.b16 %v945, %v936
      %v1342 = vpack.c.b16 %v946, %v937
      %v1343 = vpack.c.b16 %v947, %v938
      %v1344 = vpack.c.b16 %v948, %v939
      %v1345 = vpack.c.b16 %v958, %v949
      %v1346 = vpack.c.b16 %v959, %v950
      %v1347 = vpack.c.b16 %v960, %v951
      %v1348 = vpack.c.b16 %v961, %v952
      %v1349 = vpack.c.b16 %v962, %v953
      %v1350 = vpack.c.b16 %v963, %v954
      %v1351 = vpack.c.b16 %v964, %v955
      %v1352 = vpack.c.b16 %v965, %v956
      %v1353 = vpack.c.b16 %v966, %v957
      %v1354 = vpack.c.b16 %v976, %v967
      %v1355 = vpack.c.b16 %v977, %v968
      %v1356 = vpack.c.b16 %v978, %v969
      %v1357 = vpack.c.b16 %v979, %v970
      %v1358 = vpack.c.b16 %v980, %v971
      %v1359 = vpack.c.b16 %v981, %v972
      %v1360 = vpack.c.b16 %v982, %v973
      %v1361 = vpack.c.b16 %v983, %v974
      %v1362 = vpack.c.b16 %v984, %v975
      %v1363 = vpack.c.b16 %v994, %v985
      %v1364 = vpack.c.b16 %v995, %v986
      %v1365 = vpack.c.b16 %v996, %v987
      %v1366 = vpack.c.b16 %v997, %v988
      %v1367 = vpack.c.b16 %v998, %v989
      %v1368 = vpack.c.b16 %v999, %v990
      %v1369 = vpack.c.b16 %v1000, %v991
      %v1370 = vpack.c.b16 %v1001, %v992
      %v1371 = vpack.c.b16 %v1002, %v993
      %v1372 = vpack.c.b16 %v1012, %v1003
      %v1373 = vpack.c.b16 %v1013, %v1004
      %v1374 = vpack.c.b16 %v1014, %v1005
      %v1375 = vpack.c.b16 %v1015, %v1006
      %v1376 = vpack.c.b16 %v1016, %v1007
      %v1377 = vpack.c.b16 %v1017, %v1008
      %v1378 = vpack.c.b16 %v1018, %v1009
      %v1379 = vpack.c.b16 %v1019, %v1010
      %v1380 = vpack.c.b16 %v1020, %v1011
      %v1381 = vpack.c.b16 %v1030, %v1021
      %v1382 = vpack.c.b16 %v1031, %v1022
      %v1383 = vpack.c.b16 %v1032, %v1023
      %v1384 = vpack.c.b16 %v1033, %v1024
      %v1385 = vpack.c.b16 %v1034, %v1025
      %v1386 = vpack.c.b16 %v1035, %v1026
      %v1387 = vpack.c.b16 %v1036, %v1027
      %v1388 = vpack.c.b16 %v1037, %v1028
      %v1389 = vpack.c.b16 %v1038, %v1029
      %v1390 = vpack.c.b16 %v1048, %v1039
      %v1391 = vpack.c.b16 %v1049, %v1040
      %v1392 = vpack.c.b16 %v1050, %v1041
      %v1393 = vpack.c.b16 %v1051, %v1042
      %v1394 = vpack.c.b16 %v1052, %v1043
      %v1395 = vpack.c.b16 %v1053, %v1044
      %v1396 = vpack.c.b16 %v1054, %v1045
      %v1397 = vpack.c.b16 %v1055, %v1046
      %v1398 = vpack.c.b16 %v1056, %v1047
      %v1399 = vpack.c.b16 %v1066, %v1057
      %v1400 = vpack.c.b16 %v1067, %v1058
      %v1401 = vpack.c.b16 %v1068, %v1059
      %v1402 = vpack.c.b16 %v1069, %v1060
      %v1403 = vpack.c.b16 %v1070, %v1061
      %v1404 = vpack.c.b16 %v1071, %v1062
      %v1405 = vpack.c.b16 %v1072, %v1063
      %v1406 = vpack.c.b16 %v1073, %v1064
      %v1407 = vpack.c.b16 %v1074, %v1065
      %v1408 = vpack.c.b16 %v1084, %v1075
      %v1409 = vpack.c.b16 %v1085, %v1076
      %v1410 = vpack.c.b16 %v1086, %v1077
      %v1411 = vpack.c.b16 %v1087, %v1078
      %v1412 = vpack.c.b16 %v1088, %v1079
      %v1413 = vpack.c.b16 %v1089, %v1080
      %v1414 = vpack.c.b16 %v1090, %v1081
      %v1415 = vpack.c.b16 %v1091, %v1082
      %v1416 = vpack.c.b16 %v1092, %v1083
      %v1417 = vpack.c.b16 %v1102, %v1093
      %v1418 = vpack.c.b16 %v1103, %v1094
      %v1419 = vpack.c.b16 %v1104, %v1095
      %v1420 = vpack.c.b16 %v1105, %v1096
      %v1421 = vpack.c.b16 %v1106, %v1097
      %v1422 = vpack.c.b16 %v1107, %v1098
      %v1423 = vpack.c.b16 %v1108, %v1099
      %v1424 = vpack.c.b16 %v1109, %v1100
      %v1425 = vpack.c.b16 %v1110, %v1101
      %v1426 = vpack.c.b16 %v1120, %v1111
      %v1427 = vpack.c.b16 %v1121, %v1112
      %v1428 = vpack.c.b16 %v1122, %v1113
      %v1429 = vpack.c.b16 %v1123, %v1114
      %v1430 = vpack.c.b16 %v1124, %v1115
      %v1431 = vpack.c.b16 %v1125, %v1116
      %v1432 = vpack.c.b16 %v1126, %v1117
      %v1433 = vpack.c.b16 %v1127, %v1118
      %v1434 = vpack.c.b16 %v1128, %v1119
      %v1435 = vpack.c.b16 %v1138, %v1129
      %v1436 = vpack.c.b16 %v1139, %v1130
      %v1437 = vpack.c.b16 %v1140, %v1131
      %v1438 = vpack.c.b16 %v1141, %v1132
      %v1439 = vpack.c.b16 %v1142, %v1133
      %v1440 = vpack.c.b16 %v1143, %v1134
      %v1441 = vpack.c.b16 %v1144, %v1135
      %v1442 = vpack.c.b16 %v1145, %v1136
      %v1443 = vpack.c.b16 %v1146, %v1137
      %v1444 = vpack.c.b16 %v1156, %v1147
      %v1445 = vpack.c.b16 %v1157, %v1148
      %v1446 = vpack.c.b16 %v1158, %v1149
      %v1447 = vpack.c.b16 %v1159, %v1150
      %v1448 = vpack.c.b16 %v1160, %v1151
      %v1449 = vpack.c.b16 %v1161, %v1152
      %v1450 = vpack.c.b16 %v1162, %v1153
      %v1451 = vpack.c.b16 %v1163, %v1154
      %v1452 = vpack.c.b16 %v1164, %v1155
      %v1453 = vpack.c.b16 %v1174, %v1165
      %v1454 = vpack.c.b16 %v1175, %v1166
      %v1455 = vpack.c.b16 %v1176, %v1167
      %v1456 = vpack.c.b16 %v1177, %v1168
      %v1457 = vpack.c.b16 %v1178, %v1169
      %v1458 = vpack.c.b16 %v1179, %v1170
      %v1459 = vpack.c.b16 %v1180, %v1171
      %v1460 = vpack.c.b16 %v1181, %v1172
      %v1461 = vpack.c.b16 %v1182, %v1173
      %v1462 = vpack.c.b16 %v1192, %v1183
      %v1463 = vpack.c.b16 %v1193, %v1184
      %v1464 = vpack.c.b16 %v1194, %v1185
      %v1465 = vpack.c.b16 %v1195, %v1186
      %v1466 = vpack.c.b16 %v1196, %v1187
      %v1467 = vpack.c.b16 %v1197, %v1188
      %v1468 = vpack.c.b16 %v1198, %v1189
      %v1469 = vpack.c.b16 %v1199, %v1190
      %v1470 = vpack.c.b16 %v1200, %v1191
      %v1471 = vpack.c.b16 %v1210, %v1201
      %v1472 = vpack.c.b16 %v1211, %v1202
      %v1473 = vpack.c.b16 %v1212, %v1203
      %v1474 = vpack.c.b16 %v1213, %v1204
      %v1475 = vpack.c.b16 %v1214, %v1205
      %v1476 = vpack.c.b16 %v1215, %v1206
      %v1477 = vpack.c.b16 %v1216, %v1207
      %v1478 = vpack.c.b16 %v1217, %v1208
      %v1479 = vpack.c.b16 %v1218, %v1209
      %v1480 = vpack.c.b16 %v1228, %v1219
      %v1481 = vpack.c.b16 %v1229, %v1220
      %v1482 = vpack.c.b16 %v1230, %v1221
      %v1483 = vpack.c.b16 %v1231, %v1222
      %v1484 = vpack.c.b16 %v1232, %v1223
      %v1485 = vpack.c.b16 %v1233, %v1224
      %v1486 = vpack.c.b16 %v1234, %v1225
      %v1487 = vpack.c.b16 %v1235, %v1226
      %v1488 = vpack.c.b16 %v1236, %v1227
      %v1489 = vpack.c.b16 %v1246, %v1237
      %v1490 = vpack.c.b16 %v1247, %v1238
      %v1491 = vpack.c.b16 %v1248, %v1239
      %v1492 = vpack.c.b16 %v1249, %v1240
      %v1493 = vpack.c.b16 %v1250, %v1241
      %v1494 = vpack.c.b16 %v1251, %v1242
      %v1495 = vpack.c.b16 %v1252, %v1243
      %v1496 = vpack.c.b16 %v1253, %v1244
      %v1497 = vpack.c.b16 %v1254, %v1245
      %v1498 = vpack.c.b16 %v1264, %v1255
      %v1499 = vpack.c.b16 %v1265, %v1256
      %v1500 = vpack.c.b16 %v1266, %v1257
      %v1501 = vpack.c.b16 %v1267, %v1258
      %v1502 = vpack.c.b16 %v1268, %v1259
      %v1503 = vpack.c.b16 %v1269, %v1260
      %v1504 = vpack.c.b16 %v1270, %v1261
      %v1505 = vpack.c.b16 %v1271, %v1262
      %v1506 = vpack.c.b16 %v1272, %v1263
      %v1507 = vpack.c.b16 %v1282, %v1273
      %v1508 = vpack.c.b16 %v1283, %v1274
      %v1509 = vpack.c.b16 %v1284, %v1275
      %v1510 = vpack.c.b16 %v1285, %v1276
      %v1511 = vpack.c.b16 %v1286, %v1277
      %v1512 = vpack.c.b16 %v1287, %v1278
      %v1513 = vpack.c.b16 %v1288, %v1279
      %v1514 = vpack.c.b16 %v1289, %v1280
      %v1515 = vpack.c.b16 %v1290, %v1281
      %v1516 = vpack.c.b16 %v1300, %v1291
      %v1517 = vpack.c.b16 %v1301, %v1292
      %v1518 = vpack.c.b16 %v1302, %v1293
      %v1519 = vpack.c.b16 %v1303, %v1294
      %v1520 = vpack.c.b16 %v1304, %v1295
      %v1521 = vpack.c.b16 %v1305, %v1296
      %v1522 = vpack.c.b16 %v1306, %v1297
      %v1523 = vpack.c.b16 %v1307, %v1298
      %v1524 = vpack.c.b16 %v1308, %v1299
      %1741 = vmatprep.subr.bf16.mxu0 %v1373
      %1742 = vmatpush1.bf16.msra.mxu0 %v1372
      %1743 = vmatprep.subr.bf16.mxu0 %v1364
      %1744 = vmatpush1.bf16.msra.mxu0 %v1363
      %1745 = vmatprep.subr.bf16.mxu0 %v1355
      %1746 = vmatpush1.bf16.msra.mxu0 %v1354
      %1747 = vmatprep.subr.bf16.mxu0 %v1346
      %1748 = vmatpush1.bf16.msra.mxu0 %v1345
      %1749 = vmatprep.subr.bf16.mxu0 %v1337
      %1750 = vmatpush1.bf16.msra.mxu0 %v1336
      %1751 = vmatprep.subr.bf16.mxu0 %v1328
      %1752 = vmatpush1.bf16.msra.mxu0 %v1327
      %1753 = vmatprep.subr.bf16.mxu0 %v1319
      %1754 = vmatpush1.bf16.msra.mxu0 %v1318
      %1755 = vmatprep.subr.bf16.mxu0 %v1310
      %1756 = vmatpush1.bf16.msra.mxu0 %v1309
      %1757 = vmatprep.subr.bf16.mxu0 %v1445
      %1758 = vmatpush2.bf16.msra.mxu0 %v1444
      %1759 = vmatprep.subr.bf16.mxu0 %v1436
      %1760 = vmatpush2.bf16.msra.mxu0 %v1435
      %1761 = vmatprep.subr.bf16.mxu0 %v1427
      %1762 = vmatpush2.bf16.msra.mxu0 %v1426
      %1763 = vmatprep.subr.bf16.mxu0 %v1418
      %1764 = vmatpush2.bf16.msra.mxu0 %v1417
      %1765 = vmatprep.subr.bf16.mxu0 %v1409
      %1766 = vmatpush2.bf16.msra.mxu0 %v1408
      %1767 = vmatprep.subr.bf16.mxu0 %v1400
      %1768 = vmatpush2.bf16.msra.mxu0 %v1399
      %1769 = vmatprep.subr.bf16.mxu0 %v1391
      %1770 = vmatpush2.bf16.msra.mxu0 %v1390
      %1771 = vmatprep.subr.bf16.mxu0 %v1382
      %1772 = vmatpush2.bf16.msra.mxu0 %v1381
      %1773 = vmatprep.mubr.bf16.mxu0 %v346
      %1774 = vmatmul.mubr.bf16.gmra.mxu0 %v345
      %v1775 = vpop.f32.mrf.mxu0
      %v1776 = vadd.f32 %v595, %v1775
      %v1777 = vpop.f32.mrf.mxu0
      %v1778 = vadd.f32 %v599, %v1777
      %v1779 = vpop.f32.mrf.mxu0
      %v1780 = vpop.f32.mrf.mxu0
      %1781 = vdwg.mxu0
      %1782 = vmatprep.subr.bf16.mxu0 %v1517
      %1783 = vmatpush1.bf16.msra.mxu0 %v1516
      %1784 = vmatprep.subr.bf16.mxu0 %v1508
      %1785 = vmatpush1.bf16.msra.mxu0 %v1507
      %1786 = vmatprep.subr.bf16.mxu0 %v1499
      %1787 = vmatpush1.bf16.msra.mxu0 %v1498
      %1788 = vmatprep.subr.bf16.mxu0 %v1490
      %1789 = vmatpush1.bf16.msra.mxu0 %v1489
      %1790 = vmatprep.subr.bf16.mxu0 %v1481
      %1791 = vmatpush1.bf16.msra.mxu0 %v1480
      %1792 = vmatprep.subr.bf16.mxu0 %v1472
      %1793 = vmatpush1.bf16.msra.mxu0 %v1471
      %1794 = vmatprep.subr.bf16.mxu0 %v1463
      %1795 = vmatpush1.bf16.msra.mxu0 %v1462
      %1796 = vmatprep.subr.bf16.mxu0 %v1454
      %1797 = vmatpush1.bf16.msra.mxu0 %v1453
      %1798 = vmatprep.subr.bf16.mxu0 0
      %1799 = vmatpush2.bf16.msra.mxu0 0
      %1800 = vmatprep.subr.bf16.mxu0 0
      %1801 = vmatpush2.bf16.msra.mxu0 0
      %1802 = vmatprep.subr.bf16.mxu0 0
      %1803 = vmatpush2.bf16.msra.mxu0 0
      %1804 = vmatprep.subr.bf16.mxu0 0
      %1805 = vmatpush2.bf16.msra.mxu0 0
      %1806 = vmatprep.subr.bf16.mxu0 0
      %1807 = vmatpush2.bf16.msra.mxu0 0
      %1808 = vmatprep.subr.bf16.mxu0 0
      %1809 = vmatpush2.bf16.msra.mxu0 0
      %1810 = vmatprep.subr.bf16.mxu0 0
      %1811 = vmatpush2.bf16.msra.mxu0 0
      %1812 = vmatprep.subr.bf16.mxu0 0
      %1813 = vmatpush2.bf16.msra.mxu0 0
      %1814 = vmatprep.mubr.bf16.mxu0 0
      %1815 = vmatmul.mubr.bf16.gmra.mxu0 %v347
      %v1816 = vpop.f32.mrf.mxu0
      %v1817 = vadd.f32 %v1776, %v1816
      %v1818 = vpop.f32.mrf.mxu0
      %v1819 = vadd.f32 %v1778, %v1818
      %v1820 = vpop.f32.mrf.mxu0
      %v1821 = vpop.f32.mrf.mxu0
      %1822 = vdwg.mxu0
      %1823 = vmatprep.subr.bf16.mxu0 %v1375
      %1824 = vmatpush1.bf16.msra.mxu0 %v1374
      %1825 = vmatprep.subr.bf16.mxu0 %v1366
      %1826 = vmatpush1.bf16.msra.mxu0 %v1365
      %1827 = vmatprep.subr.bf16.mxu0 %v1357
      %1828 = vmatpush1.bf16.msra.mxu0 %v1356
      %1829 = vmatprep.subr.bf16.mxu0 %v1348
      %1830 = vmatpush1.bf16.msra.mxu0 %v1347
      %1831 = vmatprep.subr.bf16.mxu0 %v1339
      %1832 = vmatpush1.bf16.msra.mxu0 %v1338
      %1833 = vmatprep.subr.bf16.mxu0 %v1330
      %1834 = vmatpush1.bf16.msra.mxu0 %v1329
      %1835 = vmatprep.subr.bf16.mxu0 %v1321
      %1836 = vmatpush1.bf16.msra.mxu0 %v1320
      %1837 = vmatprep.subr.bf16.mxu0 %v1312
      %1838 = vmatpush1.bf16.msra.mxu0 %v1311
      %1839 = vmatprep.subr.bf16.mxu0 %v1447
      %1840 = vmatpush2.bf16.msra.mxu0 %v1446
      %1841 = vmatprep.subr.bf16.mxu0 %v1438
      %1842 = vmatpush2.bf16.msra.mxu0 %v1437
      %1843 = vmatprep.subr.bf16.mxu0 %v1429
      %1844 = vmatpush2.bf16.msra.mxu0 %v1428
      %1845 = vmatprep.subr.bf16.mxu0 %v1420
      %1846 = vmatpush2.bf16.msra.mxu0 %v1419
      %1847 = vmatprep.subr.bf16.mxu0 %v1411
      %1848 = vmatpush2.bf16.msra.mxu0 %v1410
      %1849 = vmatprep.subr.bf16.mxu0 %v1402
      %1850 = vmatpush2.bf16.msra.mxu0 %v1401
      %1851 = vmatprep.subr.bf16.mxu0 %v1393
      %1852 = vmatpush2.bf16.msra.mxu0 %v1392
      %1853 = vmatprep.subr.bf16.mxu0 %v1384
      %1854 = vmatpush2.bf16.msra.mxu0 %v1383
      %1855 = vmatprep.mubr.bf16.mxu0 %v346
      %1856 = vmatmul.mubr.bf16.gmra.mxu0 %v345
      %v1857 = vpop.f32.mrf.mxu0
      %v1858 = vadd.f32 %v603, %v1857
      %v1859 = vpop.f32.mrf.mxu0
      %v1860 = vadd.f32 %v607, %v1859
      %v1861 = vpop.f32.mrf.mxu0
      %v1862 = vpop.f32.mrf.mxu0
      %1863 = vdwg.mxu0
      %1864 = vmatprep.subr.bf16.mxu0 %v1519
      %1865 = vmatpush1.bf16.msra.mxu0 %v1518
      %1866 = vmatprep.subr.bf16.mxu0 %v1510
      %1867 = vmatpush1.bf16.msra.mxu0 %v1509
      %1868 = vmatprep.subr.bf16.mxu0 %v1501
      %1869 = vmatpush1.bf16.msra.mxu0 %v1500
      %1870 = vmatprep.subr.bf16.mxu0 %v1492
      %1871 = vmatpush1.bf16.msra.mxu0 %v1491
      %1872 = vmatprep.subr.bf16.mxu0 %v1483
      %1873 = vmatpush1.bf16.msra.mxu0 %v1482
      %1874 = vmatprep.subr.bf16.mxu0 %v1474
      %1875 = vmatpush1.bf16.msra.mxu0 %v1473
      %1876 = vmatprep.subr.bf16.mxu0 %v1465
      %1877 = vmatpush1.bf16.msra.mxu0 %v1464
      %1878 = vmatprep.subr.bf16.mxu0 %v1456
      %1879 = vmatpush1.bf16.msra.mxu0 %v1455
      %1880 = vmatprep.subr.bf16.mxu0 0
      %1881 = vmatpush2.bf16.msra.mxu0 0
      %1882 = vmatprep.subr.bf16.mxu0 0
      %1883 = vmatpush2.bf16.msra.mxu0 0
      %1884 = vmatprep.subr.bf16.mxu0 0
      %1885 = vmatpush2.bf16.msra.mxu0 0
      %1886 = vmatprep.subr.bf16.mxu0 0
      %1887 = vmatpush2.bf16.msra.mxu0 0
      %1888 = vmatprep.subr.bf16.mxu0 0
      %1889 = vmatpush2.bf16.msra.mxu0 0
      %1890 = vmatprep.subr.bf16.mxu0 0
      %1891 = vmatpush2.bf16.msra.mxu0 0
      %1892 = vmatprep.subr.bf16.mxu0 0
      %1893 = vmatpush2.bf16.msra.mxu0 0
      %1894 = vmatprep.subr.bf16.mxu0 0
      %1895 = vmatpush2.bf16.msra.mxu0 0
      %1896 = vmatprep.mubr.bf16.mxu0 0
      %1897 = vmatmul.mubr.bf16.gmra.mxu0 %v347
      %v1898 = vpop.f32.mrf.mxu0
      %v1899 = vadd.f32 %v1858, %v1898
      %v1900 = vpop.f32.mrf.mxu0
      %v1901 = vadd.f32 %v1860, %v1900
      %v1902 = vpop.f32.mrf.mxu0
      %v1903 = vpop.f32.mrf.mxu0
      %1904 = vdwg.mxu0
      %1905 = vmatprep.subr.bf16.mxu0 %v1377
      %1906 = vmatpush1.bf16.msra.mxu0 %v1376
      %1907 = vmatprep.subr.bf16.mxu0 %v1368
      %1908 = vmatpush1.bf16.msra.mxu0 %v1367
      %1909 = vmatprep.subr.bf16.mxu0 %v1359
      %1910 = vmatpush1.bf16.msra.mxu0 %v1358
      %1911 = vmatprep.subr.bf16.mxu0 %v1350
      %1912 = vmatpush1.bf16.msra.mxu0 %v1349
      %1913 = vmatprep.subr.bf16.mxu0 %v1341
      %1914 = vmatpush1.bf16.msra.mxu0 %v1340
      %1915 = vmatprep.subr.bf16.mxu0 %v1332
      %1916 = vmatpush1.bf16.msra.mxu0 %v1331
      %1917 = vmatprep.subr.bf16.mxu0 %v1323
      %1918 = vmatpush1.bf16.msra.mxu0 %v1322
      %1919 = vmatprep.subr.bf16.mxu0 %v1314
      %1920 = vmatpush1.bf16.msra.mxu0 %v1313
      %1921 = vmatprep.subr.bf16.mxu0 %v1449
      %1922 = vmatpush2.bf16.msra.mxu0 %v1448
      %1923 = vmatprep.subr.bf16.mxu0 %v1440
      %1924 = vmatpush2.bf16.msra.mxu0 %v1439
      %1925 = vmatprep.subr.bf16.mxu0 %v1431
      %1926 = vmatpush2.bf16.msra.mxu0 %v1430
      %1927 = vmatprep.subr.bf16.mxu0 %v1422
      %1928 = vmatpush2.bf16.msra.mxu0 %v1421
      %1929 = vmatprep.subr.bf16.mxu0 %v1413
      %1930 = vmatpush2.bf16.msra.mxu0 %v1412
      %1931 = vmatprep.subr.bf16.mxu0 %v1404
      %1932 = vmatpush2.bf16.msra.mxu0 %v1403
      %1933 = vmatprep.subr.bf16.mxu0 %v1395
      %1934 = vmatpush2.bf16.msra.mxu0 %v1394
      %1935 = vmatprep.subr.bf16.mxu0 %v1386
      %1936 = vmatpush2.bf16.msra.mxu0 %v1385
      %1937 = vmatprep.mubr.bf16.mxu0 %v346
      %1938 = vmatmul.mubr.bf16.gmra.mxu0 %v345
      %v1939 = vpop.f32.mrf.mxu0
      %v1940 = vadd.f32 %v611, %v1939
      %v1941 = vpop.f32.mrf.mxu0
      %v1942 = vadd.f32 %v615, %v1941
      %v1943 = vpop.f32.mrf.mxu0
      %v1944 = vpop.f32.mrf.mxu0
      %1945 = vdwg.mxu0
      %1946 = vmatprep.subr.bf16.mxu0 %v1521
      %1947 = vmatpush1.bf16.msra.mxu0 %v1520
      %1948 = vmatprep.subr.bf16.mxu0 %v1512
      %1949 = vmatpush1.bf16.msra.mxu0 %v1511
      %1950 = vmatprep.subr.bf16.mxu0 %v1503
      %1951 = vmatpush1.bf16.msra.mxu0 %v1502
      %1952 = vmatprep.subr.bf16.mxu0 %v1494
      %1953 = vmatpush1.bf16.msra.mxu0 %v1493
      %1954 = vmatprep.subr.bf16.mxu0 %v1485
      %1955 = vmatpush1.bf16.msra.mxu0 %v1484
      %1956 = vmatprep.subr.bf16.mxu0 %v1476
      %1957 = vmatpush1.bf16.msra.mxu0 %v1475
      %1958 = vmatprep.subr.bf16.mxu0 %v1467
      %1959 = vmatpush1.bf16.msra.mxu0 %v1466
      %1960 = vmatprep.subr.bf16.mxu0 %v1458
      %1961 = vmatpush1.bf16.msra.mxu0 %v1457
      %1962 = vmatprep.subr.bf16.mxu0 0
      %1963 = vmatpush2.bf16.msra.mxu0 0
      %1964 = vmatprep.subr.bf16.mxu0 0
      %1965 = vmatpush2.bf16.msra.mxu0 0
      %1966 = vmatprep.subr.bf16.mxu0 0
      %1967 = vmatpush2.bf16.msra.mxu0 0
      %1968 = vmatprep.subr.bf16.mxu0 0
      %1969 = vmatpush2.bf16.msra.mxu0 0
      %1970 = vmatprep.subr.bf16.mxu0 0
      %1971 = vmatpush2.bf16.msra.mxu0 0
      %1972 = vmatprep.subr.bf16.mxu0 0
      %1973 = vmatpush2.bf16.msra.mxu0 0
      %1974 = vmatprep.subr.bf16.mxu0 0
      %1975 = vmatpush2.bf16.msra.mxu0 0
      %1976 = vmatprep.subr.bf16.mxu0 0
      %1977 = vmatpush2.bf16.msra.mxu0 0
      %1978 = vmatprep.mubr.bf16.mxu0 0
      %1979 = vmatmul.mubr.bf16.gmra.mxu0 %v347
      %v1980 = vpop.f32.mrf.mxu0
      %v1981 = vadd.f32 %v1940, %v1980
      %v1982 = vpop.f32.mrf.mxu0
      %v1983 = vadd.f32 %v1942, %v1982
      %v1984 = vpop.f32.mrf.mxu0
      %v1985 = vpop.f32.mrf.mxu0
      %1986 = vdwg.mxu0
      %1987 = vmatprep.subr.bf16.mxu0 %v1379
      %1988 = vmatpush1.bf16.msra.mxu0 %v1378
      %1989 = vmatprep.subr.bf16.mxu0 %v1370
      %1990 = vmatpush1.bf16.msra.mxu0 %v1369
      %1991 = vmatprep.subr.bf16.mxu0 %v1361
      %1992 = vmatpush1.bf16.msra.mxu0 %v1360
      %1993 = vmatprep.subr.bf16.mxu0 %v1352
      %1994 = vmatpush1.bf16.msra.mxu0 %v1351
      %1995 = vmatprep.subr.bf16.mxu0 %v1343
      %1996 = vmatpush1.bf16.msra.mxu0 %v1342
      %1997 = vmatprep.subr.bf16.mxu0 %v1334
      %1998 = vmatpush1.bf16.msra.mxu0 %v1333
      %1999 = vmatprep.subr.bf16.mxu0 %v1325
      %2000 = vmatpush1.bf16.msra.mxu0 %v1324
      %2001 = vmatprep.subr.bf16.mxu0 %v1316
      %2002 = vmatpush1.bf16.msra.mxu0 %v1315
      %2003 = vmatprep.subr.bf16.mxu0 %v1451
      %2004 = vmatpush2.bf16.msra.mxu0 %v1450
      %2005 = vmatprep.subr.bf16.mxu0 %v1442
      %2006 = vmatpush2.bf16.msra.mxu0 %v1441
      %2007 = vmatprep.subr.bf16.mxu0 %v1433
      %2008 = vmatpush2.bf16.msra.mxu0 %v1432
      %2009 = vmatprep.subr.bf16.mxu0 %v1424
      %2010 = vmatpush2.bf16.msra.mxu0 %v1423
      %2011 = vmatprep.subr.bf16.mxu0 %v1415
      %2012 = vmatpush2.bf16.msra.mxu0 %v1414
      %2013 = vmatprep.subr.bf16.mxu0 %v1406
      %2014 = vmatpush2.bf16.msra.mxu0 %v1405
      %2015 = vmatprep.subr.bf16.mxu0 %v1397
      %2016 = vmatpush2.bf16.msra.mxu0 %v1396
      %2017 = vmatprep.subr.bf16.mxu0 %v1388
      %2018 = vmatpush2.bf16.msra.mxu0 %v1387
      %2019 = vmatprep.mubr.bf16.mxu0 %v346
      %2020 = vmatmul.mubr.bf16.gmra.mxu0 %v345
      %v2021 = vpop.f32.mrf.mxu0
      %v2022 = vadd.f32 %v619, %v2021
      %v2023 = vpop.f32.mrf.mxu0
      %v2024 = vadd.f32 %v623, %v2023
      %v2025 = vpop.f32.mrf.mxu0
      %v2026 = vpop.f32.mrf.mxu0
      %2027 = vdwg.mxu0
      %2028 = vmatprep.subr.bf16.mxu0 %v1523
      %2029 = vmatpush1.bf16.msra.mxu0 %v1522
      %2030 = vmatprep.subr.bf16.mxu0 %v1514
      %2031 = vmatpush1.bf16.msra.mxu0 %v1513
      %2032 = vmatprep.subr.bf16.mxu0 %v1505
      %2033 = vmatpush1.bf16.msra.mxu0 %v1504
      %2034 = vmatprep.subr.bf16.mxu0 %v1496
      %2035 = vmatpush1.bf16.msra.mxu0 %v1495
      %2036 = vmatprep.subr.bf16.mxu0 %v1487
      %2037 = vmatpush1.bf16.msra.mxu0 %v1486
      %2038 = vmatprep.subr.bf16.mxu0 %v1478
      %2039 = vmatpush1.bf16.msra.mxu0 %v1477
      %2040 = vmatprep.subr.bf16.mxu0 %v1469
      %2041 = vmatpush1.bf16.msra.mxu0 %v1468
      %2042 = vmatprep.subr.bf16.mxu0 %v1460
      %2043 = vmatpush1.bf16.msra.mxu0 %v1459
      %2044 = vmatprep.subr.bf16.mxu0 0
      %2045 = vmatpush2.bf16.msra.mxu0 0
      %2046 = vmatprep.subr.bf16.mxu0 0
      %2047 = vmatpush2.bf16.msra.mxu0 0
      %2048 = vmatprep.subr.bf16.mxu0 0
      %2049 = vmatpush2.bf16.msra.mxu0 0
      %2050 = vmatprep.subr.bf16.mxu0 0
      %2051 = vmatpush2.bf16.msra.mxu0 0
      %2052 = vmatprep.subr.bf16.mxu0 0
      %2053 = vmatpush2.bf16.msra.mxu0 0
      %2054 = vmatprep.subr.bf16.mxu0 0
      %2055 = vmatpush2.bf16.msra.mxu0 0
      %2056 = vmatprep.subr.bf16.mxu0 0
      %2057 = vmatpush2.bf16.msra.mxu0 0
      %2058 = vmatprep.subr.bf16.mxu0 0
      %2059 = vmatpush2.bf16.msra.mxu0 0
      %2060 = vmatprep.mubr.bf16.mxu0 0
      %2061 = vmatmul.mubr.bf16.gmra.mxu0 %v347
      %v2062 = vpop.f32.mrf.mxu0
      %v2063 = vadd.f32 %v2022, %v2062
      %v2064 = vpop.f32.mrf.mxu0
      %v2065 = vadd.f32 %v2024, %v2064
      %v2066 = vpop.f32.mrf.mxu0
      %v2067 = vpop.f32.mrf.mxu0
      %2068 = vdwg.mxu0
      %2069 = vmatprep.subr.bf16.mxu0 0
      %2070 = vmatpush1.bf16.msra.mxu0 %v1380
      %2071 = vmatprep.subr.bf16.mxu0 0
      %2072 = vmatpush1.bf16.msra.mxu0 %v1371
      %2073 = vmatprep.subr.bf16.mxu0 0
      %2074 = vmatpush1.bf16.msra.mxu0 %v1362
      %2075 = vmatprep.subr.bf16.mxu0 0
      %2076 = vmatpush1.bf16.msra.mxu0 %v1353
      %2077 = vmatprep.subr.bf16.mxu0 0
      %2078 = vmatpush1.bf16.msra.mxu0 %v1344
      %2079 = vmatprep.subr.bf16.mxu0 0
      %2080 = vmatpush1.bf16.msra.mxu0 %v1335
      %2081 = vmatprep.subr.bf16.mxu0 0
      %2082 = vmatpush1.bf16.msra.mxu0 %v1326
      %2083 = vmatprep.subr.bf16.mxu0 0
      %2084 = vmatpush1.bf16.msra.mxu0 %v1317
      %2085 = vmatprep.subr.bf16.mxu0 0
      %2086 = vmatpush2.bf16.msra.mxu0 %v1452
      %2087 = vmatprep.subr.bf16.mxu0 0
      %2088 = vmatpush2.bf16.msra.mxu0 %v1443
      %2089 = vmatprep.subr.bf16.mxu0 0
      %2090 = vmatpush2.bf16.msra.mxu0 %v1434
      %2091 = vmatprep.subr.bf16.mxu0 0
      %2092 = vmatpush2.bf16.msra.mxu0 %v1425
      %2093 = vmatprep.subr.bf16.mxu0 0
      %2094 = vmatpush2.bf16.msra.mxu0 %v1416
      %2095 = vmatprep.subr.bf16.mxu0 0
      %2096 = vmatpush2.bf16.msra.mxu0 %v1407
      %2097 = vmatprep.subr.bf16.mxu0 0
      %2098 = vmatpush2.bf16.msra.mxu0 %v1398
      %2099 = vmatprep.subr.bf16.mxu0 0
      %2100 = vmatpush2.bf16.msra.mxu0 %v1389
      %2101 = vmatprep.mubr.bf16.mxu0 %v346
      %2102 = vmatmul.mubr.bf16.gmra.mxu0 %v345
      %v2103 = vpop.f32.mrf.mxu0
      %v2104 = vadd.f32 %v627, %v2103
      %v2105 = vpop.f32.mrf.mxu0
      %v2106 = vpop.f32.mrf.mxu0
      %v2107 = vpop.f32.mrf.mxu0
      %2108 = vdwg.mxu0
      %2109 = vmatprep.subr.bf16.mxu0 0
      %2110 = vmatpush1.bf16.msra.mxu0 %v1524
      %2111 = vmatprep.subr.bf16.mxu0 0
      %2112 = vmatpush1.bf16.msra.mxu0 %v1515
      %2113 = vmatprep.subr.bf16.mxu0 0
      %2114 = vmatpush1.bf16.msra.mxu0 %v1506
      %2115 = vmatprep.subr.bf16.mxu0 0
      %2116 = vmatpush1.bf16.msra.mxu0 %v1497
      %2117 = vmatprep.subr.bf16.mxu0 0
      %2118 = vmatpush1.bf16.msra.mxu0 %v1488
      %2119 = vmatprep.subr.bf16.mxu0 0
      %2120 = vmatpush1.bf16.msra.mxu0 %v1479
      %2121 = vmatprep.subr.bf16.mxu0 0
      %2122 = vmatpush1.bf16.msra.mxu0 %v1470
      %2123 = vmatprep.subr.bf16.mxu0 0
      %2124 = vmatpush1.bf16.msra.mxu0 %v1461
      %2125 = vmatprep.subr.bf16.mxu0 0
      %2126 = vmatpush2.bf16.msra.mxu0 0
      %2127 = vmatprep.subr.bf16.mxu0 0
      %2128 = vmatpush2.bf16.msra.mxu0 0
      %2129 = vmatprep.subr.bf16.mxu0 0
      %2130 = vmatpush2.bf16.msra.mxu0 0
      %2131 = vmatprep.subr.bf16.mxu0 0
      %2132 = vmatpush2.bf16.msra.mxu0 0
      %2133 = vmatprep.subr.bf16.mxu0 0
      %2134 = vmatpush2.bf16.msra.mxu0 0
      %2135 = vmatprep.subr.bf16.mxu0 0
      %2136 = vmatpush2.bf16.msra.mxu0 0
      %2137 = vmatprep.subr.bf16.mxu0 0
      %2138 = vmatpush2.bf16.msra.mxu0 0
      %2139 = vmatprep.subr.bf16.mxu0 0
      %2140 = vmatpush2.bf16.msra.mxu0 0
      %2141 = vmatprep.mubr.bf16.mxu0 0
      %2142 = vmatmul.mubr.bf16.gmra.mxu0 %v347
      %v2143 = vpop.f32.mrf.mxu0
      %v2144 = vadd.f32 %v2104, %v2143
      %v2145 = vpop.f32.mrf.mxu0
      %v2146 = vpop.f32.mrf.mxu0
      %v2147 = vpop.f32.mrf.mxu0
      %2148 = vdwg.mxu0
      %v2149 = vlaneseq
      %v2150 = vand.u32 %v2149, 127
      %vm2151 = vcmp.lt.s32.totalorder %v2150, 5
      %v2152 = vpack.c.bf16 %v1817, %v1817
      %v2153 = vpack.c.bf16 %v1901, %v1901
      %vm2154 = vcmask 523264
      %v2156 = vsel %vm2154, %v2152, 0
      %v2159 = vsel %vm2154, %v2153, 0
      %2161 = vmatprep.subr.bf16.mxu0 0
      %2162 = vmatpush1.bf16.xpose.msra.mxu0 0
      %2163 = vmatprep.subr.bf16.mxu0 0
      %2164 = vmatpush1.bf16.xpose.msra.mxu0 0
      %2165 = vmatprep.subr.bf16.mxu0 0
      %2166 = vmatpush1.bf16.xpose.msra.mxu0 0
      %2167 = vmatprep.subr.bf16.mxu0 0
      %2168 = vmatpush1.bf16.xpose.msra.mxu0 0
      %2169 = vmatprep.subr.bf16.mxu0 0
      %2170 = vmatpush1.bf16.xpose.msra.mxu0 0
      %2171 = vmatprep.subr.bf16.mxu0 0
      %2172 = vmatpush1.bf16.xpose.msra.mxu0 0
      %2173 = vmatprep.subr.bf16.mxu0 0
      %2174 = vmatpush1.bf16.xpose.msra.mxu0 0
      %2175 = vmatprep.subr.bf16.mxu0 0
      %2176 = vmatpush1.bf16.xpose.msra.mxu0 %v2159
      %2177 = vmatprep.subr.bf16.mxu0 0
      %2178 = vmatpush2.bf16.xpose.msra.mxu0 0
      %2179 = vmatprep.subr.bf16.mxu0 0
      %2180 = vmatpush2.bf16.xpose.msra.mxu0 0
      %2181 = vmatprep.subr.bf16.mxu0 0
      %2182 = vmatpush2.bf16.xpose.msra.mxu0 0
      %2183 = vmatprep.subr.bf16.mxu0 0
      %2184 = vmatpush2.bf16.xpose.msra.mxu0 0
      %2185 = vmatprep.subr.bf16.mxu0 0
      %2186 = vmatpush2.bf16.xpose.msra.mxu0 0
      %2187 = vmatprep.subr.bf16.mxu0 0
      %2188 = vmatpush2.bf16.xpose.msra.mxu0 0
      %2189 = vmatprep.subr.bf16.mxu0 0
      %2190 = vmatpush2.bf16.xpose.msra.mxu0 0
      %2191 = vmatprep.subr.bf16.mxu0 0
      %2192 = vmatpush2.bf16.xpose.msra.mxu0 0
      %2193 = vmatprep.mubr.bf16.mxu0 0
      %2194 = vmatmul.mubr.bf16.gmra.mxu0 %v2156
      %v2195 = vpop.f32.mrf.mxu0
      %v2196 = vadd.f32 0.0, %v2195
      %v2197 = vpop.f32.mrf.mxu0
      %v2198 = vpop.f32.mrf.mxu0
      %v2199 = vpop.f32.mrf.mxu0
      %2200 = vdwg.mxu0
      %v2201 = vsel %vm2151, %v2196, -inf
      %vm2202 = vcmask 64512
      %v2203 = vsel %vm2202, %v2201, -inf
      %2204 = vmax.xlane.f32.xlu0 %v2203
      %v2205 = vpop.xlane.xlu0 %2204
      %v2206 = vsub.f32 %v2201, %v2205
      %v2207 = vmul.f32 %v2206, 1.442695
      %v2208 = vpow.pop %v2207
      %v2209 = vsel %vm2202, %v2208, 0.0
      %2210 = vadd.xlane.f32.xlu0 %v2209
      %v2211 = vpop.xlane.xlu0 %2210
      %v2212 = vrcp.pop %v2211
      %v2213 = vpack.c.bf16 %v2208, %v2208
      %v2214 = vpack.c.bf16 %v2063, %v2063
      %v2216 = vsel %vm2202, %v2213, 0
      %vm2218 = vcmask 1043456
      %v2220 = vsel %vm2218, %v2214, 0
      %2222 = vmatprep.subr.bf16.mxu0 0
      %2223 = vmatpush1.bf16.msra.mxu0 0
      %2224 = vmatprep.subr.bf16.mxu0 0
      %2225 = vmatpush1.bf16.msra.mxu0 0
      %2226 = vmatprep.subr.bf16.mxu0 0
      %2227 = vmatpush1.bf16.msra.mxu0 0
      %2228 = vmatprep.subr.bf16.mxu0 0
      %2229 = vmatpush1.bf16.msra.mxu0 0
      %2230 = vmatprep.subr.bf16.mxu0 0
      %2231 = vmatpush1.bf16.msra.mxu0 0
      %2232 = vmatprep.subr.bf16.mxu0 0
      %2233 = vmatpush1.bf16.msra.mxu0 0
      %2234 = vmatprep.subr.bf16.mxu0 0
      %2235 = vmatpush1.bf16.msra.mxu0 0
      %2236 = vmatprep.subr.bf16.mxu0 0
      %2237 = vmatpush1.bf16.msra.mxu0 %v2220
      %2238 = vmatprep.subr.bf16.mxu0 0
      %2239 = vmatpush2.bf16.msra.mxu0 0
      %2240 = vmatprep.subr.bf16.mxu0 0
      %2241 = vmatpush2.bf16.msra.mxu0 0
      %2242 = vmatprep.subr.bf16.mxu0 0
      %2243 = vmatpush2.bf16.msra.mxu0 0
      %2244 = vmatprep.subr.bf16.mxu0 0
      %2245 = vmatpush2.bf16.msra.mxu0 0
      %2246 = vmatprep.subr.bf16.mxu0 0
      %2247 = vmatpush2.bf16.msra.mxu0 0
      %2248 = vmatprep.subr.bf16.mxu0 0
      %2249 = vmatpush2.bf16.msra.mxu0 0
      %2250 = vmatprep.subr.bf16.mxu0 0
      %2251 = vmatpush2.bf16.msra.mxu0 0
      %2252 = vmatprep.subr.bf16.mxu0 0
      %2253 = vmatpush2.bf16.msra.mxu0 0
      %2254 = vmatprep.mubr.bf16.mxu0 0
      %2255 = vmatmul.mubr.bf16.gmra.mxu0 %v2216
      %v2256 = vpop.f32.mrf.mxu0
      %v2257 = vadd.f32 0.0, %v2256
      %v2258 = vpop.f32.mrf.mxu0
      %v2259 = vpop.f32.mrf.mxu0
      %v2260 = vpop.f32.mrf.mxu0
      %2261 = vdwg.mxu0
      %v2262 = vmul.f32 %v2257, %v2212
      %2264 = vrot.lane.b32.xlu0 %v2152, 64
      %v2265 = vpop.permute.xlu0 %2264
      %2267 = vrot.lane.b32.xlu0 %v2153, 64
      %v2268 = vpop.permute.xlu0 %2267
      %v2270 = vsel %vm2154, %v2265, 0
      %v2273 = vsel %vm2154, %v2268, 0
      %2275 = vmatprep.subr.bf16.mxu0 0
      %2276 = vmatpush1.bf16.xpose.msra.mxu0 0
      %2277 = vmatprep.subr.bf16.mxu0 0
      %2278 = vmatpush1.bf16.xpose.msra.mxu0 0
      %2279 = vmatprep.subr.bf16.mxu0 0
      %2280 = vmatpush1.bf16.xpose.msra.mxu0 0
      %2281 = vmatprep.subr.bf16.mxu0 0
      %2282 = vmatpush1.bf16.xpose.msra.mxu0 0
      %2283 = vmatprep.subr.bf16.mxu0 0
      %2284 = vmatpush1.bf16.xpose.msra.mxu0 0
      %2285 = vmatprep.subr.bf16.mxu0 0
      %2286 = vmatpush1.bf16.xpose.msra.mxu0 0
      %2287 = vmatprep.subr.bf16.mxu0 0
      %2288 = vmatpush1.bf16.xpose.msra.mxu0 0
      %2289 = vmatprep.subr.bf16.mxu0 0
      %2290 = vmatpush1.bf16.xpose.msra.mxu0 %v2273
      %2291 = vmatprep.subr.bf16.mxu0 0
      %2292 = vmatpush2.bf16.xpose.msra.mxu0 0
      %2293 = vmatprep.subr.bf16.mxu0 0
      %2294 = vmatpush2.bf16.xpose.msra.mxu0 0
      %2295 = vmatprep.subr.bf16.mxu0 0
      %2296 = vmatpush2.bf16.xpose.msra.mxu0 0
      %2297 = vmatprep.subr.bf16.mxu0 0
      %2298 = vmatpush2.bf16.xpose.msra.mxu0 0
      %2299 = vmatprep.subr.bf16.mxu0 0
      %2300 = vmatpush2.bf16.xpose.msra.mxu0 0
      %2301 = vmatprep.subr.bf16.mxu0 0
      %2302 = vmatpush2.bf16.xpose.msra.mxu0 0
      %2303 = vmatprep.subr.bf16.mxu0 0
      %2304 = vmatpush2.bf16.xpose.msra.mxu0 0
      %2305 = vmatprep.subr.bf16.mxu0 0
      %2306 = vmatpush2.bf16.xpose.msra.mxu0 0
      %2307 = vmatprep.mubr.bf16.mxu0 0
      %2308 = vmatmul.mubr.bf16.gmra.mxu0 %v2270
      %v2309 = vpop.f32.mrf.mxu0
      %v2310 = vadd.f32 0.0, %v2309
      %v2311 = vpop.f32.mrf.mxu0
      %v2312 = vpop.f32.mrf.mxu0
      %v2313 = vpop.f32.mrf.mxu0
      %2314 = vdwg.mxu0
      %v2315 = vsel %vm2151, %v2310, -inf
      %v2316 = vsel %vm2202, %v2315, -inf
      %2317 = vmax.xlane.f32.xlu0 %v2316
      %v2318 = vpop.xlane.xlu0 %2317
      %v2319 = vsub.f32 %v2315, %v2318
      %v2320 = vmul.f32 %v2319, 1.442695
      %v2321 = vpow.pop %v2320
      %v2322 = vsel %vm2202, %v2321, 0.0
      %2323 = vadd.xlane.f32.xlu0 %v2322
      %v2324 = vpop.xlane.xlu0 %2323
      %v2325 = vrcp.pop %v2324
      %v2326 = vpack.c.bf16 %v2321, %v2321
      %2328 = vrot.lane.b32.xlu0 %v2214, 64
      %v2329 = vpop.permute.xlu0 %2328
      %v2331 = vsel %vm2202, %v2326, 0
      %v2334 = vsel %vm2218, %v2329, 0
      %2336 = vmatprep.subr.bf16.mxu0 0
      %2337 = vmatpush1.bf16.msra.mxu0 0
      %2338 = vmatprep.subr.bf16.mxu0 0
      %2339 = vmatpush1.bf16.msra.mxu0 0
      %2340 = vmatprep.subr.bf16.mxu0 0
      %2341 = vmatpush1.bf16.msra.mxu0 0
      %2342 = vmatprep.subr.bf16.mxu0 0
      %2343 = vmatpush1.bf16.msra.mxu0 0
      %2344 = vmatprep.subr.bf16.mxu0 0
      %2345 = vmatpush1.bf16.msra.mxu0 0
      %2346 = vmatprep.subr.bf16.mxu0 0
      %2347 = vmatpush1.bf16.msra.mxu0 0
      %2348 = vmatprep.subr.bf16.mxu0 0
      %2349 = vmatpush1.bf16.msra.mxu0 0
      %2350 = vmatprep.subr.bf16.mxu0 0
      %2351 = vmatpush1.bf16.msra.mxu0 %v2334
      %2352 = vmatprep.subr.bf16.mxu0 0
      %2353 = vmatpush2.bf16.msra.mxu0 0
      %2354 = vmatprep.subr.bf16.mxu0 0
      %2355 = vmatpush2.bf16.msra.mxu0 0
      %2356 = vmatprep.subr.bf16.mxu0 0
      %2357 = vmatpush2.bf16.msra.mxu0 0
      %2358 = vmatprep.subr.bf16.mxu0 0
      %2359 = vmatpush2.bf16.msra.mxu0 0
      %2360 = vmatprep.subr.bf16.mxu0 0
      %2361 = vmatpush2.bf16.msra.mxu0 0
      %2362 = vmatprep.subr.bf16.mxu0 0
      %2363 = vmatpush2.bf16.msra.mxu0 0
      %2364 = vmatprep.subr.bf16.mxu0 0
      %2365 = vmatpush2.bf16.msra.mxu0 0
      %2366 = vmatprep.subr.bf16.mxu0 0
      %2367 = vmatpush2.bf16.msra.mxu0 0
      %2368 = vmatprep.mubr.bf16.mxu0 0
      %2369 = vmatmul.mubr.bf16.gmra.mxu0 %v2331
      %v2370 = vpop.f32.mrf.mxu0
      %v2371 = vadd.f32 0.0, %v2370
      %v2372 = vpop.f32.mrf.mxu0
      %v2373 = vpop.f32.mrf.mxu0
      %v2374 = vpop.f32.mrf.mxu0
      %2375 = vdwg.mxu0
      %v2376 = vmul.f32 %v2371, %v2325
      %v2377 = vpack.c.bf16 %v1819, %v1819
      %v2378 = vpack.c.bf16 %v1981, %v1981
      %v2380 = vsel %vm2154, %v2377, 0
      %v2383 = vsel %vm2154, %v2378, 0
      %2385 = vmatprep.subr.bf16.mxu0 0
      %2386 = vmatpush1.bf16.xpose.msra.mxu0 0
      %2387 = vmatprep.subr.bf16.mxu0 0
      %2388 = vmatpush1.bf16.xpose.msra.mxu0 0
      %2389 = vmatprep.subr.bf16.mxu0 0
      %2390 = vmatpush1.bf16.xpose.msra.mxu0 0
      %2391 = vmatprep.subr.bf16.mxu0 0
      %2392 = vmatpush1.bf16.xpose.msra.mxu0 0
      %2393 = vmatprep.subr.bf16.mxu0 0
      %2394 = vmatpush1.bf16.xpose.msra.mxu0 0
      %2395 = vmatprep.subr.bf16.mxu0 0
      %2396 = vmatpush1.bf16.xpose.msra.mxu0 0
      %2397 = vmatprep.subr.bf16.mxu0 0
      %2398 = vmatpush1.bf16.xpose.msra.mxu0 0
      %2399 = vmatprep.subr.bf16.mxu0 0
      %2400 = vmatpush1.bf16.xpose.msra.mxu0 %v2383
      %2401 = vmatprep.subr.bf16.mxu0 0
      %2402 = vmatpush2.bf16.xpose.msra.mxu0 0
      %2403 = vmatprep.subr.bf16.mxu0 0
      %2404 = vmatpush2.bf16.xpose.msra.mxu0 0
      %2405 = vmatprep.subr.bf16.mxu0 0
      %2406 = vmatpush2.bf16.xpose.msra.mxu0 0
      %2407 = vmatprep.subr.bf16.mxu0 0
      %2408 = vmatpush2.bf16.xpose.msra.mxu0 0
      %2409 = vmatprep.subr.bf16.mxu0 0
      %2410 = vmatpush2.bf16.xpose.msra.mxu0 0
      %2411 = vmatprep.subr.bf16.mxu0 0
      %2412 = vmatpush2.bf16.xpose.msra.mxu0 0
      %2413 = vmatprep.subr.bf16.mxu0 0
      %2414 = vmatpush2.bf16.xpose.msra.mxu0 0
      %2415 = vmatprep.subr.bf16.mxu0 0
      %2416 = vmatpush2.bf16.xpose.msra.mxu0 0
      %2417 = vmatprep.mubr.bf16.mxu0 0
      %2418 = vmatmul.mubr.bf16.gmra.mxu0 %v2380
      %v2419 = vpop.f32.mrf.mxu0
      %v2420 = vadd.f32 0.0, %v2419
      %v2421 = vpop.f32.mrf.mxu0
      %v2422 = vpop.f32.mrf.mxu0
      %v2423 = vpop.f32.mrf.mxu0
      %2424 = vdwg.mxu0
      %v2425 = vsel %vm2151, %v2420, -inf
      %v2426 = vsel %vm2202, %v2425, -inf
      %2427 = vmax.xlane.f32.xlu0 %v2426
      %v2428 = vpop.xlane.xlu0 %2427
      %v2429 = vsub.f32 %v2425, %v2428
      %v2430 = vmul.f32 %v2429, 1.442695
      %v2431 = vpow.pop %v2430
      %v2432 = vsel %vm2202, %v2431, 0.0
      %2433 = vadd.xlane.f32.xlu0 %v2432
      %v2434 = vpop.xlane.xlu0 %2433
      %v2435 = vrcp.pop %v2434
      %v2436 = vpack.c.bf16 %v2431, %v2431
      %v2437 = vpack.c.bf16 %v2065, %v2065
      %v2439 = vsel %vm2202, %v2436, 0
      %v2442 = vsel %vm2218, %v2437, 0
      %2444 = vmatprep.subr.bf16.mxu0 0
      %2445 = vmatpush1.bf16.msra.mxu0 0
      %2446 = vmatprep.subr.bf16.mxu0 0
      %2447 = vmatpush1.bf16.msra.mxu0 0
      %2448 = vmatprep.subr.bf16.mxu0 0
      %2449 = vmatpush1.bf16.msra.mxu0 0
      %2450 = vmatprep.subr.bf16.mxu0 0
      %2451 = vmatpush1.bf16.msra.mxu0 0
      %2452 = vmatprep.subr.bf16.mxu0 0
      %2453 = vmatpush1.bf16.msra.mxu0 0
      %2454 = vmatprep.subr.bf16.mxu0 0
      %2455 = vmatpush1.bf16.msra.mxu0 0
      %2456 = vmatprep.subr.bf16.mxu0 0
      %2457 = vmatpush1.bf16.msra.mxu0 0
      %2458 = vmatprep.subr.bf16.mxu0 0
      %2459 = vmatpush1.bf16.msra.mxu0 %v2442
      %2460 = vmatprep.subr.bf16.mxu0 0
      %2461 = vmatpush2.bf16.msra.mxu0 0
      %2462 = vmatprep.subr.bf16.mxu0 0
      %2463 = vmatpush2.bf16.msra.mxu0 0
      %2464 = vmatprep.subr.bf16.mxu0 0
      %2465 = vmatpush2.bf16.msra.mxu0 0
      %2466 = vmatprep.subr.bf16.mxu0 0
      %2467 = vmatpush2.bf16.msra.mxu0 0
      %2468 = vmatprep.subr.bf16.mxu0 0
      %2469 = vmatpush2.bf16.msra.mxu0 0
      %2470 = vmatprep.subr.bf16.mxu0 0
      %2471 = vmatpush2.bf16.msra.mxu0 0
      %2472 = vmatprep.subr.bf16.mxu0 0
      %2473 = vmatpush2.bf16.msra.mxu0 0
      %2474 = vmatprep.subr.bf16.mxu0 0
      %2475 = vmatpush2.bf16.msra.mxu0 0
      %2476 = vmatprep.mubr.bf16.mxu0 0
      %2477 = vmatmul.mubr.bf16.gmra.mxu0 %v2439
      %v2478 = vpop.f32.mrf.mxu0
      %v2479 = vadd.f32 0.0, %v2478
      %v2480 = vpop.f32.mrf.mxu0
      %v2481 = vpop.f32.mrf.mxu0
      %v2482 = vpop.f32.mrf.mxu0
      %2483 = vdwg.mxu0
      %v2484 = vmul.f32 %v2479, %v2435
      %2486 = vrot.lane.b32.xlu0 %v2377, 64
      %v2487 = vpop.permute.xlu0 %2486
      %2489 = vrot.lane.b32.xlu0 %v2378, 64
      %v2490 = vpop.permute.xlu0 %2489
      %v2492 = vsel %vm2154, %v2487, 0
      %v2495 = vsel %vm2154, %v2490, 0
      %2497 = vmatprep.subr.bf16.mxu0 0
      %2498 = vmatpush1.bf16.xpose.msra.mxu0 0
      %2499 = vmatprep.subr.bf16.mxu0 0
      %2500 = vmatpush1.bf16.xpose.msra.mxu0 0
      %2501 = vmatprep.subr.bf16.mxu0 0
      %2502 = vmatpush1.bf16.xpose.msra.mxu0 0
      %2503 = vmatprep.subr.bf16.mxu0 0
      %2504 = vmatpush1.bf16.xpose.msra.mxu0 0
      %2505 = vmatprep.subr.bf16.mxu0 0
      %2506 = vmatpush1.bf16.xpose.msra.mxu0 0
      %2507 = vmatprep.subr.bf16.mxu0 0
      %2508 = vmatpush1.bf16.xpose.msra.mxu0 0
      %2509 = vmatprep.subr.bf16.mxu0 0
      %2510 = vmatpush1.bf16.xpose.msra.mxu0 0
      %2511 = vmatprep.subr.bf16.mxu0 0
      %2512 = vmatpush1.bf16.xpose.msra.mxu0 %v2495
      %2513 = vmatprep.subr.bf16.mxu0 0
      %2514 = vmatpush2.bf16.xpose.msra.mxu0 0
      %2515 = vmatprep.subr.bf16.mxu0 0
      %2516 = vmatpush2.bf16.xpose.msra.mxu0 0
      %2517 = vmatprep.subr.bf16.mxu0 0
      %2518 = vmatpush2.bf16.xpose.msra.mxu0 0
      %2519 = vmatprep.subr.bf16.mxu0 0
      %2520 = vmatpush2.bf16.xpose.msra.mxu0 0
      %2521 = vmatprep.subr.bf16.mxu0 0
      %2522 = vmatpush2.bf16.xpose.msra.mxu0 0
      %2523 = vmatprep.subr.bf16.mxu0 0
      %2524 = vmatpush2.bf16.xpose.msra.mxu0 0
      %2525 = vmatprep.subr.bf16.mxu0 0
      %2526 = vmatpush2.bf16.xpose.msra.mxu0 0
      %2527 = vmatprep.subr.bf16.mxu0 0
      %2528 = vmatpush2.bf16.xpose.msra.mxu0 0
      %2529 = vmatprep.mubr.bf16.mxu0 0
      %2530 = vmatmul.mubr.bf16.gmra.mxu0 %v2492
      %v2531 = vpop.f32.mrf.mxu0
      %v2532 = vadd.f32 0.0, %v2531
      %v2533 = vpop.f32.mrf.mxu0
      %v2534 = vpop.f32.mrf.mxu0
      %v2535 = vpop.f32.mrf.mxu0
      %2536 = vdwg.mxu0
      %v2537 = vsel %vm2151, %v2532, -inf
      %v2538 = vsel %vm2202, %v2537, -inf
      %2539 = vmax.xlane.f32.xlu0 %v2538
      %v2540 = vpop.xlane.xlu0 %2539
      %v2541 = vsub.f32 %v2537, %v2540
      %v2542 = vmul.f32 %v2541, 1.442695
      %v2543 = vpow.pop %v2542
      %v2544 = vsel %vm2202, %v2543, 0.0
      %2545 = vadd.xlane.f32.xlu0 %v2544
      %v2546 = vpop.xlane.xlu0 %2545
      %v2547 = vrcp.pop %v2546
      %v2548 = vpack.c.bf16 %v2543, %v2543
      %2550 = vrot.lane.b32.xlu0 %v2437, 64
      %v2551 = vpop.permute.xlu0 %2550
      %v2553 = vsel %vm2202, %v2548, 0
      %v2556 = vsel %vm2218, %v2551, 0
      %2558 = vmatprep.subr.bf16.mxu0 0
      %2559 = vmatpush1.bf16.msra.mxu0 0
      %2560 = vmatprep.subr.bf16.mxu0 0
      %2561 = vmatpush1.bf16.msra.mxu0 0
      %2562 = vmatprep.subr.bf16.mxu0 0
      %2563 = vmatpush1.bf16.msra.mxu0 0
      %2564 = vmatprep.subr.bf16.mxu0 0
      %2565 = vmatpush1.bf16.msra.mxu0 0
      %2566 = vmatprep.subr.bf16.mxu0 0
      %2567 = vmatpush1.bf16.msra.mxu0 0
      %2568 = vmatprep.subr.bf16.mxu0 0
      %2569 = vmatpush1.bf16.msra.mxu0 0
      %2570 = vmatprep.subr.bf16.mxu0 0
      %2571 = vmatpush1.bf16.msra.mxu0 0
      %2572 = vmatprep.subr.bf16.mxu0 0
      %2573 = vmatpush1.bf16.msra.mxu0 %v2556
      %2574 = vmatprep.subr.bf16.mxu0 0
      %2575 = vmatpush2.bf16.msra.mxu0 0
      %2576 = vmatprep.subr.bf16.mxu0 0
      %2577 = vmatpush2.bf16.msra.mxu0 0
      %2578 = vmatprep.subr.bf16.mxu0 0
      %2579 = vmatpush2.bf16.msra.mxu0 0
      %2580 = vmatprep.subr.bf16.mxu0 0
      %2581 = vmatpush2.bf16.msra.mxu0 0
      %2582 = vmatprep.subr.bf16.mxu0 0
      %2583 = vmatpush2.bf16.msra.mxu0 0
      %2584 = vmatprep.subr.bf16.mxu0 0
      %2585 = vmatpush2.bf16.msra.mxu0 0
      %2586 = vmatprep.subr.bf16.mxu0 0
      %2587 = vmatpush2.bf16.msra.mxu0 0
      %2588 = vmatprep.subr.bf16.mxu0 0
      %2589 = vmatpush2.bf16.msra.mxu0 0
      %2590 = vmatprep.mubr.bf16.mxu0 0
      %2591 = vmatmul.mubr.bf16.gmra.mxu0 %v2553
      %v2592 = vpop.f32.mrf.mxu0
      %v2593 = vadd.f32 0.0, %v2592
      %v2594 = vpop.f32.mrf.mxu0
      %v2595 = vpop.f32.mrf.mxu0
      %v2596 = vpop.f32.mrf.mxu0
      %2597 = vdwg.mxu0
      %v2598 = vmul.f32 %v2593, %v2547
      %v2599 = vpack.c.bf16 %v1899, %v1899
      %v2600 = vpack.c.bf16 %v1983, %v1983
      %v2602 = vsel %vm2154, %v2599, 0
      %v2605 = vsel %vm2154, %v2600, 0
      %2607 = vmatprep.subr.bf16.mxu0 0
      %2608 = vmatpush1.bf16.xpose.msra.mxu0 0
      %2609 = vmatprep.subr.bf16.mxu0 0
      %2610 = vmatpush1.bf16.xpose.msra.mxu0 0
      %2611 = vmatprep.subr.bf16.mxu0 0
      %2612 = vmatpush1.bf16.xpose.msra.mxu0 0
      %2613 = vmatprep.subr.bf16.mxu0 0
      %2614 = vmatpush1.bf16.xpose.msra.mxu0 0
      %2615 = vmatprep.subr.bf16.mxu0 0
      %2616 = vmatpush1.bf16.xpose.msra.mxu0 0
      %2617 = vmatprep.subr.bf16.mxu0 0
      %2618 = vmatpush1.bf16.xpose.msra.mxu0 0
      %2619 = vmatprep.subr.bf16.mxu0 0
      %2620 = vmatpush1.bf16.xpose.msra.mxu0 0
      %2621 = vmatprep.subr.bf16.mxu0 0
      %2622 = vmatpush1.bf16.xpose.msra.mxu0 %v2605
      %2623 = vmatprep.subr.bf16.mxu0 0
      %2624 = vmatpush2.bf16.xpose.msra.mxu0 0
      %2625 = vmatprep.subr.bf16.mxu0 0
      %2626 = vmatpush2.bf16.xpose.msra.mxu0 0
      %2627 = vmatprep.subr.bf16.mxu0 0
      %2628 = vmatpush2.bf16.xpose.msra.mxu0 0
      %2629 = vmatprep.subr.bf16.mxu0 0
      %2630 = vmatpush2.bf16.xpose.msra.mxu0 0
      %2631 = vmatprep.subr.bf16.mxu0 0
      %2632 = vmatpush2.bf16.xpose.msra.mxu0 0
      %2633 = vmatprep.subr.bf16.mxu0 0
      %2634 = vmatpush2.bf16.xpose.msra.mxu0 0
      %2635 = vmatprep.subr.bf16.mxu0 0
      %2636 = vmatpush2.bf16.xpose.msra.mxu0 0
      %2637 = vmatprep.subr.bf16.mxu0 0
      %2638 = vmatpush2.bf16.xpose.msra.mxu0 0
      %2639 = vmatprep.mubr.bf16.mxu0 0
      %2640 = vmatmul.mubr.bf16.gmra.mxu0 %v2602
      %v2641 = vpop.f32.mrf.mxu0
      %v2642 = vadd.f32 0.0, %v2641
      %v2643 = vpop.f32.mrf.mxu0
      %v2644 = vpop.f32.mrf.mxu0
      %v2645 = vpop.f32.mrf.mxu0
      %2646 = vdwg.mxu0
      %v2647 = vsel %vm2151, %v2642, -inf
      %v2648 = vsel %vm2202, %v2647, -inf
      %2649 = vmax.xlane.f32.xlu0 %v2648
      %v2650 = vpop.xlane.xlu0 %2649
      %v2651 = vsub.f32 %v2647, %v2650
      %v2652 = vmul.f32 %v2651, 1.442695
      %v2653 = vpow.pop %v2652
      %v2654 = vsel %vm2202, %v2653, 0.0
      %2655 = vadd.xlane.f32.xlu0 %v2654
      %v2656 = vpop.xlane.xlu0 %2655
      %v2657 = vrcp.pop %v2656
      %v2658 = vpack.c.bf16 %v2653, %v2653
      %v2659 = vpack.c.bf16 %v2144, %v2144
      %v2661 = vsel %vm2202, %v2658, 0
      %v2664 = vsel %vm2218, %v2659, 0
      %2666 = vmatprep.subr.bf16.mxu0 0
      %2667 = vmatpush1.bf16.msra.mxu0 0
      %2668 = vmatprep.subr.bf16.mxu0 0
      %2669 = vmatpush1.bf16.msra.mxu0 0
      %2670 = vmatprep.subr.bf16.mxu0 0
      %2671 = vmatpush1.bf16.msra.mxu0 0
      %2672 = vmatprep.subr.bf16.mxu0 0
      %2673 = vmatpush1.bf16.msra.mxu0 0
      %2674 = vmatprep.subr.bf16.mxu0 0
      %2675 = vmatpush1.bf16.msra.mxu0 0
      %2676 = vmatprep.subr.bf16.mxu0 0
      %2677 = vmatpush1.bf16.msra.mxu0 0
      %2678 = vmatprep.subr.bf16.mxu0 0
      %2679 = vmatpush1.bf16.msra.mxu0 0
      %2680 = vmatprep.subr.bf16.mxu0 0
      %2681 = vmatpush1.bf16.msra.mxu0 %v2664
      %2682 = vmatprep.subr.bf16.mxu0 0
      %2683 = vmatpush2.bf16.msra.mxu0 0
      %2684 = vmatprep.subr.bf16.mxu0 0
      %2685 = vmatpush2.bf16.msra.mxu0 0
      %2686 = vmatprep.subr.bf16.mxu0 0
      %2687 = vmatpush2.bf16.msra.mxu0 0
      %2688 = vmatprep.subr.bf16.mxu0 0
      %2689 = vmatpush2.bf16.msra.mxu0 0
      %2690 = vmatprep.subr.bf16.mxu0 0
      %2691 = vmatpush2.bf16.msra.mxu0 0
      %2692 = vmatprep.subr.bf16.mxu0 0
      %2693 = vmatpush2.bf16.msra.mxu0 0
      %2694 = vmatprep.subr.bf16.mxu0 0
      %2695 = vmatpush2.bf16.msra.mxu0 0
      %2696 = vmatprep.subr.bf16.mxu0 0
      %2697 = vmatpush2.bf16.msra.mxu0 0
      %2698 = vmatprep.mubr.bf16.mxu0 0
      %2699 = vmatmul.mubr.bf16.gmra.mxu0 %v2661
      %v2700 = vpop.f32.mrf.mxu0
      %v2701 = vadd.f32 0.0, %v2700
      %v2702 = vpop.f32.mrf.mxu0
      %v2703 = vpop.f32.mrf.mxu0
      %v2704 = vpop.f32.mrf.mxu0
      %2705 = vdwg.mxu0
      %v2706 = vmul.f32 %v2701, %v2657
      %2708 = vrot.lane.b32.xlu0 %v2599, 64
      %v2709 = vpop.permute.xlu0 %2708
      %2711 = vrot.lane.b32.xlu0 %v2600, 64
      %v2712 = vpop.permute.xlu0 %2711
      %v2714 = vsel %vm2154, %v2709, 0
      %v2717 = vsel %vm2154, %v2712, 0
      %2719 = vmatprep.subr.bf16.mxu0 0
      %2720 = vmatpush1.bf16.xpose.msra.mxu0 0
      %2721 = vmatprep.subr.bf16.mxu0 0
      %2722 = vmatpush1.bf16.xpose.msra.mxu0 0
      %2723 = vmatprep.subr.bf16.mxu0 0
      %2724 = vmatpush1.bf16.xpose.msra.mxu0 0
      %2725 = vmatprep.subr.bf16.mxu0 0
      %2726 = vmatpush1.bf16.xpose.msra.mxu0 0
      %2727 = vmatprep.subr.bf16.mxu0 0
      %2728 = vmatpush1.bf16.xpose.msra.mxu0 0
      %2729 = vmatprep.subr.bf16.mxu0 0
      %2730 = vmatpush1.bf16.xpose.msra.mxu0 0
      %2731 = vmatprep.subr.bf16.mxu0 0
      %2732 = vmatpush1.bf16.xpose.msra.mxu0 0
      %2733 = vmatprep.subr.bf16.mxu0 0
      %2734 = vmatpush1.bf16.xpose.msra.mxu0 %v2717
      %2735 = vmatprep.subr.bf16.mxu0 0
      %2736 = vmatpush2.bf16.xpose.msra.mxu0 0
      %2737 = vmatprep.subr.bf16.mxu0 0
      %2738 = vmatpush2.bf16.xpose.msra.mxu0 0
      %2739 = vmatprep.subr.bf16.mxu0 0
      %2740 = vmatpush2.bf16.xpose.msra.mxu0 0
      %2741 = vmatprep.subr.bf16.mxu0 0
      %2742 = vmatpush2.bf16.xpose.msra.mxu0 0
      %2743 = vmatprep.subr.bf16.mxu0 0
      %2744 = vmatpush2.bf16.xpose.msra.mxu0 0
      %2745 = vmatprep.subr.bf16.mxu0 0
      %2746 = vmatpush2.bf16.xpose.msra.mxu0 0
      %2747 = vmatprep.subr.bf16.mxu0 0
      %2748 = vmatpush2.bf16.xpose.msra.mxu0 0
      %2749 = vmatprep.subr.bf16.mxu0 0
      %2750 = vmatpush2.bf16.xpose.msra.mxu0 0
      %2751 = vmatprep.mubr.bf16.mxu0 0
      %2752 = vmatmul.mubr.bf16.gmra.mxu0 %v2714
      %v2753 = vpop.f32.mrf.mxu0
      %v2754 = vadd.f32 0.0, %v2753
      %v2755 = vpop.f32.mrf.mxu0
      %v2756 = vpop.f32.mrf.mxu0
      %v2757 = vpop.f32.mrf.mxu0
      %2758 = vdwg.mxu0
      %v2759 = vsel %vm2151, %v2754, -inf
      %v2760 = vsel %vm2202, %v2759, -inf
      %2761 = vmax.xlane.f32.xlu0 %v2760
      %v2762 = vpop.xlane.xlu0 %2761
      %v2763 = vsub.f32 %v2759, %v2762
      %v2764 = vmul.f32 %v2763, 1.442695
      %v2765 = vpow.pop %v2764
      %v2766 = vsel %vm2202, %v2765, 0.0
      %2767 = vadd.xlane.f32.xlu0 %v2766
      %v2768 = vpop.xlane.xlu0 %2767
      %v2769 = vrcp.pop %v2768
      %v2770 = vpack.c.bf16 %v2765, %v2765
      %2772 = vrot.lane.b32.xlu0 %v2659, 64
      %v2773 = vpop.permute.xlu0 %2772
      %v2775 = vsel %vm2202, %v2770, 0
      %v2778 = vsel %vm2218, %v2773, 0
      %2780 = vmatprep.subr.bf16.mxu0 0
      %2781 = vmatpush1.bf16.msra.mxu0 0
      %2782 = vmatprep.subr.bf16.mxu0 0
      %2783 = vmatpush1.bf16.msra.mxu0 0
      %2784 = vmatprep.subr.bf16.mxu0 0
      %2785 = vmatpush1.bf16.msra.mxu0 0
      %2786 = vmatprep.subr.bf16.mxu0 0
      %2787 = vmatpush1.bf16.msra.mxu0 0
      %2788 = vmatprep.subr.bf16.mxu0 0
      %2789 = vmatpush1.bf16.msra.mxu0 0
      %2790 = vmatprep.subr.bf16.mxu0 0
      %2791 = vmatpush1.bf16.msra.mxu0 0
      %2792 = vmatprep.subr.bf16.mxu0 0
      %2793 = vmatpush1.bf16.msra.mxu0 0
      %2794 = vmatprep.subr.bf16.mxu0 0
      %2795 = vmatpush1.bf16.msra.mxu0 %v2778
      %2796 = vmatprep.subr.bf16.mxu0 0
      %2797 = vmatpush2.bf16.msra.mxu0 0
      %2798 = vmatprep.subr.bf16.mxu0 0
      %2799 = vmatpush2.bf16.msra.mxu0 0
      %2800 = vmatprep.subr.bf16.mxu0 0
      %2801 = vmatpush2.bf16.msra.mxu0 0
      %2802 = vmatprep.subr.bf16.mxu0 0
      %2803 = vmatpush2.bf16.msra.mxu0 0
      %2804 = vmatprep.subr.bf16.mxu0 0
      %2805 = vmatpush2.bf16.msra.mxu0 0
      %2806 = vmatprep.subr.bf16.mxu0 0
      %2807 = vmatpush2.bf16.msra.mxu0 0
      %2808 = vmatprep.subr.bf16.mxu0 0
      %2809 = vmatpush2.bf16.msra.mxu0 0
      %2810 = vmatprep.subr.bf16.mxu0 0
      %2811 = vmatpush2.bf16.msra.mxu0 0
      %2812 = vmatprep.mubr.bf16.mxu0 0
      %2813 = vmatmul.mubr.bf16.gmra.mxu0 %v2775
      %v2814 = vpop.f32.mrf.mxu0
      %v2815 = vadd.f32 0.0, %v2814
      %v2816 = vpop.f32.mrf.mxu0
      %v2817 = vpop.f32.mrf.mxu0
      %v2818 = vpop.f32.mrf.mxu0
      %2819 = vdwg.mxu0
      %v2820 = vmul.f32 %v2815, %v2769
      %2822 = vrot.lane.b32.xlu0 %v2376, 64
      %v2823 = vpop.permute.xlu0 %2822
      %2826 = vrot.lane.b32.xlu0 %v2598, 64
      %v2827 = vpop.permute.xlu0 %2826
      %2830 = vrot.lane.b32.xlu0 %v2820, 64
      %v2831 = vpop.permute.xlu0 %2830
      %v2833 = vsel %vm2154, %v2262, %v2823
      %v2834 = vsel %vm2154, %v2484, %v2827
      %v2835 = vsel %vm2154, %v2706, %v2831
      %v2836 = vpack.c.bf16 %v2833, %v2833
      %v2837 = vpack.c.bf16 %v2834, %v2834
      %v2838 = vpack.c.bf16 %v2835, %v2835
      %v2839 = vld [vmem:[%s5] sm:$0xff]
      %v2840 = vld [vmem:[%s5 + $0x8] sm:$0xf]
      %v2841 = vld [vmem:[%s5 + $0xc] sm:$0xff]
      %v2842 = vld [vmem:[%s5 + $0x14] sm:$0xf]
      %v2843 = vld [vmem:[%s5 + $0x18] sm:$0xff]
      %v2844 = vld [vmem:[%s5 + $0x20] sm:$0xf]
      %v2845 = vld [vmem:[%s5 + $0x24] sm:$0xff]
      %v2846 = vld [vmem:[%s5 + $0x2c] sm:$0xf]
      %v2847 = vld [vmem:[%s5 + $0x30] sm:$0xff]
      %v2848 = vld [vmem:[%s5 + $0x38] sm:$0xf]
      %v2849 = vld [vmem:[%s5 + $0x3c] sm:$0xff]
      %v2850 = vld [vmem:[%s5 + $0x44] sm:$0xf]
      %v2851 = vld [vmem:[%s5 + $0x48] sm:$0xff]
      %v2852 = vld [vmem:[%s5 + $0x50] sm:$0xf]
      %v2853 = vld [vmem:[%s5 + $0x54] sm:$0xff]
      %v2854 = vld [vmem:[%s5 + $0x5c] sm:$0xf]
      %v2855 = vld [vmem:[%s5 + $0x60] sm:$0xff]
      %v2856 = vld [vmem:[%s5 + $0x68] sm:$0xf]
      %v2857 = vld [vmem:[%s5 + $0x6c] sm:$0xff]
      %v2858 = vld [vmem:[%s5 + $0x74] sm:$0xf]
      %v2859 = vld [vmem:[%s5 + $0x78] sm:$0xff]
      %v2860 = vld [vmem:[%s5 + $0x80] sm:$0xf]
      %v2861 = vld [vmem:[%s5 + $0x84] sm:$0xff]
      %v2862 = vld [vmem:[%s5 + $0x8c] sm:$0xf]
      %v2863 = vld [vmem:[%s5 + $0x90] sm:$0xff]
      %v2864 = vld [vmem:[%s5 + $0x98] sm:$0xf]
      %v2865 = vld [vmem:[%s5 + $0x9c] sm:$0xff]
      %v2866 = vld [vmem:[%s5 + $0xa4] sm:$0xf]
      %v2867 = vld [vmem:[%s5 + $0xa8] sm:$0xff]
      %v2868 = vld [vmem:[%s5 + $0xb0] sm:$0xf]
      %v2869 = vld [vmem:[%s5 + $0xb4] sm:$0xff]
      %v2870 = vld [vmem:[%s5 + $0xbc] sm:$0xf]
      %v2871 = vld [vmem:[%s5 + $0xc0] sm:$0xff]
      %v2872 = vld [vmem:[%s5 + $0xc8] sm:$0xf]
      %v2873 = vld [vmem:[%s5 + $0xcc] sm:$0xff]
      %v2874 = vld [vmem:[%s5 + $0xd4] sm:$0xf]
      %v2875 = vld [vmem:[%s5 + $0xd8] sm:$0xff]
      %v2876 = vld [vmem:[%s5 + $0xe0] sm:$0xf]
      %v2877 = vld [vmem:[%s5 + $0xe4] sm:$0xff]
      %v2878 = vld [vmem:[%s5 + $0xec] sm:$0xf]
      %v2879 = vld [vmem:[%s5 + $0xf0] sm:$0xff]
      %v2880 = vld [vmem:[%s5 + $0xf8] sm:$0xf]
      %v2881 = vld [vmem:[%s5 + $0xfc] sm:$0xff]
      %v2882 = vld [vmem:[%s5 + $0x104] sm:$0xf]
      %v2883 = vld [vmem:[%s5 + $0x108] sm:$0xff]
      %v2884 = vld [vmem:[%s5 + $0x110] sm:$0xf]
      %v2885 = vld [vmem:[%s5 + $0x114] sm:$0xff]
      %v2886 = vld [vmem:[%s5 + $0x11c] sm:$0xf]
      %v2887 = vld [vmem:[%s5 + $0x120] sm:$0xff]
      %v2888 = vld [vmem:[%s5 + $0x128] sm:$0xf]
      %v2889 = vld [vmem:[%s5 + $0x12c] sm:$0xff]
      %v2890 = vld [vmem:[%s5 + $0x134] sm:$0xf]
      %v2891 = vld [vmem:[%s5 + $0x138] sm:$0xff]
      %v2892 = vld [vmem:[%s5 + $0x140] sm:$0xf]
      %v2893 = vld [vmem:[%s5 + $0x144] sm:$0xff]
      %v2894 = vld [vmem:[%s5 + $0x14c] sm:$0xf]
      %v2895 = vld [vmem:[%s5 + $0x150] sm:$0xff]
      %v2896 = vld [vmem:[%s5 + $0x158] sm:$0xf]
      %v2897 = vld [vmem:[%s5 + $0x15c] sm:$0xff]
      %v2898 = vld [vmem:[%s5 + $0x164] sm:$0xf]
      %v2899 = vld [vmem:[%s5 + $0x168] sm:$0xff]
      %v2900 = vld [vmem:[%s5 + $0x170] sm:$0xf]
      %v2901 = vld [vmem:[%s5 + $0x174] sm:$0xff]
      %v2902 = vld [vmem:[%s5 + $0x17c] sm:$0xf]
      %v2903 = vld [vmem:[%s5 + $0x180] sm:$0xff]
      %v2904 = vld [vmem:[%s5 + $0x188] sm:$0xf]
      %v2905 = vld [vmem:[%s5 + $0x18c] sm:$0xff]
      %v2906 = vld [vmem:[%s5 + $0x194] sm:$0xf]
      %v2907 = vld [vmem:[%s5 + $0x198] sm:$0xff]
      %v2908 = vld [vmem:[%s5 + $0x1a0] sm:$0xf]
      %v2909 = vld [vmem:[%s5 + $0x1a4] sm:$0xff]
      %v2910 = vld [vmem:[%s5 + $0x1ac] sm:$0xf]
      %v2911 = vld [vmem:[%s5 + $0x1b0] sm:$0xff]
      %v2912 = vld [vmem:[%s5 + $0x1b8] sm:$0xf]
      %v2913 = vld [vmem:[%s5 + $0x1bc] sm:$0xff]
      %v2914 = vld [vmem:[%s5 + $0x1c4] sm:$0xf]
      %v2915 = vld [vmem:[%s5 + $0x1c8] sm:$0xff]
      %v2916 = vld [vmem:[%s5 + $0x1d0] sm:$0xf]
      %v2917 = vld [vmem:[%s5 + $0x1d4] sm:$0xff]
      %v2918 = vld [vmem:[%s5 + $0x1dc] sm:$0xf]
      %v2919 = vld [vmem:[%s5 + $0x1e0] sm:$0xff]
      %v2920 = vld [vmem:[%s5 + $0x1e8] sm:$0xf]
      %v2921 = vld [vmem:[%s5 + $0x1ec] sm:$0xff]
      %v2922 = vld [vmem:[%s5 + $0x1f4] sm:$0xf]
      %v2923 = vld [vmem:[%s5 + $0x1f8] sm:$0xff]
      %v2924 = vld [vmem:[%s5 + $0x200] sm:$0xf]
      %v2925 = vld [vmem:[%s5 + $0x204] sm:$0xff]
      %v2926 = vld [vmem:[%s5 + $0x20c] sm:$0xf]
      %v2927 = vld [vmem:[%s5 + $0x210] sm:$0xff]
      %v2928 = vld [vmem:[%s5 + $0x218] sm:$0xf]
      %v2929 = vld [vmem:[%s5 + $0x21c] sm:$0xff]
      %v2930 = vld [vmem:[%s5 + $0x224] sm:$0xf]
      %v2931 = vld [vmem:[%s5 + $0x228] sm:$0xff]
      %v2932 = vld [vmem:[%s5 + $0x230] sm:$0xf]
      %v2933 = vld [vmem:[%s5 + $0x234] sm:$0xff]
      %v2934 = vld [vmem:[%s5 + $0x23c] sm:$0xf]
      %v2935 = vld [vmem:[%s6] sm:$0x7]
      %v2937 = vlaneseq
      %v2938 = vshrl.u32 %v2937, 7
      %v2939 = vsub.s32 0, %v2938
      %v2940 = vrot.slane %v2935, %v2939
      %v2941 = vlaneseq
      %v2942 = vshrl.u32 %v2941, 7
      %v2943 = vsub.s32 1, %v2942
      %v2944 = vrot.slane %v2935, %v2943
      %v2945 = vlaneseq
      %v2946 = vshrl.u32 %v2945, 7
      %v2947 = vsub.s32 2, %v2946
      %v2948 = vrot.slane %v2935, %v2947
      %v3048 = vunpack.c.l.b16 %v2839
      %v3049 = vunpack.c.h.b16 %v2839
      %v3050 = vunpack.c.l.b16 %v2840
      %v3051 = vunpack.c.l.b16 %v2841
      %v3052 = vunpack.c.h.b16 %v2841
      %v3053 = vunpack.c.l.b16 %v2842
      %v3054 = vunpack.c.l.b16 %v2843
      %v3055 = vunpack.c.h.b16 %v2843
      %v3056 = vunpack.c.l.b16 %v2844
      %v3057 = vunpack.c.l.b16 %v2845
      %v3058 = vunpack.c.h.b16 %v2845
      %v3059 = vunpack.c.l.b16 %v2846
      %v3060 = vunpack.c.l.b16 %v2847
      %v3061 = vunpack.c.h.b16 %v2847
      %v3062 = vunpack.c.l.b16 %v2848
      %v3063 = vunpack.c.l.b16 %v2849
      %v3064 = vunpack.c.h.b16 %v2849
      %v3065 = vunpack.c.l.b16 %v2850
      %v3066 = vunpack.c.l.b16 %v2851
      %v3067 = vunpack.c.h.b16 %v2851
      %v3068 = vunpack.c.l.b16 %v2852
      %v3069 = vunpack.c.l.b16 %v2853
      %v3070 = vunpack.c.h.b16 %v2853
      %v3071 = vunpack.c.l.b16 %v2854
      %v3072 = vunpack.c.l.b16 %v2855
      %v3073 = vunpack.c.h.b16 %v2855
      %v3074 = vunpack.c.l.b16 %v2856
      %v3075 = vunpack.c.l.b16 %v2857
      %v3076 = vunpack.c.h.b16 %v2857
      %v3077 = vunpack.c.l.b16 %v2858
      %v3078 = vunpack.c.l.b16 %v2859
      %v3079 = vunpack.c.h.b16 %v2859
      %v3080 = vunpack.c.l.b16 %v2860
      %v3081 = vunpack.c.l.b16 %v2861
      %v3082 = vunpack.c.h.b16 %v2861
      %v3083 = vunpack.c.l.b16 %v2862
      %v3084 = vunpack.c.l.b16 %v2863
      %v3085 = vunpack.c.h.b16 %v2863
      %v3086 = vunpack.c.l.b16 %v2864
      %v3087 = vunpack.c.l.b16 %v2865
      %v3088 = vunpack.c.h.b16 %v2865
      %v3089 = vunpack.c.l.b16 %v2866
      %v3090 = vunpack.c.l.b16 %v2867
      %v3091 = vunpack.c.h.b16 %v2867
      %v3092 = vunpack.c.l.b16 %v2868
      %v3093 = vunpack.c.l.b16 %v2869
      %v3094 = vunpack.c.h.b16 %v2869
      %v3095 = vunpack.c.l.b16 %v2870
      %v3096 = vunpack.c.l.b16 %v2871
      %v3097 = vunpack.c.h.b16 %v2871
      %v3098 = vunpack.c.l.b16 %v2872
      %v3099 = vunpack.c.l.b16 %v2873
      %v3100 = vunpack.c.h.b16 %v2873
      %v3101 = vunpack.c.l.b16 %v2874
      %v3102 = vunpack.c.l.b16 %v2875
      %v3103 = vunpack.c.h.b16 %v2875
      %v3104 = vunpack.c.l.b16 %v2876
      %v3105 = vunpack.c.l.b16 %v2877
      %v3106 = vunpack.c.h.b16 %v2877
      %v3107 = vunpack.c.l.b16 %v2878
      %v3108 = vunpack.c.l.b16 %v2879
      %v3109 = vunpack.c.h.b16 %v2879
      %v3110 = vunpack.c.l.b16 %v2880
      %v3111 = vunpack.c.l.b16 %v2881
      %v3112 = vunpack.c.h.b16 %v2881
      %v3113 = vunpack.c.l.b16 %v2882
      %v3114 = vunpack.c.l.b16 %v2883
      %v3115 = vunpack.c.h.b16 %v2883
      %v3116 = vunpack.c.l.b16 %v2884
      %v3117 = vunpack.c.l.b16 %v2885
      %v3118 = vunpack.c.h.b16 %v2885
      %v3119 = vunpack.c.l.b16 %v2886
      %v3120 = vunpack.c.l.b16 %v2887
      %v3121 = vunpack.c.h.b16 %v2887
      %v3122 = vunpack.c.l.b16 %v2888
      %v3123 = vunpack.c.l.b16 %v2889
      %v3124 = vunpack.c.h.b16 %v2889
      %v3125 = vunpack.c.l.b16 %v2890
      %v3126 = vunpack.c.l.b16 %v2891
      %v3127 = vunpack.c.h.b16 %v2891
      %v3128 = vunpack.c.l.b16 %v2892
      %v3129 = vunpack.c.l.b16 %v2893
      %v3130 = vunpack.c.h.b16 %v2893
      %v3131 = vunpack.c.l.b16 %v2894
      %v3132 = vunpack.c.l.b16 %v2895
      %v3133 = vunpack.c.h.b16 %v2895
      %v3134 = vunpack.c.l.b16 %v2896
      %v3135 = vunpack.c.l.b16 %v2897
      %v3136 = vunpack.c.h.b16 %v2897
      %v3137 = vunpack.c.l.b16 %v2898
      %v3138 = vunpack.c.l.b16 %v2899
      %v3139 = vunpack.c.h.b16 %v2899
      %v3140 = vunpack.c.l.b16 %v2900
      %v3141 = vunpack.c.l.b16 %v2901
      %v3142 = vunpack.c.h.b16 %v2901
      %v3143 = vunpack.c.l.b16 %v2902
      %v3144 = vunpack.c.l.b16 %v2903
      %v3145 = vunpack.c.h.b16 %v2903
      %v3146 = vunpack.c.l.b16 %v2904
      %v3147 = vunpack.c.l.b16 %v2905
      %v3148 = vunpack.c.h.b16 %v2905
      %v3149 = vunpack.c.l.b16 %v2906
      %v3150 = vunpack.c.l.b16 %v2907
      %v3151 = vunpack.c.h.b16 %v2907
      %v3152 = vunpack.c.l.b16 %v2908
      %v3153 = vunpack.c.l.b16 %v2909
      %v3154 = vunpack.c.h.b16 %v2909
      %v3155 = vunpack.c.l.b16 %v2910
      %v3156 = vunpack.c.l.b16 %v2911
      %v3157 = vunpack.c.h.b16 %v2911
      %v3158 = vunpack.c.l.b16 %v2912
      %v3159 = vunpack.c.l.b16 %v2913
      %v3160 = vunpack.c.h.b16 %v2913
      %v3161 = vunpack.c.l.b16 %v2914
      %v3162 = vunpack.c.l.b16 %v2915
      %v3163 = vunpack.c.h.b16 %v2915
      %v3164 = vunpack.c.l.b16 %v2916
      %v3165 = vunpack.c.l.b16 %v2917
      %v3166 = vunpack.c.h.b16 %v2917
      %v3167 = vunpack.c.l.b16 %v2918
      %v3168 = vunpack.c.l.b16 %v2919
      %v3169 = vunpack.c.h.b16 %v2919
      %v3170 = vunpack.c.l.b16 %v2920
      %v3171 = vunpack.c.l.b16 %v2921
      %v3172 = vunpack.c.h.b16 %v2921
      %v3173 = vunpack.c.l.b16 %v2922
      %v3174 = vunpack.c.l.b16 %v2923
      %v3175 = vunpack.c.h.b16 %v2923
      %v3176 = vunpack.c.l.b16 %v2924
      %v3177 = vunpack.c.l.b16 %v2925
      %v3178 = vunpack.c.h.b16 %v2925
      %v3179 = vunpack.c.l.b16 %v2926
      %v3180 = vunpack.c.l.b16 %v2927
      %v3181 = vunpack.c.h.b16 %v2927
      %v3182 = vunpack.c.l.b16 %v2928
      %v3183 = vunpack.c.l.b16 %v2929
      %v3184 = vunpack.c.h.b16 %v2929
      %v3185 = vunpack.c.l.b16 %v2930
      %v3186 = vunpack.c.l.b16 %v2931
      %v3187 = vunpack.c.h.b16 %v2931
      %v3188 = vunpack.c.l.b16 %v2932
      %v3189 = vunpack.c.l.b16 %v2933
      %v3190 = vunpack.c.h.b16 %v2933
      %v3191 = vunpack.c.l.b16 %v2934
      %v3192 = vpack.c.b16 %v3051, %v3048
      %v3193 = vpack.c.b16 %v3052, %v3049
      %v3194 = vpack.c.b16 %v3053, %v3050
      %v3195 = vpack.c.b16 %v3057, %v3054
      %v3196 = vpack.c.b16 %v3058, %v3055
      %v3197 = vpack.c.b16 %v3059, %v3056
      %v3198 = vpack.c.b16 %v3063, %v3060
      %v3199 = vpack.c.b16 %v3064, %v3061
      %v3200 = vpack.c.b16 %v3065, %v3062
      %v3201 = vpack.c.b16 %v3069, %v3066
      %v3202 = vpack.c.b16 %v3070, %v3067
      %v3203 = vpack.c.b16 %v3071, %v3068
      %v3204 = vpack.c.b16 %v3075, %v3072
      %v3205 = vpack.c.b16 %v3076, %v3073
      %v3206 = vpack.c.b16 %v3077, %v3074
      %v3207 = vpack.c.b16 %v3081, %v3078
      %v3208 = vpack.c.b16 %v3082, %v3079
      %v3209 = vpack.c.b16 %v3083, %v3080
      %v3210 = vpack.c.b16 %v3087, %v3084
      %v3211 = vpack.c.b16 %v3088, %v3085
      %v3212 = vpack.c.b16 %v3089, %v3086
      %v3213 = vpack.c.b16 %v3093, %v3090
      %v3214 = vpack.c.b16 %v3094, %v3091
      %v3215 = vpack.c.b16 %v3095, %v3092
      %v3216 = vpack.c.b16 %v3099, %v3096
      %v3217 = vpack.c.b16 %v3100, %v3097
      %v3218 = vpack.c.b16 %v3101, %v3098
      %v3219 = vpack.c.b16 %v3105, %v3102
      %v3220 = vpack.c.b16 %v3106, %v3103
      %v3221 = vpack.c.b16 %v3107, %v3104
      %v3222 = vpack.c.b16 %v3111, %v3108
      %v3223 = vpack.c.b16 %v3112, %v3109
      %v3224 = vpack.c.b16 %v3113, %v3110
      %v3225 = vpack.c.b16 %v3117, %v3114
      %v3226 = vpack.c.b16 %v3118, %v3115
      %v3227 = vpack.c.b16 %v3119, %v3116
      %v3228 = vpack.c.b16 %v3123, %v3120
      %v3229 = vpack.c.b16 %v3124, %v3121
      %v3230 = vpack.c.b16 %v3125, %v3122
      %v3231 = vpack.c.b16 %v3129, %v3126
      %v3232 = vpack.c.b16 %v3130, %v3127
      %v3233 = vpack.c.b16 %v3131, %v3128
      %v3234 = vpack.c.b16 %v3135, %v3132
      %v3235 = vpack.c.b16 %v3136, %v3133
      %v3236 = vpack.c.b16 %v3137, %v3134
      %v3237 = vpack.c.b16 %v3141, %v3138
      %v3238 = vpack.c.b16 %v3142, %v3139
      %v3239 = vpack.c.b16 %v3143, %v3140
      %v3240 = vpack.c.b16 %v3147, %v3144
      %v3241 = vpack.c.b16 %v3148, %v3145
      %v3242 = vpack.c.b16 %v3149, %v3146
      %v3243 = vpack.c.b16 %v3153, %v3150
      %v3244 = vpack.c.b16 %v3154, %v3151
      %v3245 = vpack.c.b16 %v3155, %v3152
      %v3246 = vpack.c.b16 %v3159, %v3156
      %v3247 = vpack.c.b16 %v3160, %v3157
      %v3248 = vpack.c.b16 %v3161, %v3158
      %v3249 = vpack.c.b16 %v3165, %v3162
      %v3250 = vpack.c.b16 %v3166, %v3163
      %v3251 = vpack.c.b16 %v3167, %v3164
      %v3252 = vpack.c.b16 %v3171, %v3168
      %v3253 = vpack.c.b16 %v3172, %v3169
      %v3254 = vpack.c.b16 %v3173, %v3170
      %v3255 = vpack.c.b16 %v3177, %v3174
      %v3256 = vpack.c.b16 %v3178, %v3175
      %v3257 = vpack.c.b16 %v3179, %v3176
      %v3258 = vpack.c.b16 %v3183, %v3180
      %v3259 = vpack.c.b16 %v3184, %v3181
      %v3260 = vpack.c.b16 %v3185, %v3182
      %v3261 = vpack.c.b16 %v3189, %v3186
      %v3262 = vpack.c.b16 %v3190, %v3187
      %v3263 = vpack.c.b16 %v3191, %v3188
      %3336 = vmatprep.subr.bf16.mxu0 %v3214
      %3337 = vmatpush1.bf16.msra.mxu0 %v3213
      %3338 = vmatprep.subr.bf16.mxu0 %v3211
      %3339 = vmatpush1.bf16.msra.mxu0 %v3210
      %3340 = vmatprep.subr.bf16.mxu0 %v3208
      %3341 = vmatpush1.bf16.msra.mxu0 %v3207
      %3342 = vmatprep.subr.bf16.mxu0 %v3205
      %3343 = vmatpush1.bf16.msra.mxu0 %v3204
      %3344 = vmatprep.subr.bf16.mxu0 %v3202
      %3345 = vmatpush1.bf16.msra.mxu0 %v3201
      %3346 = vmatprep.subr.bf16.mxu0 %v3199
      %3347 = vmatpush1.bf16.msra.mxu0 %v3198
      %3348 = vmatprep.subr.bf16.mxu0 %v3196
      %3349 = vmatpush1.bf16.msra.mxu0 %v3195
      %3350 = vmatprep.subr.bf16.mxu0 %v3193
      %3351 = vmatpush1.bf16.msra.mxu0 %v3192
      %3352 = vmatprep.subr.bf16.mxu0 %v3238
      %3353 = vmatpush2.bf16.msra.mxu0 %v3237
      %3354 = vmatprep.subr.bf16.mxu0 %v3235
      %3355 = vmatpush2.bf16.msra.mxu0 %v3234
      %3356 = vmatprep.subr.bf16.mxu0 %v3232
      %3357 = vmatpush2.bf16.msra.mxu0 %v3231
      %3358 = vmatprep.subr.bf16.mxu0 %v3229
      %3359 = vmatpush2.bf16.msra.mxu0 %v3228
      %3360 = vmatprep.subr.bf16.mxu0 %v3226
      %3361 = vmatpush2.bf16.msra.mxu0 %v3225
      %3362 = vmatprep.subr.bf16.mxu0 %v3223
      %3363 = vmatpush2.bf16.msra.mxu0 %v3222
      %3364 = vmatprep.subr.bf16.mxu0 %v3220
      %3365 = vmatpush2.bf16.msra.mxu0 %v3219
      %3366 = vmatprep.subr.bf16.mxu0 %v3217
      %3367 = vmatpush2.bf16.msra.mxu0 %v3216
      %3368 = vmatprep.mubr.bf16.mxu0 %v2837
      %3369 = vmatmul.mubr.bf16.gmra.mxu0 %v2836
      %v3370 = vpop.f32.mrf.mxu0
      %v3371 = vadd.f32 %v2940, %v3370
      %v3372 = vpop.f32.mrf.mxu0
      %v3373 = vadd.f32 %v2944, %v3372
      %v3374 = vpop.f32.mrf.mxu0
      %v3375 = vpop.f32.mrf.mxu0
      %3376 = vdwg.mxu0
      %3377 = vmatprep.subr.bf16.mxu0 %v3262
      %3378 = vmatpush1.bf16.msra.mxu0 %v3261
      %3379 = vmatprep.subr.bf16.mxu0 %v3259
      %3380 = vmatpush1.bf16.msra.mxu0 %v3258
      %3381 = vmatprep.subr.bf16.mxu0 %v3256
      %3382 = vmatpush1.bf16.msra.mxu0 %v3255
      %3383 = vmatprep.subr.bf16.mxu0 %v3253
      %3384 = vmatpush1.bf16.msra.mxu0 %v3252
      %3385 = vmatprep.subr.bf16.mxu0 %v3250
      %3386 = vmatpush1.bf16.msra.mxu0 %v3249
      %3387 = vmatprep.subr.bf16.mxu0 %v3247
      %3388 = vmatpush1.bf16.msra.mxu0 %v3246
      %3389 = vmatprep.subr.bf16.mxu0 %v3244
      %3390 = vmatpush1.bf16.msra.mxu0 %v3243
      %3391 = vmatprep.subr.bf16.mxu0 %v3241
      %3392 = vmatpush1.bf16.msra.mxu0 %v3240
      %3393 = vmatprep.subr.bf16.mxu0 0
      %3394 = vmatpush2.bf16.msra.mxu0 0
      %3395 = vmatprep.subr.bf16.mxu0 0
      %3396 = vmatpush2.bf16.msra.mxu0 0
      %3397 = vmatprep.subr.bf16.mxu0 0
      %3398 = vmatpush2.bf16.msra.mxu0 0
      %3399 = vmatprep.subr.bf16.mxu0 0
      %3400 = vmatpush2.bf16.msra.mxu0 0
      %3401 = vmatprep.subr.bf16.mxu0 0
      %3402 = vmatpush2.bf16.msra.mxu0 0
      %3403 = vmatprep.subr.bf16.mxu0 0
      %3404 = vmatpush2.bf16.msra.mxu0 0
      %3405 = vmatprep.subr.bf16.mxu0 0
      %3406 = vmatpush2.bf16.msra.mxu0 0
      %3407 = vmatprep.subr.bf16.mxu0 0
      %3408 = vmatpush2.bf16.msra.mxu0 0
      %3409 = vmatprep.mubr.bf16.mxu0 0
      %3410 = vmatmul.mubr.bf16.gmra.mxu0 %v2838
      %v3411 = vpop.f32.mrf.mxu0
      %v3412 = vadd.f32 %v3371, %v3411
      %v3413 = vpop.f32.mrf.mxu0
      %v3414 = vadd.f32 %v3373, %v3413
      %v3415 = vpop.f32.mrf.mxu0
      %v3416 = vpop.f32.mrf.mxu0
      %3417 = vdwg.mxu0
      %3418 = vmatprep.subr.bf16.mxu0 0
      %3419 = vmatpush1.bf16.msra.mxu0 %v3215
      %3420 = vmatprep.subr.bf16.mxu0 0
      %3421 = vmatpush1.bf16.msra.mxu0 %v3212
      %3422 = vmatprep.subr.bf16.mxu0 0
      %3423 = vmatpush1.bf16.msra.mxu0 %v3209
      %3424 = vmatprep.subr.bf16.mxu0 0
      %3425 = vmatpush1.bf16.msra.mxu0 %v3206
      %3426 = vmatprep.subr.bf16.mxu0 0
      %3427 = vmatpush1.bf16.msra.mxu0 %v3203
      %3428 = vmatprep.subr.bf16.mxu0 0
      %3429 = vmatpush1.bf16.msra.mxu0 %v3200
      %3430 = vmatprep.subr.bf16.mxu0 0
      %3431 = vmatpush1.bf16.msra.mxu0 %v3197
      %3432 = vmatprep.subr.bf16.mxu0 0
      %3433 = vmatpush1.bf16.msra.mxu0 %v3194
      %3434 = vmatprep.subr.bf16.mxu0 0
      %3435 = vmatpush2.bf16.msra.mxu0 %v3239
      %3436 = vmatprep.subr.bf16.mxu0 0
      %3437 = vmatpush2.bf16.msra.mxu0 %v3236
      %3438 = vmatprep.subr.bf16.mxu0 0
      %3439 = vmatpush2.bf16.msra.mxu0 %v3233
      %3440 = vmatprep.subr.bf16.mxu0 0
      %3441 = vmatpush2.bf16.msra.mxu0 %v3230
      %3442 = vmatprep.subr.bf16.mxu0 0
      %3443 = vmatpush2.bf16.msra.mxu0 %v3227
      %3444 = vmatprep.subr.bf16.mxu0 0
      %3445 = vmatpush2.bf16.msra.mxu0 %v3224
      %3446 = vmatprep.subr.bf16.mxu0 0
      %3447 = vmatpush2.bf16.msra.mxu0 %v3221
      %3448 = vmatprep.subr.bf16.mxu0 0
      %3449 = vmatpush2.bf16.msra.mxu0 %v3218
      %3450 = vmatprep.mubr.bf16.mxu0 %v2837
      %3451 = vmatmul.mubr.bf16.gmra.mxu0 %v2836
      %v3452 = vpop.f32.mrf.mxu0
      %v3453 = vadd.f32 %v2948, %v3452
      %v3454 = vpop.f32.mrf.mxu0
      %v3455 = vpop.f32.mrf.mxu0
      %v3456 = vpop.f32.mrf.mxu0
      %3457 = vdwg.mxu0
      %3458 = vmatprep.subr.bf16.mxu0 0
      %3459 = vmatpush1.bf16.msra.mxu0 %v3263
      %3460 = vmatprep.subr.bf16.mxu0 0
      %3461 = vmatpush1.bf16.msra.mxu0 %v3260
      %3462 = vmatprep.subr.bf16.mxu0 0
      %3463 = vmatpush1.bf16.msra.mxu0 %v3257
      %3464 = vmatprep.subr.bf16.mxu0 0
      %3465 = vmatpush1.bf16.msra.mxu0 %v3254
      %3466 = vmatprep.subr.bf16.mxu0 0
      %3467 = vmatpush1.bf16.msra.mxu0 %v3251
      %3468 = vmatprep.subr.bf16.mxu0 0
      %3469 = vmatpush1.bf16.msra.mxu0 %v3248
      %3470 = vmatprep.subr.bf16.mxu0 0
      %3471 = vmatpush1.bf16.msra.mxu0 %v3245
      %3472 = vmatprep.subr.bf16.mxu0 0
      %3473 = vmatpush1.bf16.msra.mxu0 %v3242
      %3474 = vmatprep.subr.bf16.mxu0 0
      %3475 = vmatpush2.bf16.msra.mxu0 0
      %3476 = vmatprep.subr.bf16.mxu0 0
      %3477 = vmatpush2.bf16.msra.mxu0 0
      %3478 = vmatprep.subr.bf16.mxu0 0
      %3479 = vmatpush2.bf16.msra.mxu0 0
      %3480 = vmatprep.subr.bf16.mxu0 0
      %3481 = vmatpush2.bf16.msra.mxu0 0
      %3482 = vmatprep.subr.bf16.mxu0 0
      %3483 = vmatpush2.bf16.msra.mxu0 0
      %3484 = vmatprep.subr.bf16.mxu0 0
      %3485 = vmatpush2.bf16.msra.mxu0 0
      %3486 = vmatprep.subr.bf16.mxu0 0
      %3487 = vmatpush2.bf16.msra.mxu0 0
      %3488 = vmatprep.subr.bf16.mxu0 0
      %3489 = vmatpush2.bf16.msra.mxu0 0
      %3490 = vmatprep.mubr.bf16.mxu0 0
      %3491 = vmatmul.mubr.bf16.gmra.mxu0 %v2838
      %v3492 = vpop.f32.mrf.mxu0
      %v3493 = vadd.f32 %v3453, %v3492
      %v3494 = vpop.f32.mrf.mxu0
      %v3495 = vpop.f32.mrf.mxu0
      %v3496 = vpop.f32.mrf.mxu0
      %3497 = vdwg.mxu0
      %v3498 = vadd.f32 %v280, %v3412
      %v3499 = vadd.f32 %v281, %v3414
      %v3500 = vadd.f32 %v282, %v3493
      %3501 = vst [vmem:[%s278] sm:$0xff] %v3498
      %3502 = vst [vmem:[%s278 + $0x8] sm:$0xff] %v3499
      %3503 = vst [vmem:[%s278 + $0x10] sm:$0xff] %v3500
      %p3504 = scmp.lt.s32.totalorder %s18, 1
      %s3505 = scalar_select %p3504, %s18, 1
      %s3506 = smul.addr %s3505, 3
      %s3507 = smul.addr %s3506, 8
      %s3508 = scalar_lea.vmem %s7, %s3507
      // Predicated region
      $region49: #{_lambda_.27} parent=47 // pred_check
        %p3509 = pneg %p188
      $region50: #{_lambda_.27} parent=47 // pred_check_branch
        %3511 = sbr.rel (%p3509) target = $region52
      $region51: #{_lambda_.27} parent=47 // pred_region
        _
      $region52: #{_lambda_.27} parent=47 // pred_fallthru
        _
    $region48: #{_lambda_.27} parent=5 // pred_fallthru
      _
    %p3512 = scmp.le.s32.totalorder 2, %s13
    // Predicated region
    $region53: #{_lambda_.27} parent=5 // pred_check
      %p3513 = pneg %p3512
    $region54: #{_lambda_.27} parent=5 // pred_check_branch
      %3515 = sbr.rel (%p3513) target = $region56
    $region55: #{_lambda_.27} parent=5 // pred_region
      %s3516 = ssub.s32 %s13, 2
      // Predicated region
      $region57: #{_lambda_.27} parent=55 // pred_check
        %p3517 = pneg %p194
      $region58: #{_lambda_.27} parent=55 // pred_check_branch
        %3519 = sbr.rel (%p3517) target = $region60
      $region59: #{_lambda_.27} parent=55 // pred_region
        %p3520 = scmp.lt.s32.totalorder %s19, 1
        %s3521 = scalar_select %p3520, %s19, 1
        %s3522 = smul.addr %s3521, 3
        %s3523 = smul.addr %s3522, 8
        %s3524 = scalar_lea.vmem %s7, %s3523
      $region60: #{_lambda_.27} parent=55 // pred_fallthru
        _
    $region56: #{_lambda_.27} parent=5 // pred_fallthru
      _
  $region6: #{_lambda_.27} parent=0 // loop_footer
    %s17 = sadd.s32 1, %s13
  $region7: #{_lambda_.27} parent=0 // loop_footer_branch
    %12 = sbr.rel target = $region3
  $region8: #{_lambda_.27} parent=0 // loop_exit
    _

// kernel: _lambda_.28
$region0: #{_lambda_.28}
  #allocation0 [shape = 'u32[]', space=smem, size = 0x4, offset = 0x4, fixed_abs, tag = 'smem constant byte address 0x4 - core index']
  #allocation1 [shape = 'u32[144,128]{1,0:T(1,128)}', space=vmem, size = 0x12000, scoped, tag = 'internal scratch']
  %s0 = inlined_call_operand.vmem [shape: f32[16,384], index: 0, kind: input, shape index: {}]
  %s1 = inlined_call_operand.vmem [shape: f32[1,384], index: 1, kind: input, shape index: {}]
  %s2 = inlined_call_operand.vmem [shape: f32[1,384], index: 2, kind: input, shape index: {}]
  %s3 = inlined_call_operand.vmem [shape: bf16[384,1536], index: 3, kind: input, shape index: {}]
  %s4 = inlined_call_operand.vmem [shape: f32[1,1536], index: 4, kind: input, shape index: {}]
  %s5 = inlined_call_operand.vmem [shape: bf16[1536,384], index: 5, kind: input, shape index: {}]
  %s6 = inlined_call_operand.vmem [shape: f32[1,384], index: 6, kind: input, shape index: {}]
  %s7 = inlined_call_operand.vmem [shape: f32[16,384], index: 7, kind: output, shape index: {}]
  %s8 = sld [smem:[#allocation0]]
  $region38: #{_lambda_.28} parent=0
    _
  %s10 = ssub.s32 1, %s8
  %s11 = scalar_select 0, %s10, %s8
  // Predicated region
  $region2: #{_lambda_.28} parent=0 // pred_check
    _
  $region3: #{_lambda_.28} parent=0 // pred_check_branch
    %13 = sbr.rel (0) target = $region5
  $region4: #{_lambda_.28} parent=0 // pred_region
    _
  $region5: #{_lambda_.28} parent=0 // pred_fallthru
    _
  // Predicated region
  $region6: #{_lambda_.28} parent=0 // pred_check
    _
  $region7: #{_lambda_.28} parent=0 // pred_check_branch
    %15 = sbr.rel (0) target = $region9
  $region8: #{_lambda_.28} parent=0 // pred_region
    _
  $region9: #{_lambda_.28} parent=0 // pred_fallthru
    _
  // Predicated region
  $region10: #{_lambda_.28} parent=0 // pred_check
    _
  $region11: #{_lambda_.28} parent=0 // pred_check_branch
    %17 = sbr.rel (0) target = $region13
  $region12: #{_lambda_.28} parent=0 // pred_region
    _
  $region13: #{_lambda_.28} parent=0 // pred_fallthru
    _
  // Predicated region
  $region14: #{_lambda_.28} parent=0 // pred_check
    _
  $region15: #{_lambda_.28} parent=0 // pred_check_branch
    %19 = sbr.rel (0) target = $region17
  $region16: #{_lambda_.28} parent=0 // pred_region
    _
  $region17: #{_lambda_.28} parent=0 // pred_fallthru
    _
  // Predicated region
  $region18: #{_lambda_.28} parent=0 // pred_check
    _
  $region19: #{_lambda_.28} parent=0 // pred_check_branch
    %21 = sbr.rel (0) target = $region21
  $region20: #{_lambda_.28} parent=0 // pred_region
    _
  $region21: #{_lambda_.28} parent=0 // pred_fallthru
    _
  // Predicated region
  $region22: #{_lambda_.28} parent=0 // pred_check
    _
  $region23: #{_lambda_.28} parent=0 // pred_check_branch
    %23 = sbr.rel (0) target = $region25
  $region24: #{_lambda_.28} parent=0 // pred_region
    _
  $region25: #{_lambda_.28} parent=0 // pred_fallthru
    _
  // Predicated region
  $region26: #{_lambda_.28} parent=0 // pred_check
    _
  $region27: #{_lambda_.28} parent=0 // pred_check_branch
    %25 = sbr.rel (0) target = $region29
  $region28: #{_lambda_.28} parent=0 // pred_region
    _
  $region29: #{_lambda_.28} parent=0 // pred_fallthru
    _
  %v27 = vld [vmem:[%s0] sm:$0xff]
  %v28 = vld [vmem:[%s0 + $0x8] sm:$0xff]
  %v29 = vld [vmem:[%s0 + $0x10] sm:$0xff]
  %v30 = vld [vmem:[%s0 + $0x18] sm:$0xff]
  %v31 = vld [vmem:[%s0 + $0x20] sm:$0xff]
  %v32 = vld [vmem:[%s0 + $0x28] sm:$0xff]
  %v33 = vld [vmem:[%s1] sm:$0x7]
  %v34 = vld [vmem:[%s2] sm:$0x7]
  %v35 = vadd.f32 %v27, %v28
  %v36 = vadd.f32 %v35, %v29
  %37 = vadd.xlane.f32.xlu0 %v36
  %v38 = vpop.xlane.xlu0 %37
  %v39 = vadd.f32 %v30, %v31
  %v40 = vadd.f32 %v39, %v32
  %41 = vadd.xlane.f32.xlu0 %v40
  %v42 = vpop.xlane.xlu0 %41
  %v43 = vrcp.pop 384.0
  %v44 = vmul.f32 %v38, %v43
  %v45 = vmul.f32 %v42, %v43
  %v46 = vsub.f32 %v27, %v44
  %v47 = vsub.f32 %v28, %v44
  %v48 = vsub.f32 %v29, %v44
  %v49 = vsub.f32 %v30, %v45
  %v50 = vsub.f32 %v31, %v45
  %v51 = vsub.f32 %v32, %v45
  %v52 = vmul.f32 %v46, %v46
  %v53 = vmul.f32 %v47, %v47
  %v54 = vmul.f32 %v48, %v48
  %v55 = vmul.f32 %v49, %v49
  %v56 = vmul.f32 %v50, %v50
  %v57 = vmul.f32 %v51, %v51
  %v58 = vadd.f32 %v52, %v53
  %v59 = vadd.f32 %v58, %v54
  %60 = vadd.xlane.f32.xlu0 %v59
  %v61 = vpop.xlane.xlu0 %60
  %v62 = vadd.f32 %v55, %v56
  %v63 = vadd.f32 %v62, %v57
  %64 = vadd.xlane.f32.xlu0 %v63
  %v65 = vpop.xlane.xlu0 %64
  %v66 = vmul.f32 %v61, %v43
  %v67 = vmul.f32 %v65, %v43
  %v68 = vadd.f32 %v66, 1e-05
  %v69 = vadd.f32 %v67, 1e-05
  %v70 = vrsqrt.pop %v68
  %v71 = vrsqrt.pop %v69
  %v72 = vmul.f32 %v46, %v70
  %v73 = vmul.f32 %v47, %v70
  %v74 = vmul.f32 %v48, %v70
  %v75 = vmul.f32 %v49, %v71
  %v76 = vmul.f32 %v50, %v71
  %v77 = vmul.f32 %v51, %v71
  %v79 = vlaneseq
  %v80 = vshrl.u32 %v79, 7
  %v81 = vsub.s32 0, %v80
  %v82 = vrot.slane %v33, %v81
  %v83 = vlaneseq
  %v84 = vshrl.u32 %v83, 7
  %v85 = vsub.s32 1, %v84
  %v86 = vrot.slane %v33, %v85
  %v87 = vlaneseq
  %v88 = vshrl.u32 %v87, 7
  %v89 = vsub.s32 2, %v88
  %v90 = vrot.slane %v33, %v89
  %v94 = vmul.f32 %v72, %v82
  %v95 = vmul.f32 %v73, %v86
  %v96 = vmul.f32 %v74, %v90
  %v97 = vmul.f32 %v75, %v82
  %v98 = vmul.f32 %v76, %v86
  %v99 = vmul.f32 %v77, %v90
  %v101 = vlaneseq
  %v102 = vshrl.u32 %v101, 7
  %v103 = vsub.s32 0, %v102
  %v104 = vrot.slane %v34, %v103
  %v105 = vlaneseq
  %v106 = vshrl.u32 %v105, 7
  %v107 = vsub.s32 1, %v106
  %v108 = vrot.slane %v34, %v107
  %v109 = vlaneseq
  %v110 = vshrl.u32 %v109, 7
  %v111 = vsub.s32 2, %v110
  %v112 = vrot.slane %v34, %v111
  %v116 = vadd.f32 %v94, %v104
  %v117 = vadd.f32 %v95, %v108
  %v118 = vadd.f32 %v96, %v112
  %v119 = vadd.f32 %v97, %v104
  %v120 = vadd.f32 %v98, %v108
  %v121 = vadd.f32 %v99, %v112
  %v122 = vpack.c.bf16 %v119, %v116
  %v123 = vpack.c.bf16 %v120, %v117
  %v124 = vpack.c.bf16 %v121, %v118
  %v125 = vld [vmem:[%s3] sm:$0xff]
  %v126 = vld [vmem:[%s3 + $0x8] sm:$0xff]
  %v127 = vld [vmem:[%s3 + $0x10] sm:$0xff]
  %v128 = vld [vmem:[%s3 + $0x18] sm:$0xff]
  %v129 = vld [vmem:[%s3 + $0x20] sm:$0xff]
  %v130 = vld [vmem:[%s3 + $0x28] sm:$0xff]
  %v131 = vld [vmem:[%s3 + $0x30] sm:$0xff]
  %v132 = vld [vmem:[%s3 + $0x38] sm:$0xff]
  %v133 = vld [vmem:[%s3 + $0x40] sm:$0xff]
  %v134 = vld [vmem:[%s3 + $0x48] sm:$0xff]
  %v135 = vld [vmem:[%s3 + $0x50] sm:$0xff]
  %v136 = vld [vmem:[%s3 + $0x58] sm:$0xff]
  %v137 = vld [vmem:[%s3 + $0x60] sm:$0xff]
  %v138 = vld [vmem:[%s3 + $0x68] sm:$0xff]
  %v139 = vld [vmem:[%s3 + $0x70] sm:$0xff]
  %v140 = vld [vmem:[%s3 + $0x78] sm:$0xff]
  %v141 = vld [vmem:[%s3 + $0x80] sm:$0xff]
  %v142 = vld [vmem:[%s3 + $0x88] sm:$0xff]
  %v143 = vld [vmem:[%s3 + $0x90] sm:$0xff]
  %v144 = vld [vmem:[%s3 + $0x98] sm:$0xff]
  %v145 = vld [vmem:[%s3 + $0xa0] sm:$0xff]
  %v146 = vld [vmem:[%s3 + $0xa8] sm:$0xff]
  %v147 = vld [vmem:[%s3 + $0xb0] sm:$0xff]
  %v148 = vld [vmem:[%s3 + $0xb8] sm:$0xff]
  %v149 = vld [vmem:[%s3 + $0xc0] sm:$0xff]
  %v150 = vld [vmem:[%s3 + $0xc8] sm:$0xff]
  %v151 = vld [vmem:[%s3 + $0xd0] sm:$0xff]
  %v152 = vld [vmem:[%s3 + $0xd8] sm:$0xff]
  %v153 = vld [vmem:[%s3 + $0xe0] sm:$0xff]
  %v154 = vld [vmem:[%s3 + $0xe8] sm:$0xff]
  %v155 = vld [vmem:[%s3 + $0xf0] sm:$0xff]
  %v156 = vld [vmem:[%s3 + $0xf8] sm:$0xff]
  %v157 = vld [vmem:[%s3 + $0x100] sm:$0xff]
  %v158 = vld [vmem:[%s3 + $0x108] sm:$0xff]
  %v159 = vld [vmem:[%s3 + $0x110] sm:$0xff]
  %v160 = vld [vmem:[%s3 + $0x118] sm:$0xff]
  %v161 = vld [vmem:[%s3 + $0x120] sm:$0xff]
  %v162 = vld [vmem:[%s3 + $0x128] sm:$0xff]
  %v163 = vld [vmem:[%s3 + $0x130] sm:$0xff]
  %v164 = vld [vmem:[%s3 + $0x138] sm:$0xff]
  %v165 = vld [vmem:[%s3 + $0x140] sm:$0xff]
  %v166 = vld [vmem:[%s3 + $0x148] sm:$0xff]
  %v167 = vld [vmem:[%s3 + $0x150] sm:$0xff]
  %v168 = vld [vmem:[%s3 + $0x158] sm:$0xff]
  %v169 = vld [vmem:[%s3 + $0x160] sm:$0xff]
  %v170 = vld [vmem:[%s3 + $0x168] sm:$0xff]
  %v171 = vld [vmem:[%s3 + $0x170] sm:$0xff]
  %v172 = vld [vmem:[%s3 + $0x178] sm:$0xff]
  %v173 = vld [vmem:[%s3 + $0x180] sm:$0xff]
  %v174 = vld [vmem:[%s3 + $0x188] sm:$0xff]
  %v175 = vld [vmem:[%s3 + $0x190] sm:$0xff]
  %v176 = vld [vmem:[%s3 + $0x198] sm:$0xff]
  %v177 = vld [vmem:[%s3 + $0x1a0] sm:$0xff]
  %v178 = vld [vmem:[%s3 + $0x1a8] sm:$0xff]
  %v179 = vld [vmem:[%s3 + $0x1b0] sm:$0xff]
  %v180 = vld [vmem:[%s3 + $0x1b8] sm:$0xff]
  %v181 = vld [vmem:[%s3 + $0x1c0] sm:$0xff]
  %v182 = vld [vmem:[%s3 + $0x1c8] sm:$0xff]
  %v183 = vld [vmem:[%s3 + $0x1d0] sm:$0xff]
  %v184 = vld [vmem:[%s3 + $0x1d8] sm:$0xff]
  %v185 = vld [vmem:[%s3 + $0x1e0] sm:$0xff]
  %v186 = vld [vmem:[%s3 + $0x1e8] sm:$0xff]
  %v187 = vld [vmem:[%s3 + $0x1f0] sm:$0xff]
  %v188 = vld [vmem:[%s3 + $0x1f8] sm:$0xff]
  %v189 = vld [vmem:[%s3 + $0x200] sm:$0xff]
  %v190 = vld [vmem:[%s3 + $0x208] sm:$0xff]
  %v191 = vld [vmem:[%s3 + $0x210] sm:$0xff]
  %v192 = vld [vmem:[%s3 + $0x218] sm:$0xff]
  %v193 = vld [vmem:[%s3 + $0x220] sm:$0xff]
  %v194 = vld [vmem:[%s3 + $0x228] sm:$0xff]
  %v195 = vld [vmem:[%s3 + $0x230] sm:$0xff]
  %v196 = vld [vmem:[%s3 + $0x238] sm:$0xff]
  %v197 = vld [vmem:[%s3 + $0x240] sm:$0xff]
  %v198 = vld [vmem:[%s3 + $0x248] sm:$0xff]
  %v199 = vld [vmem:[%s3 + $0x250] sm:$0xff]
  %v200 = vld [vmem:[%s3 + $0x258] sm:$0xff]
  %v201 = vld [vmem:[%s3 + $0x260] sm:$0xff]
  %v202 = vld [vmem:[%s3 + $0x268] sm:$0xff]
  %v203 = vld [vmem:[%s3 + $0x270] sm:$0xff]
  %v204 = vld [vmem:[%s3 + $0x278] sm:$0xff]
  %v205 = vld [vmem:[%s3 + $0x280] sm:$0xff]
  %v206 = vld [vmem:[%s3 + $0x288] sm:$0xff]
  %v207 = vld [vmem:[%s3 + $0x290] sm:$0xff]
  %v208 = vld [vmem:[%s3 + $0x298] sm:$0xff]
  %v209 = vld [vmem:[%s3 + $0x2a0] sm:$0xff]
  %v210 = vld [vmem:[%s3 + $0x2a8] sm:$0xff]
  %v211 = vld [vmem:[%s3 + $0x2b0] sm:$0xff]
  %v212 = vld [vmem:[%s3 + $0x2b8] sm:$0xff]
  %v213 = vld [vmem:[%s3 + $0x2c0] sm:$0xff]
  %v214 = vld [vmem:[%s3 + $0x2c8] sm:$0xff]
  %v215 = vld [vmem:[%s3 + $0x2d0] sm:$0xff]
  %v216 = vld [vmem:[%s3 + $0x2d8] sm:$0xff]
  %v217 = vld [vmem:[%s3 + $0x2e0] sm:$0xff]
  %v218 = vld [vmem:[%s3 + $0x2e8] sm:$0xff]
  %v219 = vld [vmem:[%s3 + $0x2f0] sm:$0xff]
  %v220 = vld [vmem:[%s3 + $0x2f8] sm:$0xff]
  %v221 = vld [vmem:[%s3 + $0x300] sm:$0xff]
  %v222 = vld [vmem:[%s3 + $0x308] sm:$0xff]
  %v223 = vld [vmem:[%s3 + $0x310] sm:$0xff]
  %v224 = vld [vmem:[%s3 + $0x318] sm:$0xff]
  %v225 = vld [vmem:[%s3 + $0x320] sm:$0xff]
  %v226 = vld [vmem:[%s3 + $0x328] sm:$0xff]
  %v227 = vld [vmem:[%s3 + $0x330] sm:$0xff]
  %v228 = vld [vmem:[%s3 + $0x338] sm:$0xff]
  %v229 = vld [vmem:[%s3 + $0x340] sm:$0xff]
  %v230 = vld [vmem:[%s3 + $0x348] sm:$0xff]
  %v231 = vld [vmem:[%s3 + $0x350] sm:$0xff]
  %v232 = vld [vmem:[%s3 + $0x358] sm:$0xff]
  %v233 = vld [vmem:[%s3 + $0x360] sm:$0xff]
  %v234 = vld [vmem:[%s3 + $0x368] sm:$0xff]
  %v235 = vld [vmem:[%s3 + $0x370] sm:$0xff]
  %v236 = vld [vmem:[%s3 + $0x378] sm:$0xff]
  %v237 = vld [vmem:[%s3 + $0x380] sm:$0xff]
  %v238 = vld [vmem:[%s3 + $0x388] sm:$0xff]
  %v239 = vld [vmem:[%s3 + $0x390] sm:$0xff]
  %v240 = vld [vmem:[%s3 + $0x398] sm:$0xff]
  %v241 = vld [vmem:[%s3 + $0x3a0] sm:$0xff]
  %v242 = vld [vmem:[%s3 + $0x3a8] sm:$0xff]
  %v243 = vld [vmem:[%s3 + $0x3b0] sm:$0xff]
  %v244 = vld [vmem:[%s3 + $0x3b8] sm:$0xff]
  %v245 = vld [vmem:[%s3 + $0x3c0] sm:$0xff]
  %v246 = vld [vmem:[%s3 + $0x3c8] sm:$0xff]
  %v247 = vld [vmem:[%s3 + $0x3d0] sm:$0xff]
  %v248 = vld [vmem:[%s3 + $0x3d8] sm:$0xff]
  %v249 = vld [vmem:[%s3 + $0x3e0] sm:$0xff]
  %v250 = vld [vmem:[%s3 + $0x3e8] sm:$0xff]
  %v251 = vld [vmem:[%s3 + $0x3f0] sm:$0xff]
  %v252 = vld [vmem:[%s3 + $0x3f8] sm:$0xff]
  %v253 = vld [vmem:[%s3 + $0x400] sm:$0xff]
  %v254 = vld [vmem:[%s3 + $0x408] sm:$0xff]
  %v255 = vld [vmem:[%s3 + $0x410] sm:$0xff]
  %v256 = vld [vmem:[%s3 + $0x418] sm:$0xff]
  %v257 = vld [vmem:[%s3 + $0x420] sm:$0xff]
  %v258 = vld [vmem:[%s3 + $0x428] sm:$0xff]
  %v259 = vld [vmem:[%s3 + $0x430] sm:$0xff]
  %v260 = vld [vmem:[%s3 + $0x438] sm:$0xff]
  %v261 = vld [vmem:[%s3 + $0x440] sm:$0xff]
  %v262 = vld [vmem:[%s3 + $0x448] sm:$0xff]
  %v263 = vld [vmem:[%s3 + $0x450] sm:$0xff]
  %v264 = vld [vmem:[%s3 + $0x458] sm:$0xff]
  %v265 = vld [vmem:[%s3 + $0x460] sm:$0xff]
  %v266 = vld [vmem:[%s3 + $0x468] sm:$0xff]
  %v267 = vld [vmem:[%s3 + $0x470] sm:$0xff]
  %v268 = vld [vmem:[%s3 + $0x478] sm:$0xff]
  %v269 = vld [vmem:[%s3 + $0x480] sm:$0xff]
  %v270 = vld [vmem:[%s3 + $0x488] sm:$0xff]
  %v271 = vld [vmem:[%s3 + $0x490] sm:$0xff]
  %v272 = vld [vmem:[%s3 + $0x498] sm:$0xff]
  %v273 = vld [vmem:[%s3 + $0x4a0] sm:$0xff]
  %v274 = vld [vmem:[%s3 + $0x4a8] sm:$0xff]
  %v275 = vld [vmem:[%s3 + $0x4b0] sm:$0xff]
  %v276 = vld [vmem:[%s3 + $0x4b8] sm:$0xff]
  %v277 = vld [vmem:[%s3 + $0x4c0] sm:$0xff]
  %v278 = vld [vmem:[%s3 + $0x4c8] sm:$0xff]
  %v279 = vld [vmem:[%s3 + $0x4d0] sm:$0xff]
  %v280 = vld [vmem:[%s3 + $0x4d8] sm:$0xff]
  %v281 = vld [vmem:[%s3 + $0x4e0] sm:$0xff]
  %v282 = vld [vmem:[%s3 + $0x4e8] sm:$0xff]
  %v283 = vld [vmem:[%s3 + $0x4f0] sm:$0xff]
  %v284 = vld [vmem:[%s3 + $0x4f8] sm:$0xff]
  %v285 = vld [vmem:[%s3 + $0x500] sm:$0xff]
  %v286 = vld [vmem:[%s3 + $0x508] sm:$0xff]
  %v287 = vld [vmem:[%s3 + $0x510] sm:$0xff]
  %v288 = vld [vmem:[%s3 + $0x518] sm:$0xff]
  %v289 = vld [vmem:[%s3 + $0x520] sm:$0xff]
  %v290 = vld [vmem:[%s3 + $0x528] sm:$0xff]
  %v291 = vld [vmem:[%s3 + $0x530] sm:$0xff]
  %v292 = vld [vmem:[%s3 + $0x538] sm:$0xff]
  %v293 = vld [vmem:[%s3 + $0x540] sm:$0xff]
  %v294 = vld [vmem:[%s3 + $0x548] sm:$0xff]
  %v295 = vld [vmem:[%s3 + $0x550] sm:$0xff]
  %v296 = vld [vmem:[%s3 + $0x558] sm:$0xff]
  %v297 = vld [vmem:[%s3 + $0x560] sm:$0xff]
  %v298 = vld [vmem:[%s3 + $0x568] sm:$0xff]
  %v299 = vld [vmem:[%s3 + $0x570] sm:$0xff]
  %v300 = vld [vmem:[%s3 + $0x578] sm:$0xff]
  %v301 = vld [vmem:[%s3 + $0x580] sm:$0xff]
  %v302 = vld [vmem:[%s3 + $0x588] sm:$0xff]
  %v303 = vld [vmem:[%s3 + $0x590] sm:$0xff]
  %v304 = vld [vmem:[%s3 + $0x598] sm:$0xff]
  %v305 = vld [vmem:[%s3 + $0x5a0] sm:$0xff]
  %v306 = vld [vmem:[%s3 + $0x5a8] sm:$0xff]
  %v307 = vld [vmem:[%s3 + $0x5b0] sm:$0xff]
  %v308 = vld [vmem:[%s3 + $0x5b8] sm:$0xff]
  %v309 = vld [vmem:[%s3 + $0x5c0] sm:$0xff]
  %v310 = vld [vmem:[%s3 + $0x5c8] sm:$0xff]
  %v311 = vld [vmem:[%s3 + $0x5d0] sm:$0xff]
  %v312 = vld [vmem:[%s3 + $0x5d8] sm:$0xff]
  %v313 = vld [vmem:[%s3 + $0x5e0] sm:$0xff]
  %v314 = vld [vmem:[%s3 + $0x5e8] sm:$0xff]
  %v315 = vld [vmem:[%s3 + $0x5f0] sm:$0xff]
  %v316 = vld [vmem:[%s3 + $0x5f8] sm:$0xff]
  %v317 = vld [vmem:[%s3 + $0x600] sm:$0xff]
  %v318 = vld [vmem:[%s3 + $0x608] sm:$0xff]
  %v319 = vld [vmem:[%s3 + $0x610] sm:$0xff]
  %v320 = vld [vmem:[%s3 + $0x618] sm:$0xff]
  %v321 = vld [vmem:[%s3 + $0x620] sm:$0xff]
  %v322 = vld [vmem:[%s3 + $0x628] sm:$0xff]
  %v323 = vld [vmem:[%s3 + $0x630] sm:$0xff]
  %v324 = vld [vmem:[%s3 + $0x638] sm:$0xff]
  %v325 = vld [vmem:[%s3 + $0x640] sm:$0xff]
  %v326 = vld [vmem:[%s3 + $0x648] sm:$0xff]
  %v327 = vld [vmem:[%s3 + $0x650] sm:$0xff]
  %v328 = vld [vmem:[%s3 + $0x658] sm:$0xff]
  %v329 = vld [vmem:[%s3 + $0x660] sm:$0xff]
  %v330 = vld [vmem:[%s3 + $0x668] sm:$0xff]
  %v331 = vld [vmem:[%s3 + $0x670] sm:$0xff]
  %v332 = vld [vmem:[%s3 + $0x678] sm:$0xff]
  %v333 = vld [vmem:[%s3 + $0x680] sm:$0xff]
  %v334 = vld [vmem:[%s3 + $0x688] sm:$0xff]
  %v335 = vld [vmem:[%s3 + $0x690] sm:$0xff]
  %v336 = vld [vmem:[%s3 + $0x698] sm:$0xff]
  %v337 = vld [vmem:[%s3 + $0x6a0] sm:$0xff]
  %v338 = vld [vmem:[%s3 + $0x6a8] sm:$0xff]
  %v339 = vld [vmem:[%s3 + $0x6b0] sm:$0xff]
  %v340 = vld [vmem:[%s3 + $0x6b8] sm:$0xff]
  %v341 = vld [vmem:[%s3 + $0x6c0] sm:$0xff]
  %v342 = vld [vmem:[%s3 + $0x6c8] sm:$0xff]
  %v343 = vld [vmem:[%s3 + $0x6d0] sm:$0xff]
  %v344 = vld [vmem:[%s3 + $0x6d8] sm:$0xff]
  %v345 = vld [vmem:[%s3 + $0x6e0] sm:$0xff]
  %v346 = vld [vmem:[%s3 + $0x6e8] sm:$0xff]
  %v347 = vld [vmem:[%s3 + $0x6f0] sm:$0xff]
  %v348 = vld [vmem:[%s3 + $0x6f8] sm:$0xff]
  %v349 = vld [vmem:[%s3 + $0x700] sm:$0xff]
  %v350 = vld [vmem:[%s3 + $0x708] sm:$0xff]
  %v351 = vld [vmem:[%s3 + $0x710] sm:$0xff]
  %v352 = vld [vmem:[%s3 + $0x718] sm:$0xff]
  %v353 = vld [vmem:[%s3 + $0x720] sm:$0xff]
  %v354 = vld [vmem:[%s3 + $0x728] sm:$0xff]
  %v355 = vld [vmem:[%s3 + $0x730] sm:$0xff]
  %v356 = vld [vmem:[%s3 + $0x738] sm:$0xff]
  %v357 = vld [vmem:[%s3 + $0x740] sm:$0xff]
  %v358 = vld [vmem:[%s3 + $0x748] sm:$0xff]
  %v359 = vld [vmem:[%s3 + $0x750] sm:$0xff]
  %v360 = vld [vmem:[%s3 + $0x758] sm:$0xff]
  %v361 = vld [vmem:[%s3 + $0x760] sm:$0xff]
  %v362 = vld [vmem:[%s3 + $0x768] sm:$0xff]
  %v363 = vld [vmem:[%s3 + $0x770] sm:$0xff]
  %v364 = vld [vmem:[%s3 + $0x778] sm:$0xff]
  %v365 = vld [vmem:[%s3 + $0x780] sm:$0xff]
  %v366 = vld [vmem:[%s3 + $0x788] sm:$0xff]
  %v367 = vld [vmem:[%s3 + $0x790] sm:$0xff]
  %v368 = vld [vmem:[%s3 + $0x798] sm:$0xff]
  %v369 = vld [vmem:[%s3 + $0x7a0] sm:$0xff]
  %v370 = vld [vmem:[%s3 + $0x7a8] sm:$0xff]
  %v371 = vld [vmem:[%s3 + $0x7b0] sm:$0xff]
  %v372 = vld [vmem:[%s3 + $0x7b8] sm:$0xff]
  %v373 = vld [vmem:[%s3 + $0x7c0] sm:$0xff]
  %v374 = vld [vmem:[%s3 + $0x7c8] sm:$0xff]
  %v375 = vld [vmem:[%s3 + $0x7d0] sm:$0xff]
  %v376 = vld [vmem:[%s3 + $0x7d8] sm:$0xff]
  %v377 = vld [vmem:[%s3 + $0x7e0] sm:$0xff]
  %v378 = vld [vmem:[%s3 + $0x7e8] sm:$0xff]
  %v379 = vld [vmem:[%s3 + $0x7f0] sm:$0xff]
  %v380 = vld [vmem:[%s3 + $0x7f8] sm:$0xff]
  %v381 = vld [vmem:[%s3 + $0x800] sm:$0xff]
  %v382 = vld [vmem:[%s3 + $0x808] sm:$0xff]
  %v383 = vld [vmem:[%s3 + $0x810] sm:$0xff]
  %v384 = vld [vmem:[%s3 + $0x818] sm:$0xff]
  %v385 = vld [vmem:[%s3 + $0x820] sm:$0xff]
  %v386 = vld [vmem:[%s3 + $0x828] sm:$0xff]
  %v387 = vld [vmem:[%s3 + $0x830] sm:$0xff]
  %v388 = vld [vmem:[%s3 + $0x838] sm:$0xff]
  %v389 = vld [vmem:[%s3 + $0x840] sm:$0xff]
  %v390 = vld [vmem:[%s3 + $0x848] sm:$0xff]
  %v391 = vld [vmem:[%s3 + $0x850] sm:$0xff]
  %v392 = vld [vmem:[%s3 + $0x858] sm:$0xff]
  %v393 = vld [vmem:[%s3 + $0x860] sm:$0xff]
  %v394 = vld [vmem:[%s3 + $0x868] sm:$0xff]
  %v395 = vld [vmem:[%s3 + $0x870] sm:$0xff]
  %v396 = vld [vmem:[%s3 + $0x878] sm:$0xff]
  %v397 = vld [vmem:[%s3 + $0x880] sm:$0xff]
  %v398 = vld [vmem:[%s3 + $0x888] sm:$0xff]
  %v399 = vld [vmem:[%s3 + $0x890] sm:$0xff]
  %v400 = vld [vmem:[%s3 + $0x898] sm:$0xff]
  %v401 = vld [vmem:[%s3 + $0x8a0] sm:$0xff]
  %v402 = vld [vmem:[%s3 + $0x8a8] sm:$0xff]
  %v403 = vld [vmem:[%s3 + $0x8b0] sm:$0xff]
  %v404 = vld [vmem:[%s3 + $0x8b8] sm:$0xff]
  %v405 = vld [vmem:[%s3 + $0x8c0] sm:$0xff]
  %v406 = vld [vmem:[%s3 + $0x8c8] sm:$0xff]
  %v407 = vld [vmem:[%s3 + $0x8d0] sm:$0xff]
  %v408 = vld [vmem:[%s3 + $0x8d8] sm:$0xff]
  %v409 = vld [vmem:[%s3 + $0x8e0] sm:$0xff]
  %v410 = vld [vmem:[%s3 + $0x8e8] sm:$0xff]
  %v411 = vld [vmem:[%s3 + $0x8f0] sm:$0xff]
  %v412 = vld [vmem:[%s3 + $0x8f8] sm:$0xff]
  %v413 = vld [vmem:[%s4] sm:$0xff]
  %v414 = vld [vmem:[%s4 + $0x8] sm:$0xf]
  %v417 = vlaneseq
  %v418 = vshrl.u32 %v417, 7
  %v419 = vsub.s32 0, %v418
  %v420 = vrot.slane %v413, %v419
  %v421 = vlaneseq
  %v422 = vshrl.u32 %v421, 7
  %v423 = vsub.s32 1, %v422
  %v424 = vrot.slane %v413, %v423
  %v425 = vlaneseq
  %v426 = vshrl.u32 %v425, 7
  %v427 = vsub.s32 2, %v426
  %v428 = vrot.slane %v413, %v427
  %v429 = vlaneseq
  %v430 = vshrl.u32 %v429, 7
  %v431 = vsub.s32 3, %v430
  %v432 = vrot.slane %v413, %v431
  %v433 = vlaneseq
  %v434 = vshrl.u32 %v433, 7
  %v435 = vsub.s32 4, %v434
  %v436 = vrot.slane %v413, %v435
  %v437 = vlaneseq
  %v438 = vshrl.u32 %v437, 7
  %v439 = vsub.s32 5, %v438
  %v440 = vrot.slane %v413, %v439
  %v441 = vlaneseq
  %v442 = vshrl.u32 %v441, 7
  %v443 = vsub.s32 6, %v442
  %v444 = vrot.slane %v413, %v443
  %v445 = vlaneseq
  %v446 = vshrl.u32 %v445, 7
  %v447 = vsub.s32 7, %v446
  %v448 = vrot.slane %v413, %v447
  %v449 = vlaneseq
  %v450 = vshrl.u32 %v449, 7
  %v451 = vsub.s32 0, %v450
  %v452 = vrot.slane %v414, %v451
  %v453 = vlaneseq
  %v454 = vshrl.u32 %v453, 7
  %v455 = vsub.s32 1, %v454
  %v456 = vrot.slane %v414, %v455
  %v457 = vlaneseq
  %v458 = vshrl.u32 %v457, 7
  %v459 = vsub.s32 2, %v458
  %v460 = vrot.slane %v414, %v459
  %v461 = vlaneseq
  %v462 = vshrl.u32 %v461, 7
  %v463 = vsub.s32 3, %v462
  %v464 = vrot.slane %v414, %v463
  %v765 = vunpack.c.l.b16 %v125
  %v766 = vunpack.c.h.b16 %v125
  %v767 = vunpack.c.l.b16 %v126
  %v768 = vunpack.c.h.b16 %v126
  %v769 = vunpack.c.l.b16 %v127
  %v770 = vunpack.c.h.b16 %v127
  %v771 = vunpack.c.l.b16 %v128
  %v772 = vunpack.c.h.b16 %v128
  %v773 = vunpack.c.l.b16 %v129
  %v774 = vunpack.c.h.b16 %v129
  %v775 = vunpack.c.l.b16 %v130
  %v776 = vunpack.c.h.b16 %v130
  %v777 = vunpack.c.l.b16 %v131
  %v778 = vunpack.c.h.b16 %v131
  %v779 = vunpack.c.l.b16 %v132
  %v780 = vunpack.c.h.b16 %v132
  %v781 = vunpack.c.l.b16 %v133
  %v782 = vunpack.c.h.b16 %v133
  %v783 = vunpack.c.l.b16 %v134
  %v784 = vunpack.c.h.b16 %v134
  %v785 = vunpack.c.l.b16 %v135
  %v786 = vunpack.c.h.b16 %v135
  %v787 = vunpack.c.l.b16 %v136
  %v788 = vunpack.c.h.b16 %v136
  %v789 = vunpack.c.l.b16 %v137
  %v790 = vunpack.c.h.b16 %v137
  %v791 = vunpack.c.l.b16 %v138
  %v792 = vunpack.c.h.b16 %v138
  %v793 = vunpack.c.l.b16 %v139
  %v794 = vunpack.c.h.b16 %v139
  %v795 = vunpack.c.l.b16 %v140
  %v796 = vunpack.c.h.b16 %v140
  %v797 = vunpack.c.l.b16 %v141
  %v798 = vunpack.c.h.b16 %v141
  %v799 = vunpack.c.l.b16 %v142
  %v800 = vunpack.c.h.b16 %v142
  %v801 = vunpack.c.l.b16 %v143
  %v802 = vunpack.c.h.b16 %v143
  %v803 = vunpack.c.l.b16 %v144
  %v804 = vunpack.c.h.b16 %v144
  %v805 = vunpack.c.l.b16 %v145
  %v806 = vunpack.c.h.b16 %v145
  %v807 = vunpack.c.l.b16 %v146
  %v808 = vunpack.c.h.b16 %v146
  %v809 = vunpack.c.l.b16 %v147
  %v810 = vunpack.c.h.b16 %v147
  %v811 = vunpack.c.l.b16 %v148
  %v812 = vunpack.c.h.b16 %v148
  %v813 = vunpack.c.l.b16 %v149
  %v814 = vunpack.c.h.b16 %v149
  %v815 = vunpack.c.l.b16 %v150
  %v816 = vunpack.c.h.b16 %v150
  %v817 = vunpack.c.l.b16 %v151
  %v818 = vunpack.c.h.b16 %v151
  %v819 = vunpack.c.l.b16 %v152
  %v820 = vunpack.c.h.b16 %v152
  %v821 = vunpack.c.l.b16 %v153
  %v822 = vunpack.c.h.b16 %v153
  %v823 = vunpack.c.l.b16 %v154
  %v824 = vunpack.c.h.b16 %v154
  %v825 = vunpack.c.l.b16 %v155
  %v826 = vunpack.c.h.b16 %v155
  %v827 = vunpack.c.l.b16 %v156
  %v828 = vunpack.c.h.b16 %v156
  %v829 = vunpack.c.l.b16 %v157
  %v830 = vunpack.c.h.b16 %v157
  %v831 = vunpack.c.l.b16 %v158
  %v832 = vunpack.c.h.b16 %v158
  %v833 = vunpack.c.l.b16 %v159
  %v834 = vunpack.c.h.b16 %v159
  %v835 = vunpack.c.l.b16 %v160
  %v836 = vunpack.c.h.b16 %v160
  %v837 = vunpack.c.l.b16 %v161
  %v838 = vunpack.c.h.b16 %v161
  %v839 = vunpack.c.l.b16 %v162
  %v840 = vunpack.c.h.b16 %v162
  %v841 = vunpack.c.l.b16 %v163
  %v842 = vunpack.c.h.b16 %v163
  %v843 = vunpack.c.l.b16 %v164
  %v844 = vunpack.c.h.b16 %v164
  %v845 = vunpack.c.l.b16 %v165
  %v846 = vunpack.c.h.b16 %v165
  %v847 = vunpack.c.l.b16 %v166
  %v848 = vunpack.c.h.b16 %v166
  %v849 = vunpack.c.l.b16 %v167
  %v850 = vunpack.c.h.b16 %v167
  %v851 = vunpack.c.l.b16 %v168
  %v852 = vunpack.c.h.b16 %v168
  %v853 = vunpack.c.l.b16 %v169
  %v854 = vunpack.c.h.b16 %v169
  %v855 = vunpack.c.l.b16 %v170
  %v856 = vunpack.c.h.b16 %v170
  %v857 = vunpack.c.l.b16 %v171
  %v858 = vunpack.c.h.b16 %v171
  %v859 = vunpack.c.l.b16 %v172
  %v860 = vunpack.c.h.b16 %v172
  %v861 = vunpack.c.l.b16 %v173
  %v862 = vunpack.c.h.b16 %v173
  %v863 = vunpack.c.l.b16 %v174
  %v864 = vunpack.c.h.b16 %v174
  %v865 = vunpack.c.l.b16 %v175
  %v866 = vunpack.c.h.b16 %v175
  %v867 = vunpack.c.l.b16 %v176
  %v868 = vunpack.c.h.b16 %v176
  %v869 = vunpack.c.l.b16 %v177
  %v870 = vunpack.c.h.b16 %v177
  %v871 = vunpack.c.l.b16 %v178
  %v872 = vunpack.c.h.b16 %v178
  %v873 = vunpack.c.l.b16 %v179
  %v874 = vunpack.c.h.b16 %v179
  %v875 = vunpack.c.l.b16 %v180
  %v876 = vunpack.c.h.b16 %v180
  %v877 = vunpack.c.l.b16 %v181
  %v878 = vunpack.c.h.b16 %v181
  %v879 = vunpack.c.l.b16 %v182
  %v880 = vunpack.c.h.b16 %v182
  %v881 = vunpack.c.l.b16 %v183
  %v882 = vunpack.c.h.b16 %v183
  %v883 = vunpack.c.l.b16 %v184
  %v884 = vunpack.c.h.b16 %v184
  %v885 = vunpack.c.l.b16 %v185
  %v886 = vunpack.c.h.b16 %v185
  %v887 = vunpack.c.l.b16 %v186
  %v888 = vunpack.c.h.b16 %v186
  %v889 = vunpack.c.l.b16 %v187
  %v890 = vunpack.c.h.b16 %v187
  %v891 = vunpack.c.l.b16 %v188
  %v892 = vunpack.c.h.b16 %v188
  %v893 = vunpack.c.l.b16 %v189
  %v894 = vunpack.c.h.b16 %v189
  %v895 = vunpack.c.l.b16 %v190
  %v896 = vunpack.c.h.b16 %v190
  %v897 = vunpack.c.l.b16 %v191
  %v898 = vunpack.c.h.b16 %v191
  %v899 = vunpack.c.l.b16 %v192
  %v900 = vunpack.c.h.b16 %v192
  %v901 = vunpack.c.l.b16 %v193
  %v902 = vunpack.c.h.b16 %v193
  %v903 = vunpack.c.l.b16 %v194
  %v904 = vunpack.c.h.b16 %v194
  %v905 = vunpack.c.l.b16 %v195
  %v906 = vunpack.c.h.b16 %v195
  %v907 = vunpack.c.l.b16 %v196
  %v908 = vunpack.c.h.b16 %v196
  %v909 = vunpack.c.l.b16 %v197
  %v910 = vunpack.c.h.b16 %v197
  %v911 = vunpack.c.l.b16 %v198
  %v912 = vunpack.c.h.b16 %v198
  %v913 = vunpack.c.l.b16 %v199
  %v914 = vunpack.c.h.b16 %v199
  %v915 = vunpack.c.l.b16 %v200
  %v916 = vunpack.c.h.b16 %v200
  %v917 = vunpack.c.l.b16 %v201
  %v918 = vunpack.c.h.b16 %v201
  %v919 = vunpack.c.l.b16 %v202
  %v920 = vunpack.c.h.b16 %v202
  %v921 = vunpack.c.l.b16 %v203
  %v922 = vunpack.c.h.b16 %v203
  %v923 = vunpack.c.l.b16 %v204
  %v924 = vunpack.c.h.b16 %v204
  %v925 = vunpack.c.l.b16 %v205
  %v926 = vunpack.c.h.b16 %v205
  %v927 = vunpack.c.l.b16 %v206
  %v928 = vunpack.c.h.b16 %v206
  %v929 = vunpack.c.l.b16 %v207
  %v930 = vunpack.c.h.b16 %v207
  %v931 = vunpack.c.l.b16 %v208
  %v932 = vunpack.c.h.b16 %v208
  %v933 = vunpack.c.l.b16 %v209
  %v934 = vunpack.c.h.b16 %v209
  %v935 = vunpack.c.l.b16 %v210
  %v936 = vunpack.c.h.b16 %v210
  %v937 = vunpack.c.l.b16 %v211
  %v938 = vunpack.c.h.b16 %v211
  %v939 = vunpack.c.l.b16 %v212
  %v940 = vunpack.c.h.b16 %v212
  %v941 = vunpack.c.l.b16 %v213
  %v942 = vunpack.c.h.b16 %v213
  %v943 = vunpack.c.l.b16 %v214
  %v944 = vunpack.c.h.b16 %v214
  %v945 = vunpack.c.l.b16 %v215
  %v946 = vunpack.c.h.b16 %v215
  %v947 = vunpack.c.l.b16 %v216
  %v948 = vunpack.c.h.b16 %v216
  %v949 = vunpack.c.l.b16 %v217
  %v950 = vunpack.c.h.b16 %v217
  %v951 = vunpack.c.l.b16 %v218
  %v952 = vunpack.c.h.b16 %v218
  %v953 = vunpack.c.l.b16 %v219
  %v954 = vunpack.c.h.b16 %v219
  %v955 = vunpack.c.l.b16 %v220
  %v956 = vunpack.c.h.b16 %v220
  %v957 = vunpack.c.l.b16 %v221
  %v958 = vunpack.c.h.b16 %v221
  %v959 = vunpack.c.l.b16 %v222
  %v960 = vunpack.c.h.b16 %v222
  %v961 = vunpack.c.l.b16 %v223
  %v962 = vunpack.c.h.b16 %v223
  %v963 = vunpack.c.l.b16 %v224
  %v964 = vunpack.c.h.b16 %v224
  %v965 = vunpack.c.l.b16 %v225
  %v966 = vunpack.c.h.b16 %v225
  %v967 = vunpack.c.l.b16 %v226
  %v968 = vunpack.c.h.b16 %v226
  %v969 = vunpack.c.l.b16 %v227
  %v970 = vunpack.c.h.b16 %v227
  %v971 = vunpack.c.l.b16 %v228
  %v972 = vunpack.c.h.b16 %v228
  %v973 = vunpack.c.l.b16 %v229
  %v974 = vunpack.c.h.b16 %v229
  %v975 = vunpack.c.l.b16 %v230
  %v976 = vunpack.c.h.b16 %v230
  %v977 = vunpack.c.l.b16 %v231
  %v978 = vunpack.c.h.b16 %v231
  %v979 = vunpack.c.l.b16 %v232
  %v980 = vunpack.c.h.b16 %v232
  %v981 = vunpack.c.l.b16 %v233
  %v982 = vunpack.c.h.b16 %v233
  %v983 = vunpack.c.l.b16 %v234
  %v984 = vunpack.c.h.b16 %v234
  %v985 = vunpack.c.l.b16 %v235
  %v986 = vunpack.c.h.b16 %v235
  %v987 = vunpack.c.l.b16 %v236
  %v988 = vunpack.c.h.b16 %v236
  %v989 = vunpack.c.l.b16 %v237
  %v990 = vunpack.c.h.b16 %v237
  %v991 = vunpack.c.l.b16 %v238
  %v992 = vunpack.c.h.b16 %v238
  %v993 = vunpack.c.l.b16 %v239
  %v994 = vunpack.c.h.b16 %v239
  %v995 = vunpack.c.l.b16 %v240
  %v996 = vunpack.c.h.b16 %v240
  %v997 = vunpack.c.l.b16 %v241
  %v998 = vunpack.c.h.b16 %v241
  %v999 = vunpack.c.l.b16 %v242
  %v1000 = vunpack.c.h.b16 %v242
  %v1001 = vunpack.c.l.b16 %v243
  %v1002 = vunpack.c.h.b16 %v243
  %v1003 = vunpack.c.l.b16 %v244
  %v1004 = vunpack.c.h.b16 %v244
  %v1005 = vunpack.c.l.b16 %v245
  %v1006 = vunpack.c.h.b16 %v245
  %v1007 = vunpack.c.l.b16 %v246
  %v1008 = vunpack.c.h.b16 %v246
  %v1009 = vunpack.c.l.b16 %v247
  %v1010 = vunpack.c.h.b16 %v247
  %v1011 = vunpack.c.l.b16 %v248
  %v1012 = vunpack.c.h.b16 %v248
  %v1013 = vunpack.c.l.b16 %v249
  %v1014 = vunpack.c.h.b16 %v249
  %v1015 = vunpack.c.l.b16 %v250
  %v1016 = vunpack.c.h.b16 %v250
  %v1017 = vunpack.c.l.b16 %v251
  %v1018 = vunpack.c.h.b16 %v251
  %v1019 = vunpack.c.l.b16 %v252
  %v1020 = vunpack.c.h.b16 %v252
  %v1021 = vunpack.c.l.b16 %v253
  %v1022 = vunpack.c.h.b16 %v253
  %v1023 = vunpack.c.l.b16 %v254
  %v1024 = vunpack.c.h.b16 %v254
  %v1025 = vunpack.c.l.b16 %v255
  %v1026 = vunpack.c.h.b16 %v255
  %v1027 = vunpack.c.l.b16 %v256
  %v1028 = vunpack.c.h.b16 %v256
  %v1029 = vunpack.c.l.b16 %v257
  %v1030 = vunpack.c.h.b16 %v257
  %v1031 = vunpack.c.l.b16 %v258
  %v1032 = vunpack.c.h.b16 %v258
  %v1033 = vunpack.c.l.b16 %v259
  %v1034 = vunpack.c.h.b16 %v259
  %v1035 = vunpack.c.l.b16 %v260
  %v1036 = vunpack.c.h.b16 %v260
  %v1037 = vunpack.c.l.b16 %v261
  %v1038 = vunpack.c.h.b16 %v261
  %v1039 = vunpack.c.l.b16 %v262
  %v1040 = vunpack.c.h.b16 %v262
  %v1041 = vunpack.c.l.b16 %v263
  %v1042 = vunpack.c.h.b16 %v263
  %v1043 = vunpack.c.l.b16 %v264
  %v1044 = vunpack.c.h.b16 %v264
  %v1045 = vunpack.c.l.b16 %v265
  %v1046 = vunpack.c.h.b16 %v265
  %v1047 = vunpack.c.l.b16 %v266
  %v1048 = vunpack.c.h.b16 %v266
  %v1049 = vunpack.c.l.b16 %v267
  %v1050 = vunpack.c.h.b16 %v267
  %v1051 = vunpack.c.l.b16 %v268
  %v1052 = vunpack.c.h.b16 %v268
  %v1053 = vunpack.c.l.b16 %v269
  %v1054 = vunpack.c.h.b16 %v269
  %v1055 = vunpack.c.l.b16 %v270
  %v1056 = vunpack.c.h.b16 %v270
  %v1057 = vunpack.c.l.b16 %v271
  %v1058 = vunpack.c.h.b16 %v271
  %v1059 = vunpack.c.l.b16 %v272
  %v1060 = vunpack.c.h.b16 %v272
  %v1061 = vunpack.c.l.b16 %v273
  %v1062 = vunpack.c.h.b16 %v273
  %v1063 = vunpack.c.l.b16 %v274
  %v1064 = vunpack.c.h.b16 %v274
  %v1065 = vunpack.c.l.b16 %v275
  %v1066 = vunpack.c.h.b16 %v275
  %v1067 = vunpack.c.l.b16 %v276
  %v1068 = vunpack.c.h.b16 %v276
  %v1069 = vunpack.c.l.b16 %v277
  %v1070 = vunpack.c.h.b16 %v277
  %v1071 = vunpack.c.l.b16 %v278
  %v1072 = vunpack.c.h.b16 %v278
  %v1073 = vunpack.c.l.b16 %v279
  %v1074 = vunpack.c.h.b16 %v279
  %v1075 = vunpack.c.l.b16 %v280
  %v1076 = vunpack.c.h.b16 %v280
  %v1077 = vunpack.c.l.b16 %v281
  %v1078 = vunpack.c.h.b16 %v281
  %v1079 = vunpack.c.l.b16 %v282
  %v1080 = vunpack.c.h.b16 %v282
  %v1081 = vunpack.c.l.b16 %v283
  %v1082 = vunpack.c.h.b16 %v283
  %v1083 = vunpack.c.l.b16 %v284
  %v1084 = vunpack.c.h.b16 %v284
  %v1085 = vunpack.c.l.b16 %v285
  %v1086 = vunpack.c.h.b16 %v285
  %v1087 = vunpack.c.l.b16 %v286
  %v1088 = vunpack.c.h.b16 %v286
  %v1089 = vunpack.c.l.b16 %v287
  %v1090 = vunpack.c.h.b16 %v287
  %v1091 = vunpack.c.l.b16 %v288
  %v1092 = vunpack.c.h.b16 %v288
  %v1093 = vunpack.c.l.b16 %v289
  %v1094 = vunpack.c.h.b16 %v289
  %v1095 = vunpack.c.l.b16 %v290
  %v1096 = vunpack.c.h.b16 %v290
  %v1097 = vunpack.c.l.b16 %v291
  %v1098 = vunpack.c.h.b16 %v291
  %v1099 = vunpack.c.l.b16 %v292
  %v1100 = vunpack.c.h.b16 %v292
  %v1101 = vunpack.c.l.b16 %v293
  %v1102 = vunpack.c.h.b16 %v293
  %v1103 = vunpack.c.l.b16 %v294
  %v1104 = vunpack.c.h.b16 %v294
  %v1105 = vunpack.c.l.b16 %v295
  %v1106 = vunpack.c.h.b16 %v295
  %v1107 = vunpack.c.l.b16 %v296
  %v1108 = vunpack.c.h.b16 %v296
  %v1109 = vunpack.c.l.b16 %v297
  %v1110 = vunpack.c.h.b16 %v297
  %v1111 = vunpack.c.l.b16 %v298
  %v1112 = vunpack.c.h.b16 %v298
  %v1113 = vunpack.c.l.b16 %v299
  %v1114 = vunpack.c.h.b16 %v299
  %v1115 = vunpack.c.l.b16 %v300
  %v1116 = vunpack.c.h.b16 %v300
  %v1117 = vunpack.c.l.b16 %v301
  %v1118 = vunpack.c.h.b16 %v301
  %v1119 = vunpack.c.l.b16 %v302
  %v1120 = vunpack.c.h.b16 %v302
  %v1121 = vunpack.c.l.b16 %v303
  %v1122 = vunpack.c.h.b16 %v303
  %v1123 = vunpack.c.l.b16 %v304
  %v1124 = vunpack.c.h.b16 %v304
  %v1125 = vunpack.c.l.b16 %v305
  %v1126 = vunpack.c.h.b16 %v305
  %v1127 = vunpack.c.l.b16 %v306
  %v1128 = vunpack.c.h.b16 %v306
  %v1129 = vunpack.c.l.b16 %v307
  %v1130 = vunpack.c.h.b16 %v307
  %v1131 = vunpack.c.l.b16 %v308
  %v1132 = vunpack.c.h.b16 %v308
  %v1133 = vunpack.c.l.b16 %v309
  %v1134 = vunpack.c.h.b16 %v309
  %v1135 = vunpack.c.l.b16 %v310
  %v1136 = vunpack.c.h.b16 %v310
  %v1137 = vunpack.c.l.b16 %v311
  %v1138 = vunpack.c.h.b16 %v311
  %v1139 = vunpack.c.l.b16 %v312
  %v1140 = vunpack.c.h.b16 %v312
  %v1141 = vunpack.c.l.b16 %v313
  %v1142 = vunpack.c.h.b16 %v313
  %v1143 = vunpack.c.l.b16 %v314
  %v1144 = vunpack.c.h.b16 %v314
  %v1145 = vunpack.c.l.b16 %v315
  %v1146 = vunpack.c.h.b16 %v315
  %v1147 = vunpack.c.l.b16 %v316
  %v1148 = vunpack.c.h.b16 %v316
  %v1149 = vunpack.c.l.b16 %v317
  %v1150 = vunpack.c.h.b16 %v317
  %v1151 = vunpack.c.l.b16 %v318
  %v1152 = vunpack.c.h.b16 %v318
  %v1153 = vunpack.c.l.b16 %v319
  %v1154 = vunpack.c.h.b16 %v319
  %v1155 = vunpack.c.l.b16 %v320
  %v1156 = vunpack.c.h.b16 %v320
  %v1157 = vunpack.c.l.b16 %v321
  %v1158 = vunpack.c.h.b16 %v321
  %v1159 = vunpack.c.l.b16 %v322
  %v1160 = vunpack.c.h.b16 %v322
  %v1161 = vunpack.c.l.b16 %v323
  %v1162 = vunpack.c.h.b16 %v323
  %v1163 = vunpack.c.l.b16 %v324
  %v1164 = vunpack.c.h.b16 %v324
  %v1165 = vunpack.c.l.b16 %v325
  %v1166 = vunpack.c.h.b16 %v325
  %v1167 = vunpack.c.l.b16 %v326
  %v1168 = vunpack.c.h.b16 %v326
  %v1169 = vunpack.c.l.b16 %v327
  %v1170 = vunpack.c.h.b16 %v327
  %v1171 = vunpack.c.l.b16 %v328
  %v1172 = vunpack.c.h.b16 %v328
  %v1173 = vunpack.c.l.b16 %v329
  %v1174 = vunpack.c.h.b16 %v329
  %v1175 = vunpack.c.l.b16 %v330
  %v1176 = vunpack.c.h.b16 %v330
  %v1177 = vunpack.c.l.b16 %v331
  %v1178 = vunpack.c.h.b16 %v331
  %v1179 = vunpack.c.l.b16 %v332
  %v1180 = vunpack.c.h.b16 %v332
  %v1181 = vunpack.c.l.b16 %v333
  %v1182 = vunpack.c.h.b16 %v333
  %v1183 = vunpack.c.l.b16 %v334
  %v1184 = vunpack.c.h.b16 %v334
  %v1185 = vunpack.c.l.b16 %v335
  %v1186 = vunpack.c.h.b16 %v335
  %v1187 = vunpack.c.l.b16 %v336
  %v1188 = vunpack.c.h.b16 %v336
  %v1189 = vunpack.c.l.b16 %v337
  %v1190 = vunpack.c.h.b16 %v337
  %v1191 = vunpack.c.l.b16 %v338
  %v1192 = vunpack.c.h.b16 %v338
  %v1193 = vunpack.c.l.b16 %v339
  %v1194 = vunpack.c.h.b16 %v339
  %v1195 = vunpack.c.l.b16 %v340
  %v1196 = vunpack.c.h.b16 %v340
  %v1197 = vunpack.c.l.b16 %v341
  %v1198 = vunpack.c.h.b16 %v341
  %v1199 = vunpack.c.l.b16 %v342
  %v1200 = vunpack.c.h.b16 %v342
  %v1201 = vunpack.c.l.b16 %v343
  %v1202 = vunpack.c.h.b16 %v343
  %v1203 = vunpack.c.l.b16 %v344
  %v1204 = vunpack.c.h.b16 %v344
  %v1205 = vunpack.c.l.b16 %v345
  %v1206 = vunpack.c.h.b16 %v345
  %v1207 = vunpack.c.l.b16 %v346
  %v1208 = vunpack.c.h.b16 %v346
  %v1209 = vunpack.c.l.b16 %v347
  %v1210 = vunpack.c.h.b16 %v347
  %v1211 = vunpack.c.l.b16 %v348
  %v1212 = vunpack.c.h.b16 %v348
  %v1213 = vunpack.c.l.b16 %v349
  %v1214 = vunpack.c.h.b16 %v349
  %v1215 = vunpack.c.l.b16 %v350
  %v1216 = vunpack.c.h.b16 %v350
  %v1217 = vunpack.c.l.b16 %v351
  %v1218 = vunpack.c.h.b16 %v351
  %v1219 = vunpack.c.l.b16 %v352
  %v1220 = vunpack.c.h.b16 %v352
  %v1221 = vunpack.c.l.b16 %v353
  %v1222 = vunpack.c.h.b16 %v353
  %v1223 = vunpack.c.l.b16 %v354
  %v1224 = vunpack.c.h.b16 %v354
  %v1225 = vunpack.c.l.b16 %v355
  %v1226 = vunpack.c.h.b16 %v355
  %v1227 = vunpack.c.l.b16 %v356
  %v1228 = vunpack.c.h.b16 %v356
  %v1229 = vunpack.c.l.b16 %v357
  %v1230 = vunpack.c.h.b16 %v357
  %v1231 = vunpack.c.l.b16 %v358
  %v1232 = vunpack.c.h.b16 %v358
  %v1233 = vunpack.c.l.b16 %v359
  %v1234 = vunpack.c.h.b16 %v359
  %v1235 = vunpack.c.l.b16 %v360
  %v1236 = vunpack.c.h.b16 %v360
  %v1237 = vunpack.c.l.b16 %v361
  %v1238 = vunpack.c.h.b16 %v361
  %v1239 = vunpack.c.l.b16 %v362
  %v1240 = vunpack.c.h.b16 %v362
  %v1241 = vunpack.c.l.b16 %v363
  %v1242 = vunpack.c.h.b16 %v363
  %v1243 = vunpack.c.l.b16 %v364
  %v1244 = vunpack.c.h.b16 %v364
  %v1245 = vunpack.c.l.b16 %v365
  %v1246 = vunpack.c.h.b16 %v365
  %v1247 = vunpack.c.l.b16 %v366
  %v1248 = vunpack.c.h.b16 %v366
  %v1249 = vunpack.c.l.b16 %v367
  %v1250 = vunpack.c.h.b16 %v367
  %v1251 = vunpack.c.l.b16 %v368
  %v1252 = vunpack.c.h.b16 %v368
  %v1253 = vunpack.c.l.b16 %v369
  %v1254 = vunpack.c.h.b16 %v369
  %v1255 = vunpack.c.l.b16 %v370
  %v1256 = vunpack.c.h.b16 %v370
  %v1257 = vunpack.c.l.b16 %v371
  %v1258 = vunpack.c.h.b16 %v371
  %v1259 = vunpack.c.l.b16 %v372
  %v1260 = vunpack.c.h.b16 %v372
  %v1261 = vunpack.c.l.b16 %v373
  %v1262 = vunpack.c.h.b16 %v373
  %v1263 = vunpack.c.l.b16 %v374
  %v1264 = vunpack.c.h.b16 %v374
  %v1265 = vunpack.c.l.b16 %v375
  %v1266 = vunpack.c.h.b16 %v375
  %v1267 = vunpack.c.l.b16 %v376
  %v1268 = vunpack.c.h.b16 %v376
  %v1269 = vunpack.c.l.b16 %v377
  %v1270 = vunpack.c.h.b16 %v377
  %v1271 = vunpack.c.l.b16 %v378
  %v1272 = vunpack.c.h.b16 %v378
  %v1273 = vunpack.c.l.b16 %v379
  %v1274 = vunpack.c.h.b16 %v379
  %v1275 = vunpack.c.l.b16 %v380
  %v1276 = vunpack.c.h.b16 %v380
  %v1277 = vunpack.c.l.b16 %v381
  %v1278 = vunpack.c.h.b16 %v381
  %v1279 = vunpack.c.l.b16 %v382
  %v1280 = vunpack.c.h.b16 %v382
  %v1281 = vunpack.c.l.b16 %v383
  %v1282 = vunpack.c.h.b16 %v383
  %v1283 = vunpack.c.l.b16 %v384
  %v1284 = vunpack.c.h.b16 %v384
  %v1285 = vunpack.c.l.b16 %v385
  %v1286 = vunpack.c.h.b16 %v385
  %v1287 = vunpack.c.l.b16 %v386
  %v1288 = vunpack.c.h.b16 %v386
  %v1289 = vunpack.c.l.b16 %v387
  %v1290 = vunpack.c.h.b16 %v387
  %v1291 = vunpack.c.l.b16 %v388
  %v1292 = vunpack.c.h.b16 %v388
  %v1293 = vunpack.c.l.b16 %v389
  %v1294 = vunpack.c.h.b16 %v389
  %v1295 = vunpack.c.l.b16 %v390
  %v1296 = vunpack.c.h.b16 %v390
  %v1297 = vunpack.c.l.b16 %v391
  %v1298 = vunpack.c.h.b16 %v391
  %v1299 = vunpack.c.l.b16 %v392
  %v1300 = vunpack.c.h.b16 %v392
  %v1301 = vunpack.c.l.b16 %v393
  %v1302 = vunpack.c.h.b16 %v393
  %v1303 = vunpack.c.l.b16 %v394
  %v1304 = vunpack.c.h.b16 %v394
  %v1305 = vunpack.c.l.b16 %v395
  %v1306 = vunpack.c.h.b16 %v395
  %v1307 = vunpack.c.l.b16 %v396
  %v1308 = vunpack.c.h.b16 %v396
  %v1309 = vunpack.c.l.b16 %v397
  %v1310 = vunpack.c.h.b16 %v397
  %v1311 = vunpack.c.l.b16 %v398
  %v1312 = vunpack.c.h.b16 %v398
  %v1313 = vunpack.c.l.b16 %v399
  %v1314 = vunpack.c.h.b16 %v399
  %v1315 = vunpack.c.l.b16 %v400
  %v1316 = vunpack.c.h.b16 %v400
  %v1317 = vunpack.c.l.b16 %v401
  %v1318 = vunpack.c.h.b16 %v401
  %v1319 = vunpack.c.l.b16 %v402
  %v1320 = vunpack.c.h.b16 %v402
  %v1321 = vunpack.c.l.b16 %v403
  %v1322 = vunpack.c.h.b16 %v403
  %v1323 = vunpack.c.l.b16 %v404
  %v1324 = vunpack.c.h.b16 %v404
  %v1325 = vunpack.c.l.b16 %v405
  %v1326 = vunpack.c.h.b16 %v405
  %v1327 = vunpack.c.l.b16 %v406
  %v1328 = vunpack.c.h.b16 %v406
  %v1329 = vunpack.c.l.b16 %v407
  %v1330 = vunpack.c.h.b16 %v407
  %v1331 = vunpack.c.l.b16 %v408
  %v1332 = vunpack.c.h.b16 %v408
  %v1333 = vunpack.c.l.b16 %v409
  %v1334 = vunpack.c.h.b16 %v409
  %v1335 = vunpack.c.l.b16 %v410
  %v1336 = vunpack.c.h.b16 %v410
  %v1337 = vunpack.c.l.b16 %v411
  %v1338 = vunpack.c.h.b16 %v411
  %v1339 = vunpack.c.l.b16 %v412
  %v1340 = vunpack.c.h.b16 %v412
  %v1341 = vpack.c.b16 %v777, %v765
  %v1342 = vpack.c.b16 %v778, %v766
  %v1343 = vpack.c.b16 %v779, %v767
  %v1344 = vpack.c.b16 %v780, %v768
  %v1345 = vpack.c.b16 %v781, %v769
  %v1346 = vpack.c.b16 %v782, %v770
  %v1347 = vpack.c.b16 %v783, %v771
  %v1348 = vpack.c.b16 %v784, %v772
  %v1349 = vpack.c.b16 %v785, %v773
  %v1350 = vpack.c.b16 %v786, %v774
  %v1351 = vpack.c.b16 %v787, %v775
  %v1352 = vpack.c.b16 %v788, %v776
  %v1353 = vpack.c.b16 %v801, %v789
  %v1354 = vpack.c.b16 %v802, %v790
  %v1355 = vpack.c.b16 %v803, %v791
  %v1356 = vpack.c.b16 %v804, %v792
  %v1357 = vpack.c.b16 %v805, %v793
  %v1358 = vpack.c.b16 %v806, %v794
  %v1359 = vpack.c.b16 %v807, %v795
  %v1360 = vpack.c.b16 %v808, %v796
  %v1361 = vpack.c.b16 %v809, %v797
  %v1362 = vpack.c.b16 %v810, %v798
  %v1363 = vpack.c.b16 %v811, %v799
  %v1364 = vpack.c.b16 %v812, %v800
  %v1365 = vpack.c.b16 %v825, %v813
  %v1366 = vpack.c.b16 %v826, %v814
  %v1367 = vpack.c.b16 %v827, %v815
  %v1368 = vpack.c.b16 %v828, %v816
  %v1369 = vpack.c.b16 %v829, %v817
  %v1370 = vpack.c.b16 %v830, %v818
  %v1371 = vpack.c.b16 %v831, %v819
  %v1372 = vpack.c.b16 %v832, %v820
  %v1373 = vpack.c.b16 %v833, %v821
  %v1374 = vpack.c.b16 %v834, %v822
  %v1375 = vpack.c.b16 %v835, %v823
  %v1376 = vpack.c.b16 %v836, %v824
  %v1377 = vpack.c.b16 %v849, %v837
  %v1378 = vpack.c.b16 %v850, %v838
  %v1379 = vpack.c.b16 %v851, %v839
  %v1380 = vpack.c.b16 %v852, %v840
  %v1381 = vpack.c.b16 %v853, %v841
  %v1382 = vpack.c.b16 %v854, %v842
  %v1383 = vpack.c.b16 %v855, %v843
  %v1384 = vpack.c.b16 %v856, %v844
  %v1385 = vpack.c.b16 %v857, %v845
  %v1386 = vpack.c.b16 %v858, %v846
  %v1387 = vpack.c.b16 %v859, %v847
  %v1388 = vpack.c.b16 %v860, %v848
  %v1389 = vpack.c.b16 %v873, %v861
  %v1390 = vpack.c.b16 %v874, %v862
  %v1391 = vpack.c.b16 %v875, %v863
  %v1392 = vpack.c.b16 %v876, %v864
  %v1393 = vpack.c.b16 %v877, %v865
  %v1394 = vpack.c.b16 %v878, %v866
  %v1395 = vpack.c.b16 %v879, %v867
  %v1396 = vpack.c.b16 %v880, %v868
  %v1397 = vpack.c.b16 %v881, %v869
  %v1398 = vpack.c.b16 %v882, %v870
  %v1399 = vpack.c.b16 %v883, %v871
  %v1400 = vpack.c.b16 %v884, %v872
  %v1401 = vpack.c.b16 %v897, %v885
  %v1402 = vpack.c.b16 %v898, %v886
  %v1403 = vpack.c.b16 %v899, %v887
  %v1404 = vpack.c.b16 %v900, %v888
  %v1405 = vpack.c.b16 %v901, %v889
  %v1406 = vpack.c.b16 %v902, %v890
  %v1407 = vpack.c.b16 %v903, %v891
  %v1408 = vpack.c.b16 %v904, %v892
  %v1409 = vpack.c.b16 %v905, %v893
  %v1410 = vpack.c.b16 %v906, %v894
  %v1411 = vpack.c.b16 %v907, %v895
  %v1412 = vpack.c.b16 %v908, %v896
  %v1413 = vpack.c.b16 %v921, %v909
  %v1414 = vpack.c.b16 %v922, %v910
  %v1415 = vpack.c.b16 %v923, %v911
  %v1416 = vpack.c.b16 %v924, %v912
  %v1417 = vpack.c.b16 %v925, %v913
  %v1418 = vpack.c.b16 %v926, %v914
  %v1419 = vpack.c.b16 %v927, %v915
  %v1420 = vpack.c.b16 %v928, %v916
  %v1421 = vpack.c.b16 %v929, %v917
  %v1422 = vpack.c.b16 %v930, %v918
  %v1423 = vpack.c.b16 %v931, %v919
  %v1424 = vpack.c.b16 %v932, %v920
  %v1425 = vpack.c.b16 %v945, %v933
  %v1426 = vpack.c.b16 %v946, %v934
  %v1427 = vpack.c.b16 %v947, %v935
  %v1428 = vpack.c.b16 %v948, %v936
  %v1429 = vpack.c.b16 %v949, %v937
  %v1430 = vpack.c.b16 %v950, %v938
  %v1431 = vpack.c.b16 %v951, %v939
  %v1432 = vpack.c.b16 %v952, %v940
  %v1433 = vpack.c.b16 %v953, %v941
  %v1434 = vpack.c.b16 %v954, %v942
  %v1435 = vpack.c.b16 %v955, %v943
  %v1436 = vpack.c.b16 %v956, %v944
  %v1437 = vpack.c.b16 %v969, %v957
  %v1438 = vpack.c.b16 %v970, %v958
  %v1439 = vpack.c.b16 %v971, %v959
  %v1440 = vpack.c.b16 %v972, %v960
  %v1441 = vpack.c.b16 %v973, %v961
  %v1442 = vpack.c.b16 %v974, %v962
  %v1443 = vpack.c.b16 %v975, %v963
  %v1444 = vpack.c.b16 %v976, %v964
  %v1445 = vpack.c.b16 %v977, %v965
  %v1446 = vpack.c.b16 %v978, %v966
  %v1447 = vpack.c.b16 %v979, %v967
  %v1448 = vpack.c.b16 %v980, %v968
  %v1449 = vpack.c.b16 %v993, %v981
  %v1450 = vpack.c.b16 %v994, %v982
  %v1451 = vpack.c.b16 %v995, %v983
  %v1452 = vpack.c.b16 %v996, %v984
  %v1453 = vpack.c.b16 %v997, %v985
  %v1454 = vpack.c.b16 %v998, %v986
  %v1455 = vpack.c.b16 %v999, %v987
  %v1456 = vpack.c.b16 %v1000, %v988
  %v1457 = vpack.c.b16 %v1001, %v989
  %v1458 = vpack.c.b16 %v1002, %v990
  %v1459 = vpack.c.b16 %v1003, %v991
  %v1460 = vpack.c.b16 %v1004, %v992
  %v1461 = vpack.c.b16 %v1017, %v1005
  %v1462 = vpack.c.b16 %v1018, %v1006
  %v1463 = vpack.c.b16 %v1019, %v1007
  %v1464 = vpack.c.b16 %v1020, %v1008
  %v1465 = vpack.c.b16 %v1021, %v1009
  %v1466 = vpack.c.b16 %v1022, %v1010
  %v1467 = vpack.c.b16 %v1023, %v1011
  %v1468 = vpack.c.b16 %v1024, %v1012
  %v1469 = vpack.c.b16 %v1025, %v1013
  %v1470 = vpack.c.b16 %v1026, %v1014
  %v1471 = vpack.c.b16 %v1027, %v1015
  %v1472 = vpack.c.b16 %v1028, %v1016
  %v1473 = vpack.c.b16 %v1041, %v1029
  %v1474 = vpack.c.b16 %v1042, %v1030
  %v1475 = vpack.c.b16 %v1043, %v1031
  %v1476 = vpack.c.b16 %v1044, %v1032
  %v1477 = vpack.c.b16 %v1045, %v1033
  %v1478 = vpack.c.b16 %v1046, %v1034
  %v1479 = vpack.c.b16 %v1047, %v1035
  %v1480 = vpack.c.b16 %v1048, %v1036
  %v1481 = vpack.c.b16 %v1049, %v1037
  %v1482 = vpack.c.b16 %v1050, %v1038
  %v1483 = vpack.c.b16 %v1051, %v1039
  %v1484 = vpack.c.b16 %v1052, %v1040
  %v1485 = vpack.c.b16 %v1065, %v1053
  %v1486 = vpack.c.b16 %v1066, %v1054
  %v1487 = vpack.c.b16 %v1067, %v1055
  %v1488 = vpack.c.b16 %v1068, %v1056
  %v1489 = vpack.c.b16 %v1069, %v1057
  %v1490 = vpack.c.b16 %v1070, %v1058
  %v1491 = vpack.c.b16 %v1071, %v1059
  %v1492 = vpack.c.b16 %v1072, %v1060
  %v1493 = vpack.c.b16 %v1073, %v1061
  %v1494 = vpack.c.b16 %v1074, %v1062
  %v1495 = vpack.c.b16 %v1075, %v1063
  %v1496 = vpack.c.b16 %v1076, %v1064
  %v1497 = vpack.c.b16 %v1089, %v1077
  %v1498 = vpack.c.b16 %v1090, %v1078
  %v1499 = vpack.c.b16 %v1091, %v1079
  %v1500 = vpack.c.b16 %v1092, %v1080
  %v1501 = vpack.c.b16 %v1093, %v1081
  %v1502 = vpack.c.b16 %v1094, %v1082
  %v1503 = vpack.c.b16 %v1095, %v1083
  %v1504 = vpack.c.b16 %v1096, %v1084
  %v1505 = vpack.c.b16 %v1097, %v1085
  %v1506 = vpack.c.b16 %v1098, %v1086
  %v1507 = vpack.c.b16 %v1099, %v1087
  %v1508 = vpack.c.b16 %v1100, %v1088
  %v1509 = vpack.c.b16 %v1113, %v1101
  %v1510 = vpack.c.b16 %v1114, %v1102
  %v1511 = vpack.c.b16 %v1115, %v1103
  %v1512 = vpack.c.b16 %v1116, %v1104
  %v1513 = vpack.c.b16 %v1117, %v1105
  %v1514 = vpack.c.b16 %v1118, %v1106
  %v1515 = vpack.c.b16 %v1119, %v1107
  %v1516 = vpack.c.b16 %v1120, %v1108
  %v1517 = vpack.c.b16 %v1121, %v1109
  %v1518 = vpack.c.b16 %v1122, %v1110
  %v1519 = vpack.c.b16 %v1123, %v1111
  %v1520 = vpack.c.b16 %v1124, %v1112
  %v1521 = vpack.c.b16 %v1137, %v1125
  %v1522 = vpack.c.b16 %v1138, %v1126
  %v1523 = vpack.c.b16 %v1139, %v1127
  %v1524 = vpack.c.b16 %v1140, %v1128
  %v1525 = vpack.c.b16 %v1141, %v1129
  %v1526 = vpack.c.b16 %v1142, %v1130
  %v1527 = vpack.c.b16 %v1143, %v1131
  %v1528 = vpack.c.b16 %v1144, %v1132
  %v1529 = vpack.c.b16 %v1145, %v1133
  %v1530 = vpack.c.b16 %v1146, %v1134
  %v1531 = vpack.c.b16 %v1147, %v1135
  %v1532 = vpack.c.b16 %v1148, %v1136
  %v1533 = vpack.c.b16 %v1161, %v1149
  %v1534 = vpack.c.b16 %v1162, %v1150
  %v1535 = vpack.c.b16 %v1163, %v1151
  %v1536 = vpack.c.b16 %v1164, %v1152
  %v1537 = vpack.c.b16 %v1165, %v1153
  %v1538 = vpack.c.b16 %v1166, %v1154
  %v1539 = vpack.c.b16 %v1167, %v1155
  %v1540 = vpack.c.b16 %v1168, %v1156
  %v1541 = vpack.c.b16 %v1169, %v1157
  %v1542 = vpack.c.b16 %v1170, %v1158
  %v1543 = vpack.c.b16 %v1171, %v1159
  %v1544 = vpack.c.b16 %v1172, %v1160
  %v1545 = vpack.c.b16 %v1185, %v1173
  %v1546 = vpack.c.b16 %v1186, %v1174
  %v1547 = vpack.c.b16 %v1187, %v1175
  %v1548 = vpack.c.b16 %v1188, %v1176
  %v1549 = vpack.c.b16 %v1189, %v1177
  %v1550 = vpack.c.b16 %v1190, %v1178
  %v1551 = vpack.c.b16 %v1191, %v1179
  %v1552 = vpack.c.b16 %v1192, %v1180
  %v1553 = vpack.c.b16 %v1193, %v1181
  %v1554 = vpack.c.b16 %v1194, %v1182
  %v1555 = vpack.c.b16 %v1195, %v1183
  %v1556 = vpack.c.b16 %v1196, %v1184
  %v1557 = vpack.c.b16 %v1209, %v1197
  %v1558 = vpack.c.b16 %v1210, %v1198
  %v1559 = vpack.c.b16 %v1211, %v1199
  %v1560 = vpack.c.b16 %v1212, %v1200
  %v1561 = vpack.c.b16 %v1213, %v1201
  %v1562 = vpack.c.b16 %v1214, %v1202
  %v1563 = vpack.c.b16 %v1215, %v1203
  %v1564 = vpack.c.b16 %v1216, %v1204
  %v1565 = vpack.c.b16 %v1217, %v1205
  %v1566 = vpack.c.b16 %v1218, %v1206
  %v1567 = vpack.c.b16 %v1219, %v1207
  %v1568 = vpack.c.b16 %v1220, %v1208
  %v1569 = vpack.c.b16 %v1233, %v1221
  %v1570 = vpack.c.b16 %v1234, %v1222
  %v1571 = vpack.c.b16 %v1235, %v1223
  %v1572 = vpack.c.b16 %v1236, %v1224
  %v1573 = vpack.c.b16 %v1237, %v1225
  %v1574 = vpack.c.b16 %v1238, %v1226
  %v1575 = vpack.c.b16 %v1239, %v1227
  %v1576 = vpack.c.b16 %v1240, %v1228
  %v1577 = vpack.c.b16 %v1241, %v1229
  %v1578 = vpack.c.b16 %v1242, %v1230
  %v1579 = vpack.c.b16 %v1243, %v1231
  %v1580 = vpack.c.b16 %v1244, %v1232
  %v1581 = vpack.c.b16 %v1257, %v1245
  %v1582 = vpack.c.b16 %v1258, %v1246
  %v1583 = vpack.c.b16 %v1259, %v1247
  %v1584 = vpack.c.b16 %v1260, %v1248
  %v1585 = vpack.c.b16 %v1261, %v1249
  %v1586 = vpack.c.b16 %v1262, %v1250
  %v1587 = vpack.c.b16 %v1263, %v1251
  %v1588 = vpack.c.b16 %v1264, %v1252
  %v1589 = vpack.c.b16 %v1265, %v1253
  %v1590 = vpack.c.b16 %v1266, %v1254
  %v1591 = vpack.c.b16 %v1267, %v1255
  %v1592 = vpack.c.b16 %v1268, %v1256
  %v1593 = vpack.c.b16 %v1281, %v1269
  %v1594 = vpack.c.b16 %v1282, %v1270
  %v1595 = vpack.c.b16 %v1283, %v1271
  %v1596 = vpack.c.b16 %v1284, %v1272
  %v1597 = vpack.c.b16 %v1285, %v1273
  %v1598 = vpack.c.b16 %v1286, %v1274
  %v1599 = vpack.c.b16 %v1287, %v1275
  %v1600 = vpack.c.b16 %v1288, %v1276
  %v1601 = vpack.c.b16 %v1289, %v1277
  %v1602 = vpack.c.b16 %v1290, %v1278
  %v1603 = vpack.c.b16 %v1291, %v1279
  %v1604 = vpack.c.b16 %v1292, %v1280
  %v1605 = vpack.c.b16 %v1305, %v1293
  %v1606 = vpack.c.b16 %v1306, %v1294
  %v1607 = vpack.c.b16 %v1307, %v1295
  %v1608 = vpack.c.b16 %v1308, %v1296
  %v1609 = vpack.c.b16 %v1309, %v1297
  %v1610 = vpack.c.b16 %v1310, %v1298
  %v1611 = vpack.c.b16 %v1311, %v1299
  %v1612 = vpack.c.b16 %v1312, %v1300
  %v1613 = vpack.c.b16 %v1313, %v1301
  %v1614 = vpack.c.b16 %v1314, %v1302
  %v1615 = vpack.c.b16 %v1315, %v1303
  %v1616 = vpack.c.b16 %v1316, %v1304
  %v1617 = vpack.c.b16 %v1329, %v1317
  %v1618 = vpack.c.b16 %v1330, %v1318
  %v1619 = vpack.c.b16 %v1331, %v1319
  %v1620 = vpack.c.b16 %v1332, %v1320
  %v1621 = vpack.c.b16 %v1333, %v1321
  %v1622 = vpack.c.b16 %v1334, %v1322
  %v1623 = vpack.c.b16 %v1335, %v1323
  %v1624 = vpack.c.b16 %v1336, %v1324
  %v1625 = vpack.c.b16 %v1337, %v1325
  %v1626 = vpack.c.b16 %v1338, %v1326
  %v1627 = vpack.c.b16 %v1339, %v1327
  %v1628 = vpack.c.b16 %v1340, %v1328
  %1917 = vmatprep.subr.bf16.mxu0 %v1426
  %1918 = vmatpush1.bf16.msra.mxu0 %v1425
  %1919 = vmatprep.subr.bf16.mxu0 %v1414
  %1920 = vmatpush1.bf16.msra.mxu0 %v1413
  %1921 = vmatprep.subr.bf16.mxu0 %v1402
  %1922 = vmatpush1.bf16.msra.mxu0 %v1401
  %1923 = vmatprep.subr.bf16.mxu0 %v1390
  %1924 = vmatpush1.bf16.msra.mxu0 %v1389
  %1925 = vmatprep.subr.bf16.mxu0 %v1378
  %1926 = vmatpush1.bf16.msra.mxu0 %v1377
  %1927 = vmatprep.subr.bf16.mxu0 %v1366
  %1928 = vmatpush1.bf16.msra.mxu0 %v1365
  %1929 = vmatprep.subr.bf16.mxu0 %v1354
  %1930 = vmatpush1.bf16.msra.mxu0 %v1353
  %1931 = vmatprep.subr.bf16.mxu0 %v1342
  %1932 = vmatpush1.bf16.msra.mxu0 %v1341
  %1933 = vmatprep.subr.bf16.mxu0 %v1522
  %1934 = vmatpush2.bf16.msra.mxu0 %v1521
  %1935 = vmatprep.subr.bf16.mxu0 %v1510
  %1936 = vmatpush2.bf16.msra.mxu0 %v1509
  %1937 = vmatprep.subr.bf16.mxu0 %v1498
  %1938 = vmatpush2.bf16.msra.mxu0 %v1497
  %1939 = vmatprep.subr.bf16.mxu0 %v1486
  %1940 = vmatpush2.bf16.msra.mxu0 %v1485
  %1941 = vmatprep.subr.bf16.mxu0 %v1474
  %1942 = vmatpush2.bf16.msra.mxu0 %v1473
  %1943 = vmatprep.subr.bf16.mxu0 %v1462
  %1944 = vmatpush2.bf16.msra.mxu0 %v1461
  %1945 = vmatprep.subr.bf16.mxu0 %v1450
  %1946 = vmatpush2.bf16.msra.mxu0 %v1449
  %1947 = vmatprep.subr.bf16.mxu0 %v1438
  %1948 = vmatpush2.bf16.msra.mxu0 %v1437
  %1949 = vmatprep.mubr.bf16.mxu0 %v123
  %1950 = vmatmul.mubr.bf16.gmra.mxu0 %v122
  %v1951 = vpop.f32.mrf.mxu0
  %v1952 = vadd.f32 %v420, %v1951
  %v1953 = vpop.f32.mrf.mxu0
  %v1954 = vadd.f32 %v424, %v1953
  %v1955 = vpop.f32.mrf.mxu0
  %v1956 = vadd.f32 %v420, %v1955
  %v1957 = vpop.f32.mrf.mxu0
  %v1958 = vadd.f32 %v424, %v1957
  %1959 = vdwg.mxu0
  %1960 = vmatprep.subr.bf16.mxu0 %v1618
  %1961 = vmatpush1.bf16.msra.mxu0 %v1617
  %1962 = vmatprep.subr.bf16.mxu0 %v1606
  %1963 = vmatpush1.bf16.msra.mxu0 %v1605
  %1964 = vmatprep.subr.bf16.mxu0 %v1594
  %1965 = vmatpush1.bf16.msra.mxu0 %v1593
  %1966 = vmatprep.subr.bf16.mxu0 %v1582
  %1967 = vmatpush1.bf16.msra.mxu0 %v1581
  %1968 = vmatprep.subr.bf16.mxu0 %v1570
  %1969 = vmatpush1.bf16.msra.mxu0 %v1569
  %1970 = vmatprep.subr.bf16.mxu0 %v1558
  %1971 = vmatpush1.bf16.msra.mxu0 %v1557
  %1972 = vmatprep.subr.bf16.mxu0 %v1546
  %1973 = vmatpush1.bf16.msra.mxu0 %v1545
  %1974 = vmatprep.subr.bf16.mxu0 %v1534
  %1975 = vmatpush1.bf16.msra.mxu0 %v1533
  %1976 = vmatprep.subr.bf16.mxu0 0
  %1977 = vmatpush2.bf16.msra.mxu0 0
  %1978 = vmatprep.subr.bf16.mxu0 0
  %1979 = vmatpush2.bf16.msra.mxu0 0
  %1980 = vmatprep.subr.bf16.mxu0 0
  %1981 = vmatpush2.bf16.msra.mxu0 0
  %1982 = vmatprep.subr.bf16.mxu0 0
  %1983 = vmatpush2.bf16.msra.mxu0 0
  %1984 = vmatprep.subr.bf16.mxu0 0
  %1985 = vmatpush2.bf16.msra.mxu0 0
  %1986 = vmatprep.subr.bf16.mxu0 0
  %1987 = vmatpush2.bf16.msra.mxu0 0
  %1988 = vmatprep.subr.bf16.mxu0 0
  %1989 = vmatpush2.bf16.msra.mxu0 0
  %1990 = vmatprep.subr.bf16.mxu0 0
  %1991 = vmatpush2.bf16.msra.mxu0 0
  %1992 = vmatprep.mubr.bf16.mxu0 0
  %1993 = vmatmul.mubr.bf16.gmra.mxu0 %v124
  %v1994 = vpop.f32.mrf.mxu0
  %v1995 = vadd.f32 %v1952, %v1994
  %v1996 = vpop.f32.mrf.mxu0
  %v1997 = vadd.f32 %v1954, %v1996
  %v1998 = vpop.f32.mrf.mxu0
  %v1999 = vadd.f32 %v1956, %v1998
  %v2000 = vpop.f32.mrf.mxu0
  %v2001 = vadd.f32 %v1958, %v2000
  %2002 = vdwg.mxu0
  %2003 = vmatprep.subr.bf16.mxu0 %v1428
  %2004 = vmatpush1.bf16.msra.mxu0 %v1427
  %2005 = vmatprep.subr.bf16.mxu0 %v1416
  %2006 = vmatpush1.bf16.msra.mxu0 %v1415
  %2007 = vmatprep.subr.bf16.mxu0 %v1404
  %2008 = vmatpush1.bf16.msra.mxu0 %v1403
  %2009 = vmatprep.subr.bf16.mxu0 %v1392
  %2010 = vmatpush1.bf16.msra.mxu0 %v1391
  %2011 = vmatprep.subr.bf16.mxu0 %v1380
  %2012 = vmatpush1.bf16.msra.mxu0 %v1379
  %2013 = vmatprep.subr.bf16.mxu0 %v1368
  %2014 = vmatpush1.bf16.msra.mxu0 %v1367
  %2015 = vmatprep.subr.bf16.mxu0 %v1356
  %2016 = vmatpush1.bf16.msra.mxu0 %v1355
  %2017 = vmatprep.subr.bf16.mxu0 %v1344
  %2018 = vmatpush1.bf16.msra.mxu0 %v1343
  %2019 = vmatprep.subr.bf16.mxu0 %v1524
  %2020 = vmatpush2.bf16.msra.mxu0 %v1523
  %2021 = vmatprep.subr.bf16.mxu0 %v1512
  %2022 = vmatpush2.bf16.msra.mxu0 %v1511
  %2023 = vmatprep.subr.bf16.mxu0 %v1500
  %2024 = vmatpush2.bf16.msra.mxu0 %v1499
  %2025 = vmatprep.subr.bf16.mxu0 %v1488
  %2026 = vmatpush2.bf16.msra.mxu0 %v1487
  %2027 = vmatprep.subr.bf16.mxu0 %v1476
  %2028 = vmatpush2.bf16.msra.mxu0 %v1475
  %2029 = vmatprep.subr.bf16.mxu0 %v1464
  %2030 = vmatpush2.bf16.msra.mxu0 %v1463
  %2031 = vmatprep.subr.bf16.mxu0 %v1452
  %2032 = vmatpush2.bf16.msra.mxu0 %v1451
  %2033 = vmatprep.subr.bf16.mxu0 %v1440
  %2034 = vmatpush2.bf16.msra.mxu0 %v1439
  %2035 = vmatprep.mubr.bf16.mxu0 %v123
  %2036 = vmatmul.mubr.bf16.gmra.mxu0 %v122
  %v2037 = vpop.f32.mrf.mxu0
  %v2038 = vadd.f32 %v428, %v2037
  %v2039 = vpop.f32.mrf.mxu0
  %v2040 = vadd.f32 %v432, %v2039
  %v2041 = vpop.f32.mrf.mxu0
  %v2042 = vadd.f32 %v428, %v2041
  %v2043 = vpop.f32.mrf.mxu0
  %v2044 = vadd.f32 %v432, %v2043
  %2045 = vdwg.mxu0
  %2046 = vmatprep.subr.bf16.mxu0 %v1620
  %2047 = vmatpush1.bf16.msra.mxu0 %v1619
  %2048 = vmatprep.subr.bf16.mxu0 %v1608
  %2049 = vmatpush1.bf16.msra.mxu0 %v1607
  %2050 = vmatprep.subr.bf16.mxu0 %v1596
  %2051 = vmatpush1.bf16.msra.mxu0 %v1595
  %2052 = vmatprep.subr.bf16.mxu0 %v1584
  %2053 = vmatpush1.bf16.msra.mxu0 %v1583
  %2054 = vmatprep.subr.bf16.mxu0 %v1572
  %2055 = vmatpush1.bf16.msra.mxu0 %v1571
  %2056 = vmatprep.subr.bf16.mxu0 %v1560
  %2057 = vmatpush1.bf16.msra.mxu0 %v1559
  %2058 = vmatprep.subr.bf16.mxu0 %v1548
  %2059 = vmatpush1.bf16.msra.mxu0 %v1547
  %2060 = vmatprep.subr.bf16.mxu0 %v1536
  %2061 = vmatpush1.bf16.msra.mxu0 %v1535
  %2062 = vmatprep.subr.bf16.mxu0 0
  %2063 = vmatpush2.bf16.msra.mxu0 0
  %2064 = vmatprep.subr.bf16.mxu0 0
  %2065 = vmatpush2.bf16.msra.mxu0 0
  %2066 = vmatprep.subr.bf16.mxu0 0
  %2067 = vmatpush2.bf16.msra.mxu0 0
  %2068 = vmatprep.subr.bf16.mxu0 0
  %2069 = vmatpush2.bf16.msra.mxu0 0
  %2070 = vmatprep.subr.bf16.mxu0 0
  %2071 = vmatpush2.bf16.msra.mxu0 0
  %2072 = vmatprep.subr.bf16.mxu0 0
  %2073 = vmatpush2.bf16.msra.mxu0 0
  %2074 = vmatprep.subr.bf16.mxu0 0
  %2075 = vmatpush2.bf16.msra.mxu0 0
  %2076 = vmatprep.subr.bf16.mxu0 0
  %2077 = vmatpush2.bf16.msra.mxu0 0
  %2078 = vmatprep.mubr.bf16.mxu0 0
  %2079 = vmatmul.mubr.bf16.gmra.mxu0 %v124
  %v2080 = vpop.f32.mrf.mxu0
  %v2081 = vadd.f32 %v2038, %v2080
  %v2082 = vpop.f32.mrf.mxu0
  %v2083 = vadd.f32 %v2040, %v2082
  %v2084 = vpop.f32.mrf.mxu0
  %v2085 = vadd.f32 %v2042, %v2084
  %v2086 = vpop.f32.mrf.mxu0
  %v2087 = vadd.f32 %v2044, %v2086
  %2088 = vdwg.mxu0
  %2089 = vmatprep.subr.bf16.mxu0 %v1430
  %2090 = vmatpush1.bf16.msra.mxu0 %v1429
  %2091 = vmatprep.subr.bf16.mxu0 %v1418
  %2092 = vmatpush1.bf16.msra.mxu0 %v1417
  %2093 = vmatprep.subr.bf16.mxu0 %v1406
  %2094 = vmatpush1.bf16.msra.mxu0 %v1405
  %2095 = vmatprep.subr.bf16.mxu0 %v1394
  %2096 = vmatpush1.bf16.msra.mxu0 %v1393
  %2097 = vmatprep.subr.bf16.mxu0 %v1382
  %2098 = vmatpush1.bf16.msra.mxu0 %v1381
  %2099 = vmatprep.subr.bf16.mxu0 %v1370
  %2100 = vmatpush1.bf16.msra.mxu0 %v1369
  %2101 = vmatprep.subr.bf16.mxu0 %v1358
  %2102 = vmatpush1.bf16.msra.mxu0 %v1357
  %2103 = vmatprep.subr.bf16.mxu0 %v1346
  %2104 = vmatpush1.bf16.msra.mxu0 %v1345
  %2105 = vmatprep.subr.bf16.mxu0 %v1526
  %2106 = vmatpush2.bf16.msra.mxu0 %v1525
  %2107 = vmatprep.subr.bf16.mxu0 %v1514
  %2108 = vmatpush2.bf16.msra.mxu0 %v1513
  %2109 = vmatprep.subr.bf16.mxu0 %v1502
  %2110 = vmatpush2.bf16.msra.mxu0 %v1501
  %2111 = vmatprep.subr.bf16.mxu0 %v1490
  %2112 = vmatpush2.bf16.msra.mxu0 %v1489
  %2113 = vmatprep.subr.bf16.mxu0 %v1478
  %2114 = vmatpush2.bf16.msra.mxu0 %v1477
  %2115 = vmatprep.subr.bf16.mxu0 %v1466
  %2116 = vmatpush2.bf16.msra.mxu0 %v1465
  %2117 = vmatprep.subr.bf16.mxu0 %v1454
  %2118 = vmatpush2.bf16.msra.mxu0 %v1453
  %2119 = vmatprep.subr.bf16.mxu0 %v1442
  %2120 = vmatpush2.bf16.msra.mxu0 %v1441
  %2121 = vmatprep.mubr.bf16.mxu0 %v123
  %2122 = vmatmul.mubr.bf16.gmra.mxu0 %v122
  %v2123 = vpop.f32.mrf.mxu0
  %v2124 = vadd.f32 %v436, %v2123
  %v2125 = vpop.f32.mrf.mxu0
  %v2126 = vadd.f32 %v440, %v2125
  %v2127 = vpop.f32.mrf.mxu0
  %v2128 = vadd.f32 %v436, %v2127
  %v2129 = vpop.f32.mrf.mxu0
  %v2130 = vadd.f32 %v440, %v2129
  %2131 = vdwg.mxu0
  %2132 = vmatprep.subr.bf16.mxu0 %v1622
  %2133 = vmatpush1.bf16.msra.mxu0 %v1621
  %2134 = vmatprep.subr.bf16.mxu0 %v1610
  %2135 = vmatpush1.bf16.msra.mxu0 %v1609
  %2136 = vmatprep.subr.bf16.mxu0 %v1598
  %2137 = vmatpush1.bf16.msra.mxu0 %v1597
  %2138 = vmatprep.subr.bf16.mxu0 %v1586
  %2139 = vmatpush1.bf16.msra.mxu0 %v1585
  %2140 = vmatprep.subr.bf16.mxu0 %v1574
  %2141 = vmatpush1.bf16.msra.mxu0 %v1573
  %2142 = vmatprep.subr.bf16.mxu0 %v1562
  %2143 = vmatpush1.bf16.msra.mxu0 %v1561
  %2144 = vmatprep.subr.bf16.mxu0 %v1550
  %2145 = vmatpush1.bf16.msra.mxu0 %v1549
  %2146 = vmatprep.subr.bf16.mxu0 %v1538
  %2147 = vmatpush1.bf16.msra.mxu0 %v1537
  %2148 = vmatprep.subr.bf16.mxu0 0
  %2149 = vmatpush2.bf16.msra.mxu0 0
  %2150 = vmatprep.subr.bf16.mxu0 0
  %2151 = vmatpush2.bf16.msra.mxu0 0
  %2152 = vmatprep.subr.bf16.mxu0 0
  %2153 = vmatpush2.bf16.msra.mxu0 0
  %2154 = vmatprep.subr.bf16.mxu0 0
  %2155 = vmatpush2.bf16.msra.mxu0 0
  %2156 = vmatprep.subr.bf16.mxu0 0
  %2157 = vmatpush2.bf16.msra.mxu0 0
  %2158 = vmatprep.subr.bf16.mxu0 0
  %2159 = vmatpush2.bf16.msra.mxu0 0
  %2160 = vmatprep.subr.bf16.mxu0 0
  %2161 = vmatpush2.bf16.msra.mxu0 0
  %2162 = vmatprep.subr.bf16.mxu0 0
  %2163 = vmatpush2.bf16.msra.mxu0 0
  %2164 = vmatprep.mubr.bf16.mxu0 0
  %2165 = vmatmul.mubr.bf16.gmra.mxu0 %v124
  %v2166 = vpop.f32.mrf.mxu0
  %v2167 = vadd.f32 %v2124, %v2166
  %v2168 = vpop.f32.mrf.mxu0
  %v2169 = vadd.f32 %v2126, %v2168
  %v2170 = vpop.f32.mrf.mxu0
  %v2171 = vadd.f32 %v2128, %v2170
  %v2172 = vpop.f32.mrf.mxu0
  %v2173 = vadd.f32 %v2130, %v2172
  %2174 = vdwg.mxu0
  %2175 = vmatprep.subr.bf16.mxu0 %v1432
  %2176 = vmatpush1.bf16.msra.mxu0 %v1431
  %2177 = vmatprep.subr.bf16.mxu0 %v1420
  %2178 = vmatpush1.bf16.msra.mxu0 %v1419
  %2179 = vmatprep.subr.bf16.mxu0 %v1408
  %2180 = vmatpush1.bf16.msra.mxu0 %v1407
  %2181 = vmatprep.subr.bf16.mxu0 %v1396
  %2182 = vmatpush1.bf16.msra.mxu0 %v1395
  %2183 = vmatprep.subr.bf16.mxu0 %v1384
  %2184 = vmatpush1.bf16.msra.mxu0 %v1383
  %2185 = vmatprep.subr.bf16.mxu0 %v1372
  %2186 = vmatpush1.bf16.msra.mxu0 %v1371
  %2187 = vmatprep.subr.bf16.mxu0 %v1360
  %2188 = vmatpush1.bf16.msra.mxu0 %v1359
  %2189 = vmatprep.subr.bf16.mxu0 %v1348
  %2190 = vmatpush1.bf16.msra.mxu0 %v1347
  %2191 = vmatprep.subr.bf16.mxu0 %v1528
  %2192 = vmatpush2.bf16.msra.mxu0 %v1527
  %2193 = vmatprep.subr.bf16.mxu0 %v1516
  %2194 = vmatpush2.bf16.msra.mxu0 %v1515
  %2195 = vmatprep.subr.bf16.mxu0 %v1504
  %2196 = vmatpush2.bf16.msra.mxu0 %v1503
  %2197 = vmatprep.subr.bf16.mxu0 %v1492
  %2198 = vmatpush2.bf16.msra.mxu0 %v1491
  %2199 = vmatprep.subr.bf16.mxu0 %v1480
  %2200 = vmatpush2.bf16.msra.mxu0 %v1479
  %2201 = vmatprep.subr.bf16.mxu0 %v1468
  %2202 = vmatpush2.bf16.msra.mxu0 %v1467
  %2203 = vmatprep.subr.bf16.mxu0 %v1456
  %2204 = vmatpush2.bf16.msra.mxu0 %v1455
  %2205 = vmatprep.subr.bf16.mxu0 %v1444
  %2206 = vmatpush2.bf16.msra.mxu0 %v1443
  %2207 = vmatprep.mubr.bf16.mxu0 %v123
  %2208 = vmatmul.mubr.bf16.gmra.mxu0 %v122
  %v2209 = vpop.f32.mrf.mxu0
  %v2210 = vadd.f32 %v444, %v2209
  %v2211 = vpop.f32.mrf.mxu0
  %v2212 = vadd.f32 %v448, %v2211
  %v2213 = vpop.f32.mrf.mxu0
  %v2214 = vadd.f32 %v444, %v2213
  %v2215 = vpop.f32.mrf.mxu0
  %v2216 = vadd.f32 %v448, %v2215
  %2217 = vdwg.mxu0
  %2218 = vmatprep.subr.bf16.mxu0 %v1624
  %2219 = vmatpush1.bf16.msra.mxu0 %v1623
  %2220 = vmatprep.subr.bf16.mxu0 %v1612
  %2221 = vmatpush1.bf16.msra.mxu0 %v1611
  %2222 = vmatprep.subr.bf16.mxu0 %v1600
  %2223 = vmatpush1.bf16.msra.mxu0 %v1599
  %2224 = vmatprep.subr.bf16.mxu0 %v1588
  %2225 = vmatpush1.bf16.msra.mxu0 %v1587
  %2226 = vmatprep.subr.bf16.mxu0 %v1576
  %2227 = vmatpush1.bf16.msra.mxu0 %v1575
  %2228 = vmatprep.subr.bf16.mxu0 %v1564
  %2229 = vmatpush1.bf16.msra.mxu0 %v1563
  %2230 = vmatprep.subr.bf16.mxu0 %v1552
  %2231 = vmatpush1.bf16.msra.mxu0 %v1551
  %2232 = vmatprep.subr.bf16.mxu0 %v1540
  %2233 = vmatpush1.bf16.msra.mxu0 %v1539
  %2234 = vmatprep.subr.bf16.mxu0 0
  %2235 = vmatpush2.bf16.msra.mxu0 0
  %2236 = vmatprep.subr.bf16.mxu0 0
  %2237 = vmatpush2.bf16.msra.mxu0 0
  %2238 = vmatprep.subr.bf16.mxu0 0
  %2239 = vmatpush2.bf16.msra.mxu0 0
  %2240 = vmatprep.subr.bf16.mxu0 0
  %2241 = vmatpush2.bf16.msra.mxu0 0
  %2242 = vmatprep.subr.bf16.mxu0 0
  %2243 = vmatpush2.bf16.msra.mxu0 0
  %2244 = vmatprep.subr.bf16.mxu0 0
  %2245 = vmatpush2.bf16.msra.mxu0 0
  %2246 = vmatprep.subr.bf16.mxu0 0
  %2247 = vmatpush2.bf16.msra.mxu0 0
  %2248 = vmatprep.subr.bf16.mxu0 0
  %2249 = vmatpush2.bf16.msra.mxu0 0
  %2250 = vmatprep.mubr.bf16.mxu0 0
  %2251 = vmatmul.mubr.bf16.gmra.mxu0 %v124
  %v2252 = vpop.f32.mrf.mxu0
  %v2253 = vadd.f32 %v2210, %v2252
  %v2254 = vpop.f32.mrf.mxu0
  %v2255 = vadd.f32 %v2212, %v2254
  %v2256 = vpop.f32.mrf.mxu0
  %v2257 = vadd.f32 %v2214, %v2256
  %v2258 = vpop.f32.mrf.mxu0
  %v2259 = vadd.f32 %v2216, %v2258
  %2260 = vdwg.mxu0
  %2261 = vmatprep.subr.bf16.mxu0 %v1434
  %2262 = vmatpush1.bf16.msra.mxu0 %v1433
  %2263 = vmatprep.subr.bf16.mxu0 %v1422
  %2264 = vmatpush1.bf16.msra.mxu0 %v1421
  %2265 = vmatprep.subr.bf16.mxu0 %v1410
  %2266 = vmatpush1.bf16.msra.mxu0 %v1409
  %2267 = vmatprep.subr.bf16.mxu0 %v1398
  %2268 = vmatpush1.bf16.msra.mxu0 %v1397
  %2269 = vmatprep.subr.bf16.mxu0 %v1386
  %2270 = vmatpush1.bf16.msra.mxu0 %v1385
  %2271 = vmatprep.subr.bf16.mxu0 %v1374
  %2272 = vmatpush1.bf16.msra.mxu0 %v1373
  %2273 = vmatprep.subr.bf16.mxu0 %v1362
  %2274 = vmatpush1.bf16.msra.mxu0 %v1361
  %2275 = vmatprep.subr.bf16.mxu0 %v1350
  %2276 = vmatpush1.bf16.msra.mxu0 %v1349
  %2277 = vmatprep.subr.bf16.mxu0 %v1530
  %2278 = vmatpush2.bf16.msra.mxu0 %v1529
  %2279 = vmatprep.subr.bf16.mxu0 %v1518
  %2280 = vmatpush2.bf16.msra.mxu0 %v1517
  %2281 = vmatprep.subr.bf16.mxu0 %v1506
  %2282 = vmatpush2.bf16.msra.mxu0 %v1505
  %2283 = vmatprep.subr.bf16.mxu0 %v1494
  %2284 = vmatpush2.bf16.msra.mxu0 %v1493
  %2285 = vmatprep.subr.bf16.mxu0 %v1482
  %2286 = vmatpush2.bf16.msra.mxu0 %v1481
  %2287 = vmatprep.subr.bf16.mxu0 %v1470
  %2288 = vmatpush2.bf16.msra.mxu0 %v1469
  %2289 = vmatprep.subr.bf16.mxu0 %v1458
  %2290 = vmatpush2.bf16.msra.mxu0 %v1457
  %2291 = vmatprep.subr.bf16.mxu0 %v1446
  %2292 = vmatpush2.bf16.msra.mxu0 %v1445
  %2293 = vmatprep.mubr.bf16.mxu0 %v123
  %2294 = vmatmul.mubr.bf16.gmra.mxu0 %v122
  %v2295 = vpop.f32.mrf.mxu0
  %v2296 = vadd.f32 %v452, %v2295
  %v2297 = vpop.f32.mrf.mxu0
  %v2298 = vadd.f32 %v456, %v2297
  %v2299 = vpop.f32.mrf.mxu0
  %v2300 = vadd.f32 %v452, %v2299
  %v2301 = vpop.f32.mrf.mxu0
  %v2302 = vadd.f32 %v456, %v2301
  %2303 = vdwg.mxu0
  %2304 = vmatprep.subr.bf16.mxu0 %v1626
  %2305 = vmatpush1.bf16.msra.mxu0 %v1625
  %2306 = vmatprep.subr.bf16.mxu0 %v1614
  %2307 = vmatpush1.bf16.msra.mxu0 %v1613
  %2308 = vmatprep.subr.bf16.mxu0 %v1602
  %2309 = vmatpush1.bf16.msra.mxu0 %v1601
  %2310 = vmatprep.subr.bf16.mxu0 %v1590
  %2311 = vmatpush1.bf16.msra.mxu0 %v1589
  %2312 = vmatprep.subr.bf16.mxu0 %v1578
  %2313 = vmatpush1.bf16.msra.mxu0 %v1577
  %2314 = vmatprep.subr.bf16.mxu0 %v1566
  %2315 = vmatpush1.bf16.msra.mxu0 %v1565
  %2316 = vmatprep.subr.bf16.mxu0 %v1554
  %2317 = vmatpush1.bf16.msra.mxu0 %v1553
  %2318 = vmatprep.subr.bf16.mxu0 %v1542
  %2319 = vmatpush1.bf16.msra.mxu0 %v1541
  %2320 = vmatprep.subr.bf16.mxu0 0
  %2321 = vmatpush2.bf16.msra.mxu0 0
  %2322 = vmatprep.subr.bf16.mxu0 0
  %2323 = vmatpush2.bf16.msra.mxu0 0
  %2324 = vmatprep.subr.bf16.mxu0 0
  %2325 = vmatpush2.bf16.msra.mxu0 0
  %2326 = vmatprep.subr.bf16.mxu0 0
  %2327 = vmatpush2.bf16.msra.mxu0 0
  %2328 = vmatprep.subr.bf16.mxu0 0
  %2329 = vmatpush2.bf16.msra.mxu0 0
  %2330 = vmatprep.subr.bf16.mxu0 0
  %2331 = vmatpush2.bf16.msra.mxu0 0
  %2332 = vmatprep.subr.bf16.mxu0 0
  %2333 = vmatpush2.bf16.msra.mxu0 0
  %2334 = vmatprep.subr.bf16.mxu0 0
  %2335 = vmatpush2.bf16.msra.mxu0 0
  %2336 = vmatprep.mubr.bf16.mxu0 0
  %2337 = vmatmul.mubr.bf16.gmra.mxu0 %v124
  %v2338 = vpop.f32.mrf.mxu0
  %v2339 = vadd.f32 %v2296, %v2338
  %v2340 = vpop.f32.mrf.mxu0
  %v2341 = vadd.f32 %v2298, %v2340
  %v2342 = vpop.f32.mrf.mxu0
  %v2343 = vadd.f32 %v2300, %v2342
  %v2344 = vpop.f32.mrf.mxu0
  %v2345 = vadd.f32 %v2302, %v2344
  %2346 = vdwg.mxu0
  %2347 = vmatprep.subr.bf16.mxu0 %v1436
  %2348 = vmatpush1.bf16.msra.mxu0 %v1435
  %2349 = vmatprep.subr.bf16.mxu0 %v1424
  %2350 = vmatpush1.bf16.msra.mxu0 %v1423
  %2351 = vmatprep.subr.bf16.mxu0 %v1412
  %2352 = vmatpush1.bf16.msra.mxu0 %v1411
  %2353 = vmatprep.subr.bf16.mxu0 %v1400
  %2354 = vmatpush1.bf16.msra.mxu0 %v1399
  %2355 = vmatprep.subr.bf16.mxu0 %v1388
  %2356 = vmatpush1.bf16.msra.mxu0 %v1387
  %2357 = vmatprep.subr.bf16.mxu0 %v1376
  %2358 = vmatpush1.bf16.msra.mxu0 %v1375
  %2359 = vmatprep.subr.bf16.mxu0 %v1364
  %2360 = vmatpush1.bf16.msra.mxu0 %v1363
  %2361 = vmatprep.subr.bf16.mxu0 %v1352
  %2362 = vmatpush1.bf16.msra.mxu0 %v1351
  %2363 = vmatprep.subr.bf16.mxu0 %v1532
  %2364 = vmatpush2.bf16.msra.mxu0 %v1531
  %2365 = vmatprep.subr.bf16.mxu0 %v1520
  %2366 = vmatpush2.bf16.msra.mxu0 %v1519
  %2367 = vmatprep.subr.bf16.mxu0 %v1508
  %2368 = vmatpush2.bf16.msra.mxu0 %v1507
  %2369 = vmatprep.subr.bf16.mxu0 %v1496
  %2370 = vmatpush2.bf16.msra.mxu0 %v1495
  %2371 = vmatprep.subr.bf16.mxu0 %v1484
  %2372 = vmatpush2.bf16.msra.mxu0 %v1483
  %2373 = vmatprep.subr.bf16.mxu0 %v1472
  %2374 = vmatpush2.bf16.msra.mxu0 %v1471
  %2375 = vmatprep.subr.bf16.mxu0 %v1460
  %2376 = vmatpush2.bf16.msra.mxu0 %v1459
  %2377 = vmatprep.subr.bf16.mxu0 %v1448
  %2378 = vmatpush2.bf16.msra.mxu0 %v1447
  %2379 = vmatprep.mubr.bf16.mxu0 %v123
  %2380 = vmatmul.mubr.bf16.gmra.mxu0 %v122
  %v2381 = vpop.f32.mrf.mxu0
  %v2382 = vadd.f32 %v460, %v2381
  %v2383 = vpop.f32.mrf.mxu0
  %v2384 = vadd.f32 %v464, %v2383
  %v2385 = vpop.f32.mrf.mxu0
  %v2386 = vadd.f32 %v460, %v2385
  %v2387 = vpop.f32.mrf.mxu0
  %v2388 = vadd.f32 %v464, %v2387
  %2389 = vdwg.mxu0
  %2390 = vmatprep.subr.bf16.mxu0 %v1628
  %2391 = vmatpush1.bf16.msra.mxu0 %v1627
  %2392 = vmatprep.subr.bf16.mxu0 %v1616
  %2393 = vmatpush1.bf16.msra.mxu0 %v1615
  %2394 = vmatprep.subr.bf16.mxu0 %v1604
  %2395 = vmatpush1.bf16.msra.mxu0 %v1603
  %2396 = vmatprep.subr.bf16.mxu0 %v1592
  %2397 = vmatpush1.bf16.msra.mxu0 %v1591
  %2398 = vmatprep.subr.bf16.mxu0 %v1580
  %2399 = vmatpush1.bf16.msra.mxu0 %v1579
  %2400 = vmatprep.subr.bf16.mxu0 %v1568
  %2401 = vmatpush1.bf16.msra.mxu0 %v1567
  %2402 = vmatprep.subr.bf16.mxu0 %v1556
  %2403 = vmatpush1.bf16.msra.mxu0 %v1555
  %2404 = vmatprep.subr.bf16.mxu0 %v1544
  %2405 = vmatpush1.bf16.msra.mxu0 %v1543
  %2406 = vmatprep.subr.bf16.mxu0 0
  %2407 = vmatpush2.bf16.msra.mxu0 0
  %2408 = vmatprep.subr.bf16.mxu0 0
  %2409 = vmatpush2.bf16.msra.mxu0 0
  %2410 = vmatprep.subr.bf16.mxu0 0
  %2411 = vmatpush2.bf16.msra.mxu0 0
  %2412 = vmatprep.subr.bf16.mxu0 0
  %2413 = vmatpush2.bf16.msra.mxu0 0
  %2414 = vmatprep.subr.bf16.mxu0 0
  %2415 = vmatpush2.bf16.msra.mxu0 0
  %2416 = vmatprep.subr.bf16.mxu0 0
  %2417 = vmatpush2.bf16.msra.mxu0 0
  %2418 = vmatprep.subr.bf16.mxu0 0
  %2419 = vmatpush2.bf16.msra.mxu0 0
  %2420 = vmatprep.subr.bf16.mxu0 0
  %2421 = vmatpush2.bf16.msra.mxu0 0
  %2422 = vmatprep.mubr.bf16.mxu0 0
  %2423 = vmatmul.mubr.bf16.gmra.mxu0 %v124
  %v2424 = vpop.f32.mrf.mxu0
  %v2425 = vadd.f32 %v2382, %v2424
  %v2426 = vpop.f32.mrf.mxu0
  %v2427 = vadd.f32 %v2384, %v2426
  %v2428 = vpop.f32.mrf.mxu0
  %v2429 = vadd.f32 %v2386, %v2428
  %v2430 = vpop.f32.mrf.mxu0
  %v2431 = vadd.f32 %v2388, %v2430
  %2432 = vdwg.mxu0
  %v2433 = vmul.f32 %v1995, 0.5
  %v2434 = vmul.f32 %v1997, 0.5
  %v2435 = vmul.f32 %v2081, 0.5
  %v2436 = vmul.f32 %v2083, 0.5
  %v2437 = vmul.f32 %v2167, 0.5
  %v2438 = vmul.f32 %v2169, 0.5
  %v2439 = vmul.f32 %v2253, 0.5
  %v2440 = vmul.f32 %v2255, 0.5
  %v2441 = vmul.f32 %v2339, 0.5
  %v2442 = vmul.f32 %v2341, 0.5
  %v2443 = vmul.f32 %v2425, 0.5
  %v2444 = vmul.f32 %v2427, 0.5
  %v2445 = vmul.f32 %v1999, 0.5
  %v2446 = vmul.f32 %v2001, 0.5
  %v2447 = vmul.f32 %v2085, 0.5
  %v2448 = vmul.f32 %v2087, 0.5
  %v2449 = vmul.f32 %v2171, 0.5
  %v2450 = vmul.f32 %v2173, 0.5
  %v2451 = vmul.f32 %v2257, 0.5
  %v2452 = vmul.f32 %v2259, 0.5
  %v2453 = vmul.f32 %v2343, 0.5
  %v2454 = vmul.f32 %v2345, 0.5
  %v2455 = vmul.f32 %v2429, 0.5
  %v2456 = vmul.f32 %v2431, 0.5
  %v2457 = vmul.f32 %v1995, 0.70710677
  %v2458 = vmul.f32 %v1997, 0.70710677
  %v2459 = vmul.f32 %v2081, 0.70710677
  %v2460 = vmul.f32 %v2083, 0.70710677
  %v2461 = vmul.f32 %v2167, 0.70710677
  %v2462 = vmul.f32 %v2169, 0.70710677
  %v2463 = vmul.f32 %v2253, 0.70710677
  %v2464 = vmul.f32 %v2255, 0.70710677
  %v2465 = vmul.f32 %v2339, 0.70710677
  %v2466 = vmul.f32 %v2341, 0.70710677
  %v2467 = vmul.f32 %v2425, 0.70710677
  %v2468 = vmul.f32 %v2427, 0.70710677
  %v2469 = vmul.f32 %v1999, 0.70710677
  %v2470 = vmul.f32 %v2001, 0.70710677
  %v2471 = vmul.f32 %v2085, 0.70710677
  %v2472 = vmul.f32 %v2087, 0.70710677
  %v2473 = vmul.f32 %v2171, 0.70710677
  %v2474 = vmul.f32 %v2173, 0.70710677
  %v2475 = vmul.f32 %v2257, 0.70710677
  %v2476 = vmul.f32 %v2259, 0.70710677
  %v2477 = vmul.f32 %v2343, 0.70710677
  %v2478 = vmul.f32 %v2345, 0.70710677
  %v2479 = vmul.f32 %v2429, 0.70710677
  %v2480 = vmul.f32 %v2431, 0.70710677
  %v2481 = verf.f32.pop %v2457
  %v2482 = verf.f32.pop %v2458
  %v2483 = verf.f32.pop %v2459
  %v2484 = verf.f32.pop %v2460
  %v2485 = verf.f32.pop %v2461
  %v2486 = verf.f32.pop %v2462
  %v2487 = verf.f32.pop %v2463
  %v2488 = verf.f32.pop %v2464
  %v2489 = verf.f32.pop %v2465
  %v2490 = verf.f32.pop %v2466
  %v2491 = verf.f32.pop %v2467
  %v2492 = verf.f32.pop %v2468
  %v2493 = verf.f32.pop %v2469
  %v2494 = verf.f32.pop %v2470
  %v2495 = verf.f32.pop %v2471
  %v2496 = verf.f32.pop %v2472
  %v2497 = verf.f32.pop %v2473
  %v2498 = verf.f32.pop %v2474
  %v2499 = verf.f32.pop %v2475
  %v2500 = verf.f32.pop %v2476
  %v2501 = verf.f32.pop %v2477
  %v2502 = verf.f32.pop %v2478
  %v2503 = verf.f32.pop %v2479
  %v2504 = verf.f32.pop %v2480
  %v2505 = vadd.f32 %v2481, 1.0
  %v2506 = vadd.f32 %v2482, 1.0
  %v2507 = vadd.f32 %v2483, 1.0
  %v2508 = vadd.f32 %v2484, 1.0
  %v2509 = vadd.f32 %v2485, 1.0
  %v2510 = vadd.f32 %v2486, 1.0
  %v2511 = vadd.f32 %v2487, 1.0
  %v2512 = vadd.f32 %v2488, 1.0
  %v2513 = vadd.f32 %v2489, 1.0
  %v2514 = vadd.f32 %v2490, 1.0
  %v2515 = vadd.f32 %v2491, 1.0
  %v2516 = vadd.f32 %v2492, 1.0
  %v2517 = vadd.f32 %v2493, 1.0
  %v2518 = vadd.f32 %v2494, 1.0
  %v2519 = vadd.f32 %v2495, 1.0
  %v2520 = vadd.f32 %v2496, 1.0
  %v2521 = vadd.f32 %v2497, 1.0
  %v2522 = vadd.f32 %v2498, 1.0
  %v2523 = vadd.f32 %v2499, 1.0
  %v2524 = vadd.f32 %v2500, 1.0
  %v2525 = vadd.f32 %v2501, 1.0
  %v2526 = vadd.f32 %v2502, 1.0
  %v2527 = vadd.f32 %v2503, 1.0
  %v2528 = vadd.f32 %v2504, 1.0
  %v2529 = vmul.f32 %v2433, %v2505
  %v2530 = vmul.f32 %v2434, %v2506
  %v2531 = vmul.f32 %v2435, %v2507
  %v2532 = vmul.f32 %v2436, %v2508
  %v2533 = vmul.f32 %v2437, %v2509
  %v2534 = vmul.f32 %v2438, %v2510
  %v2535 = vmul.f32 %v2439, %v2511
  %v2536 = vmul.f32 %v2440, %v2512
  %v2537 = vmul.f32 %v2441, %v2513
  %v2538 = vmul.f32 %v2442, %v2514
  %v2539 = vmul.f32 %v2443, %v2515
  %v2540 = vmul.f32 %v2444, %v2516
  %v2541 = vmul.f32 %v2445, %v2517
  %v2542 = vmul.f32 %v2446, %v2518
  %v2543 = vmul.f32 %v2447, %v2519
  %v2544 = vmul.f32 %v2448, %v2520
  %v2545 = vmul.f32 %v2449, %v2521
  %v2546 = vmul.f32 %v2450, %v2522
  %v2547 = vmul.f32 %v2451, %v2523
  %v2548 = vmul.f32 %v2452, %v2524
  %v2549 = vmul.f32 %v2453, %v2525
  %v2550 = vmul.f32 %v2454, %v2526
  %v2551 = vmul.f32 %v2455, %v2527
  %v2552 = vmul.f32 %v2456, %v2528
  %v2553 = vpack.c.bf16 %v2541, %v2529
  %v2554 = vpack.c.bf16 %v2542, %v2530
  %v2555 = vpack.c.bf16 %v2543, %v2531
  %v2556 = vpack.c.bf16 %v2544, %v2532
  %v2557 = vpack.c.bf16 %v2545, %v2533
  %v2558 = vpack.c.bf16 %v2546, %v2534
  %v2559 = vpack.c.bf16 %v2547, %v2535
  %v2560 = vpack.c.bf16 %v2548, %v2536
  %v2561 = vpack.c.bf16 %v2549, %v2537
  %v2562 = vpack.c.bf16 %v2550, %v2538
  %v2563 = vpack.c.bf16 %v2551, %v2539
  %v2564 = vpack.c.bf16 %v2552, %v2540
  %v2565 = vld [vmem:[%s5] sm:$0xff]
  %v2566 = vld [vmem:[%s5 + $0x8] sm:$0xf]
  %v2567 = vld [vmem:[%s5 + $0xc] sm:$0xff]
  %v2568 = vld [vmem:[%s5 + $0x14] sm:$0xf]
  %v2569 = vld [vmem:[%s5 + $0x18] sm:$0xff]
  %v2570 = vld [vmem:[%s5 + $0x20] sm:$0xf]
  %v2571 = vld [vmem:[%s5 + $0x24] sm:$0xff]
  %v2572 = vld [vmem:[%s5 + $0x2c] sm:$0xf]
  %v2573 = vld [vmem:[%s5 + $0x30] sm:$0xff]
  %v2574 = vld [vmem:[%s5 + $0x38] sm:$0xf]
  %v2575 = vld [vmem:[%s5 + $0x3c] sm:$0xff]
  %v2576 = vld [vmem:[%s5 + $0x44] sm:$0xf]
  %v2577 = vld [vmem:[%s5 + $0x48] sm:$0xff]
  %v2578 = vld [vmem:[%s5 + $0x50] sm:$0xf]
  %v2579 = vld [vmem:[%s5 + $0x54] sm:$0xff]
  %v2580 = vld [vmem:[%s5 + $0x5c] sm:$0xf]
  %v2581 = vld [vmem:[%s5 + $0x60] sm:$0xff]
  %v2582 = vld [vmem:[%s5 + $0x68] sm:$0xf]
  %v2583 = vld [vmem:[%s5 + $0x6c] sm:$0xff]
  %v2584 = vld [vmem:[%s5 + $0x74] sm:$0xf]
  %v2585 = vld [vmem:[%s5 + $0x78] sm:$0xff]
  %v2586 = vld [vmem:[%s5 + $0x80] sm:$0xf]
  %v2587 = vld [vmem:[%s5 + $0x84] sm:$0xff]
  %v2588 = vld [vmem:[%s5 + $0x8c] sm:$0xf]
  %v2589 = vld [vmem:[%s5 + $0x90] sm:$0xff]
  %v2590 = vld [vmem:[%s5 + $0x98] sm:$0xf]
  %v2591 = vld [vmem:[%s5 + $0x9c] sm:$0xff]
  %v2592 = vld [vmem:[%s5 + $0xa4] sm:$0xf]
  %v2593 = vld [vmem:[%s5 + $0xa8] sm:$0xff]
  %v2594 = vld [vmem:[%s5 + $0xb0] sm:$0xf]
  %v2595 = vld [vmem:[%s5 + $0xb4] sm:$0xff]
  %v2596 = vld [vmem:[%s5 + $0xbc] sm:$0xf]
  %v2597 = vld [vmem:[%s5 + $0xc0] sm:$0xff]
  %v2598 = vld [vmem:[%s5 + $0xc8] sm:$0xf]
  %v2599 = vld [vmem:[%s5 + $0xcc] sm:$0xff]
  %v2600 = vld [vmem:[%s5 + $0xd4] sm:$0xf]
  %v2601 = vld [vmem:[%s5 + $0xd8] sm:$0xff]
  %v2602 = vld [vmem:[%s5 + $0xe0] sm:$0xf]
  %v2603 = vld [vmem:[%s5 + $0xe4] sm:$0xff]
  %v2604 = vld [vmem:[%s5 + $0xec] sm:$0xf]
  %v2605 = vld [vmem:[%s5 + $0xf0] sm:$0xff]
  %v2606 = vld [vmem:[%s5 + $0xf8] sm:$0xf]
  %v2607 = vld [vmem:[%s5 + $0xfc] sm:$0xff]
  %v2608 = vld [vmem:[%s5 + $0x104] sm:$0xf]
  %v2609 = vld [vmem:[%s5 + $0x108] sm:$0xff]
  %v2610 = vld [vmem:[%s5 + $0x110] sm:$0xf]
  %v2611 = vld [vmem:[%s5 + $0x114] sm:$0xff]
  %v2612 = vld [vmem:[%s5 + $0x11c] sm:$0xf]
  %v2613 = vld [vmem:[%s5 + $0x120] sm:$0xff]
  %v2614 = vld [vmem:[%s5 + $0x128] sm:$0xf]
  %v2615 = vld [vmem:[%s5 + $0x12c] sm:$0xff]
  %v2616 = vld [vmem:[%s5 + $0x134] sm:$0xf]
  %v2617 = vld [vmem:[%s5 + $0x138] sm:$0xff]
  %v2618 = vld [vmem:[%s5 + $0x140] sm:$0xf]
  %v2619 = vld [vmem:[%s5 + $0x144] sm:$0xff]
  %v2620 = vld [vmem:[%s5 + $0x14c] sm:$0xf]
  %v2621 = vld [vmem:[%s5 + $0x150] sm:$0xff]
  %v2622 = vld [vmem:[%s5 + $0x158] sm:$0xf]
  %v2623 = vld [vmem:[%s5 + $0x15c] sm:$0xff]
  %v2624 = vld [vmem:[%s5 + $0x164] sm:$0xf]
  %v2625 = vld [vmem:[%s5 + $0x168] sm:$0xff]
  %v2626 = vld [vmem:[%s5 + $0x170] sm:$0xf]
  %v2627 = vld [vmem:[%s5 + $0x174] sm:$0xff]
  %v2628 = vld [vmem:[%s5 + $0x17c] sm:$0xf]
  %v2629 = vld [vmem:[%s5 + $0x180] sm:$0xff]
  %v2630 = vld [vmem:[%s5 + $0x188] sm:$0xf]
  %v2631 = vld [vmem:[%s5 + $0x18c] sm:$0xff]
  %v2632 = vld [vmem:[%s5 + $0x194] sm:$0xf]
  %v2633 = vld [vmem:[%s5 + $0x198] sm:$0xff]
  %v2634 = vld [vmem:[%s5 + $0x1a0] sm:$0xf]
  %v2635 = vld [vmem:[%s5 + $0x1a4] sm:$0xff]
  %v2636 = vld [vmem:[%s5 + $0x1ac] sm:$0xf]
  %v2637 = vld [vmem:[%s5 + $0x1b0] sm:$0xff]
  %v2638 = vld [vmem:[%s5 + $0x1b8] sm:$0xf]
  %v2639 = vld [vmem:[%s5 + $0x1bc] sm:$0xff]
  %v2640 = vld [vmem:[%s5 + $0x1c4] sm:$0xf]
  %v2641 = vld [vmem:[%s5 + $0x1c8] sm:$0xff]
  %v2642 = vld [vmem:[%s5 + $0x1d0] sm:$0xf]
  %v2643 = vld [vmem:[%s5 + $0x1d4] sm:$0xff]
  %v2644 = vld [vmem:[%s5 + $0x1dc] sm:$0xf]
  %v2645 = vld [vmem:[%s5 + $0x1e0] sm:$0xff]
  %v2646 = vld [vmem:[%s5 + $0x1e8] sm:$0xf]
  %v2647 = vld [vmem:[%s5 + $0x1ec] sm:$0xff]
  %v2648 = vld [vmem:[%s5 + $0x1f4] sm:$0xf]
  %v2649 = vld [vmem:[%s5 + $0x1f8] sm:$0xff]
  %v2650 = vld [vmem:[%s5 + $0x200] sm:$0xf]
  %v2651 = vld [vmem:[%s5 + $0x204] sm:$0xff]
  %v2652 = vld [vmem:[%s5 + $0x20c] sm:$0xf]
  %v2653 = vld [vmem:[%s5 + $0x210] sm:$0xff]
  %v2654 = vld [vmem:[%s5 + $0x218] sm:$0xf]
  %v2655 = vld [vmem:[%s5 + $0x21c] sm:$0xff]
  %v2656 = vld [vmem:[%s5 + $0x224] sm:$0xf]
  %v2657 = vld [vmem:[%s5 + $0x228] sm:$0xff]
  %v2658 = vld [vmem:[%s5 + $0x230] sm:$0xf]
  %v2659 = vld [vmem:[%s5 + $0x234] sm:$0xff]
  %v2660 = vld [vmem:[%s5 + $0x23c] sm:$0xf]
  %v2661 = vld [vmem:[%s5 + $0x240] sm:$0xff]
  %v2662 = vld [vmem:[%s5 + $0x248] sm:$0xf]
  %v2663 = vld [vmem:[%s5 + $0x24c] sm:$0xff]
  %v2664 = vld [vmem:[%s5 + $0x254] sm:$0xf]
  %v2665 = vld [vmem:[%s5 + $0x258] sm:$0xff]
  %v2666 = vld [vmem:[%s5 + $0x260] sm:$0xf]
  %v2667 = vld [vmem:[%s5 + $0x264] sm:$0xff]
  %v2668 = vld [vmem:[%s5 + $0x26c] sm:$0xf]
  %v2669 = vld [vmem:[%s5 + $0x270] sm:$0xff]
  %v2670 = vld [vmem:[%s5 + $0x278] sm:$0xf]
  %v2671 = vld [vmem:[%s5 + $0x27c] sm:$0xff]
  %v2672 = vld [vmem:[%s5 + $0x284] sm:$0xf]
  %v2673 = vld [vmem:[%s5 + $0x288] sm:$0xff]
  %v2674 = vld [vmem:[%s5 + $0x290] sm:$0xf]
  %v2675 = vld [vmem:[%s5 + $0x294] sm:$0xff]
  %v2676 = vld [vmem:[%s5 + $0x29c] sm:$0xf]
  %v2677 = vld [vmem:[%s5 + $0x2a0] sm:$0xff]
  %v2678 = vld [vmem:[%s5 + $0x2a8] sm:$0xf]
  %v2679 = vld [vmem:[%s5 + $0x2ac] sm:$0xff]
  %v2680 = vld [vmem:[%s5 + $0x2b4] sm:$0xf]
  %v2681 = vld [vmem:[%s5 + $0x2b8] sm:$0xff]
  %v2682 = vld [vmem:[%s5 + $0x2c0] sm:$0xf]
  %v2683 = vld [vmem:[%s5 + $0x2c4] sm:$0xff]
  %v2684 = vld [vmem:[%s5 + $0x2cc] sm:$0xf]
  %v2685 = vld [vmem:[%s5 + $0x2d0] sm:$0xff]
  %v2686 = vld [vmem:[%s5 + $0x2d8] sm:$0xf]
  %v2687 = vld [vmem:[%s5 + $0x2dc] sm:$0xff]
  %v2688 = vld [vmem:[%s5 + $0x2e4] sm:$0xf]
  %v2689 = vld [vmem:[%s5 + $0x2e8] sm:$0xff]
  %v2690 = vld [vmem:[%s5 + $0x2f0] sm:$0xf]
  %v2691 = vld [vmem:[%s5 + $0x2f4] sm:$0xff]
  %v2692 = vld [vmem:[%s5 + $0x2fc] sm:$0xf]
  %v2693 = vld [vmem:[%s5 + $0x300] sm:$0xff]
  %v2694 = vld [vmem:[%s5 + $0x308] sm:$0xf]
  %v2695 = vld [vmem:[%s5 + $0x30c] sm:$0xff]
  %v2696 = vld [vmem:[%s5 + $0x314] sm:$0xf]
  %v2697 = vld [vmem:[%s5 + $0x318] sm:$0xff]
  %v2698 = vld [vmem:[%s5 + $0x320] sm:$0xf]
  %v2699 = vld [vmem:[%s5 + $0x324] sm:$0xff]
  %v2700 = vld [vmem:[%s5 + $0x32c] sm:$0xf]
  %v2701 = vld [vmem:[%s5 + $0x330] sm:$0xff]
  %v2702 = vld [vmem:[%s5 + $0x338] sm:$0xf]
  %v2703 = vld [vmem:[%s5 + $0x33c] sm:$0xff]
  %v2704 = vld [vmem:[%s5 + $0x344] sm:$0xf]
  %v2705 = vld [vmem:[%s5 + $0x348] sm:$0xff]
  %v2706 = vld [vmem:[%s5 + $0x350] sm:$0xf]
  %v2707 = vld [vmem:[%s5 + $0x354] sm:$0xff]
  %v2708 = vld [vmem:[%s5 + $0x35c] sm:$0xf]
  %v2709 = vld [vmem:[%s5 + $0x360] sm:$0xff]
  %v2710 = vld [vmem:[%s5 + $0x368] sm:$0xf]
  %v2711 = vld [vmem:[%s5 + $0x36c] sm:$0xff]
  %v2712 = vld [vmem:[%s5 + $0x374] sm:$0xf]
  %v2713 = vld [vmem:[%s5 + $0x378] sm:$0xff]
  %v2714 = vld [vmem:[%s5 + $0x380] sm:$0xf]
  %v2715 = vld [vmem:[%s5 + $0x384] sm:$0xff]
  %v2716 = vld [vmem:[%s5 + $0x38c] sm:$0xf]
  %v2717 = vld [vmem:[%s5 + $0x390] sm:$0xff]
  %v2718 = vld [vmem:[%s5 + $0x398] sm:$0xf]
  %v2719 = vld [vmem:[%s5 + $0x39c] sm:$0xff]
  %v2720 = vld [vmem:[%s5 + $0x3a4] sm:$0xf]
  %v2721 = vld [vmem:[%s5 + $0x3a8] sm:$0xff]
  %v2722 = vld [vmem:[%s5 + $0x3b0] sm:$0xf]
  %v2723 = vld [vmem:[%s5 + $0x3b4] sm:$0xff]
  %v2724 = vld [vmem:[%s5 + $0x3bc] sm:$0xf]
  %v2725 = vld [vmem:[%s5 + $0x3c0] sm:$0xff]
  %v2726 = vld [vmem:[%s5 + $0x3c8] sm:$0xf]
  %v2727 = vld [vmem:[%s5 + $0x3cc] sm:$0xff]
  %v2728 = vld [vmem:[%s5 + $0x3d4] sm:$0xf]
  %v2729 = vld [vmem:[%s5 + $0x3d8] sm:$0xff]
  %v2730 = vld [vmem:[%s5 + $0x3e0] sm:$0xf]
  %v2731 = vld [vmem:[%s5 + $0x3e4] sm:$0xff]
  %v2732 = vld [vmem:[%s5 + $0x3ec] sm:$0xf]
  %v2733 = vld [vmem:[%s5 + $0x3f0] sm:$0xff]
  %v2734 = vld [vmem:[%s5 + $0x3f8] sm:$0xf]
  %v2735 = vld [vmem:[%s5 + $0x3fc] sm:$0xff]
  %v2736 = vld [vmem:[%s5 + $0x404] sm:$0xf]
  %v2737 = vld [vmem:[%s5 + $0x408] sm:$0xff]
  %v2738 = vld [vmem:[%s5 + $0x410] sm:$0xf]
  %v2739 = vld [vmem:[%s5 + $0x414] sm:$0xff]
  %v2740 = vld [vmem:[%s5 + $0x41c] sm:$0xf]
  %v2741 = vld [vmem:[%s5 + $0x420] sm:$0xff]
  %v2742 = vld [vmem:[%s5 + $0x428] sm:$0xf]
  %v2743 = vld [vmem:[%s5 + $0x42c] sm:$0xff]
  %v2744 = vld [vmem:[%s5 + $0x434] sm:$0xf]
  %v2745 = vld [vmem:[%s5 + $0x438] sm:$0xff]
  %v2746 = vld [vmem:[%s5 + $0x440] sm:$0xf]
  %v2747 = vld [vmem:[%s5 + $0x444] sm:$0xff]
  %v2748 = vld [vmem:[%s5 + $0x44c] sm:$0xf]
  %v2749 = vld [vmem:[%s5 + $0x450] sm:$0xff]
  %v2750 = vld [vmem:[%s5 + $0x458] sm:$0xf]
  %v2751 = vld [vmem:[%s5 + $0x45c] sm:$0xff]
  %v2752 = vld [vmem:[%s5 + $0x464] sm:$0xf]
  %v2753 = vld [vmem:[%s5 + $0x468] sm:$0xff]
  %v2754 = vld [vmem:[%s5 + $0x470] sm:$0xf]
  %v2755 = vld [vmem:[%s5 + $0x474] sm:$0xff]
  %v2756 = vld [vmem:[%s5 + $0x47c] sm:$0xf]
  %v2757 = vld [vmem:[%s5 + $0x480] sm:$0xff]
  %v2758 = vld [vmem:[%s5 + $0x488] sm:$0xf]
  %v2759 = vld [vmem:[%s5 + $0x48c] sm:$0xff]
  %v2760 = vld [vmem:[%s5 + $0x494] sm:$0xf]
  %v2761 = vld [vmem:[%s5 + $0x498] sm:$0xff]
  %v2762 = vld [vmem:[%s5 + $0x4a0] sm:$0xf]
  %v2763 = vld [vmem:[%s5 + $0x4a4] sm:$0xff]
  %v2764 = vld [vmem:[%s5 + $0x4ac] sm:$0xf]
  %v2765 = vld [vmem:[%s5 + $0x4b0] sm:$0xff]
  %v2766 = vld [vmem:[%s5 + $0x4b8] sm:$0xf]
  %v2767 = vld [vmem:[%s5 + $0x4bc] sm:$0xff]
  %v2768 = vld [vmem:[%s5 + $0x4c4] sm:$0xf]
  %v2769 = vld [vmem:[%s5 + $0x4c8] sm:$0xff]
  %v2770 = vld [vmem:[%s5 + $0x4d0] sm:$0xf]
  %v2771 = vld [vmem:[%s5 + $0x4d4] sm:$0xff]
  %v2772 = vld [vmem:[%s5 + $0x4dc] sm:$0xf]
  %v2773 = vld [vmem:[%s5 + $0x4e0] sm:$0xff]
  %v2774 = vld [vmem:[%s5 + $0x4e8] sm:$0xf]
  %v2775 = vld [vmem:[%s5 + $0x4ec] sm:$0xff]
  %v2776 = vld [vmem:[%s5 + $0x4f4] sm:$0xf]
  %v2777 = vld [vmem:[%s5 + $0x4f8] sm:$0xff]
  %v2778 = vld [vmem:[%s5 + $0x500] sm:$0xf]
  %v2779 = vld [vmem:[%s5 + $0x504] sm:$0xff]
  %v2780 = vld [vmem:[%s5 + $0x50c] sm:$0xf]
  %v2781 = vld [vmem:[%s5 + $0x510] sm:$0xff]
  %v2782 = vld [vmem:[%s5 + $0x518] sm:$0xf]
  %v2783 = vld [vmem:[%s5 + $0x51c] sm:$0xff]
  %v2784 = vld [vmem:[%s5 + $0x524] sm:$0xf]
  %v2785 = vld [vmem:[%s5 + $0x528] sm:$0xff]
  %v2786 = vld [vmem:[%s5 + $0x530] sm:$0xf]
  %v2787 = vld [vmem:[%s5 + $0x534] sm:$0xff]
  %v2788 = vld [vmem:[%s5 + $0x53c] sm:$0xf]
  %v2789 = vld [vmem:[%s5 + $0x540] sm:$0xff]
  %v2790 = vld [vmem:[%s5 + $0x548] sm:$0xf]
  %v2791 = vld [vmem:[%s5 + $0x54c] sm:$0xff]
  %v2792 = vld [vmem:[%s5 + $0x554] sm:$0xf]
  %v2793 = vld [vmem:[%s5 + $0x558] sm:$0xff]
  %v2794 = vld [vmem:[%s5 + $0x560] sm:$0xf]
  %v2795 = vld [vmem:[%s5 + $0x564] sm:$0xff]
  %v2796 = vld [vmem:[%s5 + $0x56c] sm:$0xf]
  %v2797 = vld [vmem:[%s5 + $0x570] sm:$0xff]
  %v2798 = vld [vmem:[%s5 + $0x578] sm:$0xf]
  %v2799 = vld [vmem:[%s5 + $0x57c] sm:$0xff]
  %v2800 = vld [vmem:[%s5 + $0x584] sm:$0xf]
  %v2801 = vld [vmem:[%s5 + $0x588] sm:$0xff]
  %v2802 = vld [vmem:[%s5 + $0x590] sm:$0xf]
  %v2803 = vld [vmem:[%s5 + $0x594] sm:$0xff]
  %v2804 = vld [vmem:[%s5 + $0x59c] sm:$0xf]
  %v2805 = vld [vmem:[%s5 + $0x5a0] sm:$0xff]
  %v2806 = vld [vmem:[%s5 + $0x5a8] sm:$0xf]
  %v2807 = vld [vmem:[%s5 + $0x5ac] sm:$0xff]
  %v2808 = vld [vmem:[%s5 + $0x5b4] sm:$0xf]
  %v2809 = vld [vmem:[%s5 + $0x5b8] sm:$0xff]
  %v2810 = vld [vmem:[%s5 + $0x5c0] sm:$0xf]
  %v2811 = vld [vmem:[%s5 + $0x5c4] sm:$0xff]
  %v2812 = vld [vmem:[%s5 + $0x5cc] sm:$0xf]
  %v2813 = vld [vmem:[%s5 + $0x5d0] sm:$0xff]
  %v2814 = vld [vmem:[%s5 + $0x5d8] sm:$0xf]
  %v2815 = vld [vmem:[%s5 + $0x5dc] sm:$0xff]
  %v2816 = vld [vmem:[%s5 + $0x5e4] sm:$0xf]
  %v2817 = vld [vmem:[%s5 + $0x5e8] sm:$0xff]
  %v2818 = vld [vmem:[%s5 + $0x5f0] sm:$0xf]
  %v2819 = vld [vmem:[%s5 + $0x5f4] sm:$0xff]
  %v2820 = vld [vmem:[%s5 + $0x5fc] sm:$0xf]
  %v2821 = vld [vmem:[%s5 + $0x600] sm:$0xff]
  %v2822 = vld [vmem:[%s5 + $0x608] sm:$0xf]
  %v2823 = vld [vmem:[%s5 + $0x60c] sm:$0xff]
  %v2824 = vld [vmem:[%s5 + $0x614] sm:$0xf]
  %v2825 = vld [vmem:[%s5 + $0x618] sm:$0xff]
  %v2826 = vld [vmem:[%s5 + $0x620] sm:$0xf]
  %v2827 = vld [vmem:[%s5 + $0x624] sm:$0xff]
  %v2828 = vld [vmem:[%s5 + $0x62c] sm:$0xf]
  %v2829 = vld [vmem:[%s5 + $0x630] sm:$0xff]
  %v2830 = vld [vmem:[%s5 + $0x638] sm:$0xf]
  %v2831 = vld [vmem:[%s5 + $0x63c] sm:$0xff]
  %v2832 = vld [vmem:[%s5 + $0x644] sm:$0xf]
  %v2833 = vld [vmem:[%s5 + $0x648] sm:$0xff]
  %v2834 = vld [vmem:[%s5 + $0x650] sm:$0xf]
  %v2835 = vld [vmem:[%s5 + $0x654] sm:$0xff]
  %v2836 = vld [vmem:[%s5 + $0x65c] sm:$0xf]
  %v2837 = vld [vmem:[%s5 + $0x660] sm:$0xff]
  %v2838 = vld [vmem:[%s5 + $0x668] sm:$0xf]
  %v2839 = vld [vmem:[%s5 + $0x66c] sm:$0xff]
  %v2840 = vld [vmem:[%s5 + $0x674] sm:$0xf]
  %v2841 = vld [vmem:[%s5 + $0x678] sm:$0xff]
  %v2842 = vld [vmem:[%s5 + $0x680] sm:$0xf]
  %v2843 = vld [vmem:[%s5 + $0x684] sm:$0xff]
  %v2844 = vld [vmem:[%s5 + $0x68c] sm:$0xf]
  %v2845 = vld [vmem:[%s5 + $0x690] sm:$0xff]
  %v2846 = vld [vmem:[%s5 + $0x698] sm:$0xf]
  %v2847 = vld [vmem:[%s5 + $0x69c] sm:$0xff]
  %v2848 = vld [vmem:[%s5 + $0x6a4] sm:$0xf]
  %v2849 = vld [vmem:[%s5 + $0x6a8] sm:$0xff]
  %v2850 = vld [vmem:[%s5 + $0x6b0] sm:$0xf]
  %v2851 = vld [vmem:[%s5 + $0x6b4] sm:$0xff]
  %v2852 = vld [vmem:[%s5 + $0x6bc] sm:$0xf]
  %v2853 = vld [vmem:[%s5 + $0x6c0] sm:$0xff]
  %v2854 = vld [vmem:[%s5 + $0x6c8] sm:$0xf]
  %v2855 = vld [vmem:[%s5 + $0x6cc] sm:$0xff]
  %v2856 = vld [vmem:[%s5 + $0x6d4] sm:$0xf]
  %v2857 = vld [vmem:[%s5 + $0x6d8] sm:$0xff]
  %v2858 = vld [vmem:[%s5 + $0x6e0] sm:$0xf]
  %v2859 = vld [vmem:[%s5 + $0x6e4] sm:$0xff]
  %v2860 = vld [vmem:[%s5 + $0x6ec] sm:$0xf]
  %v2861 = vld [vmem:[%s5 + $0x6f0] sm:$0xff]
  %v2862 = vld [vmem:[%s5 + $0x6f8] sm:$0xf]
  %v2863 = vld [vmem:[%s5 + $0x6fc] sm:$0xff]
  %v2864 = vld [vmem:[%s5 + $0x704] sm:$0xf]
  %v2865 = vld [vmem:[%s5 + $0x708] sm:$0xff]
  %v2866 = vld [vmem:[%s5 + $0x710] sm:$0xf]
  %v2867 = vld [vmem:[%s5 + $0x714] sm:$0xff]
  %v2868 = vld [vmem:[%s5 + $0x71c] sm:$0xf]
  %v2869 = vld [vmem:[%s5 + $0x720] sm:$0xff]
  %v2870 = vld [vmem:[%s5 + $0x728] sm:$0xf]
  %v2871 = vld [vmem:[%s5 + $0x72c] sm:$0xff]
  %v2872 = vld [vmem:[%s5 + $0x734] sm:$0xf]
  %v2873 = vld [vmem:[%s5 + $0x738] sm:$0xff]
  %v2874 = vld [vmem:[%s5 + $0x740] sm:$0xf]
  %v2875 = vld [vmem:[%s5 + $0x744] sm:$0xff]
  %v2876 = vld [vmem:[%s5 + $0x74c] sm:$0xf]
  %v2877 = vld [vmem:[%s5 + $0x750] sm:$0xff]
  %v2878 = vld [vmem:[%s5 + $0x758] sm:$0xf]
  %v2879 = vld [vmem:[%s5 + $0x75c] sm:$0xff]
  %v2880 = vld [vmem:[%s5 + $0x764] sm:$0xf]
  %v2881 = vld [vmem:[%s5 + $0x768] sm:$0xff]
  %v2882 = vld [vmem:[%s5 + $0x770] sm:$0xf]
  %v2883 = vld [vmem:[%s5 + $0x774] sm:$0xff]
  %v2884 = vld [vmem:[%s5 + $0x77c] sm:$0xf]
  %v2885 = vld [vmem:[%s5 + $0x780] sm:$0xff]
  %v2886 = vld [vmem:[%s5 + $0x788] sm:$0xf]
  %v2887 = vld [vmem:[%s5 + $0x78c] sm:$0xff]
  %v2888 = vld [vmem:[%s5 + $0x794] sm:$0xf]
  %v2889 = vld [vmem:[%s5 + $0x798] sm:$0xff]
  %v2890 = vld [vmem:[%s5 + $0x7a0] sm:$0xf]
  %v2891 = vld [vmem:[%s5 + $0x7a4] sm:$0xff]
  %v2892 = vld [vmem:[%s5 + $0x7ac] sm:$0xf]
  %v2893 = vld [vmem:[%s5 + $0x7b0] sm:$0xff]
  %v2894 = vld [vmem:[%s5 + $0x7b8] sm:$0xf]
  %v2895 = vld [vmem:[%s5 + $0x7bc] sm:$0xff]
  %v2896 = vld [vmem:[%s5 + $0x7c4] sm:$0xf]
  %v2897 = vld [vmem:[%s5 + $0x7c8] sm:$0xff]
  %v2898 = vld [vmem:[%s5 + $0x7d0] sm:$0xf]
  %v2899 = vld [vmem:[%s5 + $0x7d4] sm:$0xff]
  %v2900 = vld [vmem:[%s5 + $0x7dc] sm:$0xf]
  %v2901 = vld [vmem:[%s5 + $0x7e0] sm:$0xff]
  %v2902 = vld [vmem:[%s5 + $0x7e8] sm:$0xf]
  %v2903 = vld [vmem:[%s5 + $0x7ec] sm:$0xff]
  %v2904 = vld [vmem:[%s5 + $0x7f4] sm:$0xf]
  %v2905 = vld [vmem:[%s5 + $0x7f8] sm:$0xff]
  %v2906 = vld [vmem:[%s5 + $0x800] sm:$0xf]
  %v2907 = vld [vmem:[%s5 + $0x804] sm:$0xff]
  %v2908 = vld [vmem:[%s5 + $0x80c] sm:$0xf]
  %v2909 = vld [vmem:[%s5 + $0x810] sm:$0xff]
  %v2910 = vld [vmem:[%s5 + $0x818] sm:$0xf]
  %v2911 = vld [vmem:[%s5 + $0x81c] sm:$0xff]
  %v2912 = vld [vmem:[%s5 + $0x824] sm:$0xf]
  %v2913 = vld [vmem:[%s5 + $0x828] sm:$0xff]
  %v2914 = vld [vmem:[%s5 + $0x830] sm:$0xf]
  %v2915 = vld [vmem:[%s5 + $0x834] sm:$0xff]
  %v2916 = vld [vmem:[%s5 + $0x83c] sm:$0xf]
  %v2917 = vld [vmem:[%s5 + $0x840] sm:$0xff]
  %v2918 = vld [vmem:[%s5 + $0x848] sm:$0xf]
  %v2919 = vld [vmem:[%s5 + $0x84c] sm:$0xff]
  %v2920 = vld [vmem:[%s5 + $0x854] sm:$0xf]
  %v2921 = vld [vmem:[%s5 + $0x858] sm:$0xff]
  %v2922 = vld [vmem:[%s5 + $0x860] sm:$0xf]
  %v2923 = vld [vmem:[%s5 + $0x864] sm:$0xff]
  %v2924 = vld [vmem:[%s5 + $0x86c] sm:$0xf]
  %v2925 = vld [vmem:[%s5 + $0x870] sm:$0xff]
  %v2926 = vld [vmem:[%s5 + $0x878] sm:$0xf]
  %v2927 = vld [vmem:[%s5 + $0x87c] sm:$0xff]
  %v2928 = vld [vmem:[%s5 + $0x884] sm:$0xf]
  %v2929 = vld [vmem:[%s5 + $0x888] sm:$0xff]
  %v2930 = vld [vmem:[%s5 + $0x890] sm:$0xf]
  %v2931 = vld [vmem:[%s5 + $0x894] sm:$0xff]
  %v2932 = vld [vmem:[%s5 + $0x89c] sm:$0xf]
  %v2933 = vld [vmem:[%s5 + $0x8a0] sm:$0xff]
  %v2934 = vld [vmem:[%s5 + $0x8a8] sm:$0xf]
  %v2935 = vld [vmem:[%s5 + $0x8ac] sm:$0xff]
  %v2936 = vld [vmem:[%s5 + $0x8b4] sm:$0xf]
  %v2937 = vld [vmem:[%s5 + $0x8b8] sm:$0xff]
  %v2938 = vld [vmem:[%s5 + $0x8c0] sm:$0xf]
  %v2939 = vld [vmem:[%s5 + $0x8c4] sm:$0xff]
  %v2940 = vld [vmem:[%s5 + $0x8cc] sm:$0xf]
  %v2941 = vld [vmem:[%s5 + $0x8d0] sm:$0xff]
  %v2942 = vld [vmem:[%s5 + $0x8d8] sm:$0xf]
  %v2943 = vld [vmem:[%s5 + $0x8dc] sm:$0xff]
  %v2944 = vld [vmem:[%s5 + $0x8e4] sm:$0xf]
  %v2945 = vld [vmem:[%s5 + $0x8e8] sm:$0xff]
  %v2946 = vld [vmem:[%s5 + $0x8f0] sm:$0xf]
  %v2947 = vld [vmem:[%s5 + $0x8f4] sm:$0xff]
  %v2948 = vld [vmem:[%s5 + $0x8fc] sm:$0xf]
  %v2949 = vld [vmem:[%s6] sm:$0x7]
  %v2951 = vlaneseq
  %v2952 = vshrl.u32 %v2951, 7
  %v2953 = vsub.s32 0, %v2952
  %v2954 = vrot.slane %v2949, %v2953
  %v2955 = vlaneseq
  %v2956 = vshrl.u32 %v2955, 7
  %v2957 = vsub.s32 1, %v2956
  %v2958 = vrot.slane %v2949, %v2957
  %v2959 = vlaneseq
  %v2960 = vshrl.u32 %v2959, 7
  %v2961 = vsub.s32 2, %v2960
  %v2962 = vrot.slane %v2949, %v2961
  %v3350 = vunpack.c.l.b16 %v2565
  %v3351 = vunpack.c.h.b16 %v2565
  %v3352 = vunpack.c.l.b16 %v2566
  %v3353 = vunpack.c.l.b16 %v2567
  %v3354 = vunpack.c.h.b16 %v2567
  %v3355 = vunpack.c.l.b16 %v2568
  %v3356 = vunpack.c.l.b16 %v2569
  %v3357 = vunpack.c.h.b16 %v2569
  %v3358 = vunpack.c.l.b16 %v2570
  %v3359 = vunpack.c.l.b16 %v2571
  %v3360 = vunpack.c.h.b16 %v2571
  %v3361 = vunpack.c.l.b16 %v2572
  %v3362 = vunpack.c.l.b16 %v2573
  %v3363 = vunpack.c.h.b16 %v2573
  %v3364 = vunpack.c.l.b16 %v2574
  %v3365 = vunpack.c.l.b16 %v2575
  %v3366 = vunpack.c.h.b16 %v2575
  %v3367 = vunpack.c.l.b16 %v2576
  %v3368 = vunpack.c.l.b16 %v2577
  %v3369 = vunpack.c.h.b16 %v2577
  %v3370 = vunpack.c.l.b16 %v2578
  %v3371 = vunpack.c.l.b16 %v2579
  %v3372 = vunpack.c.h.b16 %v2579
  %v3373 = vunpack.c.l.b16 %v2580
  %v3374 = vunpack.c.l.b16 %v2581
  %v3375 = vunpack.c.h.b16 %v2581
  %v3376 = vunpack.c.l.b16 %v2582
  %v3377 = vunpack.c.l.b16 %v2583
  %v3378 = vunpack.c.h.b16 %v2583
  %v3379 = vunpack.c.l.b16 %v2584
  %v3380 = vunpack.c.l.b16 %v2585
  %v3381 = vunpack.c.h.b16 %v2585
  %v3382 = vunpack.c.l.b16 %v2586
  %v3383 = vunpack.c.l.b16 %v2587
  %v3384 = vunpack.c.h.b16 %v2587
  %v3385 = vunpack.c.l.b16 %v2588
  %v3386 = vunpack.c.l.b16 %v2589
  %v3387 = vunpack.c.h.b16 %v2589
  %v3388 = vunpack.c.l.b16 %v2590
  %v3389 = vunpack.c.l.b16 %v2591
  %v3390 = vunpack.c.h.b16 %v2591
  %v3391 = vunpack.c.l.b16 %v2592
  %v3392 = vunpack.c.l.b16 %v2593
  %v3393 = vunpack.c.h.b16 %v2593
  %v3394 = vunpack.c.l.b16 %v2594
  %v3395 = vunpack.c.l.b16 %v2595
  %v3396 = vunpack.c.h.b16 %v2595
  %v3397 = vunpack.c.l.b16 %v2596
  %v3398 = vunpack.c.l.b16 %v2597
  %v3399 = vunpack.c.h.b16 %v2597
  %v3400 = vunpack.c.l.b16 %v2598
  %v3401 = vunpack.c.l.b16 %v2599
  %v3402 = vunpack.c.h.b16 %v2599
  %v3403 = vunpack.c.l.b16 %v2600
  %v3404 = vunpack.c.l.b16 %v2601
  %v3405 = vunpack.c.h.b16 %v2601
  %v3406 = vunpack.c.l.b16 %v2602
  %v3407 = vunpack.c.l.b16 %v2603
  %v3408 = vunpack.c.h.b16 %v2603
  %v3409 = vunpack.c.l.b16 %v2604
  %v3410 = vunpack.c.l.b16 %v2605
  %v3411 = vunpack.c.h.b16 %v2605
  %v3412 = vunpack.c.l.b16 %v2606
  %v3413 = vunpack.c.l.b16 %v2607
  %v3414 = vunpack.c.h.b16 %v2607
  %v3415 = vunpack.c.l.b16 %v2608
  %v3416 = vunpack.c.l.b16 %v2609
  %v3417 = vunpack.c.h.b16 %v2609
  %v3418 = vunpack.c.l.b16 %v2610
  %v3419 = vunpack.c.l.b16 %v2611
  %v3420 = vunpack.c.h.b16 %v2611
  %v3421 = vunpack.c.l.b16 %v2612
  %v3422 = vunpack.c.l.b16 %v2613
  %v3423 = vunpack.c.h.b16 %v2613
  %v3424 = vunpack.c.l.b16 %v2614
  %v3425 = vunpack.c.l.b16 %v2615
  %v3426 = vunpack.c.h.b16 %v2615
  %v3427 = vunpack.c.l.b16 %v2616
  %v3428 = vunpack.c.l.b16 %v2617
  %v3429 = vunpack.c.h.b16 %v2617
  %v3430 = vunpack.c.l.b16 %v2618
  %v3431 = vunpack.c.l.b16 %v2619
  %v3432 = vunpack.c.h.b16 %v2619
  %v3433 = vunpack.c.l.b16 %v2620
  %v3434 = vunpack.c.l.b16 %v2621
  %v3435 = vunpack.c.h.b16 %v2621
  %v3436 = vunpack.c.l.b16 %v2622
  %v3437 = vunpack.c.l.b16 %v2623
  %v3438 = vunpack.c.h.b16 %v2623
  %v3439 = vunpack.c.l.b16 %v2624
  %v3440 = vunpack.c.l.b16 %v2625
  %v3441 = vunpack.c.h.b16 %v2625
  %v3442 = vunpack.c.l.b16 %v2626
  %v3443 = vunpack.c.l.b16 %v2627
  %v3444 = vunpack.c.h.b16 %v2627
  %v3445 = vunpack.c.l.b16 %v2628
  %v3446 = vunpack.c.l.b16 %v2629
  %v3447 = vunpack.c.h.b16 %v2629
  %v3448 = vunpack.c.l.b16 %v2630
  %v3449 = vunpack.c.l.b16 %v2631
  %v3450 = vunpack.c.h.b16 %v2631
  %v3451 = vunpack.c.l.b16 %v2632
  %v3452 = vunpack.c.l.b16 %v2633
  %v3453 = vunpack.c.h.b16 %v2633
  %v3454 = vunpack.c.l.b16 %v2634
  %v3455 = vunpack.c.l.b16 %v2635
  %v3456 = vunpack.c.h.b16 %v2635
  %v3457 = vunpack.c.l.b16 %v2636
  %v3458 = vunpack.c.l.b16 %v2637
  %v3459 = vunpack.c.h.b16 %v2637
  %v3460 = vunpack.c.l.b16 %v2638
  %v3461 = vunpack.c.l.b16 %v2639
  %v3462 = vunpack.c.h.b16 %v2639
  %v3463 = vunpack.c.l.b16 %v2640
  %v3464 = vunpack.c.l.b16 %v2641
  %v3465 = vunpack.c.h.b16 %v2641
  %v3466 = vunpack.c.l.b16 %v2642
  %v3467 = vunpack.c.l.b16 %v2643
  %v3468 = vunpack.c.h.b16 %v2643
  %v3469 = vunpack.c.l.b16 %v2644
  %v3470 = vunpack.c.l.b16 %v2645
  %v3471 = vunpack.c.h.b16 %v2645
  %v3472 = vunpack.c.l.b16 %v2646
  %v3473 = vunpack.c.l.b16 %v2647
  %v3474 = vunpack.c.h.b16 %v2647
  %v3475 = vunpack.c.l.b16 %v2648
  %v3476 = vunpack.c.l.b16 %v2649
  %v3477 = vunpack.c.h.b16 %v2649
  %v3478 = vunpack.c.l.b16 %v2650
  %v3479 = vunpack.c.l.b16 %v2651
  %v3480 = vunpack.c.h.b16 %v2651
  %v3481 = vunpack.c.l.b16 %v2652
  %v3482 = vunpack.c.l.b16 %v2653
  %v3483 = vunpack.c.h.b16 %v2653
  %v3484 = vunpack.c.l.b16 %v2654
  %v3485 = vunpack.c.l.b16 %v2655
  %v3486 = vunpack.c.h.b16 %v2655
  %v3487 = vunpack.c.l.b16 %v2656
  %v3488 = vunpack.c.l.b16 %v2657
  %v3489 = vunpack.c.h.b16 %v2657
  %v3490 = vunpack.c.l.b16 %v2658
  %v3491 = vunpack.c.l.b16 %v2659
  %v3492 = vunpack.c.h.b16 %v2659
  %v3493 = vunpack.c.l.b16 %v2660
  %v3494 = vunpack.c.l.b16 %v2661
  %v3495 = vunpack.c.h.b16 %v2661
  %v3496 = vunpack.c.l.b16 %v2662
  %v3497 = vunpack.c.l.b16 %v2663
  %v3498 = vunpack.c.h.b16 %v2663
  %v3499 = vunpack.c.l.b16 %v2664
  %v3500 = vunpack.c.l.b16 %v2665
  %v3501 = vunpack.c.h.b16 %v2665
  %v3502 = vunpack.c.l.b16 %v2666
  %v3503 = vunpack.c.l.b16 %v2667
  %v3504 = vunpack.c.h.b16 %v2667
  %v3505 = vunpack.c.l.b16 %v2668
  %v3506 = vunpack.c.l.b16 %v2669
  %v3507 = vunpack.c.h.b16 %v2669
  %v3508 = vunpack.c.l.b16 %v2670
  %v3509 = vunpack.c.l.b16 %v2671
  %v3510 = vunpack.c.h.b16 %v2671
  %v3511 = vunpack.c.l.b16 %v2672
  %v3512 = vunpack.c.l.b16 %v2673
  %v3513 = vunpack.c.h.b16 %v2673
  %v3514 = vunpack.c.l.b16 %v2674
  %v3515 = vunpack.c.l.b16 %v2675
  %v3516 = vunpack.c.h.b16 %v2675
  %v3517 = vunpack.c.l.b16 %v2676
  %v3518 = vunpack.c.l.b16 %v2677
  %v3519 = vunpack.c.h.b16 %v2677
  %v3520 = vunpack.c.l.b16 %v2678
  %v3521 = vunpack.c.l.b16 %v2679
  %v3522 = vunpack.c.h.b16 %v2679
  %v3523 = vunpack.c.l.b16 %v2680
  %v3524 = vunpack.c.l.b16 %v2681
  %v3525 = vunpack.c.h.b16 %v2681
  %v3526 = vunpack.c.l.b16 %v2682
  %v3527 = vunpack.c.l.b16 %v2683
  %v3528 = vunpack.c.h.b16 %v2683
  %v3529 = vunpack.c.l.b16 %v2684
  %v3530 = vunpack.c.l.b16 %v2685
  %v3531 = vunpack.c.h.b16 %v2685
  %v3532 = vunpack.c.l.b16 %v2686
  %v3533 = vunpack.c.l.b16 %v2687
  %v3534 = vunpack.c.h.b16 %v2687
  %v3535 = vunpack.c.l.b16 %v2688
  %v3536 = vunpack.c.l.b16 %v2689
  %v3537 = vunpack.c.h.b16 %v2689
  %v3538 = vunpack.c.l.b16 %v2690
  %v3539 = vunpack.c.l.b16 %v2691
  %v3540 = vunpack.c.h.b16 %v2691
  %v3541 = vunpack.c.l.b16 %v2692
  %v3542 = vunpack.c.l.b16 %v2693
  %v3543 = vunpack.c.h.b16 %v2693
  %v3544 = vunpack.c.l.b16 %v2694
  %v3545 = vunpack.c.l.b16 %v2695
  %v3546 = vunpack.c.h.b16 %v2695
  %v3547 = vunpack.c.l.b16 %v2696
  %v3548 = vunpack.c.l.b16 %v2697
  %v3549 = vunpack.c.h.b16 %v2697
  %v3550 = vunpack.c.l.b16 %v2698
  %v3551 = vunpack.c.l.b16 %v2699
  %v3552 = vunpack.c.h.b16 %v2699
  %v3553 = vunpack.c.l.b16 %v2700
  %v3554 = vunpack.c.l.b16 %v2701
  %v3555 = vunpack.c.h.b16 %v2701
  %v3556 = vunpack.c.l.b16 %v2702
  %v3557 = vunpack.c.l.b16 %v2703
  %v3558 = vunpack.c.h.b16 %v2703
  %v3559 = vunpack.c.l.b16 %v2704
  %v3560 = vunpack.c.l.b16 %v2705
  %v3561 = vunpack.c.h.b16 %v2705
  %v3562 = vunpack.c.l.b16 %v2706
  %v3563 = vunpack.c.l.b16 %v2707
  %v3564 = vunpack.c.h.b16 %v2707
  %v3565 = vunpack.c.l.b16 %v2708
  %v3566 = vunpack.c.l.b16 %v2709
  %v3567 = vunpack.c.h.b16 %v2709
  %v3568 = vunpack.c.l.b16 %v2710
  %v3569 = vunpack.c.l.b16 %v2711
  %v3570 = vunpack.c.h.b16 %v2711
  %v3571 = vunpack.c.l.b16 %v2712
  %v3572 = vunpack.c.l.b16 %v2713
  %v3573 = vunpack.c.h.b16 %v2713
  %v3574 = vunpack.c.l.b16 %v2714
  %v3575 = vunpack.c.l.b16 %v2715
  %v3576 = vunpack.c.h.b16 %v2715
  %v3577 = vunpack.c.l.b16 %v2716
  %v3578 = vunpack.c.l.b16 %v2717
  %v3579 = vunpack.c.h.b16 %v2717
  %v3580 = vunpack.c.l.b16 %v2718
  %v3581 = vunpack.c.l.b16 %v2719
  %v3582 = vunpack.c.h.b16 %v2719
  %v3583 = vunpack.c.l.b16 %v2720
  %v3584 = vunpack.c.l.b16 %v2721
  %v3585 = vunpack.c.h.b16 %v2721
  %v3586 = vunpack.c.l.b16 %v2722
  %v3587 = vunpack.c.l.b16 %v2723
  %v3588 = vunpack.c.h.b16 %v2723
  %v3589 = vunpack.c.l.b16 %v2724
  %v3590 = vunpack.c.l.b16 %v2725
  %v3591 = vunpack.c.h.b16 %v2725
  %v3592 = vunpack.c.l.b16 %v2726
  %v3593 = vunpack.c.l.b16 %v2727
  %v3594 = vunpack.c.h.b16 %v2727
  %v3595 = vunpack.c.l.b16 %v2728
  %v3596 = vunpack.c.l.b16 %v2729
  %v3597 = vunpack.c.h.b16 %v2729
  %v3598 = vunpack.c.l.b16 %v2730
  %v3599 = vunpack.c.l.b16 %v2731
  %v3600 = vunpack.c.h.b16 %v2731
  %v3601 = vunpack.c.l.b16 %v2732
  %v3602 = vunpack.c.l.b16 %v2733
  %v3603 = vunpack.c.h.b16 %v2733
  %v3604 = vunpack.c.l.b16 %v2734
  %v3605 = vunpack.c.l.b16 %v2735
  %v3606 = vunpack.c.h.b16 %v2735
  %v3607 = vunpack.c.l.b16 %v2736
  %v3608 = vunpack.c.l.b16 %v2737
  %v3609 = vunpack.c.h.b16 %v2737
  %v3610 = vunpack.c.l.b16 %v2738
  %v3611 = vunpack.c.l.b16 %v2739
  %v3612 = vunpack.c.h.b16 %v2739
  %v3613 = vunpack.c.l.b16 %v2740
  %v3614 = vunpack.c.l.b16 %v2741
  %v3615 = vunpack.c.h.b16 %v2741
  %v3616 = vunpack.c.l.b16 %v2742
  %v3617 = vunpack.c.l.b16 %v2743
  %v3618 = vunpack.c.h.b16 %v2743
  %v3619 = vunpack.c.l.b16 %v2744
  %v3620 = vunpack.c.l.b16 %v2745
  %v3621 = vunpack.c.h.b16 %v2745
  %v3622 = vunpack.c.l.b16 %v2746
  %v3623 = vunpack.c.l.b16 %v2747
  %v3624 = vunpack.c.h.b16 %v2747
  %v3625 = vunpack.c.l.b16 %v2748
  %v3626 = vunpack.c.l.b16 %v2749
  %v3627 = vunpack.c.h.b16 %v2749
  %v3628 = vunpack.c.l.b16 %v2750
  %v3629 = vunpack.c.l.b16 %v2751
  %v3630 = vunpack.c.h.b16 %v2751
  %v3631 = vunpack.c.l.b16 %v2752
  %v3632 = vunpack.c.l.b16 %v2753
  %v3633 = vunpack.c.h.b16 %v2753
  %v3634 = vunpack.c.l.b16 %v2754
  %v3635 = vunpack.c.l.b16 %v2755
  %v3636 = vunpack.c.h.b16 %v2755
  %v3637 = vunpack.c.l.b16 %v2756
  %v3638 = vunpack.c.l.b16 %v2757
  %v3639 = vunpack.c.h.b16 %v2757
  %v3640 = vunpack.c.l.b16 %v2758
  %v3641 = vunpack.c.l.b16 %v2759
  %v3642 = vunpack.c.h.b16 %v2759
  %v3643 = vunpack.c.l.b16 %v2760
  %v3644 = vunpack.c.l.b16 %v2761
  %v3645 = vunpack.c.h.b16 %v2761
  %v3646 = vunpack.c.l.b16 %v2762
  %v3647 = vunpack.c.l.b16 %v2763
  %v3648 = vunpack.c.h.b16 %v2763
  %v3649 = vunpack.c.l.b16 %v2764
  %v3650 = vunpack.c.l.b16 %v2765
  %v3651 = vunpack.c.h.b16 %v2765
  %v3652 = vunpack.c.l.b16 %v2766
  %v3653 = vunpack.c.l.b16 %v2767
  %v3654 = vunpack.c.h.b16 %v2767
  %v3655 = vunpack.c.l.b16 %v2768
  %v3656 = vunpack.c.l.b16 %v2769
  %v3657 = vunpack.c.h.b16 %v2769
  %v3658 = vunpack.c.l.b16 %v2770
  %v3659 = vunpack.c.l.b16 %v2771
  %v3660 = vunpack.c.h.b16 %v2771
  %v3661 = vunpack.c.l.b16 %v2772
  %v3662 = vunpack.c.l.b16 %v2773
  %v3663 = vunpack.c.h.b16 %v2773
  %v3664 = vunpack.c.l.b16 %v2774
  %v3665 = vunpack.c.l.b16 %v2775
  %v3666 = vunpack.c.h.b16 %v2775
  %v3667 = vunpack.c.l.b16 %v2776
  %v3668 = vunpack.c.l.b16 %v2777
  %v3669 = vunpack.c.h.b16 %v2777
  %v3670 = vunpack.c.l.b16 %v2778
  %v3671 = vunpack.c.l.b16 %v2779
  %v3672 = vunpack.c.h.b16 %v2779
  %v3673 = vunpack.c.l.b16 %v2780
  %v3674 = vunpack.c.l.b16 %v2781
  %v3675 = vunpack.c.h.b16 %v2781
  %v3676 = vunpack.c.l.b16 %v2782
  %v3677 = vunpack.c.l.b16 %v2783
  %v3678 = vunpack.c.h.b16 %v2783
  %v3679 = vunpack.c.l.b16 %v2784
  %v3680 = vunpack.c.l.b16 %v2785
  %v3681 = vunpack.c.h.b16 %v2785
  %v3682 = vunpack.c.l.b16 %v2786
  %v3683 = vunpack.c.l.b16 %v2787
  %v3684 = vunpack.c.h.b16 %v2787
  %v3685 = vunpack.c.l.b16 %v2788
  %v3686 = vunpack.c.l.b16 %v2789
  %v3687 = vunpack.c.h.b16 %v2789
  %v3688 = vunpack.c.l.b16 %v2790
  %v3689 = vunpack.c.l.b16 %v2791
  %v3690 = vunpack.c.h.b16 %v2791
  %v3691 = vunpack.c.l.b16 %v2792
  %v3692 = vunpack.c.l.b16 %v2793
  %v3693 = vunpack.c.h.b16 %v2793
  %v3694 = vunpack.c.l.b16 %v2794
  %v3695 = vunpack.c.l.b16 %v2795
  %v3696 = vunpack.c.h.b16 %v2795
  %v3697 = vunpack.c.l.b16 %v2796
  %v3698 = vunpack.c.l.b16 %v2797
  %v3699 = vunpack.c.h.b16 %v2797
  %v3700 = vunpack.c.l.b16 %v2798
  %v3701 = vunpack.c.l.b16 %v2799
  %v3702 = vunpack.c.h.b16 %v2799
  %v3703 = vunpack.c.l.b16 %v2800
  %v3704 = vunpack.c.l.b16 %v2801
  %v3705 = vunpack.c.h.b16 %v2801
  %v3706 = vunpack.c.l.b16 %v2802
  %v3707 = vunpack.c.l.b16 %v2803
  %v3708 = vunpack.c.h.b16 %v2803
  %v3709 = vunpack.c.l.b16 %v2804
  %v3710 = vunpack.c.l.b16 %v2805
  %v3711 = vunpack.c.h.b16 %v2805
  %v3712 = vunpack.c.l.b16 %v2806
  %v3713 = vunpack.c.l.b16 %v2807
  %v3714 = vunpack.c.h.b16 %v2807
  %v3715 = vunpack.c.l.b16 %v2808
  %v3716 = vunpack.c.l.b16 %v2809
  %v3717 = vunpack.c.h.b16 %v2809
  %v3718 = vunpack.c.l.b16 %v2810
  %v3719 = vunpack.c.l.b16 %v2811
  %v3720 = vunpack.c.h.b16 %v2811
  %v3721 = vunpack.c.l.b16 %v2812
  %v3722 = vunpack.c.l.b16 %v2813
  %v3723 = vunpack.c.h.b16 %v2813
  %v3724 = vunpack.c.l.b16 %v2814
  %v3725 = vunpack.c.l.b16 %v2815
  %v3726 = vunpack.c.h.b16 %v2815
  %v3727 = vunpack.c.l.b16 %v2816
  %v3728 = vunpack.c.l.b16 %v2817
  %v3729 = vunpack.c.h.b16 %v2817
  %v3730 = vunpack.c.l.b16 %v2818
  %v3731 = vunpack.c.l.b16 %v2819
  %v3732 = vunpack.c.h.b16 %v2819
  %v3733 = vunpack.c.l.b16 %v2820
  %v3734 = vunpack.c.l.b16 %v2821
  %v3735 = vunpack.c.h.b16 %v2821
  %v3736 = vunpack.c.l.b16 %v2822
  %v3737 = vunpack.c.l.b16 %v2823
  %v3738 = vunpack.c.h.b16 %v2823
  %v3739 = vunpack.c.l.b16 %v2824
  %v3740 = vunpack.c.l.b16 %v2825
  %v3741 = vunpack.c.h.b16 %v2825
  %v3742 = vunpack.c.l.b16 %v2826
  %v3743 = vunpack.c.l.b16 %v2827
  %v3744 = vunpack.c.h.b16 %v2827
  %v3745 = vunpack.c.l.b16 %v2828
  %v3746 = vunpack.c.l.b16 %v2829
  %v3747 = vunpack.c.h.b16 %v2829
  %v3748 = vunpack.c.l.b16 %v2830
  %v3749 = vunpack.c.l.b16 %v2831
  %v3750 = vunpack.c.h.b16 %v2831
  %v3751 = vunpack.c.l.b16 %v2832
  %v3752 = vunpack.c.l.b16 %v2833
  %v3753 = vunpack.c.h.b16 %v2833
  %v3754 = vunpack.c.l.b16 %v2834
  %v3755 = vunpack.c.l.b16 %v2835
  %v3756 = vunpack.c.h.b16 %v2835
  %v3757 = vunpack.c.l.b16 %v2836
  %v3758 = vunpack.c.l.b16 %v2837
  %v3759 = vunpack.c.h.b16 %v2837
  %v3760 = vunpack.c.l.b16 %v2838
  %v3761 = vunpack.c.l.b16 %v2839
  %v3762 = vunpack.c.h.b16 %v2839
  %v3763 = vunpack.c.l.b16 %v2840
  %v3764 = vunpack.c.l.b16 %v2841
  %v3765 = vunpack.c.h.b16 %v2841
  %v3766 = vunpack.c.l.b16 %v2842
  %v3767 = vunpack.c.l.b16 %v2843
  %v3768 = vunpack.c.h.b16 %v2843
  %v3769 = vunpack.c.l.b16 %v2844
  %v3770 = vunpack.c.l.b16 %v2845
  %v3771 = vunpack.c.h.b16 %v2845
  %v3772 = vunpack.c.l.b16 %v2846
  %v3773 = vunpack.c.l.b16 %v2847
  %v3774 = vunpack.c.h.b16 %v2847
  %v3775 = vunpack.c.l.b16 %v2848
  %v3776 = vunpack.c.l.b16 %v2849
  %v3777 = vunpack.c.h.b16 %v2849
  %v3778 = vunpack.c.l.b16 %v2850
  %v3779 = vunpack.c.l.b16 %v2851
  %v3780 = vunpack.c.h.b16 %v2851
  %v3781 = vunpack.c.l.b16 %v2852
  %v3782 = vunpack.c.l.b16 %v2853
  %v3783 = vunpack.c.h.b16 %v2853
  %v3784 = vunpack.c.l.b16 %v2854
  %v3785 = vunpack.c.l.b16 %v2855
  %v3786 = vunpack.c.h.b16 %v2855
  %v3787 = vunpack.c.l.b16 %v2856
  %v3788 = vunpack.c.l.b16 %v2857
  %v3789 = vunpack.c.h.b16 %v2857
  %v3790 = vunpack.c.l.b16 %v2858
  %v3791 = vunpack.c.l.b16 %v2859
  %v3792 = vunpack.c.h.b16 %v2859
  %v3793 = vunpack.c.l.b16 %v2860
  %v3794 = vunpack.c.l.b16 %v2861
  %v3795 = vunpack.c.h.b16 %v2861
  %v3796 = vunpack.c.l.b16 %v2862
  %v3797 = vunpack.c.l.b16 %v2863
  %v3798 = vunpack.c.h.b16 %v2863
  %v3799 = vunpack.c.l.b16 %v2864
  %v3800 = vunpack.c.l.b16 %v2865
  %v3801 = vunpack.c.h.b16 %v2865
  %v3802 = vunpack.c.l.b16 %v2866
  %v3803 = vunpack.c.l.b16 %v2867
  %v3804 = vunpack.c.h.b16 %v2867
  %v3805 = vunpack.c.l.b16 %v2868
  %v3806 = vunpack.c.l.b16 %v2869
  %v3807 = vunpack.c.h.b16 %v2869
  %v3808 = vunpack.c.l.b16 %v2870
  %v3809 = vunpack.c.l.b16 %v2871
  %v3810 = vunpack.c.h.b16 %v2871
  %v3811 = vunpack.c.l.b16 %v2872
  %v3812 = vunpack.c.l.b16 %v2873
  %v3813 = vunpack.c.h.b16 %v2873
  %v3814 = vunpack.c.l.b16 %v2874
  %v3815 = vunpack.c.l.b16 %v2875
  %v3816 = vunpack.c.h.b16 %v2875
  %v3817 = vunpack.c.l.b16 %v2876
  %v3818 = vunpack.c.l.b16 %v2877
  %v3819 = vunpack.c.h.b16 %v2877
  %v3820 = vunpack.c.l.b16 %v2878
  %v3821 = vunpack.c.l.b16 %v2879
  %v3822 = vunpack.c.h.b16 %v2879
  %v3823 = vunpack.c.l.b16 %v2880
  %v3824 = vunpack.c.l.b16 %v2881
  %v3825 = vunpack.c.h.b16 %v2881
  %v3826 = vunpack.c.l.b16 %v2882
  %v3827 = vunpack.c.l.b16 %v2883
  %v3828 = vunpack.c.h.b16 %v2883
  %v3829 = vunpack.c.l.b16 %v2884
  %v3830 = vunpack.c.l.b16 %v2885
  %v3831 = vunpack.c.h.b16 %v2885
  %v3832 = vunpack.c.l.b16 %v2886
  %v3833 = vunpack.c.l.b16 %v2887
  %v3834 = vunpack.c.h.b16 %v2887
  %v3835 = vunpack.c.l.b16 %v2888
  %v3836 = vunpack.c.l.b16 %v2889
  %v3837 = vunpack.c.h.b16 %v2889
  %v3838 = vunpack.c.l.b16 %v2890
  %v3839 = vunpack.c.l.b16 %v2891
  %v3840 = vunpack.c.h.b16 %v2891
  %v3841 = vunpack.c.l.b16 %v2892
  %v3842 = vunpack.c.l.b16 %v2893
  %v3843 = vunpack.c.h.b16 %v2893
  %v3844 = vunpack.c.l.b16 %v2894
  %v3845 = vunpack.c.l.b16 %v2895
  %v3846 = vunpack.c.h.b16 %v2895
  %v3847 = vunpack.c.l.b16 %v2896
  %v3848 = vunpack.c.l.b16 %v2897
  %v3849 = vunpack.c.h.b16 %v2897
  %v3850 = vunpack.c.l.b16 %v2898
  %v3851 = vunpack.c.l.b16 %v2899
  %v3852 = vunpack.c.h.b16 %v2899
  %v3853 = vunpack.c.l.b16 %v2900
  %v3854 = vunpack.c.l.b16 %v2901
  %v3855 = vunpack.c.h.b16 %v2901
  %v3856 = vunpack.c.l.b16 %v2902
  %v3857 = vunpack.c.l.b16 %v2903
  %v3858 = vunpack.c.h.b16 %v2903
  %v3859 = vunpack.c.l.b16 %v2904
  %v3860 = vunpack.c.l.b16 %v2905
  %v3861 = vunpack.c.h.b16 %v2905
  %v3862 = vunpack.c.l.b16 %v2906
  %v3863 = vunpack.c.l.b16 %v2907
  %v3864 = vunpack.c.h.b16 %v2907
  %v3865 = vunpack.c.l.b16 %v2908
  %v3866 = vunpack.c.l.b16 %v2909
  %v3867 = vunpack.c.h.b16 %v2909
  %v3868 = vunpack.c.l.b16 %v2910
  %v3869 = vunpack.c.l.b16 %v2911
  %v3870 = vunpack.c.h.b16 %v2911
  %v3871 = vunpack.c.l.b16 %v2912
  %v3872 = vunpack.c.l.b16 %v2913
  %v3873 = vunpack.c.h.b16 %v2913
  %v3874 = vunpack.c.l.b16 %v2914
  %v3875 = vunpack.c.l.b16 %v2915
  %v3876 = vunpack.c.h.b16 %v2915
  %v3877 = vunpack.c.l.b16 %v2916
  %v3878 = vunpack.c.l.b16 %v2917
  %v3879 = vunpack.c.h.b16 %v2917
  %v3880 = vunpack.c.l.b16 %v2918
  %v3881 = vunpack.c.l.b16 %v2919
  %v3882 = vunpack.c.h.b16 %v2919
  %v3883 = vunpack.c.l.b16 %v2920
  %v3884 = vunpack.c.l.b16 %v2921
  %v3885 = vunpack.c.h.b16 %v2921
  %v3886 = vunpack.c.l.b16 %v2922
  %v3887 = vunpack.c.l.b16 %v2923
  %v3888 = vunpack.c.h.b16 %v2923
  %v3889 = vunpack.c.l.b16 %v2924
  %v3890 = vunpack.c.l.b16 %v2925
  %v3891 = vunpack.c.h.b16 %v2925
  %v3892 = vunpack.c.l.b16 %v2926
  %v3893 = vunpack.c.l.b16 %v2927
  %v3894 = vunpack.c.h.b16 %v2927
  %v3895 = vunpack.c.l.b16 %v2928
  %v3896 = vunpack.c.l.b16 %v2929
  %v3897 = vunpack.c.h.b16 %v2929
  %v3898 = vunpack.c.l.b16 %v2930
  %v3899 = vunpack.c.l.b16 %v2931
  %v3900 = vunpack.c.h.b16 %v2931
  %v3901 = vunpack.c.l.b16 %v2932
  %v3902 = vunpack.c.l.b16 %v2933
  %v3903 = vunpack.c.h.b16 %v2933
  %v3904 = vunpack.c.l.b16 %v2934
  %v3905 = vunpack.c.l.b16 %v2935
  %v3906 = vunpack.c.h.b16 %v2935
  %v3907 = vunpack.c.l.b16 %v2936
  %v3908 = vunpack.c.l.b16 %v2937
  %v3909 = vunpack.c.h.b16 %v2937
  %v3910 = vunpack.c.l.b16 %v2938
  %v3911 = vunpack.c.l.b16 %v2939
  %v3912 = vunpack.c.h.b16 %v2939
  %v3913 = vunpack.c.l.b16 %v2940
  %v3914 = vunpack.c.l.b16 %v2941
  %v3915 = vunpack.c.h.b16 %v2941
  %v3916 = vunpack.c.l.b16 %v2942
  %v3917 = vunpack.c.l.b16 %v2943
  %v3918 = vunpack.c.h.b16 %v2943
  %v3919 = vunpack.c.l.b16 %v2944
  %v3920 = vunpack.c.l.b16 %v2945
  %v3921 = vunpack.c.h.b16 %v2945
  %v3922 = vunpack.c.l.b16 %v2946
  %v3923 = vunpack.c.l.b16 %v2947
  %v3924 = vunpack.c.h.b16 %v2947
  %v3925 = vunpack.c.l.b16 %v2948
  %v3926 = vpack.c.b16 %v3353, %v3350
  %v3927 = vpack.c.b16 %v3354, %v3351
  %v3928 = vpack.c.b16 %v3355, %v3352
  %v3929 = vpack.c.b16 %v3359, %v3356
  %v3930 = vpack.c.b16 %v3360, %v3357
  %v3931 = vpack.c.b16 %v3361, %v3358
  %v3932 = vpack.c.b16 %v3365, %v3362
  %v3933 = vpack.c.b16 %v3366, %v3363
  %v3934 = vpack.c.b16 %v3367, %v3364
  %v3935 = vpack.c.b16 %v3371, %v3368
  %v3936 = vpack.c.b16 %v3372, %v3369
  %v3937 = vpack.c.b16 %v3373, %v3370
  %v3938 = vpack.c.b16 %v3377, %v3374
  %v3939 = vpack.c.b16 %v3378, %v3375
  %v3940 = vpack.c.b16 %v3379, %v3376
  %v3941 = vpack.c.b16 %v3383, %v3380
  %v3942 = vpack.c.b16 %v3384, %v3381
  %v3943 = vpack.c.b16 %v3385, %v3382
  %v3944 = vpack.c.b16 %v3389, %v3386
  %v3945 = vpack.c.b16 %v3390, %v3387
  %v3946 = vpack.c.b16 %v3391, %v3388
  %v3947 = vpack.c.b16 %v3395, %v3392
  %v3948 = vpack.c.b16 %v3396, %v3393
  %v3949 = vpack.c.b16 %v3397, %v3394
  %v3950 = vpack.c.b16 %v3401, %v3398
  %v3951 = vpack.c.b16 %v3402, %v3399
  %v3952 = vpack.c.b16 %v3403, %v3400
  %v3953 = vpack.c.b16 %v3407, %v3404
  %v3954 = vpack.c.b16 %v3408, %v3405
  %v3955 = vpack.c.b16 %v3409, %v3406
  %v3956 = vpack.c.b16 %v3413, %v3410
  %v3957 = vpack.c.b16 %v3414, %v3411
  %v3958 = vpack.c.b16 %v3415, %v3412
  %v3959 = vpack.c.b16 %v3419, %v3416
  %v3960 = vpack.c.b16 %v3420, %v3417
  %v3961 = vpack.c.b16 %v3421, %v3418
  %v3962 = vpack.c.b16 %v3425, %v3422
  %v3963 = vpack.c.b16 %v3426, %v3423
  %v3964 = vpack.c.b16 %v3427, %v3424
  %v3965 = vpack.c.b16 %v3431, %v3428
  %v3966 = vpack.c.b16 %v3432, %v3429
  %v3967 = vpack.c.b16 %v3433, %v3430
  %v3968 = vpack.c.b16 %v3437, %v3434
  %v3969 = vpack.c.b16 %v3438, %v3435
  %v3970 = vpack.c.b16 %v3439, %v3436
  %v3971 = vpack.c.b16 %v3443, %v3440
  %v3972 = vpack.c.b16 %v3444, %v3441
  %v3973 = vpack.c.b16 %v3445, %v3442
  %v3974 = vpack.c.b16 %v3449, %v3446
  %v3975 = vpack.c.b16 %v3450, %v3447
  %v3976 = vpack.c.b16 %v3451, %v3448
  %v3977 = vpack.c.b16 %v3455, %v3452
  %v3978 = vpack.c.b16 %v3456, %v3453
  %v3979 = vpack.c.b16 %v3457, %v3454
  %v3980 = vpack.c.b16 %v3461, %v3458
  %v3981 = vpack.c.b16 %v3462, %v3459
  %v3982 = vpack.c.b16 %v3463, %v3460
  %v3983 = vpack.c.b16 %v3467, %v3464
  %v3984 = vpack.c.b16 %v3468, %v3465
  %v3985 = vpack.c.b16 %v3469, %v3466
  %v3986 = vpack.c.b16 %v3473, %v3470
  %v3987 = vpack.c.b16 %v3474, %v3471
  %v3988 = vpack.c.b16 %v3475, %v3472
  %v3989 = vpack.c.b16 %v3479, %v3476
  %v3990 = vpack.c.b16 %v3480, %v3477
  %v3991 = vpack.c.b16 %v3481, %v3478
  %v3992 = vpack.c.b16 %v3485, %v3482
  %v3993 = vpack.c.b16 %v3486, %v3483
  %v3994 = vpack.c.b16 %v3487, %v3484
  %v3995 = vpack.c.b16 %v3491, %v3488
  %v3996 = vpack.c.b16 %v3492, %v3489
  %v3997 = vpack.c.b16 %v3493, %v3490
  %v3998 = vpack.c.b16 %v3497, %v3494
  %v3999 = vpack.c.b16 %v3498, %v3495
  %v4000 = vpack.c.b16 %v3499, %v3496
  %v4001 = vpack.c.b16 %v3503, %v3500
  %v4002 = vpack.c.b16 %v3504, %v3501
  %v4003 = vpack.c.b16 %v3505, %v3502
  %v4004 = vpack.c.b16 %v3509, %v3506
  %v4005 = vpack.c.b16 %v3510, %v3507
  %v4006 = vpack.c.b16 %v3511, %v3508
  %v4007 = vpack.c.b16 %v3515, %v3512
  %v4008 = vpack.c.b16 %v3516, %v3513
  %v4009 = vpack.c.b16 %v3517, %v3514
  %v4010 = vpack.c.b16 %v3521, %v3518
  %v4011 = vpack.c.b16 %v3522, %v3519
  %v4012 = vpack.c.b16 %v3523, %v3520
  %v4013 = vpack.c.b16 %v3527, %v3524
  %v4014 = vpack.c.b16 %v3528, %v3525
  %v4015 = vpack.c.b16 %v3529, %v3526
  %v4016 = vpack.c.b16 %v3533, %v3530
  %v4017 = vpack.c.b16 %v3534, %v3531
  %v4018 = vpack.c.b16 %v3535, %v3532
  %v4019 = vpack.c.b16 %v3539, %v3536
  %v4020 = vpack.c.b16 %v3540, %v3537
  %v4021 = vpack.c.b16 %v3541, %v3538
  %v4022 = vpack.c.b16 %v3545, %v3542
  %v4023 = vpack.c.b16 %v3546, %v3543
  %v4024 = vpack.c.b16 %v3547, %v3544
  %v4025 = vpack.c.b16 %v3551, %v3548
  %v4026 = vpack.c.b16 %v3552, %v3549
  %v4027 = vpack.c.b16 %v3553, %v3550
  %v4028 = vpack.c.b16 %v3557, %v3554
  %v4029 = vpack.c.b16 %v3558, %v3555
  %v4030 = vpack.c.b16 %v3559, %v3556
  %v4031 = vpack.c.b16 %v3563, %v3560
  %v4032 = vpack.c.b16 %v3564, %v3561
  %v4033 = vpack.c.b16 %v3565, %v3562
  %v4034 = vpack.c.b16 %v3569, %v3566
  %v4035 = vpack.c.b16 %v3570, %v3567
  %v4036 = vpack.c.b16 %v3571, %v3568
  %v4037 = vpack.c.b16 %v3575, %v3572
  %v4038 = vpack.c.b16 %v3576, %v3573
  %v4039 = vpack.c.b16 %v3577, %v3574
  %v4040 = vpack.c.b16 %v3581, %v3578
  %v4041 = vpack.c.b16 %v3582, %v3579
  %v4042 = vpack.c.b16 %v3583, %v3580
  %v4043 = vpack.c.b16 %v3587, %v3584
  %v4044 = vpack.c.b16 %v3588, %v3585
  %v4045 = vpack.c.b16 %v3589, %v3586
  %v4046 = vpack.c.b16 %v3593, %v3590
  %v4047 = vpack.c.b16 %v3594, %v3591
  %v4048 = vpack.c.b16 %v3595, %v3592
  %v4049 = vpack.c.b16 %v3599, %v3596
  %v4050 = vpack.c.b16 %v3600, %v3597
  %v4051 = vpack.c.b16 %v3601, %v3598
  %v4052 = vpack.c.b16 %v3605, %v3602
  %v4053 = vpack.c.b16 %v3606, %v3603
  %v4054 = vpack.c.b16 %v3607, %v3604
  %v4055 = vpack.c.b16 %v3611, %v3608
  %v4056 = vpack.c.b16 %v3612, %v3609
  %v4057 = vpack.c.b16 %v3613, %v3610
  %v4058 = vpack.c.b16 %v3617, %v3614
  %v4059 = vpack.c.b16 %v3618, %v3615
  %v4060 = vpack.c.b16 %v3619, %v3616
  %v4061 = vpack.c.b16 %v3623, %v3620
  %v4062 = vpack.c.b16 %v3624, %v3621
  %v4063 = vpack.c.b16 %v3625, %v3622
  %v4064 = vpack.c.b16 %v3629, %v3626
  %v4065 = vpack.c.b16 %v3630, %v3627
  %v4066 = vpack.c.b16 %v3631, %v3628
  %v4067 = vpack.c.b16 %v3635, %v3632
  %v4068 = vpack.c.b16 %v3636, %v3633
  %v4069 = vpack.c.b16 %v3637, %v3634
  %v4070 = vpack.c.b16 %v3641, %v3638
  %v4071 = vpack.c.b16 %v3642, %v3639
  %v4072 = vpack.c.b16 %v3643, %v3640
  %v4073 = vpack.c.b16 %v3647, %v3644
  %v4074 = vpack.c.b16 %v3648, %v3645
  %v4075 = vpack.c.b16 %v3649, %v3646
  %v4076 = vpack.c.b16 %v3653, %v3650
  %v4077 = vpack.c.b16 %v3654, %v3651
  %v4078 = vpack.c.b16 %v3655, %v3652
  %v4079 = vpack.c.b16 %v3659, %v3656
  %v4080 = vpack.c.b16 %v3660, %v3657
  %v4081 = vpack.c.b16 %v3661, %v3658
  %v4082 = vpack.c.b16 %v3665, %v3662
  %v4083 = vpack.c.b16 %v3666, %v3663
  %v4084 = vpack.c.b16 %v3667, %v3664
  %v4085 = vpack.c.b16 %v3671, %v3668
  %v4086 = vpack.c.b16 %v3672, %v3669
  %v4087 = vpack.c.b16 %v3673, %v3670
  %v4088 = vpack.c.b16 %v3677, %v3674
  %v4089 = vpack.c.b16 %v3678, %v3675
  %v4090 = vpack.c.b16 %v3679, %v3676
  %v4091 = vpack.c.b16 %v3683, %v3680
  %v4092 = vpack.c.b16 %v3684, %v3681
  %v4093 = vpack.c.b16 %v3685, %v3682
  %v4094 = vpack.c.b16 %v3689, %v3686
  %v4095 = vpack.c.b16 %v3690, %v3687
  %v4096 = vpack.c.b16 %v3691, %v3688
  %v4097 = vpack.c.b16 %v3695, %v3692
  %v4098 = vpack.c.b16 %v3696, %v3693
  %v4099 = vpack.c.b16 %v3697, %v3694
  %v4100 = vpack.c.b16 %v3701, %v3698
  %v4101 = vpack.c.b16 %v3702, %v3699
  %v4102 = vpack.c.b16 %v3703, %v3700
  %v4103 = vpack.c.b16 %v3707, %v3704
  %v4104 = vpack.c.b16 %v3708, %v3705
  %v4105 = vpack.c.b16 %v3709, %v3706
  %v4106 = vpack.c.b16 %v3713, %v3710
  %v4107 = vpack.c.b16 %v3714, %v3711
  %v4108 = vpack.c.b16 %v3715, %v3712
  %v4109 = vpack.c.b16 %v3719, %v3716
  %v4110 = vpack.c.b16 %v3720, %v3717
  %v4111 = vpack.c.b16 %v3721, %v3718
  %v4112 = vpack.c.b16 %v3725, %v3722
  %v4113 = vpack.c.b16 %v3726, %v3723
  %v4114 = vpack.c.b16 %v3727, %v3724
  %v4115 = vpack.c.b16 %v3731, %v3728
  %v4116 = vpack.c.b16 %v3732, %v3729
  %v4117 = vpack.c.b16 %v3733, %v3730
  %v4118 = vpack.c.b16 %v3737, %v3734
  %v4119 = vpack.c.b16 %v3738, %v3735
  %v4120 = vpack.c.b16 %v3739, %v3736
  %v4121 = vpack.c.b16 %v3743, %v3740
  %v4122 = vpack.c.b16 %v3744, %v3741
  %v4123 = vpack.c.b16 %v3745, %v3742
  %v4124 = vpack.c.b16 %v3749, %v3746
  %v4125 = vpack.c.b16 %v3750, %v3747
  %v4126 = vpack.c.b16 %v3751, %v3748
  %v4127 = vpack.c.b16 %v3755, %v3752
  %v4128 = vpack.c.b16 %v3756, %v3753
  %v4129 = vpack.c.b16 %v3757, %v3754
  %v4130 = vpack.c.b16 %v3761, %v3758
  %v4131 = vpack.c.b16 %v3762, %v3759
  %v4132 = vpack.c.b16 %v3763, %v3760
  %v4133 = vpack.c.b16 %v3767, %v3764
  %v4134 = vpack.c.b16 %v3768, %v3765
  %v4135 = vpack.c.b16 %v3769, %v3766
  %v4136 = vpack.c.b16 %v3773, %v3770
  %v4137 = vpack.c.b16 %v3774, %v3771
  %v4138 = vpack.c.b16 %v3775, %v3772
  %v4139 = vpack.c.b16 %v3779, %v3776
  %v4140 = vpack.c.b16 %v3780, %v3777
  %v4141 = vpack.c.b16 %v3781, %v3778
  %v4142 = vpack.c.b16 %v3785, %v3782
  %v4143 = vpack.c.b16 %v3786, %v3783
  %v4144 = vpack.c.b16 %v3787, %v3784
  %v4145 = vpack.c.b16 %v3791, %v3788
  %v4146 = vpack.c.b16 %v3792, %v3789
  %v4147 = vpack.c.b16 %v3793, %v3790
  %v4148 = vpack.c.b16 %v3797, %v3794
  %v4149 = vpack.c.b16 %v3798, %v3795
  %v4150 = vpack.c.b16 %v3799, %v3796
  %v4151 = vpack.c.b16 %v3803, %v3800
  %v4152 = vpack.c.b16 %v3804, %v3801
  %v4153 = vpack.c.b16 %v3805, %v3802
  %v4154 = vpack.c.b16 %v3809, %v3806
  %v4155 = vpack.c.b16 %v3810, %v3807
  %v4156 = vpack.c.b16 %v3811, %v3808
  %v4157 = vpack.c.b16 %v3815, %v3812
  %v4158 = vpack.c.b16 %v3816, %v3813
  %v4159 = vpack.c.b16 %v3817, %v3814
  %v4160 = vpack.c.b16 %v3821, %v3818
  %v4161 = vpack.c.b16 %v3822, %v3819
  %v4162 = vpack.c.b16 %v3823, %v3820
  %v4163 = vpack.c.b16 %v3827, %v3824
  %v4164 = vpack.c.b16 %v3828, %v3825
  %v4165 = vpack.c.b16 %v3829, %v3826
  %v4166 = vpack.c.b16 %v3833, %v3830
  %v4167 = vpack.c.b16 %v3834, %v3831
  %v4168 = vpack.c.b16 %v3835, %v3832
  %v4169 = vpack.c.b16 %v3839, %v3836
  %v4170 = vpack.c.b16 %v3840, %v3837
  %v4171 = vpack.c.b16 %v3841, %v3838
  %v4172 = vpack.c.b16 %v3845, %v3842
  %v4173 = vpack.c.b16 %v3846, %v3843
  %v4174 = vpack.c.b16 %v3847, %v3844
  %v4175 = vpack.c.b16 %v3851, %v3848
  %v4176 = vpack.c.b16 %v3852, %v3849
  %v4177 = vpack.c.b16 %v3853, %v3850
  %v4178 = vpack.c.b16 %v3857, %v3854
  %v4179 = vpack.c.b16 %v3858, %v3855
  %v4180 = vpack.c.b16 %v3859, %v3856
  %v4181 = vpack.c.b16 %v3863, %v3860
  %v4182 = vpack.c.b16 %v3864, %v3861
  %v4183 = vpack.c.b16 %v3865, %v3862
  %v4184 = vpack.c.b16 %v3869, %v3866
  %v4185 = vpack.c.b16 %v3870, %v3867
  %v4186 = vpack.c.b16 %v3871, %v3868
  %v4187 = vpack.c.b16 %v3875, %v3872
  %v4188 = vpack.c.b16 %v3876, %v3873
  %v4189 = vpack.c.b16 %v3877, %v3874
  %v4190 = vpack.c.b16 %v3881, %v3878
  %v4191 = vpack.c.b16 %v3882, %v3879
  %v4192 = vpack.c.b16 %v3883, %v3880
  %v4193 = vpack.c.b16 %v3887, %v3884
  %v4194 = vpack.c.b16 %v3888, %v3885
  %v4195 = vpack.c.b16 %v3889, %v3886
  %v4196 = vpack.c.b16 %v3893, %v3890
  %v4197 = vpack.c.b16 %v3894, %v3891
  %v4198 = vpack.c.b16 %v3895, %v3892
  %v4199 = vpack.c.b16 %v3899, %v3896
  %v4200 = vpack.c.b16 %v3900, %v3897
  %v4201 = vpack.c.b16 %v3901, %v3898
  %v4202 = vpack.c.b16 %v3905, %v3902
  %v4203 = vpack.c.b16 %v3906, %v3903
  %v4204 = vpack.c.b16 %v3907, %v3904
  %v4205 = vpack.c.b16 %v3911, %v3908
  %v4206 = vpack.c.b16 %v3912, %v3909
  %v4207 = vpack.c.b16 %v3913, %v3910
  %v4208 = vpack.c.b16 %v3917, %v3914
  %v4209 = vpack.c.b16 %v3918, %v3915
  %v4210 = vpack.c.b16 %v3919, %v3916
  %v4211 = vpack.c.b16 %v3923, %v3920
  %v4212 = vpack.c.b16 %v3924, %v3921
  %v4213 = vpack.c.b16 %v3925, %v3922
  %4502 = vmatprep.subr.bf16.mxu0 %v3948
  %4503 = vmatpush1.bf16.msra.mxu0 %v3947
  %4504 = vmatprep.subr.bf16.mxu0 %v3945
  %4505 = vmatpush1.bf16.msra.mxu0 %v3944
  %4506 = vmatprep.subr.bf16.mxu0 %v3942
  %4507 = vmatpush1.bf16.msra.mxu0 %v3941
  %4508 = vmatprep.subr.bf16.mxu0 %v3939
  %4509 = vmatpush1.bf16.msra.mxu0 %v3938
  %4510 = vmatprep.subr.bf16.mxu0 %v3936
  %4511 = vmatpush1.bf16.msra.mxu0 %v3935
  %4512 = vmatprep.subr.bf16.mxu0 %v3933
  %4513 = vmatpush1.bf16.msra.mxu0 %v3932
  %4514 = vmatprep.subr.bf16.mxu0 %v3930
  %4515 = vmatpush1.bf16.msra.mxu0 %v3929
  %4516 = vmatprep.subr.bf16.mxu0 %v3927
  %4517 = vmatpush1.bf16.msra.mxu0 %v3926
  %4518 = vmatprep.subr.bf16.mxu0 %v3972
  %4519 = vmatpush2.bf16.msra.mxu0 %v3971
  %4520 = vmatprep.subr.bf16.mxu0 %v3969
  %4521 = vmatpush2.bf16.msra.mxu0 %v3968
  %4522 = vmatprep.subr.bf16.mxu0 %v3966
  %4523 = vmatpush2.bf16.msra.mxu0 %v3965
  %4524 = vmatprep.subr.bf16.mxu0 %v3963
  %4525 = vmatpush2.bf16.msra.mxu0 %v3962
  %4526 = vmatprep.subr.bf16.mxu0 %v3960
  %4527 = vmatpush2.bf16.msra.mxu0 %v3959
  %4528 = vmatprep.subr.bf16.mxu0 %v3957
  %4529 = vmatpush2.bf16.msra.mxu0 %v3956
  %4530 = vmatprep.subr.bf16.mxu0 %v3954
  %4531 = vmatpush2.bf16.msra.mxu0 %v3953
  %4532 = vmatprep.subr.bf16.mxu0 %v3951
  %4533 = vmatpush2.bf16.msra.mxu0 %v3950
  %4534 = vmatprep.mubr.bf16.mxu0 %v2554
  %4535 = vmatmul.mubr.bf16.gmra.mxu0 %v2553
  %v4536 = vpop.f32.mrf.mxu0
  %v4537 = vadd.f32 %v2954, %v4536
  %v4538 = vpop.f32.mrf.mxu0
  %v4539 = vadd.f32 %v2958, %v4538
  %v4540 = vpop.f32.mrf.mxu0
  %v4541 = vadd.f32 %v2954, %v4540
  %v4542 = vpop.f32.mrf.mxu0
  %v4543 = vadd.f32 %v2958, %v4542
  %4544 = vdwg.mxu0
  %4545 = vmatprep.subr.bf16.mxu0 %v3996
  %4546 = vmatpush1.bf16.msra.mxu0 %v3995
  %4547 = vmatprep.subr.bf16.mxu0 %v3993
  %4548 = vmatpush1.bf16.msra.mxu0 %v3992
  %4549 = vmatprep.subr.bf16.mxu0 %v3990
  %4550 = vmatpush1.bf16.msra.mxu0 %v3989
  %4551 = vmatprep.subr.bf16.mxu0 %v3987
  %4552 = vmatpush1.bf16.msra.mxu0 %v3986
  %4553 = vmatprep.subr.bf16.mxu0 %v3984
  %4554 = vmatpush1.bf16.msra.mxu0 %v3983
  %4555 = vmatprep.subr.bf16.mxu0 %v3981
  %4556 = vmatpush1.bf16.msra.mxu0 %v3980
  %4557 = vmatprep.subr.bf16.mxu0 %v3978
  %4558 = vmatpush1.bf16.msra.mxu0 %v3977
  %4559 = vmatprep.subr.bf16.mxu0 %v3975
  %4560 = vmatpush1.bf16.msra.mxu0 %v3974
  %4561 = vmatprep.subr.bf16.mxu0 %v4020
  %4562 = vmatpush2.bf16.msra.mxu0 %v4019
  %4563 = vmatprep.subr.bf16.mxu0 %v4017
  %4564 = vmatpush2.bf16.msra.mxu0 %v4016
  %4565 = vmatprep.subr.bf16.mxu0 %v4014
  %4566 = vmatpush2.bf16.msra.mxu0 %v4013
  %4567 = vmatprep.subr.bf16.mxu0 %v4011
  %4568 = vmatpush2.bf16.msra.mxu0 %v4010
  %4569 = vmatprep.subr.bf16.mxu0 %v4008
  %4570 = vmatpush2.bf16.msra.mxu0 %v4007
  %4571 = vmatprep.subr.bf16.mxu0 %v4005
  %4572 = vmatpush2.bf16.msra.mxu0 %v4004
  %4573 = vmatprep.subr.bf16.mxu0 %v4002
  %4574 = vmatpush2.bf16.msra.mxu0 %v4001
  %4575 = vmatprep.subr.bf16.mxu0 %v3999
  %4576 = vmatpush2.bf16.msra.mxu0 %v3998
  %4577 = vmatprep.mubr.bf16.mxu0 %v2556
  %4578 = vmatmul.mubr.bf16.gmra.mxu0 %v2555
  %v4579 = vpop.f32.mrf.mxu0
  %v4580 = vadd.f32 %v4537, %v4579
  %v4581 = vpop.f32.mrf.mxu0
  %v4582 = vadd.f32 %v4539, %v4581
  %v4583 = vpop.f32.mrf.mxu0
  %v4584 = vadd.f32 %v4541, %v4583
  %v4585 = vpop.f32.mrf.mxu0
  %v4586 = vadd.f32 %v4543, %v4585
  %4587 = vdwg.mxu0
  %4588 = vmatprep.subr.bf16.mxu0 %v4044
  %4589 = vmatpush1.bf16.msra.mxu0 %v4043
  %4590 = vmatprep.subr.bf16.mxu0 %v4041
  %4591 = vmatpush1.bf16.msra.mxu0 %v4040
  %4592 = vmatprep.subr.bf16.mxu0 %v4038
  %4593 = vmatpush1.bf16.msra.mxu0 %v4037
  %4594 = vmatprep.subr.bf16.mxu0 %v4035
  %4595 = vmatpush1.bf16.msra.mxu0 %v4034
  %4596 = vmatprep.subr.bf16.mxu0 %v4032
  %4597 = vmatpush1.bf16.msra.mxu0 %v4031
  %4598 = vmatprep.subr.bf16.mxu0 %v4029
  %4599 = vmatpush1.bf16.msra.mxu0 %v4028
  %4600 = vmatprep.subr.bf16.mxu0 %v4026
  %4601 = vmatpush1.bf16.msra.mxu0 %v4025
  %4602 = vmatprep.subr.bf16.mxu0 %v4023
  %4603 = vmatpush1.bf16.msra.mxu0 %v4022
  %4604 = vmatprep.subr.bf16.mxu0 %v4068
  %4605 = vmatpush2.bf16.msra.mxu0 %v4067
  %4606 = vmatprep.subr.bf16.mxu0 %v4065
  %4607 = vmatpush2.bf16.msra.mxu0 %v4064
  %4608 = vmatprep.subr.bf16.mxu0 %v4062
  %4609 = vmatpush2.bf16.msra.mxu0 %v4061
  %4610 = vmatprep.subr.bf16.mxu0 %v4059
  %4611 = vmatpush2.bf16.msra.mxu0 %v4058
  %4612 = vmatprep.subr.bf16.mxu0 %v4056
  %4613 = vmatpush2.bf16.msra.mxu0 %v4055
  %4614 = vmatprep.subr.bf16.mxu0 %v4053
  %4615 = vmatpush2.bf16.msra.mxu0 %v4052
  %4616 = vmatprep.subr.bf16.mxu0 %v4050
  %4617 = vmatpush2.bf16.msra.mxu0 %v4049
  %4618 = vmatprep.subr.bf16.mxu0 %v4047
  %4619 = vmatpush2.bf16.msra.mxu0 %v4046
  %4620 = vmatprep.mubr.bf16.mxu0 %v2558
  %4621 = vmatmul.mubr.bf16.gmra.mxu0 %v2557
  %v4622 = vpop.f32.mrf.mxu0
  %v4623 = vadd.f32 %v4580, %v4622
  %v4624 = vpop.f32.mrf.mxu0
  %v4625 = vadd.f32 %v4582, %v4624
  %v4626 = vpop.f32.mrf.mxu0
  %v4627 = vadd.f32 %v4584, %v4626
  %v4628 = vpop.f32.mrf.mxu0
  %v4629 = vadd.f32 %v4586, %v4628
  %4630 = vdwg.mxu0
  %4631 = vmatprep.subr.bf16.mxu0 %v4092
  %4632 = vmatpush1.bf16.msra.mxu0 %v4091
  %4633 = vmatprep.subr.bf16.mxu0 %v4089
  %4634 = vmatpush1.bf16.msra.mxu0 %v4088
  %4635 = vmatprep.subr.bf16.mxu0 %v4086
  %4636 = vmatpush1.bf16.msra.mxu0 %v4085
  %4637 = vmatprep.subr.bf16.mxu0 %v4083
  %4638 = vmatpush1.bf16.msra.mxu0 %v4082
  %4639 = vmatprep.subr.bf16.mxu0 %v4080
  %4640 = vmatpush1.bf16.msra.mxu0 %v4079
  %4641 = vmatprep.subr.bf16.mxu0 %v4077
  %4642 = vmatpush1.bf16.msra.mxu0 %v4076
  %4643 = vmatprep.subr.bf16.mxu0 %v4074
  %4644 = vmatpush1.bf16.msra.mxu0 %v4073
  %4645 = vmatprep.subr.bf16.mxu0 %v4071
  %4646 = vmatpush1.bf16.msra.mxu0 %v4070
  %4647 = vmatprep.subr.bf16.mxu0 %v4116
  %4648 = vmatpush2.bf16.msra.mxu0 %v4115
  %4649 = vmatprep.subr.bf16.mxu0 %v4113
  %4650 = vmatpush2.bf16.msra.mxu0 %v4112
  %4651 = vmatprep.subr.bf16.mxu0 %v4110
  %4652 = vmatpush2.bf16.msra.mxu0 %v4109
  %4653 = vmatprep.subr.bf16.mxu0 %v4107
  %4654 = vmatpush2.bf16.msra.mxu0 %v4106
  %4655 = vmatprep.subr.bf16.mxu0 %v4104
  %4656 = vmatpush2.bf16.msra.mxu0 %v4103
  %4657 = vmatprep.subr.bf16.mxu0 %v4101
  %4658 = vmatpush2.bf16.msra.mxu0 %v4100
  %4659 = vmatprep.subr.bf16.mxu0 %v4098
  %4660 = vmatpush2.bf16.msra.mxu0 %v4097
  %4661 = vmatprep.subr.bf16.mxu0 %v4095
  %4662 = vmatpush2.bf16.msra.mxu0 %v4094
  %4663 = vmatprep.mubr.bf16.mxu0 %v2560
  %4664 = vmatmul.mubr.bf16.gmra.mxu0 %v2559
  %v4665 = vpop.f32.mrf.mxu0
  %v4666 = vadd.f32 %v4623, %v4665
  %v4667 = vpop.f32.mrf.mxu0
  %v4668 = vadd.f32 %v4625, %v4667
  %v4669 = vpop.f32.mrf.mxu0
  %v4670 = vadd.f32 %v4627, %v4669
  %v4671 = vpop.f32.mrf.mxu0
  %v4672 = vadd.f32 %v4629, %v4671
  %4673 = vdwg.mxu0
  %4674 = vmatprep.subr.bf16.mxu0 %v4140
  %4675 = vmatpush1.bf16.msra.mxu0 %v4139
  %4676 = vmatprep.subr.bf16.mxu0 %v4137
  %4677 = vmatpush1.bf16.msra.mxu0 %v4136
  %4678 = vmatprep.subr.bf16.mxu0 %v4134
  %4679 = vmatpush1.bf16.msra.mxu0 %v4133
  %4680 = vmatprep.subr.bf16.mxu0 %v4131
  %4681 = vmatpush1.bf16.msra.mxu0 %v4130
  %4682 = vmatprep.subr.bf16.mxu0 %v4128
  %4683 = vmatpush1.bf16.msra.mxu0 %v4127
  %4684 = vmatprep.subr.bf16.mxu0 %v4125
  %4685 = vmatpush1.bf16.msra.mxu0 %v4124
  %4686 = vmatprep.subr.bf16.mxu0 %v4122
  %4687 = vmatpush1.bf16.msra.mxu0 %v4121
  %4688 = vmatprep.subr.bf16.mxu0 %v4119
  %4689 = vmatpush1.bf16.msra.mxu0 %v4118
  %4690 = vmatprep.subr.bf16.mxu0 %v4164
  %4691 = vmatpush2.bf16.msra.mxu0 %v4163
  %4692 = vmatprep.subr.bf16.mxu0 %v4161
  %4693 = vmatpush2.bf16.msra.mxu0 %v4160
  %4694 = vmatprep.subr.bf16.mxu0 %v4158
  %4695 = vmatpush2.bf16.msra.mxu0 %v4157
  %4696 = vmatprep.subr.bf16.mxu0 %v4155
  %4697 = vmatpush2.bf16.msra.mxu0 %v4154
  %4698 = vmatprep.subr.bf16.mxu0 %v4152
  %4699 = vmatpush2.bf16.msra.mxu0 %v4151
  %4700 = vmatprep.subr.bf16.mxu0 %v4149
  %4701 = vmatpush2.bf16.msra.mxu0 %v4148
  %4702 = vmatprep.subr.bf16.mxu0 %v4146
  %4703 = vmatpush2.bf16.msra.mxu0 %v4145
  %4704 = vmatprep.subr.bf16.mxu0 %v4143
  %4705 = vmatpush2.bf16.msra.mxu0 %v4142
  %4706 = vmatprep.mubr.bf16.mxu0 %v2562
  %4707 = vmatmul.mubr.bf16.gmra.mxu0 %v2561
  %v4708 = vpop.f32.mrf.mxu0
  %v4709 = vadd.f32 %v4666, %v4708
  %v4710 = vpop.f32.mrf.mxu0
  %v4711 = vadd.f32 %v4668, %v4710
  %v4712 = vpop.f32.mrf.mxu0
  %v4713 = vadd.f32 %v4670, %v4712
  %v4714 = vpop.f32.mrf.mxu0
  %v4715 = vadd.f32 %v4672, %v4714
  %4716 = vdwg.mxu0
  %4717 = vmatprep.subr.bf16.mxu0 %v4188
  %4718 = vmatpush1.bf16.msra.mxu0 %v4187
  %4719 = vmatprep.subr.bf16.mxu0 %v4185
  %4720 = vmatpush1.bf16.msra.mxu0 %v4184
  %4721 = vmatprep.subr.bf16.mxu0 %v4182
  %4722 = vmatpush1.bf16.msra.mxu0 %v4181
  %4723 = vmatprep.subr.bf16.mxu0 %v4179
  %4724 = vmatpush1.bf16.msra.mxu0 %v4178
  %4725 = vmatprep.subr.bf16.mxu0 %v4176
  %4726 = vmatpush1.bf16.msra.mxu0 %v4175
  %4727 = vmatprep.subr.bf16.mxu0 %v4173
  %4728 = vmatpush1.bf16.msra.mxu0 %v4172
  %4729 = vmatprep.subr.bf16.mxu0 %v4170
  %4730 = vmatpush1.bf16.msra.mxu0 %v4169
  %4731 = vmatprep.subr.bf16.mxu0 %v4167
  %4732 = vmatpush1.bf16.msra.mxu0 %v4166
  %4733 = vmatprep.subr.bf16.mxu0 %v4212
  %4734 = vmatpush2.bf16.msra.mxu0 %v4211
  %4735 = vmatprep.subr.bf16.mxu0 %v4209
  %4736 = vmatpush2.bf16.msra.mxu0 %v4208
  %4737 = vmatprep.subr.bf16.mxu0 %v4206
  %4738 = vmatpush2.bf16.msra.mxu0 %v4205
  %4739 = vmatprep.subr.bf16.mxu0 %v4203
  %4740 = vmatpush2.bf16.msra.mxu0 %v4202
  %4741 = vmatprep.subr.bf16.mxu0 %v4200
  %4742 = vmatpush2.bf16.msra.mxu0 %v4199
  %4743 = vmatprep.subr.bf16.mxu0 %v4197
  %4744 = vmatpush2.bf16.msra.mxu0 %v4196
  %4745 = vmatprep.subr.bf16.mxu0 %v4194
  %4746 = vmatpush2.bf16.msra.mxu0 %v4193
  %4747 = vmatprep.subr.bf16.mxu0 %v4191
  %4748 = vmatpush2.bf16.msra.mxu0 %v4190
  %4749 = vmatprep.mubr.bf16.mxu0 %v2564
  %4750 = vmatmul.mubr.bf16.gmra.mxu0 %v2563
  %v4751 = vpop.f32.mrf.mxu0
  %v4752 = vadd.f32 %v4709, %v4751
  %v4753 = vpop.f32.mrf.mxu0
  %v4754 = vadd.f32 %v4711, %v4753
  %v4755 = vpop.f32.mrf.mxu0
  %v4756 = vadd.f32 %v4713, %v4755
  %v4757 = vpop.f32.mrf.mxu0
  %v4758 = vadd.f32 %v4715, %v4757
  %4759 = vdwg.mxu0
  %4760 = vmatprep.subr.bf16.mxu0 0
  %4761 = vmatpush1.bf16.msra.mxu0 %v3949
  %4762 = vmatprep.subr.bf16.mxu0 0
  %4763 = vmatpush1.bf16.msra.mxu0 %v3946
  %4764 = vmatprep.subr.bf16.mxu0 0
  %4765 = vmatpush1.bf16.msra.mxu0 %v3943
  %4766 = vmatprep.subr.bf16.mxu0 0
  %4767 = vmatpush1.bf16.msra.mxu0 %v3940
  %4768 = vmatprep.subr.bf16.mxu0 0
  %4769 = vmatpush1.bf16.msra.mxu0 %v3937
  %4770 = vmatprep.subr.bf16.mxu0 0
  %4771 = vmatpush1.bf16.msra.mxu0 %v3934
  %4772 = vmatprep.subr.bf16.mxu0 0
  %4773 = vmatpush1.bf16.msra.mxu0 %v3931
  %4774 = vmatprep.subr.bf16.mxu0 0
  %4775 = vmatpush1.bf16.msra.mxu0 %v3928
  %4776 = vmatprep.subr.bf16.mxu0 0
  %4777 = vmatpush2.bf16.msra.mxu0 %v3973
  %4778 = vmatprep.subr.bf16.mxu0 0
  %4779 = vmatpush2.bf16.msra.mxu0 %v3970
  %4780 = vmatprep.subr.bf16.mxu0 0
  %4781 = vmatpush2.bf16.msra.mxu0 %v3967
  %4782 = vmatprep.subr.bf16.mxu0 0
  %4783 = vmatpush2.bf16.msra.mxu0 %v3964
  %4784 = vmatprep.subr.bf16.mxu0 0
  %4785 = vmatpush2.bf16.msra.mxu0 %v3961
  %4786 = vmatprep.subr.bf16.mxu0 0
  %4787 = vmatpush2.bf16.msra.mxu0 %v3958
  %4788 = vmatprep.subr.bf16.mxu0 0
  %4789 = vmatpush2.bf16.msra.mxu0 %v3955
  %4790 = vmatprep.subr.bf16.mxu0 0
  %4791 = vmatpush2.bf16.msra.mxu0 %v3952
  %4792 = vmatprep.mubr.bf16.mxu0 %v2554
  %4793 = vmatmul.mubr.bf16.gmra.mxu0 %v2553
  %v4794 = vpop.f32.mrf.mxu0
  %v4795 = vadd.f32 %v2962, %v4794
  %v4796 = vpop.f32.mrf.mxu0
  %v4797 = vpop.f32.mrf.mxu0
  %v4798 = vadd.f32 %v2962, %v4797
  %v4799 = vpop.f32.mrf.mxu0
  %4800 = vdwg.mxu0
  %4801 = vmatprep.subr.bf16.mxu0 0
  %4802 = vmatpush1.bf16.msra.mxu0 %v3997
  %4803 = vmatprep.subr.bf16.mxu0 0
  %4804 = vmatpush1.bf16.msra.mxu0 %v3994
  %4805 = vmatprep.subr.bf16.mxu0 0
  %4806 = vmatpush1.bf16.msra.mxu0 %v3991
  %4807 = vmatprep.subr.bf16.mxu0 0
  %4808 = vmatpush1.bf16.msra.mxu0 %v3988
  %4809 = vmatprep.subr.bf16.mxu0 0
  %4810 = vmatpush1.bf16.msra.mxu0 %v3985
  %4811 = vmatprep.subr.bf16.mxu0 0
  %4812 = vmatpush1.bf16.msra.mxu0 %v3982
  %4813 = vmatprep.subr.bf16.mxu0 0
  %4814 = vmatpush1.bf16.msra.mxu0 %v3979
  %4815 = vmatprep.subr.bf16.mxu0 0
  %4816 = vmatpush1.bf16.msra.mxu0 %v3976
  %4817 = vmatprep.subr.bf16.mxu0 0
  %4818 = vmatpush2.bf16.msra.mxu0 %v4021
  %4819 = vmatprep.subr.bf16.mxu0 0
  %4820 = vmatpush2.bf16.msra.mxu0 %v4018
  %4821 = vmatprep.subr.bf16.mxu0 0
  %4822 = vmatpush2.bf16.msra.mxu0 %v4015
  %4823 = vmatprep.subr.bf16.mxu0 0
  %4824 = vmatpush2.bf16.msra.mxu0 %v4012
  %4825 = vmatprep.subr.bf16.mxu0 0
  %4826 = vmatpush2.bf16.msra.mxu0 %v4009
  %4827 = vmatprep.subr.bf16.mxu0 0
  %4828 = vmatpush2.bf16.msra.mxu0 %v4006
  %4829 = vmatprep.subr.bf16.mxu0 0
  %4830 = vmatpush2.bf16.msra.mxu0 %v4003
  %4831 = vmatprep.subr.bf16.mxu0 0
  %4832 = vmatpush2.bf16.msra.mxu0 %v4000
  %4833 = vmatprep.mubr.bf16.mxu0 %v2556
  %4834 = vmatmul.mubr.bf16.gmra.mxu0 %v2555
  %v4835 = vpop.f32.mrf.mxu0
  %v4836 = vadd.f32 %v4795, %v4835
  %v4837 = vpop.f32.mrf.mxu0
  %v4838 = vpop.f32.mrf.mxu0
  %v4839 = vadd.f32 %v4798, %v4838
  %v4840 = vpop.f32.mrf.mxu0
  %4841 = vdwg.mxu0
  %4842 = vmatprep.subr.bf16.mxu0 0
  %4843 = vmatpush1.bf16.msra.mxu0 %v4045
  %4844 = vmatprep.subr.bf16.mxu0 0
  %4845 = vmatpush1.bf16.msra.mxu0 %v4042
  %4846 = vmatprep.subr.bf16.mxu0 0
  %4847 = vmatpush1.bf16.msra.mxu0 %v4039
  %4848 = vmatprep.subr.bf16.mxu0 0
  %4849 = vmatpush1.bf16.msra.mxu0 %v4036
  %4850 = vmatprep.subr.bf16.mxu0 0
  %4851 = vmatpush1.bf16.msra.mxu0 %v4033
  %4852 = vmatprep.subr.bf16.mxu0 0
  %4853 = vmatpush1.bf16.msra.mxu0 %v4030
  %4854 = vmatprep.subr.bf16.mxu0 0
  %4855 = vmatpush1.bf16.msra.mxu0 %v4027
  %4856 = vmatprep.subr.bf16.mxu0 0
  %4857 = vmatpush1.bf16.msra.mxu0 %v4024
  %4858 = vmatprep.subr.bf16.mxu0 0
  %4859 = vmatpush2.bf16.msra.mxu0 %v4069
  %4860 = vmatprep.subr.bf16.mxu0 0
  %4861 = vmatpush2.bf16.msra.mxu0 %v4066
  %4862 = vmatprep.subr.bf16.mxu0 0
  %4863 = vmatpush2.bf16.msra.mxu0 %v4063
  %4864 = vmatprep.subr.bf16.mxu0 0
  %4865 = vmatpush2.bf16.msra.mxu0 %v4060
  %4866 = vmatprep.subr.bf16.mxu0 0
  %4867 = vmatpush2.bf16.msra.mxu0 %v4057
  %4868 = vmatprep.subr.bf16.mxu0 0
  %4869 = vmatpush2.bf16.msra.mxu0 %v4054
  %4870 = vmatprep.subr.bf16.mxu0 0
  %4871 = vmatpush2.bf16.msra.mxu0 %v4051
  %4872 = vmatprep.subr.bf16.mxu0 0
  %4873 = vmatpush2.bf16.msra.mxu0 %v4048
  %4874 = vmatprep.mubr.bf16.mxu0 %v2558
  %4875 = vmatmul.mubr.bf16.gmra.mxu0 %v2557
  %v4876 = vpop.f32.mrf.mxu0
  %v4877 = vadd.f32 %v4836, %v4876
  %v4878 = vpop.f32.mrf.mxu0
  %v4879 = vpop.f32.mrf.mxu0
  %v4880 = vadd.f32 %v4839, %v4879
  %v4881 = vpop.f32.mrf.mxu0
  %4882 = vdwg.mxu0
  %4883 = vmatprep.subr.bf16.mxu0 0
  %4884 = vmatpush1.bf16.msra.mxu0 %v4093
  %4885 = vmatprep.subr.bf16.mxu0 0
  %4886 = vmatpush1.bf16.msra.mxu0 %v4090
  %4887 = vmatprep.subr.bf16.mxu0 0
  %4888 = vmatpush1.bf16.msra.mxu0 %v4087
  %4889 = vmatprep.subr.bf16.mxu0 0
  %4890 = vmatpush1.bf16.msra.mxu0 %v4084
  %4891 = vmatprep.subr.bf16.mxu0 0
  %4892 = vmatpush1.bf16.msra.mxu0 %v4081
  %4893 = vmatprep.subr.bf16.mxu0 0
  %4894 = vmatpush1.bf16.msra.mxu0 %v4078
  %4895 = vmatprep.subr.bf16.mxu0 0
  %4896 = vmatpush1.bf16.msra.mxu0 %v4075
  %4897 = vmatprep.subr.bf16.mxu0 0
  %4898 = vmatpush1.bf16.msra.mxu0 %v4072
  %4899 = vmatprep.subr.bf16.mxu0 0
  %4900 = vmatpush2.bf16.msra.mxu0 %v4117
  %4901 = vmatprep.subr.bf16.mxu0 0
  %4902 = vmatpush2.bf16.msra.mxu0 %v4114
  %4903 = vmatprep.subr.bf16.mxu0 0
  %4904 = vmatpush2.bf16.msra.mxu0 %v4111
  %4905 = vmatprep.subr.bf16.mxu0 0
  %4906 = vmatpush2.bf16.msra.mxu0 %v4108
  %4907 = vmatprep.subr.bf16.mxu0 0
  %4908 = vmatpush2.bf16.msra.mxu0 %v4105
  %4909 = vmatprep.subr.bf16.mxu0 0
  %4910 = vmatpush2.bf16.msra.mxu0 %v4102
  %4911 = vmatprep.subr.bf16.mxu0 0
  %4912 = vmatpush2.bf16.msra.mxu0 %v4099
  %4913 = vmatprep.subr.bf16.mxu0 0
  %4914 = vmatpush2.bf16.msra.mxu0 %v4096
  %4915 = vmatprep.mubr.bf16.mxu0 %v2560
  %4916 = vmatmul.mubr.bf16.gmra.mxu0 %v2559
  %v4917 = vpop.f32.mrf.mxu0
  %v4918 = vadd.f32 %v4877, %v4917
  %v4919 = vpop.f32.mrf.mxu0
  %v4920 = vpop.f32.mrf.mxu0
  %v4921 = vadd.f32 %v4880, %v4920
  %v4922 = vpop.f32.mrf.mxu0
  %4923 = vdwg.mxu0
  %4924 = vmatprep.subr.bf16.mxu0 0
  %4925 = vmatpush1.bf16.msra.mxu0 %v4141
  %4926 = vmatprep.subr.bf16.mxu0 0
  %4927 = vmatpush1.bf16.msra.mxu0 %v4138
  %4928 = vmatprep.subr.bf16.mxu0 0
  %4929 = vmatpush1.bf16.msra.mxu0 %v4135
  %4930 = vmatprep.subr.bf16.mxu0 0
  %4931 = vmatpush1.bf16.msra.mxu0 %v4132
  %4932 = vmatprep.subr.bf16.mxu0 0
  %4933 = vmatpush1.bf16.msra.mxu0 %v4129
  %4934 = vmatprep.subr.bf16.mxu0 0
  %4935 = vmatpush1.bf16.msra.mxu0 %v4126
  %4936 = vmatprep.subr.bf16.mxu0 0
  %4937 = vmatpush1.bf16.msra.mxu0 %v4123
  %4938 = vmatprep.subr.bf16.mxu0 0
  %4939 = vmatpush1.bf16.msra.mxu0 %v4120
  %4940 = vmatprep.subr.bf16.mxu0 0
  %4941 = vmatpush2.bf16.msra.mxu0 %v4165
  %4942 = vmatprep.subr.bf16.mxu0 0
  %4943 = vmatpush2.bf16.msra.mxu0 %v4162
  %4944 = vmatprep.subr.bf16.mxu0 0
  %4945 = vmatpush2.bf16.msra.mxu0 %v4159
  %4946 = vmatprep.subr.bf16.mxu0 0
  %4947 = vmatpush2.bf16.msra.mxu0 %v4156
  %4948 = vmatprep.subr.bf16.mxu0 0
  %4949 = vmatpush2.bf16.msra.mxu0 %v4153
  %4950 = vmatprep.subr.bf16.mxu0 0
  %4951 = vmatpush2.bf16.msra.mxu0 %v4150
  %4952 = vmatprep.subr.bf16.mxu0 0
  %4953 = vmatpush2.bf16.msra.mxu0 %v4147
  %4954 = vmatprep.subr.bf16.mxu0 0
  %4955 = vmatpush2.bf16.msra.mxu0 %v4144
  %4956 = vmatprep.mubr.bf16.mxu0 %v2562
  %4957 = vmatmul.mubr.bf16.gmra.mxu0 %v2561
  %v4958 = vpop.f32.mrf.mxu0
  %v4959 = vadd.f32 %v4918, %v4958
  %v4960 = vpop.f32.mrf.mxu0
  %v4961 = vpop.f32.mrf.mxu0
  %v4962 = vadd.f32 %v4921, %v4961
  %v4963 = vpop.f32.mrf.mxu0
  %4964 = vdwg.mxu0
  %4965 = vmatprep.subr.bf16.mxu0 0
  %4966 = vmatpush1.bf16.msra.mxu0 %v4189
  %4967 = vmatprep.subr.bf16.mxu0 0
  %4968 = vmatpush1.bf16.msra.mxu0 %v4186
  %4969 = vmatprep.subr.bf16.mxu0 0
  %4970 = vmatpush1.bf16.msra.mxu0 %v4183
  %4971 = vmatprep.subr.bf16.mxu0 0
  %4972 = vmatpush1.bf16.msra.mxu0 %v4180
  %4973 = vmatprep.subr.bf16.mxu0 0
  %4974 = vmatpush1.bf16.msra.mxu0 %v4177
  %4975 = vmatprep.subr.bf16.mxu0 0
  %4976 = vmatpush1.bf16.msra.mxu0 %v4174
  %4977 = vmatprep.subr.bf16.mxu0 0
  %4978 = vmatpush1.bf16.msra.mxu0 %v4171
  %4979 = vmatprep.subr.bf16.mxu0 0
  %4980 = vmatpush1.bf16.msra.mxu0 %v4168
  %4981 = vmatprep.subr.bf16.mxu0 0
  %4982 = vmatpush2.bf16.msra.mxu0 %v4213
  %4983 = vmatprep.subr.bf16.mxu0 0
  %4984 = vmatpush2.bf16.msra.mxu0 %v4210
  %4985 = vmatprep.subr.bf16.mxu0 0
  %4986 = vmatpush2.bf16.msra.mxu0 %v4207
  %4987 = vmatprep.subr.bf16.mxu0 0
  %4988 = vmatpush2.bf16.msra.mxu0 %v4204
  %4989 = vmatprep.subr.bf16.mxu0 0
  %4990 = vmatpush2.bf16.msra.mxu0 %v4201
  %4991 = vmatprep.subr.bf16.mxu0 0
  %4992 = vmatpush2.bf16.msra.mxu0 %v4198
  %4993 = vmatprep.subr.bf16.mxu0 0
  %4994 = vmatpush2.bf16.msra.mxu0 %v4195
  %4995 = vmatprep.subr.bf16.mxu0 0
  %4996 = vmatpush2.bf16.msra.mxu0 %v4192
  %4997 = vmatprep.mubr.bf16.mxu0 %v2564
  %4998 = vmatmul.mubr.bf16.gmra.mxu0 %v2563
  %v4999 = vpop.f32.mrf.mxu0
  %v5000 = vadd.f32 %v4959, %v4999
  %v5001 = vpop.f32.mrf.mxu0
  %v5002 = vpop.f32.mrf.mxu0
  %v5003 = vadd.f32 %v4962, %v5002
  %v5004 = vpop.f32.mrf.mxu0
  %5005 = vdwg.mxu0
  %v5006 = vadd.f32 %v27, %v4752
  %v5007 = vadd.f32 %v28, %v4754
  %v5008 = vadd.f32 %v29, %v5000
  %v5009 = vadd.f32 %v30, %v4756
  %v5010 = vadd.f32 %v31, %v4758
  %v5011 = vadd.f32 %v32, %v5003
  %5012 = vst [vmem:[%s7] sm:$0xff] %v5006
  %5013 = vst [vmem:[%s7 + $0x8] sm:$0xff] %v5007
  %5014 = vst [vmem:[%s7 + $0x10] sm:$0xff] %v5008
  %5015 = vst [vmem:[%s7 + $0x18] sm:$0xff] %v5009
  %5016 = vst [vmem:[%s7 + $0x20] sm:$0xff] %v5010
  %5017 = vst [vmem:[%s7 + $0x28] sm:$0xff] %v5011
  // Predicated region
  $region30: #{_lambda_.28} parent=0 // pred_check
    _
  $region31: #{_lambda_.28} parent=0 // pred_check_branch
    %5019 = sbr.rel (0) target = $region33
  $region32: #{_lambda_.28} parent=0 // pred_region
    _
  $region33: #{_lambda_.28} parent=0 // pred_fallthru
    _
  // Predicated region
  $region34: #{_lambda_.28} parent=0 // pred_check
    _
  $region35: #{_lambda_.28} parent=0 // pred_check_branch
    %5021 = sbr.rel (0) target = $region37
  $region36: #{_lambda_.28} parent=0 // pred_region
    _
  $region37: #{_lambda_.28} parent=0 // pred_fallthru
    _

</llo_original>
